<compile_context>
chip_gen: v7x
topology: tpu7x:2x2x1
jax: 0.10.0
libtpu: 0.0.40
codegen_flags: <defaults>
</compile_context>

<pallas_src>
import functools

import numpy as np
import jax
import jax.numpy as jnp
from jax import lax
from jax.experimental import pallas as pl
from jax.experimental.pallas import tpu as pltpu


_VMEM = functools.partial(pl.BlockSpec, memory_space=pltpu.MemorySpace.VMEM)


def _round_up(x, m):
    return ((x + m - 1) // m) * m


# ---------------------------------------------------------------------------
# Pallas kernels
# ---------------------------------------------------------------------------
def _matmul_bias_kernel(x_ref, w_ref, b_ref, o_ref):
    """o = x @ w + b.  x:[bm,K] bf16, w:[K,N] bf16, b:[1,N] f32, o:[bm,N]."""
    acc = jnp.dot(x_ref[...], w_ref[...], preferred_element_type=jnp.float32)
    o_ref[...] = (acc + b_ref[...]).astype(o_ref.dtype)


def _conv3_esn_init_kernel(p3_ref, w3_ref, b3_ref, win_ref, xnat_ref, xesn_ref):
    """First call: conv3 as [4*mb,256]@[256,128], assemble nat-order x, then
    x_esn = tanh(W_in x)."""
    mb = xnat_ref.shape[0]
    c3 = jnp.dot(p3_ref[...], w3_ref[...], preferred_element_type=jnp.float32)
    c3 = c3 + b3_ref[...]                                  # [4*mb, 128]
    # p3 rows are s-major (s*mb + b); write spatial block s into lanes 128s..128s+127.
    for s in range(4):
        xnat_ref[:, 128 * s:128 * (s + 1)] = c3[mb * s:mb * (s + 1), :]
    x_in = xnat_ref[...].astype(jnp.bfloat16)              # [mb, 512]
    h = jnp.dot(x_in, win_ref[...], preferred_element_type=jnp.float32)
    xesn_ref[...] = jnp.tanh(h)


def _conv3_esn_step_kernel(p3_ref, w3_ref, b3_ref, wcomb_ref, xprev_ref,
                           xnat_ref, xesn_ref, xcat_scr, *, alpha):
    """Recurrent call: conv3 + x_hat = tanh([x_nat|x_prev] @ [W_in;W]), leaky blend.
    The two ESN matmuls are fused into one K=1024 matmul (wcomb = [W_in_eff; W^T])."""
    mb = xnat_ref.shape[0]
    c3 = jnp.dot(p3_ref[...], w3_ref[...], preferred_element_type=jnp.float32)
    c3 = c3 + b3_ref[...]                                  # [4*mb, 128]
    for s in range(4):
        xnat_ref[:, 128 * s:128 * (s + 1)] = c3[mb * s:mb * (s + 1), :]
    xcat_scr[:, 0:512] = xnat_ref[...].astype(jnp.bfloat16)
    xcat_scr[:, 512:1024] = xprev_ref[...].astype(jnp.bfloat16)
    h = jnp.dot(xcat_scr[...], wcomb_ref[...], preferred_element_type=jnp.float32)
    x_hat = jnp.tanh(h)
    xesn_ref[...] = (1.0 - alpha) * xprev_ref[...] + alpha * x_hat


# ---------------------------------------------------------------------------
# Pallas wrappers
# ---------------------------------------------------------------------------
def conv_matmul(patches, wmat, bias2d, *, num_m_blocks=1, out_dtype=jnp.bfloat16):
    """out = patches @ wmat + bias, optionally tiled over M (even block count
    for v7x megacore balance; block small enough for every generation's VMEM)."""
    M, K = patches.shape
    N = wmat.shape[1]
    if num_m_blocks <= 1:
        bm = M
    else:
        bm = min(M, _round_up(pl.cdiv(M, num_m_blocks), 8))
    grid_m = pl.cdiv(M, bm)
    return pl.pallas_call(
        _matmul_bias_kernel,
        out_shape=jax.ShapeDtypeStruct((M, N), out_dtype),
        grid_spec=pltpu.PrefetchScalarGridSpec(
            num_scalar_prefetch=0,
            grid=(grid_m,),
            in_specs=[
                pl.BlockSpec((bm, K), lambda i: (i, 0)),
                pl.BlockSpec((K, N), lambda i: (0, 0)),
                pl.BlockSpec((1, N), lambda i: (0, 0)),
            ],
            out_specs=pl.BlockSpec((bm, N), lambda i: (i, 0)),
        ),
        compiler_params=pltpu.CompilerParams(
            dimension_semantics=("parallel",)),
    )(patches, wmat, bias2d)


def conv3_esn_first(p3, w3m, b3row, win_eff, mb):
    return pl.pallas_call(
        _conv3_esn_init_kernel,
        out_shape=(jax.ShapeDtypeStruct((mb, 512), jnp.float32),
                   jax.ShapeDtypeStruct((mb, 512), jnp.float32)),
        in_specs=[_VMEM() for _ in range(4)],
        out_specs=(_VMEM(), _VMEM()),
    )(p3, w3m, b3row, win_eff)


def conv3_esn_step(p3, w3m, b3row, wcomb, xprev, alpha, mb):
    return pl.pallas_call(
        functools.partial(_conv3_esn_step_kernel, alpha=float(alpha)),
        out_shape=(jax.ShapeDtypeStruct((mb, 512), jnp.float32),
                   jax.ShapeDtypeStruct((mb, 512), jnp.float32)),
        in_specs=[_VMEM() for _ in range(5)],
        out_specs=(_VMEM(), _VMEM()),
        scratch_shapes=[pltpu.VMEM((mb, 1024), jnp.bfloat16)],
    )(p3, w3m, b3row, wcomb, xprev)


# ---------------------------------------------------------------------------
# Weight / bias reshaping helpers
# ---------------------------------------------------------------------------
def _conv_weight_matrix(w, oc_pad):
    """torch [OC,C,KH,KW] -> [C*KH*KW, OC_pad] bf16.
    Row order (c, kh, kw) matches lax.conv_general_dilated_patches features."""
    OC, C, KH, KW = w.shape
    wm = jnp.transpose(w, (1, 2, 3, 0)).reshape(C * KH * KW, OC)
    if oc_pad > OC:
        wm = jnp.pad(wm, ((0, 0), (0, oc_pad - OC)))
    return wm.astype(jnp.bfloat16)


def _conv_bias_row(b, oc_pad):
    OC = b.shape[0]
    if oc_pad > OC:
        b = jnp.pad(b, (0, oc_pad - OC))
    return b.reshape(1, oc_pad).astype(jnp.float32)


# ---------------------------------------------------------------------------
# Deterministic parameter init (mirrors init_W from the reference module)
# ---------------------------------------------------------------------------
def init_W_np(n, m, seed=1234):
    rng = np.random.RandomState(seed)
    weight = rng.standard_normal((n, m)).astype(np.float32)
    u, s, vh = np.linalg.svd(weight, full_matrices=False)
    s_ = 0.95 * s / s.max()
    weight = (u * s_) * vh            # elementwise, mirrors torch's `u * s_ * v.t()`
    N = n * m
    p = int(0.2 * N)
    idx = rng.choice(N, p)
    a = idx // n
    b = idx - a * n
    weight[a, b] = 0.0
    return weight.astype(np.float32)


class FixedRandomModelPallas:
    """JAX/Pallas port of FixedRandomModel (stateful echo-state network head)."""

    def __init__(self, alpha, key):
        ks = jax.random.split(key, 7)

        def nrm(k, shape, scale):
            return jax.random.normal(k, shape, jnp.float32) * scale

        # Conv2d(3,32,32,s=2), Conv2d(32,64,8,s=2), Conv2d(64,128,2,s=2)
        w1 = nrm(ks[0], (32, 3, 32, 32), 1.0 / np.sqrt(3 * 32 * 32))
        b1 = nrm(ks[1], (32,), 0.01)
        w2 = nrm(ks[2], (64, 32, 8, 8), 1.0 / np.sqrt(32 * 8 * 8))
        b2 = nrm(ks[3], (64,), 0.01)
        w3 = nrm(ks[4], (128, 64, 2, 2), 1.0 / np.sqrt(64 * 2 * 2))
        b3 = nrm(ks[5], (128,), 0.01)
        # nn.Linear(512,512,bias=False): y = x @ W^T
        win = nrm(ks[6], (512, 512), 1.0 / np.sqrt(512))      # W_in.weight [out, in]
        w_rec = jnp.asarray(init_W_np(512, 512))               # W.weight    [out, in]

        # conv1/conv2/conv3 as lane-dense matmuls (OC padded to 128), bf16 operands.
        self.w1m = _conv_weight_matrix(w1, 128)   # [3072, 128]
        self.b1m = _conv_bias_row(b1, 128)
        self.w2m = _conv_weight_matrix(w2, 128)   # [2048, 128]
        self.b2m = _conv_bias_row(b2, 128)
        self.w3m = _conv_weight_matrix(w3, 128)   # [256, 128]  (OC is already 128)
        self.b3m = _conv_bias_row(b3, 128)

        # Permute W_in's input rows so it consumes the in-kernel "nat" flatten
        # (nat index s*128+c  <->  torch .view index c*4+s).
        i = jnp.arange(512)
        perm_inv = (i % 128) * 4 + (i // 128)
        self.win_eff = win.T[perm_inv].astype(jnp.bfloat16)            # [512,512]
        w_rec_t = w_rec.T.astype(jnp.bfloat16)                          # [512,512]
        # Fused ESN weight for the recurrent step: [W_in_eff ; W^T] -> one K=1024 dot.
        self.w_comb = jnp.concatenate([self.win_eff, w_rec_t], axis=0)  # [1024,512]

        self.alpha = float(alpha)
        self.x_esn = None

        self._fwd_init = jax.jit(self._forward_init)
        self._fwd_step = jax.jit(self._forward_step)

    # -- conv stack: one conv_general_dilated_patches + one Pallas matmul each --
    def _conv_stack(self, obs):
        B = obs.shape[0]
        x = obs.astype(jnp.bfloat16)                                   # [B,3,64,64]

        # conv1: patches [B,17,17,3072] (feature order (c,kh,kw)), one XLA op.
        p1 = lax.conv_general_dilated_patches(
            x, (32, 32), (2, 2), "VALID",
            dimension_numbers=("NCHW", "OIHW", "NHWC"))
        p1 = p1.reshape(B * 289, 3072)
        # Even number of M-blocks (v7x megacore balance), block <= ~512 rows.
        nmb = max(2, -(-p1.shape[0] // 512))
        nmb += nmb % 2
        a1 = conv_matmul(p1, self.w1m, self.b1m, num_m_blocks=nmb)     # [B*289,128]

        # conv2
        a1_img = a1[:, :32].reshape(B, 17, 17, 32)
        p2 = lax.conv_general_dilated_patches(
            a1_img, (8, 8), (2, 2), "VALID",
            dimension_numbers=("NHWC", "HWIO", "NHWC"))                # [B,5,5,2048]
        p2 = p2.reshape(B * 25, 2048)
        m2 = _round_up(B * 25, 8)
        p2 = jnp.pad(p2, ((0, m2 - B * 25), (0, 0)))
        a2 = conv_matmul(p2, self.w2m, self.b2m)                       # [m2,128]

        # conv3 patches, reordered s-major (s*mb + b) for the fused ESN kernel.
        a2_img = a2[:B * 25, :64].reshape(B, 5, 5, 64)
        p3 = lax.conv_general_dilated_patches(
            a2_img, (2, 2), (2, 2), "VALID",
            dimension_numbers=("NHWC", "HWIO", "NHWC"))                # [B,2,2,256]
        mb = _round_up(max(B, 1), 8)
        p3 = jnp.transpose(p3.reshape(B, 4, 256), (1, 0, 2))           # [4,B,256]
        p3 = jnp.pad(p3, ((0, 0), (0, mb - B), (0, 0))).reshape(4 * mb, 256)
        return p3, mb

    @staticmethod
    def _to_torch_flatten(x_nat, B):
        # nat order (s*128+c) -> torch .view order (c*4+s); 4 KB op.
        return x_nat.reshape(B, 4, 128).transpose(0, 2, 1).reshape(B, 512)

    def _forward_init(self, obs):
        B = obs.shape[0]
        p3, mb = self._conv_stack(obs)
        x_nat, x_esn = conv3_esn_first(p3, self.w3m, self.b3m, self.win_eff, mb)
        return self._to_torch_flatten(x_nat[:B], B), x_esn[:B]

    def _forward_step(self, obs, x_esn_prev):
        B = obs.shape[0]
        p3, mb = self._conv_stack(obs)
        xprev = jnp.pad(x_esn_prev, ((0, mb - B), (0, 0)))
        x_nat, x_esn = conv3_esn_step(p3, self.w3m, self.b3m, self.w_comb,
                                      xprev, self.alpha, mb)
        return self._to_torch_flatten(x_nat[:B], B), x_esn[:B]

    def __call__(self, obs):
        B = obs.shape[0]
        if self.x_esn is None or self.x_esn.shape[0] != B:
            x_flat, x_esn = self._fwd_init(obs)
        else:
            x_flat, x_esn = self._fwd_step(obs, self.x_esn)
        self.x_esn = x_esn
        return x_flat, x_esn


if __name__ == "__main__":
    key = jax.random.PRNGKey(0)
    model = FixedRandomModelPallas(alpha=0.5, key=key)

    # 64x64 input is what makes the flattened conv output exactly 512-d.
    obs = jax.random.normal(jax.random.fold_in(key, 99), (2, 3, 64, 64), jnp.float32)

    # First call: x_esn is None -> x_esn = tanh(W_in @ x_conv_flat)
    x_flat1, x_esn1 = model(obs)
    # Second call: exercises the recurrent ESN update branch
    x_flat2, x_esn2 = model(obs)

    jax.block_until_ready((x_flat1, x_esn1, x_flat2, x_esn2))

    assert x_flat1.shape == (2, 512) and x_esn1.shape == (2, 512)
    assert x_flat2.shape == (2, 512) and x_esn2.shape == (2, 512)
    assert x_flat1.dtype == jnp.float32 and x_esn2.dtype == jnp.float32
    assert bool(jnp.all(jnp.isfinite(x_flat2)))
    assert bool(jnp.all(jnp.isfinite(x_esn2)))
    assert bool(jnp.all(jnp.abs(x_esn2) <= 1.0 + 1e-3))   # tanh-blend stays bounded
    print("KERNEL_OK")
</pallas_src>

<mosaic_0001>
module attributes {stable_mosaic.version = 11 : i64} {
  func.func @_matmul_bias_kernel(%arg0: i32, %arg1: memref<296x3072xbf16, #tpu.memory_space<vmem>>, %arg2: memref<3072x128xbf16, #tpu.memory_space<vmem>>, %arg3: memref<1x128xf32, #tpu.memory_space<vmem>>, %arg4: memref<296x128xbf16, #tpu.memory_space<vmem>>) attributes {dimension_semantics = [#tpu.dimension_semantics<parallel>], iteration_bounds = array<i64: 2>, scalar_prefetch = 0 : i64, scratch_operands = 0 : i64, tpu.core_type = #tpu.core_type<tc>, window_params = [{transform_indices = @transform_0, window_bounds = array<i64: 296, 3072>}, {pipeline_mode = #tpu.pipeline_mode<synchronous>, transform_indices = @transform_1, window_bounds = array<i64: 3072, 128>}, {pipeline_mode = #tpu.pipeline_mode<synchronous>, transform_indices = @transform_2, window_bounds = array<i64: 1, 128>}, {transform_indices = @transform_3, window_bounds = array<i64: 296, 128>}]} {
    %c0 = arith.constant 0 : index
    %c0_0 = arith.constant 0 : index
    %0 = vector.load %arg1[%c0, %c0_0] : memref<296x3072xbf16, #tpu.memory_space<vmem>>, vector<296x3072xbf16>
    %c0_1 = arith.constant 0 : index
    %c0_2 = arith.constant 0 : index
    %1 = vector.load %arg2[%c0_1, %c0_2] : memref<3072x128xbf16, #tpu.memory_space<vmem>>, vector<3072x128xbf16>
    %cst = arith.constant dense<0.000000e+00> : vector<296x128xf32>
    %2 = tpu.matmul %0, %1, %cst {dimension_numbers = #tpu.dot_dimension_numbers<[1], [0], [0], [1], [0, 0, 1, 1], [], []>} : vector<296x3072xbf16>, vector<3072x128xbf16>, vector<296x128xf32> -> vector<296x128xf32>
    %c0_3 = arith.constant 0 : index
    %c0_4 = arith.constant 0 : index
    %3 = vector.load %arg3[%c0_3, %c0_4] : memref<1x128xf32, #tpu.memory_space<vmem>>, vector<1x128xf32>
    %4 = vector.broadcast %3 : vector<1x128xf32> to vector<296x128xf32>
    %5 = arith.addf %2, %4 : vector<296x128xf32>
    %6 = arith.truncf %5 : vector<296x128xf32> to vector<296x128xbf16>
    %c0_5 = arith.constant 0 : index
    %c0_6 = arith.constant 0 : index
    %7 = vector.load %arg4[%c0_5, %c0_6] : memref<296x128xbf16, #tpu.memory_space<vmem>>, vector<296x128xbf16>
    tpu.vector_store %arg4[%c0_5, %c0_6], %6 {strides = array<i32>} : memref<296x128xbf16, #tpu.memory_space<vmem>>, vector<296x128xbf16>,
    return
  }
  func.func @transform_0(%arg0: i32) -> (i32, i32) {
    %c0_i32 = arith.constant 0 : i32
    %c0_i32_0 = arith.constant 0 : i32
    return %arg0, %c0_i32 : i32, i32
  }
  func.func @transform_1(%arg0: i32) -> (i32, i32) {
    %c0_i32 = arith.constant 0 : i32
    %c0_i32_0 = arith.constant 0 : i32
    %c0_i32_1 = arith.constant 0 : i32
    return %c0_i32, %c0_i32_0 : i32, i32
  }
  func.func @transform_2(%arg0: i32) -> (i32, i32) {
    %c0_i32 = arith.constant 0 : i32
    %c0_i32_0 = arith.constant 0 : i32
    %c0_i32_1 = arith.constant 0 : i32
    return %c0_i32, %c0_i32_0 : i32, i32
  }
  func.func @transform_3(%arg0: i32) -> (i32, i32) {
    %c0_i32 = arith.constant 0 : i32
    %c0_i32_0 = arith.constant 0 : i32
    return %arg0, %c0_i32 : i32, i32
  }
}

module attributes {stable_mosaic.version = 11 : i64} {
  func.func @_matmul_bias_kernel(%arg0: i32, %arg1: memref<56x2048xbf16, #tpu.memory_space<vmem>>, %arg2: memref<2048x128xbf16, #tpu.memory_space<vmem>>, %arg3: memref<1x128xf32, #tpu.memory_space<vmem>>, %arg4: memref<56x128xbf16, #tpu.memory_space<vmem>>) attributes {dimension_semantics = [#tpu.dimension_semantics<parallel>], iteration_bounds = array<i64: 1>, scalar_prefetch = 0 : i64, scratch_operands = 0 : i64, tpu.core_type = #tpu.core_type<tc>, window_params = [{transform_indices = @transform_0, window_bounds = array<i64: 56, 2048>}, {pipeline_mode = #tpu.pipeline_mode<synchronous>, transform_indices = @transform_1, window_bounds = array<i64: 2048, 128>}, {pipeline_mode = #tpu.pipeline_mode<synchronous>, transform_indices = @transform_2, window_bounds = array<i64: 1, 128>}, {transform_indices = @transform_3, window_bounds = array<i64: 56, 128>}]} {
    %c0 = arith.constant 0 : index
    %c0_0 = arith.constant 0 : index
    %0 = vector.load %arg1[%c0, %c0_0] : memref<56x2048xbf16, #tpu.memory_space<vmem>>, vector<56x2048xbf16>
    %c0_1 = arith.constant 0 : index
    %c0_2 = arith.constant 0 : index
    %1 = vector.load %arg2[%c0_1, %c0_2] : memref<2048x128xbf16, #tpu.memory_space<vmem>>, vector<2048x128xbf16>
    %cst = arith.constant dense<0.000000e+00> : vector<56x128xf32>
    %2 = tpu.matmul %0, %1, %cst {dimension_numbers = #tpu.dot_dimension_numbers<[1], [0], [0], [1], [0, 0, 1, 1], [], []>} : vector<56x2048xbf16>, vector<2048x128xbf16>, vector<56x128xf32> -> vector<56x128xf32>
    %c0_3 = arith.constant 0 : index
    %c0_4 = arith.constant 0 : index
    %3 = vector.load %arg3[%c0_3, %c0_4] : memref<1x128xf32, #tpu.memory_space<vmem>>, vector<1x128xf32>
    %4 = vector.broadcast %3 : vector<1x128xf32> to vector<56x128xf32>
    %5 = arith.addf %2, %4 : vector<56x128xf32>
    %6 = arith.truncf %5 : vector<56x128xf32> to vector<56x128xbf16>
    %c0_5 = arith.constant 0 : index
    %c0_6 = arith.constant 0 : index
    %7 = vector.load %arg4[%c0_5, %c0_6] : memref<56x128xbf16, #tpu.memory_space<vmem>>, vector<56x128xbf16>
    tpu.vector_store %arg4[%c0_5, %c0_6], %6 {strides = array<i32>} : memref<56x128xbf16, #tpu.memory_space<vmem>>, vector<56x128xbf16>,
    return
  }
  func.func @transform_0(%arg0: i32) -> (i32, i32) {
    %c0_i32 = arith.constant 0 : i32
    %c0_i32_0 = arith.constant 0 : i32
    return %arg0, %c0_i32 : i32, i32
  }
  func.func @transform_1(%arg0: i32) -> (i32, i32) {
    %c0_i32 = arith.constant 0 : i32
    %c0_i32_0 = arith.constant 0 : i32
    %c0_i32_1 = arith.constant 0 : i32
    return %c0_i32, %c0_i32_0 : i32, i32
  }
  func.func @transform_2(%arg0: i32) -> (i32, i32) {
    %c0_i32 = arith.constant 0 : i32
    %c0_i32_0 = arith.constant 0 : i32
    %c0_i32_1 = arith.constant 0 : i32
    return %c0_i32, %c0_i32_0 : i32, i32
  }
  func.func @transform_3(%arg0: i32) -> (i32, i32) {
    %c0_i32 = arith.constant 0 : i32
    %c0_i32_0 = arith.constant 0 : i32
    return %arg0, %c0_i32 : i32, i32
  }
}

module attributes {stable_mosaic.version = 11 : i64} {
  func.func @_conv3_esn_init_kernel(%arg0: memref<32x256xbf16, #tpu.memory_space<vmem>>, %arg1: memref<256x128xbf16, #tpu.memory_space<vmem>>, %arg2: memref<1x128xf32, #tpu.memory_space<vmem>>, %arg3: memref<512x512xbf16, #tpu.memory_space<vmem>>, %arg4: memref<8x512xf32, #tpu.memory_space<vmem>>, %arg5: memref<8x512xf32, #tpu.memory_space<vmem>>) attributes {dimension_semantics = [], scalar_prefetch = 0 : i64, scratch_operands = 0 : i64, tpu.core_type = #tpu.core_type<tc>} {
    %c0 = arith.constant 0 : index
    %c0_0 = arith.constant 0 : index
    %0 = vector.load %arg0[%c0, %c0_0] : memref<32x256xbf16, #tpu.memory_space<vmem>>, vector<32x256xbf16>
    %c0_1 = arith.constant 0 : index
    %c0_2 = arith.constant 0 : index
    %1 = vector.load %arg1[%c0_1, %c0_2] : memref<256x128xbf16, #tpu.memory_space<vmem>>, vector<256x128xbf16>
    %cst = arith.constant dense<0.000000e+00> : vector<32x128xf32>
    %2 = tpu.matmul %0, %1, %cst {dimension_numbers = #tpu.dot_dimension_numbers<[1], [0], [0], [1], [0, 0, 1, 1], [], []>} : vector<32x256xbf16>, vector<256x128xbf16>, vector<32x128xf32> -> vector<32x128xf32>
    %c0_3 = arith.constant 0 : index
    %c0_4 = arith.constant 0 : index
    %3 = vector.load %arg2[%c0_3, %c0_4] : memref<1x128xf32, #tpu.memory_space<vmem>>, vector<1x128xf32>
    %4 = vector.broadcast %3 : vector<1x128xf32> to vector<32x128xf32>
    %5 = arith.addf %2, %4 : vector<32x128xf32>
    %6 = vector.extract_strided_slice %5 {offsets = [0, 0], sizes = [8, 128], strides = [1, 1]} : vector<32x128xf32> to vector<8x128xf32>
    %c0_5 = arith.constant 0 : index
    %c0_6 = arith.constant 0 : index
    %7 = vector.load %arg4[%c0_5, %c0_6] : memref<8x512xf32, #tpu.memory_space<vmem>>, vector<8x128xf32>
    tpu.vector_store %arg4[%c0_5, %c0_6], %6 {strides = array<i32>} : memref<8x512xf32, #tpu.memory_space<vmem>>, vector<8x128xf32>,
    %8 = vector.extract_strided_slice %5 {offsets = [8, 0], sizes = [8, 128], strides = [1, 1]} : vector<32x128xf32> to vector<8x128xf32>
    %c0_7 = arith.constant 0 : index
    %c128 = arith.constant 128 : index
    %9 = vector.load %arg4[%c0_7, %c128] : memref<8x512xf32, #tpu.memory_space<vmem>>, vector<8x128xf32>
    tpu.vector_store %arg4[%c0_7, %c128], %8 {strides = array<i32>} : memref<8x512xf32, #tpu.memory_space<vmem>>, vector<8x128xf32>,
    %10 = vector.extract_strided_slice %5 {offsets = [16, 0], sizes = [8, 128], strides = [1, 1]} : vector<32x128xf32> to vector<8x128xf32>
    %c0_8 = arith.constant 0 : index
    %c256 = arith.constant 256 : index
    %11 = vector.load %arg4[%c0_8, %c256] : memref<8x512xf32, #tpu.memory_space<vmem>>, vector<8x128xf32>
    tpu.vector_store %arg4[%c0_8, %c256], %10 {strides = array<i32>} : memref<8x512xf32, #tpu.memory_space<vmem>>, vector<8x128xf32>,
    %12 = vector.extract_strided_slice %5 {offsets = [24, 0], sizes = [8, 128], strides = [1, 1]} : vector<32x128xf32> to vector<8x128xf32>
    %c0_9 = arith.constant 0 : index
    %c384 = arith.constant 384 : index
    %13 = vector.load %arg4[%c0_9, %c384] : memref<8x512xf32, #tpu.memory_space<vmem>>, vector<8x128xf32>
    tpu.vector_store %arg4[%c0_9, %c384], %12 {strides = array<i32>} : memref<8x512xf32, #tpu.memory_space<vmem>>, vector<8x128xf32>,
    %c0_10 = arith.constant 0 : index
    %c0_11 = arith.constant 0 : index
    %14 = vector.load %arg4[%c0_10, %c0_11] : memref<8x512xf32, #tpu.memory_space<vmem>>, vector<8x512xf32>
    %15 = arith.truncf %14 : vector<8x512xf32> to vector<8x512xbf16>
    %c0_12 = arith.constant 0 : index
    %c0_13 = arith.constant 0 : index
    %16 = vector.load %arg3[%c0_12, %c0_13] : memref<512x512xbf16, #tpu.memory_space<vmem>>, vector<512x512xbf16>
    %cst_14 = arith.constant dense<0.000000e+00> : vector<8x512xf32>
    %17 = tpu.matmul %15, %16, %cst_14 {dimension_numbers = #tpu.dot_dimension_numbers<[1], [0], [0], [1], [0, 0, 1, 1], [], []>} : vector<8x512xbf16>, vector<512x512xbf16>, vector<8x512xf32> -> vector<8x512xf32>
    %18 = math.tanh %17 : vector<8x512xf32>
    %c0_15 = arith.constant 0 : index
    %c0_16 = arith.constant 0 : index
    %19 = vector.load %arg5[%c0_15, %c0_16] : memref<8x512xf32, #tpu.memory_space<vmem>>, vector<8x512xf32>
    tpu.vector_store %arg5[%c0_15, %c0_16], %18 {strides = array<i32>} : memref<8x512xf32, #tpu.memory_space<vmem>>, vector<8x512xf32>,
    return
  }
}

</mosaic_0001>

<llo_original>
// kernel: _forward_init.3
$region0: #{_forward_init.3}
  #allocation0 [shape = 'u32[]', space=smem, size = 0x4, offset = 0x4, fixed_abs, tag = 'smem constant byte address 0x4 - core index']
  #allocation1 [shape = 'u32[144,128]{1,0:T(1,128)}', space=vmem, size = 0x12000, scoped, tag = 'internal scratch']
  %s0 = inlined_call_operand.vmem [shape: bf16[578,3072], index: 0, kind: input, shape index: {}]
  %s1 = inlined_call_operand.vmem [shape: bf16[3072,128], index: 1, kind: input, shape index: {}]
  %s2 = inlined_call_operand.vmem [shape: f32[1,128], index: 2, kind: input, shape index: {}]
  %s3 = inlined_call_operand.vmem [shape: bf16[578,128], index: 3, kind: output, shape index: {}]
  %s4 = sld [smem:[#allocation0]]
  $region89: #{_forward_init.3} parent=0
    _
  %s6 = ssub.s32 1, %s4
  %s7 = scalar_select 0, %s6, %s4
  $region1: #{_forward_init.3} parent=0
    #allocation2 [shape = 'u8[151552]{0}', space=vmem, size = 0x25000, scoped, tag = 'output window, operand 0']
    loop: start=0, step=1, limit=4
    $region2: #{_forward_init.3} parent=1 // loop_pre_header
      _
    $region3: #{_forward_init.3} parent=1 // loop_header
      %s9 = sphi 0, %s13
      %p10 = scmp.ge.s32.totalorder %s9, 4
      %s19 = sphi 0, %s21
      %s22 = sphi 0, %s19
      %s23 = sphi 0, %s22
      %s39 = sphi 0, %s23
      %s43 = sphi 0, %s43
      %s45 = sphi 0, %s43
      %s46 = sphi 0, %s45
      %s60 = sphi 0, %s46
      %s64 = sphi 0, %s64
      %s66 = sphi 0, %s64
      %s67 = sphi 0, %s66
      %s81 = sphi 0, %s67
      %s87 = sphi 0, %s89
      %s90 = sphi 0, %s87
      %s91 = sphi 0, %s90
      %s107 = sphi 0, %s91
    $region4: #{_forward_init.3} parent=1 // loop_header_branch
      %12 = sbr.rel (%p10) target = $region8
    $region5: #{_forward_init.3} parent=1 // loop_body
      %s14 = ssub.s32 %s9, 1
      %s15 = ssub.s32 %s9, 2
      %s16 = sadd.s32 %s9, 1
      %s17 = ssub.s32 %s9, %s16
      %p18 = scmp.eq.s32.totalorder %s17, 0
      %s20 = sadd.s32 %s19, 1
      %s21 = scalar_select %p18, %s19, %s20
      %p24 = pneg %p18
      %p25 = scmp.eq.s32.totalorder %s9, 1
      %p26 = por %p24, %p25
      %p27 = scmp.ne.s32.totalorder %s19, %s22
      %p28 = scmp.eq.s32.totalorder %s9, 0
      %p29 = por %p27, %p28
      %p30 = scmp.ne.s32.totalorder %s19, %s22
      %p31 = scmp.eq.s32.totalorder %s14, 1
      %p32 = por %p30, %p31
      %p33 = scmp.ne.s32.totalorder %s22, %s23
      %p34 = scmp.eq.s32.totalorder %s14, 0
      %p35 = por %p33, %p34
      %p36 = scmp.ne.s32.totalorder %s22, %s23
      %p37 = scmp.eq.s32.totalorder %s15, 1
      %p38 = por %p36, %p37
      %p40 = scmp.ne.s32.totalorder %s23, %s39
      %p41 = scmp.eq.s32.totalorder %s15, 0
      %p42 = por %p40, %p41
      %s44 = sadd.s32 %s43, 1
      %p47 = scmp.eq.s32.totalorder %s9, 1
      %p48 = scmp.ne.s32.totalorder %s43, %s45
      %p49 = scmp.eq.s32.totalorder %s9, 0
      %p50 = por %p48, %p49
      %p51 = scmp.ne.s32.totalorder %s43, %s45
      %p52 = scmp.eq.s32.totalorder %s14, 1
      %p53 = por %p51, %p52
      %p54 = scmp.ne.s32.totalorder %s45, %s46
      %p55 = scmp.eq.s32.totalorder %s14, 0
      %p56 = por %p54, %p55
      %p57 = scmp.ne.s32.totalorder %s45, %s46
      %p58 = scmp.eq.s32.totalorder %s15, 1
      %p59 = por %p57, %p58
      %p61 = scmp.ne.s32.totalorder %s46, %s60
      %p62 = scmp.eq.s32.totalorder %s15, 0
      %p63 = por %p61, %p62
      %s65 = sadd.s32 %s64, 1
      %p68 = scmp.eq.s32.totalorder %s9, 1
      %p69 = scmp.ne.s32.totalorder %s64, %s66
      %p70 = scmp.eq.s32.totalorder %s9, 0
      %p71 = por %p69, %p70
      %p72 = scmp.ne.s32.totalorder %s64, %s66
      %p73 = scmp.eq.s32.totalorder %s14, 1
      %p74 = por %p72, %p73
      %p75 = scmp.ne.s32.totalorder %s66, %s67
      %p76 = scmp.eq.s32.totalorder %s14, 0
      %p77 = por %p75, %p76
      %p78 = scmp.ne.s32.totalorder %s66, %s67
      %p79 = scmp.eq.s32.totalorder %s15, 1
      %p80 = por %p78, %p79
      %p82 = scmp.ne.s32.totalorder %s67, %s81
      %p83 = scmp.eq.s32.totalorder %s15, 0
      %p84 = por %p82, %p83
      %s85 = ssub.s32 %s9, %s16
      %p86 = scmp.eq.s32.totalorder %s85, 0
      %s88 = sadd.s32 %s87, 1
      %s89 = scalar_select %p86, %s87, %s88
      %p92 = pneg %p86
      %p93 = scmp.eq.s32.totalorder %s9, 1
      %p94 = por %p92, %p93
      %p95 = scmp.ne.s32.totalorder %s87, %s90
      %p96 = scmp.eq.s32.totalorder %s9, 0
      %p97 = por %p95, %p96
      %p98 = scmp.ne.s32.totalorder %s87, %s90
      %p99 = scmp.eq.s32.totalorder %s14, 1
      %p100 = por %p98, %p99
      %p101 = scmp.ne.s32.totalorder %s90, %s91
      %p102 = scmp.eq.s32.totalorder %s14, 0
      %p103 = por %p101, %p102
      %p104 = scmp.ne.s32.totalorder %s90, %s91
      %p105 = scmp.eq.s32.totalorder %s15, 1
      %p106 = por %p104, %p105
      %p108 = scmp.ne.s32.totalorder %s91, %s107
      %p109 = scmp.eq.s32.totalorder %s15, 0
      %p110 = por %p108, %p109
      %p111 = scmp.le.s32.totalorder 1, %s9
      %p112 = scmp.lt.s32.totalorder %s9, 3
      %p113 = pnand %p111, %p112
      %p114 = pneg %p113
      // Predicated region
      $region9: #{_forward_init.3} parent=5 // pred_check
        _
      $region10: #{_forward_init.3} parent=5 // pred_check_branch
        %116 = sbr.rel (%p113) target = $region12
      $region11: #{_forward_init.3} parent=5 // pred_region
        %s117 = ssub.s32 %s9, 1
        // Predicated region
        $region13: #{_forward_init.3} parent=11 // pred_check
          %p118 = pneg %p56
        $region14: #{_forward_init.3} parent=11 // pred_check_branch
          %120 = sbr.rel (%p118) target = $region16
        $region15: #{_forward_init.3} parent=11 // pred_region
          _
        $region16: #{_forward_init.3} parent=11 // pred_fallthru
          _
        // Predicated region
        $region17: #{_forward_init.3} parent=11 // pred_check
          %p121 = pneg %p77
        $region18: #{_forward_init.3} parent=11 // pred_check_branch
          %123 = sbr.rel (%p121) target = $region20
        $region19: #{_forward_init.3} parent=11 // pred_region
          _
        $region20: #{_forward_init.3} parent=11 // pred_fallthru
          _
      $region12: #{_forward_init.3} parent=5 // pred_fallthru
        _
      %p124 = scmp.lt.s32.totalorder %s9, 2
      // Predicated region
      $region21: #{_forward_init.3} parent=5 // pred_check
        %p125 = pneg %p124
      $region22: #{_forward_init.3} parent=5 // pred_check_branch
        %127 = sbr.rel (%p125) target = $region24
      $region23: #{_forward_init.3} parent=5 // pred_region
        // Predicated region
        $region25: #{_forward_init.3} parent=23 // pred_check
          %p128 = pneg %p29
        $region26: #{_forward_init.3} parent=23 // pred_check_branch
          %130 = sbr.rel (%p128) target = $region28
        $region27: #{_forward_init.3} parent=23 // pred_region
          %s131 = smul.u32 37, %s9
          %s132 = ssub.s32 73, %s131
          %p133 = scmp.lt.s32.totalorder %s132, 37
          %s134 = scalar_select %p133, %s132, 37
          %s135 = smul.u32 64, %s134
          %s136 = smul.u32 %s135, 24
          %p137 = scmp.lt.s32.totalorder %s131, 72
          %s138 = scalar_select %p137, %s131, 72
          %s139 = smul.addr %s138, 24
          %s140 = smul.addr %s139, 4
          %s141 = scalar_lea.vmem %s0, %s140
          %s142 = smul.u32 37, %s9
          %s143 = ssub.s32 73, %s142
          %p144 = scmp.lt.s32.totalorder %s143, 37
          %s145 = scalar_select %p144, %s143, 37
          %s146 = smul.u32 64, %s145
          %s147 = smul.u32 %s146, 24
        $region28: #{_forward_init.3} parent=23 // pred_fallthru
          _
      $region24: #{_forward_init.3} parent=5 // pred_fallthru
        _
      %p148 = scmp.le.s32.totalorder 1, %s9
      %p149 = scmp.lt.s32.totalorder %s9, 3
      %p150 = pnand %p148, %p149
      %p151 = pneg %p150
      // Predicated region
      $region29: #{_forward_init.3} parent=5 // pred_check
        _
      $region30: #{_forward_init.3} parent=5 // pred_check_branch
        %153 = sbr.rel (%p150) target = $region32
      $region31: #{_forward_init.3} parent=5 // pred_region
        %s154 = ssub.s32 %s9, 1
        %s155 = smul.u32 37, %s14
        %s156 = ssub.s32 73, %s155
        %p157 = scmp.lt.s32.totalorder %s156, 37
        %s158 = scalar_select %p157, %s156, 37
        %s159 = smul.u32 64, %s158
        %s160 = smul.u32 %s159, 24
        %p161 = scmp.lt.s32.totalorder %s155, 72
        %s162 = scalar_select %p161, %s155, 72
        %s163 = smul.addr %s162, 24
        %s164 = smul.addr %s163, 4
        %s165 = scalar_lea.vmem %s0, %s164
        %p166 = pneg %p35
        %p167 = pneg %p32
        %p168 = pneg %p56
        %p169 = pneg %p53
        %p170 = pneg %p77
        %p171 = pneg %p74
        %p172 = pneg %p103
        %p173 = pneg %p100
        %s174 = sand.u32 %s90, 1
        %s175 = sand.u32 %s90, 1
        %s176 = smul.addr %s175, 148
        %s177 = scalar_lea.vmem [#allocation2], %s176
        %s178 = smul.u32 37, %s14
        %s179 = ssub.s32 73, %s178
        %p180 = scmp.lt.s32.totalorder %s179, 37
        %s181 = scalar_select %p180, %s179, 37
        %s182 = smul.u32 64, %s181
        %s183 = smul.u32 %s182, 24
        %p184 = scmp.lt.s32.totalorder %s178, 72
        %s185 = scalar_select %p184, %s178, 72
        %s186 = smul.addr %s185, 24
        %s187 = smul.addr %s186, 4
        %s188 = scalar_lea.vmem %s0, %s187
        %s189 = smul.u32 37, %s14
        %s190 = ssub.s32 73, %s189
        %p191 = scmp.lt.s32.totalorder %s190, 37
        %s192 = scalar_select %p191, %s190, 37
        %s193 = smul.u32 64, %s192
        %s194 = smul.u32 %s193, 24
        %s195 = smul.u32 37, %s14
        %s196 = ssub.s32 73, %s195
        %p197 = scmp.lt.s32.totalorder %s196, 37
        %s198 = scalar_select %p197, %s196, 37
        %s199 = smul.u32 64, %s198
        %v201 = vld [vmem:[%s188] sm:$0xff]
        %v202 = vld [vmem:[%s188 + $0x8] sm:$0xff]
        %v203 = vld [vmem:[%s188 + $0x10] sm:$0xff]
        %v204 = vld [vmem:[%s188 + $0x18] sm:$0xff]
        %v205 = vld [vmem:[%s188 + $0x20] sm:$0xff]
        %v206 = vld [vmem:[%s188 + $0x28] sm:$0xff]
        %v207 = vld [vmem:[%s188 + $0x30] sm:$0xff]
        %v208 = vld [vmem:[%s188 + $0x38] sm:$0xff]
        %v209 = vld [vmem:[%s188 + $0x40] sm:$0xff]
        %v210 = vld [vmem:[%s188 + $0x48] sm:$0xff]
        %v211 = vld [vmem:[%s188 + $0x50] sm:$0xff]
        %v212 = vld [vmem:[%s188 + $0x58] sm:$0xff]
        %v213 = vld [vmem:[%s188 + $0x60] sm:$0xff]
        %v214 = vld [vmem:[%s188 + $0x68] sm:$0xff]
        %v215 = vld [vmem:[%s188 + $0x70] sm:$0xff]
        %v216 = vld [vmem:[%s188 + $0x78] sm:$0xff]
        %v217 = vld [vmem:[%s188 + $0x80] sm:$0xff]
        %v218 = vld [vmem:[%s188 + $0x88] sm:$0xff]
        %v219 = vld [vmem:[%s188 + $0x90] sm:$0xff]
        %v220 = vld [vmem:[%s188 + $0x98] sm:$0xff]
        %v221 = vld [vmem:[%s188 + $0xa0] sm:$0xff]
        %v222 = vld [vmem:[%s188 + $0xa8] sm:$0xff]
        %v223 = vld [vmem:[%s188 + $0xb0] sm:$0xff]
        %v224 = vld [vmem:[%s188 + $0xb8] sm:$0xff]
        %v225 = vld [vmem:[%s188 + $0xc0] sm:$0xff]
        %v226 = vld [vmem:[%s188 + $0xc8] sm:$0xff]
        %v227 = vld [vmem:[%s188 + $0xd0] sm:$0xff]
        %v228 = vld [vmem:[%s188 + $0xd8] sm:$0xff]
        %v229 = vld [vmem:[%s188 + $0xe0] sm:$0xff]
        %v230 = vld [vmem:[%s188 + $0xe8] sm:$0xff]
        %v231 = vld [vmem:[%s188 + $0xf0] sm:$0xff]
        %v232 = vld [vmem:[%s188 + $0xf8] sm:$0xff]
        %v233 = vld [vmem:[%s188 + $0x100] sm:$0xff]
        %v234 = vld [vmem:[%s188 + $0x108] sm:$0xff]
        %v235 = vld [vmem:[%s188 + $0x110] sm:$0xff]
        %v236 = vld [vmem:[%s188 + $0x118] sm:$0xff]
        %v237 = vld [vmem:[%s188 + $0x120] sm:$0xff]
        %v238 = vld [vmem:[%s188 + $0x128] sm:$0xff]
        %v239 = vld [vmem:[%s188 + $0x130] sm:$0xff]
        %v240 = vld [vmem:[%s188 + $0x138] sm:$0xff]
        %v241 = vld [vmem:[%s188 + $0x140] sm:$0xff]
        %v242 = vld [vmem:[%s188 + $0x148] sm:$0xff]
        %v243 = vld [vmem:[%s188 + $0x150] sm:$0xff]
        %v244 = vld [vmem:[%s188 + $0x158] sm:$0xff]
        %v245 = vld [vmem:[%s188 + $0x160] sm:$0xff]
        %v246 = vld [vmem:[%s188 + $0x168] sm:$0xff]
        %v247 = vld [vmem:[%s188 + $0x170] sm:$0xff]
        %v248 = vld [vmem:[%s188 + $0x178] sm:$0xff]
        %v249 = vld [vmem:[%s188 + $0x180] sm:$0xff]
        %v250 = vld [vmem:[%s188 + $0x188] sm:$0xff]
        %v251 = vld [vmem:[%s188 + $0x190] sm:$0xff]
        %v252 = vld [vmem:[%s188 + $0x198] sm:$0xff]
        %v253 = vld [vmem:[%s188 + $0x1a0] sm:$0xff]
        %v254 = vld [vmem:[%s188 + $0x1a8] sm:$0xff]
        %v255 = vld [vmem:[%s188 + $0x1b0] sm:$0xff]
        %v256 = vld [vmem:[%s188 + $0x1b8] sm:$0xff]
        %v257 = vld [vmem:[%s188 + $0x1c0] sm:$0xff]
        %v258 = vld [vmem:[%s188 + $0x1c8] sm:$0xff]
        %v259 = vld [vmem:[%s188 + $0x1d0] sm:$0xff]
        %v260 = vld [vmem:[%s188 + $0x1d8] sm:$0xff]
        %v261 = vld [vmem:[%s188 + $0x1e0] sm:$0xff]
        %v262 = vld [vmem:[%s188 + $0x1e8] sm:$0xff]
        %v263 = vld [vmem:[%s188 + $0x1f0] sm:$0xff]
        %v264 = vld [vmem:[%s188 + $0x1f8] sm:$0xff]
        %v265 = vld [vmem:[%s188 + $0x200] sm:$0xff]
        %v266 = vld [vmem:[%s188 + $0x208] sm:$0xff]
        %v267 = vld [vmem:[%s188 + $0x210] sm:$0xff]
        %v268 = vld [vmem:[%s188 + $0x218] sm:$0xff]
        %v269 = vld [vmem:[%s188 + $0x220] sm:$0xff]
        %v270 = vld [vmem:[%s188 + $0x228] sm:$0xff]
        %v271 = vld [vmem:[%s188 + $0x230] sm:$0xff]
        %v272 = vld [vmem:[%s188 + $0x238] sm:$0xff]
        %v273 = vld [vmem:[%s188 + $0x240] sm:$0xff]
        %v274 = vld [vmem:[%s188 + $0x248] sm:$0xff]
        %v275 = vld [vmem:[%s188 + $0x250] sm:$0xff]
        %v276 = vld [vmem:[%s188 + $0x258] sm:$0xff]
        %v277 = vld [vmem:[%s188 + $0x260] sm:$0xff]
        %v278 = vld [vmem:[%s188 + $0x268] sm:$0xff]
        %v279 = vld [vmem:[%s188 + $0x270] sm:$0xff]
        %v280 = vld [vmem:[%s188 + $0x278] sm:$0xff]
        %v281 = vld [vmem:[%s188 + $0x280] sm:$0xff]
        %v282 = vld [vmem:[%s188 + $0x288] sm:$0xff]
        %v283 = vld [vmem:[%s188 + $0x290] sm:$0xff]
        %v284 = vld [vmem:[%s188 + $0x298] sm:$0xff]
        %v285 = vld [vmem:[%s188 + $0x2a0] sm:$0xff]
        %v286 = vld [vmem:[%s188 + $0x2a8] sm:$0xff]
        %v287 = vld [vmem:[%s188 + $0x2b0] sm:$0xff]
        %v288 = vld [vmem:[%s188 + $0x2b8] sm:$0xff]
        %v289 = vld [vmem:[%s188 + $0x2c0] sm:$0xff]
        %v290 = vld [vmem:[%s188 + $0x2c8] sm:$0xff]
        %v291 = vld [vmem:[%s188 + $0x2d0] sm:$0xff]
        %v292 = vld [vmem:[%s188 + $0x2d8] sm:$0xff]
        %v293 = vld [vmem:[%s188 + $0x2e0] sm:$0xff]
        %v294 = vld [vmem:[%s188 + $0x2e8] sm:$0xff]
        %v295 = vld [vmem:[%s188 + $0x2f0] sm:$0xff]
        %v296 = vld [vmem:[%s188 + $0x2f8] sm:$0xff]
        %v297 = vld [vmem:[%s188 + $0x300] sm:$0xff]
        %v298 = vld [vmem:[%s188 + $0x308] sm:$0xff]
        %v299 = vld [vmem:[%s188 + $0x310] sm:$0xff]
        %v300 = vld [vmem:[%s188 + $0x318] sm:$0xff]
        %v301 = vld [vmem:[%s188 + $0x320] sm:$0xff]
        %v302 = vld [vmem:[%s188 + $0x328] sm:$0xff]
        %v303 = vld [vmem:[%s188 + $0x330] sm:$0xff]
        %v304 = vld [vmem:[%s188 + $0x338] sm:$0xff]
        %v305 = vld [vmem:[%s188 + $0x340] sm:$0xff]
        %v306 = vld [vmem:[%s188 + $0x348] sm:$0xff]
        %v307 = vld [vmem:[%s188 + $0x350] sm:$0xff]
        %v308 = vld [vmem:[%s188 + $0x358] sm:$0xff]
        %v309 = vld [vmem:[%s188 + $0x360] sm:$0xff]
        %v310 = vld [vmem:[%s188 + $0x368] sm:$0xff]
        %v311 = vld [vmem:[%s188 + $0x370] sm:$0xff]
        %v312 = vld [vmem:[%s188 + $0x378] sm:$0xff]
        %v313 = vld [vmem:[%s188 + $0x380] sm:$0xff]
        %v314 = vld [vmem:[%s188 + $0x388] sm:$0xff]
        %v315 = vld [vmem:[%s188 + $0x390] sm:$0xff]
        %v316 = vld [vmem:[%s188 + $0x398] sm:$0xff]
        %v317 = vld [vmem:[%s188 + $0x3a0] sm:$0xff]
        %v318 = vld [vmem:[%s188 + $0x3a8] sm:$0xff]
        %v319 = vld [vmem:[%s188 + $0x3b0] sm:$0xff]
        %v320 = vld [vmem:[%s188 + $0x3b8] sm:$0xff]
        %v321 = vld [vmem:[%s188 + $0x3c0] sm:$0xff]
        %v322 = vld [vmem:[%s188 + $0x3c8] sm:$0xff]
        %v323 = vld [vmem:[%s188 + $0x3d0] sm:$0xff]
        %v324 = vld [vmem:[%s188 + $0x3d8] sm:$0xff]
        %v325 = vld [vmem:[%s188 + $0x3e0] sm:$0xff]
        %v326 = vld [vmem:[%s188 + $0x3e8] sm:$0xff]
        %v327 = vld [vmem:[%s188 + $0x3f0] sm:$0xff]
        %v328 = vld [vmem:[%s188 + $0x3f8] sm:$0xff]
        %v329 = vld [vmem:[%s188 + $0x400] sm:$0xff]
        %v330 = vld [vmem:[%s188 + $0x408] sm:$0xff]
        %v331 = vld [vmem:[%s188 + $0x410] sm:$0xff]
        %v332 = vld [vmem:[%s188 + $0x418] sm:$0xff]
        %v333 = vld [vmem:[%s188 + $0x420] sm:$0xff]
        %v334 = vld [vmem:[%s188 + $0x428] sm:$0xff]
        %v335 = vld [vmem:[%s188 + $0x430] sm:$0xff]
        %v336 = vld [vmem:[%s188 + $0x438] sm:$0xff]
        %v337 = vld [vmem:[%s188 + $0x440] sm:$0xff]
        %v338 = vld [vmem:[%s188 + $0x448] sm:$0xff]
        %v339 = vld [vmem:[%s188 + $0x450] sm:$0xff]
        %v340 = vld [vmem:[%s188 + $0x458] sm:$0xff]
        %v341 = vld [vmem:[%s188 + $0x460] sm:$0xff]
        %v342 = vld [vmem:[%s188 + $0x468] sm:$0xff]
        %v343 = vld [vmem:[%s188 + $0x470] sm:$0xff]
        %v344 = vld [vmem:[%s188 + $0x478] sm:$0xff]
        %v345 = vld [vmem:[%s188 + $0x480] sm:$0xff]
        %v346 = vld [vmem:[%s188 + $0x488] sm:$0xff]
        %v347 = vld [vmem:[%s188 + $0x490] sm:$0xff]
        %v348 = vld [vmem:[%s188 + $0x498] sm:$0xff]
        %v349 = vld [vmem:[%s188 + $0x4a0] sm:$0xff]
        %v350 = vld [vmem:[%s188 + $0x4a8] sm:$0xff]
        %v351 = vld [vmem:[%s188 + $0x4b0] sm:$0xff]
        %v352 = vld [vmem:[%s188 + $0x4b8] sm:$0xff]
        %v353 = vld [vmem:[%s188 + $0x4c0] sm:$0xff]
        %v354 = vld [vmem:[%s188 + $0x4c8] sm:$0xff]
        %v355 = vld [vmem:[%s188 + $0x4d0] sm:$0xff]
        %v356 = vld [vmem:[%s188 + $0x4d8] sm:$0xff]
        %v357 = vld [vmem:[%s188 + $0x4e0] sm:$0xff]
        %v358 = vld [vmem:[%s188 + $0x4e8] sm:$0xff]
        %v359 = vld [vmem:[%s188 + $0x4f0] sm:$0xff]
        %v360 = vld [vmem:[%s188 + $0x4f8] sm:$0xff]
        %v361 = vld [vmem:[%s188 + $0x500] sm:$0xff]
        %v362 = vld [vmem:[%s188 + $0x508] sm:$0xff]
        %v363 = vld [vmem:[%s188 + $0x510] sm:$0xff]
        %v364 = vld [vmem:[%s188 + $0x518] sm:$0xff]
        %v365 = vld [vmem:[%s188 + $0x520] sm:$0xff]
        %v366 = vld [vmem:[%s188 + $0x528] sm:$0xff]
        %v367 = vld [vmem:[%s188 + $0x530] sm:$0xff]
        %v368 = vld [vmem:[%s188 + $0x538] sm:$0xff]
        %v369 = vld [vmem:[%s188 + $0x540] sm:$0xff]
        %v370 = vld [vmem:[%s188 + $0x548] sm:$0xff]
        %v371 = vld [vmem:[%s188 + $0x550] sm:$0xff]
        %v372 = vld [vmem:[%s188 + $0x558] sm:$0xff]
        %v373 = vld [vmem:[%s188 + $0x560] sm:$0xff]
        %v374 = vld [vmem:[%s188 + $0x568] sm:$0xff]
        %v375 = vld [vmem:[%s188 + $0x570] sm:$0xff]
        %v376 = vld [vmem:[%s188 + $0x578] sm:$0xff]
        %v377 = vld [vmem:[%s188 + $0x580] sm:$0xff]
        %v378 = vld [vmem:[%s188 + $0x588] sm:$0xff]
        %v379 = vld [vmem:[%s188 + $0x590] sm:$0xff]
        %v380 = vld [vmem:[%s188 + $0x598] sm:$0xff]
        %v381 = vld [vmem:[%s188 + $0x5a0] sm:$0xff]
        %v382 = vld [vmem:[%s188 + $0x5a8] sm:$0xff]
        %v383 = vld [vmem:[%s188 + $0x5b0] sm:$0xff]
        %v384 = vld [vmem:[%s188 + $0x5b8] sm:$0xff]
        %v385 = vld [vmem:[%s188 + $0x5c0] sm:$0xff]
        %v386 = vld [vmem:[%s188 + $0x5c8] sm:$0xff]
        %v387 = vld [vmem:[%s188 + $0x5d0] sm:$0xff]
        %v388 = vld [vmem:[%s188 + $0x5d8] sm:$0xff]
        %v389 = vld [vmem:[%s188 + $0x5e0] sm:$0xff]
        %v390 = vld [vmem:[%s188 + $0x5e8] sm:$0xff]
        %v391 = vld [vmem:[%s188 + $0x5f0] sm:$0xff]
        %v392 = vld [vmem:[%s188 + $0x5f8] sm:$0xff]
        %v393 = vld [vmem:[%s188 + $0x600] sm:$0xff]
        %v394 = vld [vmem:[%s188 + $0x608] sm:$0xff]
        %v395 = vld [vmem:[%s188 + $0x610] sm:$0xff]
        %v396 = vld [vmem:[%s188 + $0x618] sm:$0xff]
        %v397 = vld [vmem:[%s188 + $0x620] sm:$0xff]
        %v398 = vld [vmem:[%s188 + $0x628] sm:$0xff]
        %v399 = vld [vmem:[%s188 + $0x630] sm:$0xff]
        %v400 = vld [vmem:[%s188 + $0x638] sm:$0xff]
        %v401 = vld [vmem:[%s188 + $0x640] sm:$0xff]
        %v402 = vld [vmem:[%s188 + $0x648] sm:$0xff]
        %v403 = vld [vmem:[%s188 + $0x650] sm:$0xff]
        %v404 = vld [vmem:[%s188 + $0x658] sm:$0xff]
        %v405 = vld [vmem:[%s188 + $0x660] sm:$0xff]
        %v406 = vld [vmem:[%s188 + $0x668] sm:$0xff]
        %v407 = vld [vmem:[%s188 + $0x670] sm:$0xff]
        %v408 = vld [vmem:[%s188 + $0x678] sm:$0xff]
        %v409 = vld [vmem:[%s188 + $0x680] sm:$0xff]
        %v410 = vld [vmem:[%s188 + $0x688] sm:$0xff]
        %v411 = vld [vmem:[%s188 + $0x690] sm:$0xff]
        %v412 = vld [vmem:[%s188 + $0x698] sm:$0xff]
        %v413 = vld [vmem:[%s188 + $0x6a0] sm:$0xff]
        %v414 = vld [vmem:[%s188 + $0x6a8] sm:$0xff]
        %v415 = vld [vmem:[%s188 + $0x6b0] sm:$0xff]
        %v416 = vld [vmem:[%s188 + $0x6b8] sm:$0xff]
        %v417 = vld [vmem:[%s188 + $0x6c0] sm:$0xff]
        %v418 = vld [vmem:[%s188 + $0x6c8] sm:$0xff]
        %v419 = vld [vmem:[%s188 + $0x6d0] sm:$0xff]
        %v420 = vld [vmem:[%s188 + $0x6d8] sm:$0xff]
        %v421 = vld [vmem:[%s188 + $0x6e0] sm:$0xff]
        %v422 = vld [vmem:[%s188 + $0x6e8] sm:$0xff]
        %v423 = vld [vmem:[%s188 + $0x6f0] sm:$0xff]
        %v424 = vld [vmem:[%s188 + $0x6f8] sm:$0xff]
        %v425 = vld [vmem:[%s188 + $0x700] sm:$0xff]
        %v426 = vld [vmem:[%s188 + $0x708] sm:$0xff]
        %v427 = vld [vmem:[%s188 + $0x710] sm:$0xff]
        %v428 = vld [vmem:[%s188 + $0x718] sm:$0xff]
        %v429 = vld [vmem:[%s188 + $0x720] sm:$0xff]
        %v430 = vld [vmem:[%s188 + $0x728] sm:$0xff]
        %v431 = vld [vmem:[%s188 + $0x730] sm:$0xff]
        %v432 = vld [vmem:[%s188 + $0x738] sm:$0xff]
        %v433 = vld [vmem:[%s188 + $0x740] sm:$0xff]
        %v434 = vld [vmem:[%s188 + $0x748] sm:$0xff]
        %v435 = vld [vmem:[%s188 + $0x750] sm:$0xff]
        %v436 = vld [vmem:[%s188 + $0x758] sm:$0xff]
        %v437 = vld [vmem:[%s188 + $0x760] sm:$0xff]
        %v438 = vld [vmem:[%s188 + $0x768] sm:$0xff]
        %v439 = vld [vmem:[%s188 + $0x770] sm:$0xff]
        %v440 = vld [vmem:[%s188 + $0x778] sm:$0xff]
        %v441 = vld [vmem:[%s188 + $0x780] sm:$0xff]
        %v442 = vld [vmem:[%s188 + $0x788] sm:$0xff]
        %v443 = vld [vmem:[%s188 + $0x790] sm:$0xff]
        %v444 = vld [vmem:[%s188 + $0x798] sm:$0xff]
        %v445 = vld [vmem:[%s188 + $0x7a0] sm:$0xff]
        %v446 = vld [vmem:[%s188 + $0x7a8] sm:$0xff]
        %v447 = vld [vmem:[%s188 + $0x7b0] sm:$0xff]
        %v448 = vld [vmem:[%s188 + $0x7b8] sm:$0xff]
        %v449 = vld [vmem:[%s188 + $0x7c0] sm:$0xff]
        %v450 = vld [vmem:[%s188 + $0x7c8] sm:$0xff]
        %v451 = vld [vmem:[%s188 + $0x7d0] sm:$0xff]
        %v452 = vld [vmem:[%s188 + $0x7d8] sm:$0xff]
        %v453 = vld [vmem:[%s188 + $0x7e0] sm:$0xff]
        %v454 = vld [vmem:[%s188 + $0x7e8] sm:$0xff]
        %v455 = vld [vmem:[%s188 + $0x7f0] sm:$0xff]
        %v456 = vld [vmem:[%s188 + $0x7f8] sm:$0xff]
        %v457 = vld [vmem:[%s188 + $0x800] sm:$0xff]
        %v458 = vld [vmem:[%s188 + $0x808] sm:$0xff]
        %v459 = vld [vmem:[%s188 + $0x810] sm:$0xff]
        %v460 = vld [vmem:[%s188 + $0x818] sm:$0xff]
        %v461 = vld [vmem:[%s188 + $0x820] sm:$0xff]
        %v462 = vld [vmem:[%s188 + $0x828] sm:$0xff]
        %v463 = vld [vmem:[%s188 + $0x830] sm:$0xff]
        %v464 = vld [vmem:[%s188 + $0x838] sm:$0xff]
        %v465 = vld [vmem:[%s188 + $0x840] sm:$0xff]
        %v466 = vld [vmem:[%s188 + $0x848] sm:$0xff]
        %v467 = vld [vmem:[%s188 + $0x850] sm:$0xff]
        %v468 = vld [vmem:[%s188 + $0x858] sm:$0xff]
        %v469 = vld [vmem:[%s188 + $0x860] sm:$0xff]
        %v470 = vld [vmem:[%s188 + $0x868] sm:$0xff]
        %v471 = vld [vmem:[%s188 + $0x870] sm:$0xff]
        %v472 = vld [vmem:[%s188 + $0x878] sm:$0xff]
        %v473 = vld [vmem:[%s188 + $0x880] sm:$0xff]
        %v474 = vld [vmem:[%s188 + $0x888] sm:$0xff]
        %v475 = vld [vmem:[%s188 + $0x890] sm:$0xff]
        %v476 = vld [vmem:[%s188 + $0x898] sm:$0xff]
        %v477 = vld [vmem:[%s188 + $0x8a0] sm:$0xff]
        %v478 = vld [vmem:[%s188 + $0x8a8] sm:$0xff]
        %v479 = vld [vmem:[%s188 + $0x8b0] sm:$0xff]
        %v480 = vld [vmem:[%s188 + $0x8b8] sm:$0xff]
        %v481 = vld [vmem:[%s188 + $0x8c0] sm:$0xff]
        %v482 = vld [vmem:[%s188 + $0x8c8] sm:$0xff]
        %v483 = vld [vmem:[%s188 + $0x8d0] sm:$0xff]
        %v484 = vld [vmem:[%s188 + $0x8d8] sm:$0xff]
        %v485 = vld [vmem:[%s188 + $0x8e0] sm:$0xff]
        %v486 = vld [vmem:[%s188 + $0x8e8] sm:$0xff]
        %v487 = vld [vmem:[%s188 + $0x8f0] sm:$0xff]
        %v488 = vld [vmem:[%s188 + $0x8f8] sm:$0xff]
        %v489 = vld [vmem:[%s188 + $0x900] sm:$0xff]
        %v490 = vld [vmem:[%s188 + $0x908] sm:$0xff]
        %v491 = vld [vmem:[%s188 + $0x910] sm:$0xff]
        %v492 = vld [vmem:[%s188 + $0x918] sm:$0xff]
        %v493 = vld [vmem:[%s188 + $0x920] sm:$0xff]
        %v494 = vld [vmem:[%s188 + $0x928] sm:$0xff]
        %v495 = vld [vmem:[%s188 + $0x930] sm:$0xff]
        %v496 = vld [vmem:[%s188 + $0x938] sm:$0xff]
        %v497 = vld [vmem:[%s188 + $0x940] sm:$0xff]
        %v498 = vld [vmem:[%s188 + $0x948] sm:$0xff]
        %v499 = vld [vmem:[%s188 + $0x950] sm:$0xff]
        %v500 = vld [vmem:[%s188 + $0x958] sm:$0xff]
        %v501 = vld [vmem:[%s188 + $0x960] sm:$0xff]
        %v502 = vld [vmem:[%s188 + $0x968] sm:$0xff]
        %v503 = vld [vmem:[%s188 + $0x970] sm:$0xff]
        %v504 = vld [vmem:[%s188 + $0x978] sm:$0xff]
        %v505 = vld [vmem:[%s188 + $0x980] sm:$0xff]
        %v506 = vld [vmem:[%s188 + $0x988] sm:$0xff]
        %v507 = vld [vmem:[%s188 + $0x990] sm:$0xff]
        %v508 = vld [vmem:[%s188 + $0x998] sm:$0xff]
        %v509 = vld [vmem:[%s188 + $0x9a0] sm:$0xff]
        %v510 = vld [vmem:[%s188 + $0x9a8] sm:$0xff]
        %v511 = vld [vmem:[%s188 + $0x9b0] sm:$0xff]
        %v512 = vld [vmem:[%s188 + $0x9b8] sm:$0xff]
        %v513 = vld [vmem:[%s188 + $0x9c0] sm:$0xff]
        %v514 = vld [vmem:[%s188 + $0x9c8] sm:$0xff]
        %v515 = vld [vmem:[%s188 + $0x9d0] sm:$0xff]
        %v516 = vld [vmem:[%s188 + $0x9d8] sm:$0xff]
        %v517 = vld [vmem:[%s188 + $0x9e0] sm:$0xff]
        %v518 = vld [vmem:[%s188 + $0x9e8] sm:$0xff]
        %v519 = vld [vmem:[%s188 + $0x9f0] sm:$0xff]
        %v520 = vld [vmem:[%s188 + $0x9f8] sm:$0xff]
        %v521 = vld [vmem:[%s188 + $0xa00] sm:$0xff]
        %v522 = vld [vmem:[%s188 + $0xa08] sm:$0xff]
        %v523 = vld [vmem:[%s188 + $0xa10] sm:$0xff]
        %v524 = vld [vmem:[%s188 + $0xa18] sm:$0xff]
        %v525 = vld [vmem:[%s188 + $0xa20] sm:$0xff]
        %v526 = vld [vmem:[%s188 + $0xa28] sm:$0xff]
        %v527 = vld [vmem:[%s188 + $0xa30] sm:$0xff]
        %v528 = vld [vmem:[%s188 + $0xa38] sm:$0xff]
        %v529 = vld [vmem:[%s188 + $0xa40] sm:$0xff]
        %v530 = vld [vmem:[%s188 + $0xa48] sm:$0xff]
        %v531 = vld [vmem:[%s188 + $0xa50] sm:$0xff]
        %v532 = vld [vmem:[%s188 + $0xa58] sm:$0xff]
        %v533 = vld [vmem:[%s188 + $0xa60] sm:$0xff]
        %v534 = vld [vmem:[%s188 + $0xa68] sm:$0xff]
        %v535 = vld [vmem:[%s188 + $0xa70] sm:$0xff]
        %v536 = vld [vmem:[%s188 + $0xa78] sm:$0xff]
        %v537 = vld [vmem:[%s188 + $0xa80] sm:$0xff]
        %v538 = vld [vmem:[%s188 + $0xa88] sm:$0xff]
        %v539 = vld [vmem:[%s188 + $0xa90] sm:$0xff]
        %v540 = vld [vmem:[%s188 + $0xa98] sm:$0xff]
        %v541 = vld [vmem:[%s188 + $0xaa0] sm:$0xff]
        %v542 = vld [vmem:[%s188 + $0xaa8] sm:$0xff]
        %v543 = vld [vmem:[%s188 + $0xab0] sm:$0xff]
        %v544 = vld [vmem:[%s188 + $0xab8] sm:$0xff]
        %v545 = vld [vmem:[%s188 + $0xac0] sm:$0xff]
        %v546 = vld [vmem:[%s188 + $0xac8] sm:$0xff]
        %v547 = vld [vmem:[%s188 + $0xad0] sm:$0xff]
        %v548 = vld [vmem:[%s188 + $0xad8] sm:$0xff]
        %v549 = vld [vmem:[%s188 + $0xae0] sm:$0xff]
        %v550 = vld [vmem:[%s188 + $0xae8] sm:$0xff]
        %v551 = vld [vmem:[%s188 + $0xaf0] sm:$0xff]
        %v552 = vld [vmem:[%s188 + $0xaf8] sm:$0xff]
        %v553 = vld [vmem:[%s188 + $0xb00] sm:$0xff]
        %v554 = vld [vmem:[%s188 + $0xb08] sm:$0xff]
        %v555 = vld [vmem:[%s188 + $0xb10] sm:$0xff]
        %v556 = vld [vmem:[%s188 + $0xb18] sm:$0xff]
        %v557 = vld [vmem:[%s188 + $0xb20] sm:$0xff]
        %v558 = vld [vmem:[%s188 + $0xb28] sm:$0xff]
        %v559 = vld [vmem:[%s188 + $0xb30] sm:$0xff]
        %v560 = vld [vmem:[%s188 + $0xb38] sm:$0xff]
        %v561 = vld [vmem:[%s188 + $0xb40] sm:$0xff]
        %v562 = vld [vmem:[%s188 + $0xb48] sm:$0xff]
        %v563 = vld [vmem:[%s188 + $0xb50] sm:$0xff]
        %v564 = vld [vmem:[%s188 + $0xb58] sm:$0xff]
        %v565 = vld [vmem:[%s188 + $0xb60] sm:$0xff]
        %v566 = vld [vmem:[%s188 + $0xb68] sm:$0xff]
        %v567 = vld [vmem:[%s188 + $0xb70] sm:$0xff]
        %v568 = vld [vmem:[%s188 + $0xb78] sm:$0xff]
        %v569 = vld [vmem:[%s188 + $0xb80] sm:$0xff]
        %v570 = vld [vmem:[%s188 + $0xb88] sm:$0xff]
        %v571 = vld [vmem:[%s188 + $0xb90] sm:$0xff]
        %v572 = vld [vmem:[%s188 + $0xb98] sm:$0xff]
        %v573 = vld [vmem:[%s188 + $0xba0] sm:$0xff]
        %v574 = vld [vmem:[%s188 + $0xba8] sm:$0xff]
        %v575 = vld [vmem:[%s188 + $0xbb0] sm:$0xff]
        %v576 = vld [vmem:[%s188 + $0xbb8] sm:$0xff]
        %v577 = vld [vmem:[%s188 + $0xbc0] sm:$0xff]
        %v578 = vld [vmem:[%s188 + $0xbc8] sm:$0xff]
        %v579 = vld [vmem:[%s188 + $0xbd0] sm:$0xff]
        %v580 = vld [vmem:[%s188 + $0xbd8] sm:$0xff]
        %v581 = vld [vmem:[%s188 + $0xbe0] sm:$0xff]
        %v582 = vld [vmem:[%s188 + $0xbe8] sm:$0xff]
        %v583 = vld [vmem:[%s188 + $0xbf0] sm:$0xff]
        %v584 = vld [vmem:[%s188 + $0xbf8] sm:$0xff]
        %v585 = vld [vmem:[%s188 + $0xc00] sm:$0xff]
        %v586 = vld [vmem:[%s188 + $0xc08] sm:$0xff]
        %v587 = vld [vmem:[%s188 + $0xc10] sm:$0xff]
        %v588 = vld [vmem:[%s188 + $0xc18] sm:$0xff]
        %v589 = vld [vmem:[%s188 + $0xc20] sm:$0xff]
        %v590 = vld [vmem:[%s188 + $0xc28] sm:$0xff]
        %v591 = vld [vmem:[%s188 + $0xc30] sm:$0xff]
        %v592 = vld [vmem:[%s188 + $0xc38] sm:$0xff]
        %v593 = vld [vmem:[%s188 + $0xc40] sm:$0xff]
        %v594 = vld [vmem:[%s188 + $0xc48] sm:$0xff]
        %v595 = vld [vmem:[%s188 + $0xc50] sm:$0xff]
        %v596 = vld [vmem:[%s188 + $0xc58] sm:$0xff]
        %v597 = vld [vmem:[%s188 + $0xc60] sm:$0xff]
        %v598 = vld [vmem:[%s188 + $0xc68] sm:$0xff]
        %v599 = vld [vmem:[%s188 + $0xc70] sm:$0xff]
        %v600 = vld [vmem:[%s188 + $0xc78] sm:$0xff]
        %v601 = vld [vmem:[%s188 + $0xc80] sm:$0xff]
        %v602 = vld [vmem:[%s188 + $0xc88] sm:$0xff]
        %v603 = vld [vmem:[%s188 + $0xc90] sm:$0xff]
        %v604 = vld [vmem:[%s188 + $0xc98] sm:$0xff]
        %v605 = vld [vmem:[%s188 + $0xca0] sm:$0xff]
        %v606 = vld [vmem:[%s188 + $0xca8] sm:$0xff]
        %v607 = vld [vmem:[%s188 + $0xcb0] sm:$0xff]
        %v608 = vld [vmem:[%s188 + $0xcb8] sm:$0xff]
        %v609 = vld [vmem:[%s188 + $0xcc0] sm:$0xff]
        %v610 = vld [vmem:[%s188 + $0xcc8] sm:$0xff]
        %v611 = vld [vmem:[%s188 + $0xcd0] sm:$0xff]
        %v612 = vld [vmem:[%s188 + $0xcd8] sm:$0xff]
        %v613 = vld [vmem:[%s188 + $0xce0] sm:$0xff]
        %v614 = vld [vmem:[%s188 + $0xce8] sm:$0xff]
        %v615 = vld [vmem:[%s188 + $0xcf0] sm:$0xff]
        %v616 = vld [vmem:[%s188 + $0xcf8] sm:$0xff]
        %v617 = vld [vmem:[%s188 + $0xd00] sm:$0xff]
        %v618 = vld [vmem:[%s188 + $0xd08] sm:$0xff]
        %v619 = vld [vmem:[%s188 + $0xd10] sm:$0xff]
        %v620 = vld [vmem:[%s188 + $0xd18] sm:$0xff]
        %v621 = vld [vmem:[%s188 + $0xd20] sm:$0xff]
        %v622 = vld [vmem:[%s188 + $0xd28] sm:$0xff]
        %v623 = vld [vmem:[%s188 + $0xd30] sm:$0xff]
        %v624 = vld [vmem:[%s188 + $0xd38] sm:$0xff]
        %v625 = vld [vmem:[%s188 + $0xd40] sm:$0xff]
        %v626 = vld [vmem:[%s188 + $0xd48] sm:$0xff]
        %v627 = vld [vmem:[%s188 + $0xd50] sm:$0xff]
        %v628 = vld [vmem:[%s188 + $0xd58] sm:$0xff]
        %v629 = vld [vmem:[%s188 + $0xd60] sm:$0xff]
        %v630 = vld [vmem:[%s188 + $0xd68] sm:$0xff]
        %v631 = vld [vmem:[%s188 + $0xd70] sm:$0xff]
        %v632 = vld [vmem:[%s188 + $0xd78] sm:$0xff]
        %v633 = vld [vmem:[%s188 + $0xd80] sm:$0xff]
        %v634 = vld [vmem:[%s188 + $0xd88] sm:$0xff]
        %v635 = vld [vmem:[%s188 + $0xd90] sm:$0xff]
        %v636 = vld [vmem:[%s188 + $0xd98] sm:$0xff]
        %v637 = vld [vmem:[%s188 + $0xda0] sm:$0xff]
        %v638 = vld [vmem:[%s188 + $0xda8] sm:$0xff]
        %v639 = vld [vmem:[%s188 + $0xdb0] sm:$0xff]
        %v640 = vld [vmem:[%s188 + $0xdb8] sm:$0xff]
        %v641 = vld [vmem:[%s188 + $0xdc0] sm:$0xff]
        %v642 = vld [vmem:[%s188 + $0xdc8] sm:$0xff]
        %v643 = vld [vmem:[%s188 + $0xdd0] sm:$0xff]
        %v644 = vld [vmem:[%s188 + $0xdd8] sm:$0xff]
        %v645 = vld [vmem:[%s1] sm:$0xf]
        %v646 = vld [vmem:[%s1 + $0x4] sm:$0xf]
        %v647 = vld [vmem:[%s1 + $0x8] sm:$0xf]
        %v648 = vld [vmem:[%s1 + $0xc] sm:$0xf]
        %v649 = vld [vmem:[%s1 + $0x10] sm:$0xf]
        %v650 = vld [vmem:[%s1 + $0x14] sm:$0xf]
        %v651 = vld [vmem:[%s1 + $0x18] sm:$0xf]
        %v652 = vld [vmem:[%s1 + $0x1c] sm:$0xf]
        %v653 = vld [vmem:[%s1 + $0x20] sm:$0xf]
        %v654 = vld [vmem:[%s1 + $0x24] sm:$0xf]
        %v655 = vld [vmem:[%s1 + $0x28] sm:$0xf]
        %v656 = vld [vmem:[%s1 + $0x2c] sm:$0xf]
        %v657 = vld [vmem:[%s1 + $0x30] sm:$0xf]
        %v658 = vld [vmem:[%s1 + $0x34] sm:$0xf]
        %v659 = vld [vmem:[%s1 + $0x38] sm:$0xf]
        %v660 = vld [vmem:[%s1 + $0x3c] sm:$0xf]
        %v661 = vld [vmem:[%s1 + $0x40] sm:$0xf]
        %v662 = vld [vmem:[%s1 + $0x44] sm:$0xf]
        %v663 = vld [vmem:[%s1 + $0x48] sm:$0xf]
        %v664 = vld [vmem:[%s1 + $0x4c] sm:$0xf]
        %v665 = vld [vmem:[%s1 + $0x50] sm:$0xf]
        %v666 = vld [vmem:[%s1 + $0x54] sm:$0xf]
        %v667 = vld [vmem:[%s1 + $0x58] sm:$0xf]
        %v668 = vld [vmem:[%s1 + $0x5c] sm:$0xf]
        %v669 = vld [vmem:[%s1 + $0x60] sm:$0xf]
        %v670 = vld [vmem:[%s1 + $0x64] sm:$0xf]
        %v671 = vld [vmem:[%s1 + $0x68] sm:$0xf]
        %v672 = vld [vmem:[%s1 + $0x6c] sm:$0xf]
        %v673 = vld [vmem:[%s1 + $0x70] sm:$0xf]
        %v674 = vld [vmem:[%s1 + $0x74] sm:$0xf]
        %v675 = vld [vmem:[%s1 + $0x78] sm:$0xf]
        %v676 = vld [vmem:[%s1 + $0x7c] sm:$0xf]
        %v677 = vld [vmem:[%s1 + $0x80] sm:$0xf]
        %v678 = vld [vmem:[%s1 + $0x84] sm:$0xf]
        %v679 = vld [vmem:[%s1 + $0x88] sm:$0xf]
        %v680 = vld [vmem:[%s1 + $0x8c] sm:$0xf]
        %v681 = vld [vmem:[%s1 + $0x90] sm:$0xf]
        %v682 = vld [vmem:[%s1 + $0x94] sm:$0xf]
        %v683 = vld [vmem:[%s1 + $0x98] sm:$0xf]
        %v684 = vld [vmem:[%s1 + $0x9c] sm:$0xf]
        %v685 = vld [vmem:[%s1 + $0xa0] sm:$0xf]
        %v686 = vld [vmem:[%s1 + $0xa4] sm:$0xf]
        %v687 = vld [vmem:[%s1 + $0xa8] sm:$0xf]
        %v688 = vld [vmem:[%s1 + $0xac] sm:$0xf]
        %v689 = vld [vmem:[%s1 + $0xb0] sm:$0xf]
        %v690 = vld [vmem:[%s1 + $0xb4] sm:$0xf]
        %v691 = vld [vmem:[%s1 + $0xb8] sm:$0xf]
        %v692 = vld [vmem:[%s1 + $0xbc] sm:$0xf]
        %v693 = vld [vmem:[%s1 + $0xc0] sm:$0xf]
        %v694 = vld [vmem:[%s1 + $0xc4] sm:$0xf]
        %v695 = vld [vmem:[%s1 + $0xc8] sm:$0xf]
        %v696 = vld [vmem:[%s1 + $0xcc] sm:$0xf]
        %v697 = vld [vmem:[%s1 + $0xd0] sm:$0xf]
        %v698 = vld [vmem:[%s1 + $0xd4] sm:$0xf]
        %v699 = vld [vmem:[%s1 + $0xd8] sm:$0xf]
        %v700 = vld [vmem:[%s1 + $0xdc] sm:$0xf]
        %v701 = vld [vmem:[%s1 + $0xe0] sm:$0xf]
        %v702 = vld [vmem:[%s1 + $0xe4] sm:$0xf]
        %v703 = vld [vmem:[%s1 + $0xe8] sm:$0xf]
        %v704 = vld [vmem:[%s1 + $0xec] sm:$0xf]
        %v705 = vld [vmem:[%s1 + $0xf0] sm:$0xf]
        %v706 = vld [vmem:[%s1 + $0xf4] sm:$0xf]
        %v707 = vld [vmem:[%s1 + $0xf8] sm:$0xf]
        %v708 = vld [vmem:[%s1 + $0xfc] sm:$0xf]
        %v709 = vld [vmem:[%s1 + $0x100] sm:$0xf]
        %v710 = vld [vmem:[%s1 + $0x104] sm:$0xf]
        %v711 = vld [vmem:[%s1 + $0x108] sm:$0xf]
        %v712 = vld [vmem:[%s1 + $0x10c] sm:$0xf]
        %v713 = vld [vmem:[%s1 + $0x110] sm:$0xf]
        %v714 = vld [vmem:[%s1 + $0x114] sm:$0xf]
        %v715 = vld [vmem:[%s1 + $0x118] sm:$0xf]
        %v716 = vld [vmem:[%s1 + $0x11c] sm:$0xf]
        %v717 = vld [vmem:[%s1 + $0x120] sm:$0xf]
        %v718 = vld [vmem:[%s1 + $0x124] sm:$0xf]
        %v719 = vld [vmem:[%s1 + $0x128] sm:$0xf]
        %v720 = vld [vmem:[%s1 + $0x12c] sm:$0xf]
        %v721 = vld [vmem:[%s1 + $0x130] sm:$0xf]
        %v722 = vld [vmem:[%s1 + $0x134] sm:$0xf]
        %v723 = vld [vmem:[%s1 + $0x138] sm:$0xf]
        %v724 = vld [vmem:[%s1 + $0x13c] sm:$0xf]
        %v725 = vld [vmem:[%s1 + $0x140] sm:$0xf]
        %v726 = vld [vmem:[%s1 + $0x144] sm:$0xf]
        %v727 = vld [vmem:[%s1 + $0x148] sm:$0xf]
        %v728 = vld [vmem:[%s1 + $0x14c] sm:$0xf]
        %v729 = vld [vmem:[%s1 + $0x150] sm:$0xf]
        %v730 = vld [vmem:[%s1 + $0x154] sm:$0xf]
        %v731 = vld [vmem:[%s1 + $0x158] sm:$0xf]
        %v732 = vld [vmem:[%s1 + $0x15c] sm:$0xf]
        %v733 = vld [vmem:[%s1 + $0x160] sm:$0xf]
        %v734 = vld [vmem:[%s1 + $0x164] sm:$0xf]
        %v735 = vld [vmem:[%s1 + $0x168] sm:$0xf]
        %v736 = vld [vmem:[%s1 + $0x16c] sm:$0xf]
        %v737 = vld [vmem:[%s1 + $0x170] sm:$0xf]
        %v738 = vld [vmem:[%s1 + $0x174] sm:$0xf]
        %v739 = vld [vmem:[%s1 + $0x178] sm:$0xf]
        %v740 = vld [vmem:[%s1 + $0x17c] sm:$0xf]
        %v741 = vld [vmem:[%s1 + $0x180] sm:$0xf]
        %v742 = vld [vmem:[%s1 + $0x184] sm:$0xf]
        %v743 = vld [vmem:[%s1 + $0x188] sm:$0xf]
        %v744 = vld [vmem:[%s1 + $0x18c] sm:$0xf]
        %v745 = vld [vmem:[%s1 + $0x190] sm:$0xf]
        %v746 = vld [vmem:[%s1 + $0x194] sm:$0xf]
        %v747 = vld [vmem:[%s1 + $0x198] sm:$0xf]
        %v748 = vld [vmem:[%s1 + $0x19c] sm:$0xf]
        %v749 = vld [vmem:[%s1 + $0x1a0] sm:$0xf]
        %v750 = vld [vmem:[%s1 + $0x1a4] sm:$0xf]
        %v751 = vld [vmem:[%s1 + $0x1a8] sm:$0xf]
        %v752 = vld [vmem:[%s1 + $0x1ac] sm:$0xf]
        %v753 = vld [vmem:[%s1 + $0x1b0] sm:$0xf]
        %v754 = vld [vmem:[%s1 + $0x1b4] sm:$0xf]
        %v755 = vld [vmem:[%s1 + $0x1b8] sm:$0xf]
        %v756 = vld [vmem:[%s1 + $0x1bc] sm:$0xf]
        %v757 = vld [vmem:[%s1 + $0x1c0] sm:$0xf]
        %v758 = vld [vmem:[%s1 + $0x1c4] sm:$0xf]
        %v759 = vld [vmem:[%s1 + $0x1c8] sm:$0xf]
        %v760 = vld [vmem:[%s1 + $0x1cc] sm:$0xf]
        %v761 = vld [vmem:[%s1 + $0x1d0] sm:$0xf]
        %v762 = vld [vmem:[%s1 + $0x1d4] sm:$0xf]
        %v763 = vld [vmem:[%s1 + $0x1d8] sm:$0xf]
        %v764 = vld [vmem:[%s1 + $0x1dc] sm:$0xf]
        %v765 = vld [vmem:[%s1 + $0x1e0] sm:$0xf]
        %v766 = vld [vmem:[%s1 + $0x1e4] sm:$0xf]
        %v767 = vld [vmem:[%s1 + $0x1e8] sm:$0xf]
        %v768 = vld [vmem:[%s1 + $0x1ec] sm:$0xf]
        %v769 = vld [vmem:[%s1 + $0x1f0] sm:$0xf]
        %v770 = vld [vmem:[%s1 + $0x1f4] sm:$0xf]
        %v771 = vld [vmem:[%s1 + $0x1f8] sm:$0xf]
        %v772 = vld [vmem:[%s1 + $0x1fc] sm:$0xf]
        %v773 = vld [vmem:[%s1 + $0x200] sm:$0xf]
        %v774 = vld [vmem:[%s1 + $0x204] sm:$0xf]
        %v775 = vld [vmem:[%s1 + $0x208] sm:$0xf]
        %v776 = vld [vmem:[%s1 + $0x20c] sm:$0xf]
        %v777 = vld [vmem:[%s1 + $0x210] sm:$0xf]
        %v778 = vld [vmem:[%s1 + $0x214] sm:$0xf]
        %v779 = vld [vmem:[%s1 + $0x218] sm:$0xf]
        %v780 = vld [vmem:[%s1 + $0x21c] sm:$0xf]
        %v781 = vld [vmem:[%s1 + $0x220] sm:$0xf]
        %v782 = vld [vmem:[%s1 + $0x224] sm:$0xf]
        %v783 = vld [vmem:[%s1 + $0x228] sm:$0xf]
        %v784 = vld [vmem:[%s1 + $0x22c] sm:$0xf]
        %v785 = vld [vmem:[%s1 + $0x230] sm:$0xf]
        %v786 = vld [vmem:[%s1 + $0x234] sm:$0xf]
        %v787 = vld [vmem:[%s1 + $0x238] sm:$0xf]
        %v788 = vld [vmem:[%s1 + $0x23c] sm:$0xf]
        %v789 = vld [vmem:[%s1 + $0x240] sm:$0xf]
        %v790 = vld [vmem:[%s1 + $0x244] sm:$0xf]
        %v791 = vld [vmem:[%s1 + $0x248] sm:$0xf]
        %v792 = vld [vmem:[%s1 + $0x24c] sm:$0xf]
        %v793 = vld [vmem:[%s1 + $0x250] sm:$0xf]
        %v794 = vld [vmem:[%s1 + $0x254] sm:$0xf]
        %v795 = vld [vmem:[%s1 + $0x258] sm:$0xf]
        %v796 = vld [vmem:[%s1 + $0x25c] sm:$0xf]
        %v797 = vld [vmem:[%s1 + $0x260] sm:$0xf]
        %v798 = vld [vmem:[%s1 + $0x264] sm:$0xf]
        %v799 = vld [vmem:[%s1 + $0x268] sm:$0xf]
        %v800 = vld [vmem:[%s1 + $0x26c] sm:$0xf]
        %v801 = vld [vmem:[%s1 + $0x270] sm:$0xf]
        %v802 = vld [vmem:[%s1 + $0x274] sm:$0xf]
        %v803 = vld [vmem:[%s1 + $0x278] sm:$0xf]
        %v804 = vld [vmem:[%s1 + $0x27c] sm:$0xf]
        %v805 = vld [vmem:[%s1 + $0x280] sm:$0xf]
        %v806 = vld [vmem:[%s1 + $0x284] sm:$0xf]
        %v807 = vld [vmem:[%s1 + $0x288] sm:$0xf]
        %v808 = vld [vmem:[%s1 + $0x28c] sm:$0xf]
        %v809 = vld [vmem:[%s1 + $0x290] sm:$0xf]
        %v810 = vld [vmem:[%s1 + $0x294] sm:$0xf]
        %v811 = vld [vmem:[%s1 + $0x298] sm:$0xf]
        %v812 = vld [vmem:[%s1 + $0x29c] sm:$0xf]
        %v813 = vld [vmem:[%s1 + $0x2a0] sm:$0xf]
        %v814 = vld [vmem:[%s1 + $0x2a4] sm:$0xf]
        %v815 = vld [vmem:[%s1 + $0x2a8] sm:$0xf]
        %v816 = vld [vmem:[%s1 + $0x2ac] sm:$0xf]
        %v817 = vld [vmem:[%s1 + $0x2b0] sm:$0xf]
        %v818 = vld [vmem:[%s1 + $0x2b4] sm:$0xf]
        %v819 = vld [vmem:[%s1 + $0x2b8] sm:$0xf]
        %v820 = vld [vmem:[%s1 + $0x2bc] sm:$0xf]
        %v821 = vld [vmem:[%s1 + $0x2c0] sm:$0xf]
        %v822 = vld [vmem:[%s1 + $0x2c4] sm:$0xf]
        %v823 = vld [vmem:[%s1 + $0x2c8] sm:$0xf]
        %v824 = vld [vmem:[%s1 + $0x2cc] sm:$0xf]
        %v825 = vld [vmem:[%s1 + $0x2d0] sm:$0xf]
        %v826 = vld [vmem:[%s1 + $0x2d4] sm:$0xf]
        %v827 = vld [vmem:[%s1 + $0x2d8] sm:$0xf]
        %v828 = vld [vmem:[%s1 + $0x2dc] sm:$0xf]
        %v829 = vld [vmem:[%s1 + $0x2e0] sm:$0xf]
        %v830 = vld [vmem:[%s1 + $0x2e4] sm:$0xf]
        %v831 = vld [vmem:[%s1 + $0x2e8] sm:$0xf]
        %v832 = vld [vmem:[%s1 + $0x2ec] sm:$0xf]
        %v833 = vld [vmem:[%s1 + $0x2f0] sm:$0xf]
        %v834 = vld [vmem:[%s1 + $0x2f4] sm:$0xf]
        %v835 = vld [vmem:[%s1 + $0x2f8] sm:$0xf]
        %v836 = vld [vmem:[%s1 + $0x2fc] sm:$0xf]
        %v837 = vld [vmem:[%s1 + $0x300] sm:$0xf]
        %v838 = vld [vmem:[%s1 + $0x304] sm:$0xf]
        %v839 = vld [vmem:[%s1 + $0x308] sm:$0xf]
        %v840 = vld [vmem:[%s1 + $0x30c] sm:$0xf]
        %v841 = vld [vmem:[%s1 + $0x310] sm:$0xf]
        %v842 = vld [vmem:[%s1 + $0x314] sm:$0xf]
        %v843 = vld [vmem:[%s1 + $0x318] sm:$0xf]
        %v844 = vld [vmem:[%s1 + $0x31c] sm:$0xf]
        %v845 = vld [vmem:[%s1 + $0x320] sm:$0xf]
        %v846 = vld [vmem:[%s1 + $0x324] sm:$0xf]
        %v847 = vld [vmem:[%s1 + $0x328] sm:$0xf]
        %v848 = vld [vmem:[%s1 + $0x32c] sm:$0xf]
        %v849 = vld [vmem:[%s1 + $0x330] sm:$0xf]
        %v850 = vld [vmem:[%s1 + $0x334] sm:$0xf]
        %v851 = vld [vmem:[%s1 + $0x338] sm:$0xf]
        %v852 = vld [vmem:[%s1 + $0x33c] sm:$0xf]
        %v853 = vld [vmem:[%s1 + $0x340] sm:$0xf]
        %v854 = vld [vmem:[%s1 + $0x344] sm:$0xf]
        %v855 = vld [vmem:[%s1 + $0x348] sm:$0xf]
        %v856 = vld [vmem:[%s1 + $0x34c] sm:$0xf]
        %v857 = vld [vmem:[%s1 + $0x350] sm:$0xf]
        %v858 = vld [vmem:[%s1 + $0x354] sm:$0xf]
        %v859 = vld [vmem:[%s1 + $0x358] sm:$0xf]
        %v860 = vld [vmem:[%s1 + $0x35c] sm:$0xf]
        %v861 = vld [vmem:[%s1 + $0x360] sm:$0xf]
        %v862 = vld [vmem:[%s1 + $0x364] sm:$0xf]
        %v863 = vld [vmem:[%s1 + $0x368] sm:$0xf]
        %v864 = vld [vmem:[%s1 + $0x36c] sm:$0xf]
        %v865 = vld [vmem:[%s1 + $0x370] sm:$0xf]
        %v866 = vld [vmem:[%s1 + $0x374] sm:$0xf]
        %v867 = vld [vmem:[%s1 + $0x378] sm:$0xf]
        %v868 = vld [vmem:[%s1 + $0x37c] sm:$0xf]
        %v869 = vld [vmem:[%s1 + $0x380] sm:$0xf]
        %v870 = vld [vmem:[%s1 + $0x384] sm:$0xf]
        %v871 = vld [vmem:[%s1 + $0x388] sm:$0xf]
        %v872 = vld [vmem:[%s1 + $0x38c] sm:$0xf]
        %v873 = vld [vmem:[%s1 + $0x390] sm:$0xf]
        %v874 = vld [vmem:[%s1 + $0x394] sm:$0xf]
        %v875 = vld [vmem:[%s1 + $0x398] sm:$0xf]
        %v876 = vld [vmem:[%s1 + $0x39c] sm:$0xf]
        %v877 = vld [vmem:[%s1 + $0x3a0] sm:$0xf]
        %v878 = vld [vmem:[%s1 + $0x3a4] sm:$0xf]
        %v879 = vld [vmem:[%s1 + $0x3a8] sm:$0xf]
        %v880 = vld [vmem:[%s1 + $0x3ac] sm:$0xf]
        %v881 = vld [vmem:[%s1 + $0x3b0] sm:$0xf]
        %v882 = vld [vmem:[%s1 + $0x3b4] sm:$0xf]
        %v883 = vld [vmem:[%s1 + $0x3b8] sm:$0xf]
        %v884 = vld [vmem:[%s1 + $0x3bc] sm:$0xf]
        %v885 = vld [vmem:[%s1 + $0x3c0] sm:$0xf]
        %v886 = vld [vmem:[%s1 + $0x3c4] sm:$0xf]
        %v887 = vld [vmem:[%s1 + $0x3c8] sm:$0xf]
        %v888 = vld [vmem:[%s1 + $0x3cc] sm:$0xf]
        %v889 = vld [vmem:[%s1 + $0x3d0] sm:$0xf]
        %v890 = vld [vmem:[%s1 + $0x3d4] sm:$0xf]
        %v891 = vld [vmem:[%s1 + $0x3d8] sm:$0xf]
        %v892 = vld [vmem:[%s1 + $0x3dc] sm:$0xf]
        %v893 = vld [vmem:[%s1 + $0x3e0] sm:$0xf]
        %v894 = vld [vmem:[%s1 + $0x3e4] sm:$0xf]
        %v895 = vld [vmem:[%s1 + $0x3e8] sm:$0xf]
        %v896 = vld [vmem:[%s1 + $0x3ec] sm:$0xf]
        %v897 = vld [vmem:[%s1 + $0x3f0] sm:$0xf]
        %v898 = vld [vmem:[%s1 + $0x3f4] sm:$0xf]
        %v899 = vld [vmem:[%s1 + $0x3f8] sm:$0xf]
        %v900 = vld [vmem:[%s1 + $0x3fc] sm:$0xf]
        %v901 = vld [vmem:[%s1 + $0x400] sm:$0xf]
        %v902 = vld [vmem:[%s1 + $0x404] sm:$0xf]
        %v903 = vld [vmem:[%s1 + $0x408] sm:$0xf]
        %v904 = vld [vmem:[%s1 + $0x40c] sm:$0xf]
        %v905 = vld [vmem:[%s1 + $0x410] sm:$0xf]
        %v906 = vld [vmem:[%s1 + $0x414] sm:$0xf]
        %v907 = vld [vmem:[%s1 + $0x418] sm:$0xf]
        %v908 = vld [vmem:[%s1 + $0x41c] sm:$0xf]
        %v909 = vld [vmem:[%s1 + $0x420] sm:$0xf]
        %v910 = vld [vmem:[%s1 + $0x424] sm:$0xf]
        %v911 = vld [vmem:[%s1 + $0x428] sm:$0xf]
        %v912 = vld [vmem:[%s1 + $0x42c] sm:$0xf]
        %v913 = vld [vmem:[%s1 + $0x430] sm:$0xf]
        %v914 = vld [vmem:[%s1 + $0x434] sm:$0xf]
        %v915 = vld [vmem:[%s1 + $0x438] sm:$0xf]
        %v916 = vld [vmem:[%s1 + $0x43c] sm:$0xf]
        %v917 = vld [vmem:[%s1 + $0x440] sm:$0xf]
        %v918 = vld [vmem:[%s1 + $0x444] sm:$0xf]
        %v919 = vld [vmem:[%s1 + $0x448] sm:$0xf]
        %v920 = vld [vmem:[%s1 + $0x44c] sm:$0xf]
        %v921 = vld [vmem:[%s1 + $0x450] sm:$0xf]
        %v922 = vld [vmem:[%s1 + $0x454] sm:$0xf]
        %v923 = vld [vmem:[%s1 + $0x458] sm:$0xf]
        %v924 = vld [vmem:[%s1 + $0x45c] sm:$0xf]
        %v925 = vld [vmem:[%s1 + $0x460] sm:$0xf]
        %v926 = vld [vmem:[%s1 + $0x464] sm:$0xf]
        %v927 = vld [vmem:[%s1 + $0x468] sm:$0xf]
        %v928 = vld [vmem:[%s1 + $0x46c] sm:$0xf]
        %v929 = vld [vmem:[%s1 + $0x470] sm:$0xf]
        %v930 = vld [vmem:[%s1 + $0x474] sm:$0xf]
        %v931 = vld [vmem:[%s1 + $0x478] sm:$0xf]
        %v932 = vld [vmem:[%s1 + $0x47c] sm:$0xf]
        %v933 = vld [vmem:[%s1 + $0x480] sm:$0xf]
        %v934 = vld [vmem:[%s1 + $0x484] sm:$0xf]
        %v935 = vld [vmem:[%s1 + $0x488] sm:$0xf]
        %v936 = vld [vmem:[%s1 + $0x48c] sm:$0xf]
        %v937 = vld [vmem:[%s1 + $0x490] sm:$0xf]
        %v938 = vld [vmem:[%s1 + $0x494] sm:$0xf]
        %v939 = vld [vmem:[%s1 + $0x498] sm:$0xf]
        %v940 = vld [vmem:[%s1 + $0x49c] sm:$0xf]
        %v941 = vld [vmem:[%s1 + $0x4a0] sm:$0xf]
        %v942 = vld [vmem:[%s1 + $0x4a4] sm:$0xf]
        %v943 = vld [vmem:[%s1 + $0x4a8] sm:$0xf]
        %v944 = vld [vmem:[%s1 + $0x4ac] sm:$0xf]
        %v945 = vld [vmem:[%s1 + $0x4b0] sm:$0xf]
        %v946 = vld [vmem:[%s1 + $0x4b4] sm:$0xf]
        %v947 = vld [vmem:[%s1 + $0x4b8] sm:$0xf]
        %v948 = vld [vmem:[%s1 + $0x4bc] sm:$0xf]
        %v949 = vld [vmem:[%s1 + $0x4c0] sm:$0xf]
        %v950 = vld [vmem:[%s1 + $0x4c4] sm:$0xf]
        %v951 = vld [vmem:[%s1 + $0x4c8] sm:$0xf]
        %v952 = vld [vmem:[%s1 + $0x4cc] sm:$0xf]
        %v953 = vld [vmem:[%s1 + $0x4d0] sm:$0xf]
        %v954 = vld [vmem:[%s1 + $0x4d4] sm:$0xf]
        %v955 = vld [vmem:[%s1 + $0x4d8] sm:$0xf]
        %v956 = vld [vmem:[%s1 + $0x4dc] sm:$0xf]
        %v957 = vld [vmem:[%s1 + $0x4e0] sm:$0xf]
        %v958 = vld [vmem:[%s1 + $0x4e4] sm:$0xf]
        %v959 = vld [vmem:[%s1 + $0x4e8] sm:$0xf]
        %v960 = vld [vmem:[%s1 + $0x4ec] sm:$0xf]
        %v961 = vld [vmem:[%s1 + $0x4f0] sm:$0xf]
        %v962 = vld [vmem:[%s1 + $0x4f4] sm:$0xf]
        %v963 = vld [vmem:[%s1 + $0x4f8] sm:$0xf]
        %v964 = vld [vmem:[%s1 + $0x4fc] sm:$0xf]
        %v965 = vld [vmem:[%s1 + $0x500] sm:$0xf]
        %v966 = vld [vmem:[%s1 + $0x504] sm:$0xf]
        %v967 = vld [vmem:[%s1 + $0x508] sm:$0xf]
        %v968 = vld [vmem:[%s1 + $0x50c] sm:$0xf]
        %v969 = vld [vmem:[%s1 + $0x510] sm:$0xf]
        %v970 = vld [vmem:[%s1 + $0x514] sm:$0xf]
        %v971 = vld [vmem:[%s1 + $0x518] sm:$0xf]
        %v972 = vld [vmem:[%s1 + $0x51c] sm:$0xf]
        %v973 = vld [vmem:[%s1 + $0x520] sm:$0xf]
        %v974 = vld [vmem:[%s1 + $0x524] sm:$0xf]
        %v975 = vld [vmem:[%s1 + $0x528] sm:$0xf]
        %v976 = vld [vmem:[%s1 + $0x52c] sm:$0xf]
        %v977 = vld [vmem:[%s1 + $0x530] sm:$0xf]
        %v978 = vld [vmem:[%s1 + $0x534] sm:$0xf]
        %v979 = vld [vmem:[%s1 + $0x538] sm:$0xf]
        %v980 = vld [vmem:[%s1 + $0x53c] sm:$0xf]
        %v981 = vld [vmem:[%s1 + $0x540] sm:$0xf]
        %v982 = vld [vmem:[%s1 + $0x544] sm:$0xf]
        %v983 = vld [vmem:[%s1 + $0x548] sm:$0xf]
        %v984 = vld [vmem:[%s1 + $0x54c] sm:$0xf]
        %v985 = vld [vmem:[%s1 + $0x550] sm:$0xf]
        %v986 = vld [vmem:[%s1 + $0x554] sm:$0xf]
        %v987 = vld [vmem:[%s1 + $0x558] sm:$0xf]
        %v988 = vld [vmem:[%s1 + $0x55c] sm:$0xf]
        %v989 = vld [vmem:[%s1 + $0x560] sm:$0xf]
        %v990 = vld [vmem:[%s1 + $0x564] sm:$0xf]
        %v991 = vld [vmem:[%s1 + $0x568] sm:$0xf]
        %v992 = vld [vmem:[%s1 + $0x56c] sm:$0xf]
        %v993 = vld [vmem:[%s1 + $0x570] sm:$0xf]
        %v994 = vld [vmem:[%s1 + $0x574] sm:$0xf]
        %v995 = vld [vmem:[%s1 + $0x578] sm:$0xf]
        %v996 = vld [vmem:[%s1 + $0x57c] sm:$0xf]
        %v997 = vld [vmem:[%s1 + $0x580] sm:$0xf]
        %v998 = vld [vmem:[%s1 + $0x584] sm:$0xf]
        %v999 = vld [vmem:[%s1 + $0x588] sm:$0xf]
        %v1000 = vld [vmem:[%s1 + $0x58c] sm:$0xf]
        %v1001 = vld [vmem:[%s1 + $0x590] sm:$0xf]
        %v1002 = vld [vmem:[%s1 + $0x594] sm:$0xf]
        %v1003 = vld [vmem:[%s1 + $0x598] sm:$0xf]
        %v1004 = vld [vmem:[%s1 + $0x59c] sm:$0xf]
        %v1005 = vld [vmem:[%s1 + $0x5a0] sm:$0xf]
        %v1006 = vld [vmem:[%s1 + $0x5a4] sm:$0xf]
        %v1007 = vld [vmem:[%s1 + $0x5a8] sm:$0xf]
        %v1008 = vld [vmem:[%s1 + $0x5ac] sm:$0xf]
        %v1009 = vld [vmem:[%s1 + $0x5b0] sm:$0xf]
        %v1010 = vld [vmem:[%s1 + $0x5b4] sm:$0xf]
        %v1011 = vld [vmem:[%s1 + $0x5b8] sm:$0xf]
        %v1012 = vld [vmem:[%s1 + $0x5bc] sm:$0xf]
        %v1013 = vld [vmem:[%s1 + $0x5c0] sm:$0xf]
        %v1014 = vld [vmem:[%s1 + $0x5c4] sm:$0xf]
        %v1015 = vld [vmem:[%s1 + $0x5c8] sm:$0xf]
        %v1016 = vld [vmem:[%s1 + $0x5cc] sm:$0xf]
        %v1017 = vld [vmem:[%s1 + $0x5d0] sm:$0xf]
        %v1018 = vld [vmem:[%s1 + $0x5d4] sm:$0xf]
        %v1019 = vld [vmem:[%s1 + $0x5d8] sm:$0xf]
        %v1020 = vld [vmem:[%s1 + $0x5dc] sm:$0xf]
        %v1021 = vld [vmem:[%s1 + $0x5e0] sm:$0xf]
        %v1022 = vld [vmem:[%s1 + $0x5e4] sm:$0xf]
        %v1023 = vld [vmem:[%s1 + $0x5e8] sm:$0xf]
        %v1024 = vld [vmem:[%s1 + $0x5ec] sm:$0xf]
        %v1025 = vld [vmem:[%s1 + $0x5f0] sm:$0xf]
        %v1026 = vld [vmem:[%s1 + $0x5f4] sm:$0xf]
        %v1027 = vld [vmem:[%s1 + $0x5f8] sm:$0xf]
        %v1028 = vld [vmem:[%s1 + $0x5fc] sm:$0xf]
        %v1029 = vld [vmem:[%s2] sm:$0x1]
        %v1031 = vlaneseq
        %v1032 = vshrl.u32 %v1031, 7
        %v1033 = vsub.s32 0, %v1032
        %v1034 = vrot.slane %v1029, %v1033
        %v1480 = vunpack.c.l.b16 %v201
        %v1481 = vunpack.c.h.b16 %v201
        %v1482 = vunpack.c.l.b16 %v202
        %v1483 = vunpack.c.h.b16 %v202
        %v1484 = vunpack.c.l.b16 %v203
        %v1485 = vunpack.c.h.b16 %v203
        %v1486 = vunpack.c.l.b16 %v204
        %v1487 = vunpack.c.h.b16 %v204
        %v1488 = vunpack.c.l.b16 %v205
        %v1489 = vunpack.c.h.b16 %v205
        %v1490 = vunpack.c.l.b16 %v206
        %v1491 = vunpack.c.h.b16 %v206
        %v1492 = vunpack.c.l.b16 %v207
        %v1493 = vunpack.c.h.b16 %v207
        %v1494 = vunpack.c.l.b16 %v208
        %v1495 = vunpack.c.h.b16 %v208
        %v1496 = vunpack.c.l.b16 %v209
        %v1497 = vunpack.c.h.b16 %v209
        %v1498 = vunpack.c.l.b16 %v210
        %v1499 = vunpack.c.h.b16 %v210
        %v1500 = vunpack.c.l.b16 %v211
        %v1501 = vunpack.c.h.b16 %v211
        %v1502 = vunpack.c.l.b16 %v212
        %v1503 = vunpack.c.h.b16 %v212
        %v1504 = vunpack.c.l.b16 %v213
        %v1505 = vunpack.c.h.b16 %v213
        %v1506 = vunpack.c.l.b16 %v214
        %v1507 = vunpack.c.h.b16 %v214
        %v1508 = vunpack.c.l.b16 %v215
        %v1509 = vunpack.c.h.b16 %v215
        %v1510 = vunpack.c.l.b16 %v216
        %v1511 = vunpack.c.h.b16 %v216
        %v1512 = vunpack.c.l.b16 %v217
        %v1513 = vunpack.c.h.b16 %v217
        %v1514 = vunpack.c.l.b16 %v218
        %v1515 = vunpack.c.h.b16 %v218
        %v1516 = vunpack.c.l.b16 %v219
        %v1517 = vunpack.c.h.b16 %v219
        %v1518 = vunpack.c.l.b16 %v220
        %v1519 = vunpack.c.h.b16 %v220
        %v1520 = vunpack.c.l.b16 %v221
        %v1521 = vunpack.c.h.b16 %v221
        %v1522 = vunpack.c.l.b16 %v222
        %v1523 = vunpack.c.h.b16 %v222
        %v1524 = vunpack.c.l.b16 %v223
        %v1525 = vunpack.c.h.b16 %v223
        %v1526 = vunpack.c.l.b16 %v224
        %v1527 = vunpack.c.h.b16 %v224
        %v1528 = vunpack.c.l.b16 %v225
        %v1529 = vunpack.c.h.b16 %v225
        %v1530 = vunpack.c.l.b16 %v226
        %v1531 = vunpack.c.h.b16 %v226
        %v1532 = vunpack.c.l.b16 %v227
        %v1533 = vunpack.c.h.b16 %v227
        %v1534 = vunpack.c.l.b16 %v228
        %v1535 = vunpack.c.h.b16 %v228
        %v1536 = vunpack.c.l.b16 %v229
        %v1537 = vunpack.c.h.b16 %v229
        %v1538 = vunpack.c.l.b16 %v230
        %v1539 = vunpack.c.h.b16 %v230
        %v1540 = vunpack.c.l.b16 %v231
        %v1541 = vunpack.c.h.b16 %v231
        %v1542 = vunpack.c.l.b16 %v232
        %v1543 = vunpack.c.h.b16 %v232
        %v1544 = vunpack.c.l.b16 %v233
        %v1545 = vunpack.c.h.b16 %v233
        %v1546 = vunpack.c.l.b16 %v234
        %v1547 = vunpack.c.h.b16 %v234
        %v1548 = vunpack.c.l.b16 %v235
        %v1549 = vunpack.c.h.b16 %v235
        %v1550 = vunpack.c.l.b16 %v236
        %v1551 = vunpack.c.h.b16 %v236
        %v1552 = vunpack.c.l.b16 %v237
        %v1553 = vunpack.c.h.b16 %v237
        %v1554 = vunpack.c.l.b16 %v238
        %v1555 = vunpack.c.h.b16 %v238
        %v1556 = vunpack.c.l.b16 %v239
        %v1557 = vunpack.c.h.b16 %v239
        %v1558 = vunpack.c.l.b16 %v240
        %v1559 = vunpack.c.h.b16 %v240
        %v1560 = vunpack.c.l.b16 %v241
        %v1561 = vunpack.c.h.b16 %v241
        %v1562 = vunpack.c.l.b16 %v242
        %v1563 = vunpack.c.h.b16 %v242
        %v1564 = vunpack.c.l.b16 %v243
        %v1565 = vunpack.c.h.b16 %v243
        %v1566 = vunpack.c.l.b16 %v244
        %v1567 = vunpack.c.h.b16 %v244
        %v1568 = vunpack.c.l.b16 %v245
        %v1569 = vunpack.c.h.b16 %v245
        %v1570 = vunpack.c.l.b16 %v246
        %v1571 = vunpack.c.h.b16 %v246
        %v1572 = vunpack.c.l.b16 %v247
        %v1573 = vunpack.c.h.b16 %v247
        %v1574 = vunpack.c.l.b16 %v248
        %v1575 = vunpack.c.h.b16 %v248
        %v1576 = vunpack.c.l.b16 %v249
        %v1577 = vunpack.c.h.b16 %v249
        %v1578 = vunpack.c.l.b16 %v250
        %v1579 = vunpack.c.h.b16 %v250
        %v1580 = vunpack.c.l.b16 %v251
        %v1581 = vunpack.c.h.b16 %v251
        %v1582 = vunpack.c.l.b16 %v252
        %v1583 = vunpack.c.h.b16 %v252
        %v1584 = vunpack.c.l.b16 %v253
        %v1585 = vunpack.c.h.b16 %v253
        %v1586 = vunpack.c.l.b16 %v254
        %v1587 = vunpack.c.h.b16 %v254
        %v1588 = vunpack.c.l.b16 %v255
        %v1589 = vunpack.c.h.b16 %v255
        %v1590 = vunpack.c.l.b16 %v256
        %v1591 = vunpack.c.h.b16 %v256
        %v1592 = vunpack.c.l.b16 %v257
        %v1593 = vunpack.c.h.b16 %v257
        %v1594 = vunpack.c.l.b16 %v258
        %v1595 = vunpack.c.h.b16 %v258
        %v1596 = vunpack.c.l.b16 %v259
        %v1597 = vunpack.c.h.b16 %v259
        %v1598 = vunpack.c.l.b16 %v260
        %v1599 = vunpack.c.h.b16 %v260
        %v1600 = vunpack.c.l.b16 %v261
        %v1601 = vunpack.c.h.b16 %v261
        %v1602 = vunpack.c.l.b16 %v262
        %v1603 = vunpack.c.h.b16 %v262
        %v1604 = vunpack.c.l.b16 %v263
        %v1605 = vunpack.c.h.b16 %v263
        %v1606 = vunpack.c.l.b16 %v264
        %v1607 = vunpack.c.h.b16 %v264
        %v1608 = vunpack.c.l.b16 %v265
        %v1609 = vunpack.c.h.b16 %v265
        %v1610 = vunpack.c.l.b16 %v266
        %v1611 = vunpack.c.h.b16 %v266
        %v1612 = vunpack.c.l.b16 %v267
        %v1613 = vunpack.c.h.b16 %v267
        %v1614 = vunpack.c.l.b16 %v268
        %v1615 = vunpack.c.h.b16 %v268
        %v1616 = vunpack.c.l.b16 %v269
        %v1617 = vunpack.c.h.b16 %v269
        %v1618 = vunpack.c.l.b16 %v270
        %v1619 = vunpack.c.h.b16 %v270
        %v1620 = vunpack.c.l.b16 %v271
        %v1621 = vunpack.c.h.b16 %v271
        %v1622 = vunpack.c.l.b16 %v272
        %v1623 = vunpack.c.h.b16 %v272
        %v1624 = vunpack.c.l.b16 %v273
        %v1625 = vunpack.c.h.b16 %v273
        %v1626 = vunpack.c.l.b16 %v274
        %v1627 = vunpack.c.h.b16 %v274
        %v1628 = vunpack.c.l.b16 %v275
        %v1629 = vunpack.c.h.b16 %v275
        %v1630 = vunpack.c.l.b16 %v276
        %v1631 = vunpack.c.h.b16 %v276
        %v1632 = vunpack.c.l.b16 %v277
        %v1633 = vunpack.c.h.b16 %v277
        %v1634 = vunpack.c.l.b16 %v278
        %v1635 = vunpack.c.h.b16 %v278
        %v1636 = vunpack.c.l.b16 %v279
        %v1637 = vunpack.c.h.b16 %v279
        %v1638 = vunpack.c.l.b16 %v280
        %v1639 = vunpack.c.h.b16 %v280
        %v1640 = vunpack.c.l.b16 %v281
        %v1641 = vunpack.c.h.b16 %v281
        %v1642 = vunpack.c.l.b16 %v282
        %v1643 = vunpack.c.h.b16 %v282
        %v1644 = vunpack.c.l.b16 %v283
        %v1645 = vunpack.c.h.b16 %v283
        %v1646 = vunpack.c.l.b16 %v284
        %v1647 = vunpack.c.h.b16 %v284
        %v1648 = vunpack.c.l.b16 %v285
        %v1649 = vunpack.c.h.b16 %v285
        %v1650 = vunpack.c.l.b16 %v286
        %v1651 = vunpack.c.h.b16 %v286
        %v1652 = vunpack.c.l.b16 %v287
        %v1653 = vunpack.c.h.b16 %v287
        %v1654 = vunpack.c.l.b16 %v288
        %v1655 = vunpack.c.h.b16 %v288
        %v1656 = vunpack.c.l.b16 %v289
        %v1657 = vunpack.c.h.b16 %v289
        %v1658 = vunpack.c.l.b16 %v290
        %v1659 = vunpack.c.h.b16 %v290
        %v1660 = vunpack.c.l.b16 %v291
        %v1661 = vunpack.c.h.b16 %v291
        %v1662 = vunpack.c.l.b16 %v292
        %v1663 = vunpack.c.h.b16 %v292
        %v1664 = vunpack.c.l.b16 %v293
        %v1665 = vunpack.c.h.b16 %v293
        %v1666 = vunpack.c.l.b16 %v294
        %v1667 = vunpack.c.h.b16 %v294
        %v1668 = vunpack.c.l.b16 %v295
        %v1669 = vunpack.c.h.b16 %v295
        %v1670 = vunpack.c.l.b16 %v296
        %v1671 = vunpack.c.h.b16 %v296
        %v1672 = vunpack.c.l.b16 %v297
        %v1673 = vunpack.c.h.b16 %v297
        %v1674 = vunpack.c.l.b16 %v298
        %v1675 = vunpack.c.h.b16 %v298
        %v1676 = vunpack.c.l.b16 %v299
        %v1677 = vunpack.c.h.b16 %v299
        %v1678 = vunpack.c.l.b16 %v300
        %v1679 = vunpack.c.h.b16 %v300
        %v1680 = vunpack.c.l.b16 %v301
        %v1681 = vunpack.c.h.b16 %v301
        %v1682 = vunpack.c.l.b16 %v302
        %v1683 = vunpack.c.h.b16 %v302
        %v1684 = vunpack.c.l.b16 %v303
        %v1685 = vunpack.c.h.b16 %v303
        %v1686 = vunpack.c.l.b16 %v304
        %v1687 = vunpack.c.h.b16 %v304
        %v1688 = vunpack.c.l.b16 %v305
        %v1689 = vunpack.c.h.b16 %v305
        %v1690 = vunpack.c.l.b16 %v306
        %v1691 = vunpack.c.h.b16 %v306
        %v1692 = vunpack.c.l.b16 %v307
        %v1693 = vunpack.c.h.b16 %v307
        %v1694 = vunpack.c.l.b16 %v308
        %v1695 = vunpack.c.h.b16 %v308
        %v1696 = vunpack.c.l.b16 %v309
        %v1697 = vunpack.c.h.b16 %v309
        %v1698 = vunpack.c.l.b16 %v310
        %v1699 = vunpack.c.h.b16 %v310
        %v1700 = vunpack.c.l.b16 %v311
        %v1701 = vunpack.c.h.b16 %v311
        %v1702 = vunpack.c.l.b16 %v312
        %v1703 = vunpack.c.h.b16 %v312
        %v1704 = vunpack.c.l.b16 %v313
        %v1705 = vunpack.c.h.b16 %v313
        %v1706 = vunpack.c.l.b16 %v314
        %v1707 = vunpack.c.h.b16 %v314
        %v1708 = vunpack.c.l.b16 %v315
        %v1709 = vunpack.c.h.b16 %v315
        %v1710 = vunpack.c.l.b16 %v316
        %v1711 = vunpack.c.h.b16 %v316
        %v1712 = vunpack.c.l.b16 %v317
        %v1713 = vunpack.c.h.b16 %v317
        %v1714 = vunpack.c.l.b16 %v318
        %v1715 = vunpack.c.h.b16 %v318
        %v1716 = vunpack.c.l.b16 %v319
        %v1717 = vunpack.c.h.b16 %v319
        %v1718 = vunpack.c.l.b16 %v320
        %v1719 = vunpack.c.h.b16 %v320
        %v1720 = vunpack.c.l.b16 %v321
        %v1721 = vunpack.c.h.b16 %v321
        %v1722 = vunpack.c.l.b16 %v322
        %v1723 = vunpack.c.h.b16 %v322
        %v1724 = vunpack.c.l.b16 %v323
        %v1725 = vunpack.c.h.b16 %v323
        %v1726 = vunpack.c.l.b16 %v324
        %v1727 = vunpack.c.h.b16 %v324
        %v1728 = vunpack.c.l.b16 %v325
        %v1729 = vunpack.c.h.b16 %v325
        %v1730 = vunpack.c.l.b16 %v326
        %v1731 = vunpack.c.h.b16 %v326
        %v1732 = vunpack.c.l.b16 %v327
        %v1733 = vunpack.c.h.b16 %v327
        %v1734 = vunpack.c.l.b16 %v328
        %v1735 = vunpack.c.h.b16 %v328
        %v1736 = vunpack.c.l.b16 %v329
        %v1737 = vunpack.c.h.b16 %v329
        %v1738 = vunpack.c.l.b16 %v330
        %v1739 = vunpack.c.h.b16 %v330
        %v1740 = vunpack.c.l.b16 %v331
        %v1741 = vunpack.c.h.b16 %v331
        %v1742 = vunpack.c.l.b16 %v332
        %v1743 = vunpack.c.h.b16 %v332
        %v1744 = vunpack.c.l.b16 %v333
        %v1745 = vunpack.c.h.b16 %v333
        %v1746 = vunpack.c.l.b16 %v334
        %v1747 = vunpack.c.h.b16 %v334
        %v1748 = vunpack.c.l.b16 %v335
        %v1749 = vunpack.c.h.b16 %v335
        %v1750 = vunpack.c.l.b16 %v336
        %v1751 = vunpack.c.h.b16 %v336
        %v1752 = vunpack.c.l.b16 %v337
        %v1753 = vunpack.c.h.b16 %v337
        %v1754 = vunpack.c.l.b16 %v338
        %v1755 = vunpack.c.h.b16 %v338
        %v1756 = vunpack.c.l.b16 %v339
        %v1757 = vunpack.c.h.b16 %v339
        %v1758 = vunpack.c.l.b16 %v340
        %v1759 = vunpack.c.h.b16 %v340
        %v1760 = vunpack.c.l.b16 %v341
        %v1761 = vunpack.c.h.b16 %v341
        %v1762 = vunpack.c.l.b16 %v342
        %v1763 = vunpack.c.h.b16 %v342
        %v1764 = vunpack.c.l.b16 %v343
        %v1765 = vunpack.c.h.b16 %v343
        %v1766 = vunpack.c.l.b16 %v344
        %v1767 = vunpack.c.h.b16 %v344
        %v1768 = vunpack.c.l.b16 %v345
        %v1769 = vunpack.c.h.b16 %v345
        %v1770 = vunpack.c.l.b16 %v346
        %v1771 = vunpack.c.h.b16 %v346
        %v1772 = vunpack.c.l.b16 %v347
        %v1773 = vunpack.c.h.b16 %v347
        %v1774 = vunpack.c.l.b16 %v348
        %v1775 = vunpack.c.h.b16 %v348
        %v1776 = vunpack.c.l.b16 %v349
        %v1777 = vunpack.c.h.b16 %v349
        %v1778 = vunpack.c.l.b16 %v350
        %v1779 = vunpack.c.h.b16 %v350
        %v1780 = vunpack.c.l.b16 %v351
        %v1781 = vunpack.c.h.b16 %v351
        %v1782 = vunpack.c.l.b16 %v352
        %v1783 = vunpack.c.h.b16 %v352
        %v1784 = vunpack.c.l.b16 %v353
        %v1785 = vunpack.c.h.b16 %v353
        %v1786 = vunpack.c.l.b16 %v354
        %v1787 = vunpack.c.h.b16 %v354
        %v1788 = vunpack.c.l.b16 %v355
        %v1789 = vunpack.c.h.b16 %v355
        %v1790 = vunpack.c.l.b16 %v356
        %v1791 = vunpack.c.h.b16 %v356
        %v1792 = vunpack.c.l.b16 %v357
        %v1793 = vunpack.c.h.b16 %v357
        %v1794 = vunpack.c.l.b16 %v358
        %v1795 = vunpack.c.h.b16 %v358
        %v1796 = vunpack.c.l.b16 %v359
        %v1797 = vunpack.c.h.b16 %v359
        %v1798 = vunpack.c.l.b16 %v360
        %v1799 = vunpack.c.h.b16 %v360
        %v1800 = vunpack.c.l.b16 %v361
        %v1801 = vunpack.c.h.b16 %v361
        %v1802 = vunpack.c.l.b16 %v362
        %v1803 = vunpack.c.h.b16 %v362
        %v1804 = vunpack.c.l.b16 %v363
        %v1805 = vunpack.c.h.b16 %v363
        %v1806 = vunpack.c.l.b16 %v364
        %v1807 = vunpack.c.h.b16 %v364
        %v1808 = vunpack.c.l.b16 %v365
        %v1809 = vunpack.c.h.b16 %v365
        %v1810 = vunpack.c.l.b16 %v366
        %v1811 = vunpack.c.h.b16 %v366
        %v1812 = vunpack.c.l.b16 %v367
        %v1813 = vunpack.c.h.b16 %v367
        %v1814 = vunpack.c.l.b16 %v368
        %v1815 = vunpack.c.h.b16 %v368
        %v1816 = vunpack.c.l.b16 %v369
        %v1817 = vunpack.c.h.b16 %v369
        %v1818 = vunpack.c.l.b16 %v370
        %v1819 = vunpack.c.h.b16 %v370
        %v1820 = vunpack.c.l.b16 %v371
        %v1821 = vunpack.c.h.b16 %v371
        %v1822 = vunpack.c.l.b16 %v372
        %v1823 = vunpack.c.h.b16 %v372
        %v1824 = vunpack.c.l.b16 %v373
        %v1825 = vunpack.c.h.b16 %v373
        %v1826 = vunpack.c.l.b16 %v374
        %v1827 = vunpack.c.h.b16 %v374
        %v1828 = vunpack.c.l.b16 %v375
        %v1829 = vunpack.c.h.b16 %v375
        %v1830 = vunpack.c.l.b16 %v376
        %v1831 = vunpack.c.h.b16 %v376
        %v1832 = vunpack.c.l.b16 %v377
        %v1833 = vunpack.c.h.b16 %v377
        %v1834 = vunpack.c.l.b16 %v378
        %v1835 = vunpack.c.h.b16 %v378
        %v1836 = vunpack.c.l.b16 %v379
        %v1837 = vunpack.c.h.b16 %v379
        %v1838 = vunpack.c.l.b16 %v380
        %v1839 = vunpack.c.h.b16 %v380
        %v1840 = vunpack.c.l.b16 %v381
        %v1841 = vunpack.c.h.b16 %v381
        %v1842 = vunpack.c.l.b16 %v382
        %v1843 = vunpack.c.h.b16 %v382
        %v1844 = vunpack.c.l.b16 %v383
        %v1845 = vunpack.c.h.b16 %v383
        %v1846 = vunpack.c.l.b16 %v384
        %v1847 = vunpack.c.h.b16 %v384
        %v1848 = vunpack.c.l.b16 %v385
        %v1849 = vunpack.c.h.b16 %v385
        %v1850 = vunpack.c.l.b16 %v386
        %v1851 = vunpack.c.h.b16 %v386
        %v1852 = vunpack.c.l.b16 %v387
        %v1853 = vunpack.c.h.b16 %v387
        %v1854 = vunpack.c.l.b16 %v388
        %v1855 = vunpack.c.h.b16 %v388
        %v1856 = vunpack.c.l.b16 %v389
        %v1857 = vunpack.c.h.b16 %v389
        %v1858 = vunpack.c.l.b16 %v390
        %v1859 = vunpack.c.h.b16 %v390
        %v1860 = vunpack.c.l.b16 %v391
        %v1861 = vunpack.c.h.b16 %v391
        %v1862 = vunpack.c.l.b16 %v392
        %v1863 = vunpack.c.h.b16 %v392
        %v1864 = vunpack.c.l.b16 %v393
        %v1865 = vunpack.c.h.b16 %v393
        %v1866 = vunpack.c.l.b16 %v394
        %v1867 = vunpack.c.h.b16 %v394
        %v1868 = vunpack.c.l.b16 %v395
        %v1869 = vunpack.c.h.b16 %v395
        %v1870 = vunpack.c.l.b16 %v396
        %v1871 = vunpack.c.h.b16 %v396
        %v1872 = vunpack.c.l.b16 %v397
        %v1873 = vunpack.c.h.b16 %v397
        %v1874 = vunpack.c.l.b16 %v398
        %v1875 = vunpack.c.h.b16 %v398
        %v1876 = vunpack.c.l.b16 %v399
        %v1877 = vunpack.c.h.b16 %v399
        %v1878 = vunpack.c.l.b16 %v400
        %v1879 = vunpack.c.h.b16 %v400
        %v1880 = vunpack.c.l.b16 %v401
        %v1881 = vunpack.c.h.b16 %v401
        %v1882 = vunpack.c.l.b16 %v402
        %v1883 = vunpack.c.h.b16 %v402
        %v1884 = vunpack.c.l.b16 %v403
        %v1885 = vunpack.c.h.b16 %v403
        %v1886 = vunpack.c.l.b16 %v404
        %v1887 = vunpack.c.h.b16 %v404
        %v1888 = vunpack.c.l.b16 %v405
        %v1889 = vunpack.c.h.b16 %v405
        %v1890 = vunpack.c.l.b16 %v406
        %v1891 = vunpack.c.h.b16 %v406
        %v1892 = vunpack.c.l.b16 %v407
        %v1893 = vunpack.c.h.b16 %v407
        %v1894 = vunpack.c.l.b16 %v408
        %v1895 = vunpack.c.h.b16 %v408
        %v1896 = vunpack.c.l.b16 %v409
        %v1897 = vunpack.c.h.b16 %v409
        %v1898 = vunpack.c.l.b16 %v410
        %v1899 = vunpack.c.h.b16 %v410
        %v1900 = vunpack.c.l.b16 %v411
        %v1901 = vunpack.c.h.b16 %v411
        %v1902 = vunpack.c.l.b16 %v412
        %v1903 = vunpack.c.h.b16 %v412
        %v1904 = vunpack.c.l.b16 %v413
        %v1905 = vunpack.c.h.b16 %v413
        %v1906 = vunpack.c.l.b16 %v414
        %v1907 = vunpack.c.h.b16 %v414
        %v1908 = vunpack.c.l.b16 %v415
        %v1909 = vunpack.c.h.b16 %v415
        %v1910 = vunpack.c.l.b16 %v416
        %v1911 = vunpack.c.h.b16 %v416
        %v1912 = vunpack.c.l.b16 %v417
        %v1913 = vunpack.c.h.b16 %v417
        %v1914 = vunpack.c.l.b16 %v418
        %v1915 = vunpack.c.h.b16 %v418
        %v1916 = vunpack.c.l.b16 %v419
        %v1917 = vunpack.c.h.b16 %v419
        %v1918 = vunpack.c.l.b16 %v420
        %v1919 = vunpack.c.h.b16 %v420
        %v1920 = vunpack.c.l.b16 %v421
        %v1921 = vunpack.c.h.b16 %v421
        %v1922 = vunpack.c.l.b16 %v422
        %v1923 = vunpack.c.h.b16 %v422
        %v1924 = vunpack.c.l.b16 %v423
        %v1925 = vunpack.c.h.b16 %v423
        %v1926 = vunpack.c.l.b16 %v424
        %v1927 = vunpack.c.h.b16 %v424
        %v1928 = vunpack.c.l.b16 %v425
        %v1929 = vunpack.c.h.b16 %v425
        %v1930 = vunpack.c.l.b16 %v426
        %v1931 = vunpack.c.h.b16 %v426
        %v1932 = vunpack.c.l.b16 %v427
        %v1933 = vunpack.c.h.b16 %v427
        %v1934 = vunpack.c.l.b16 %v428
        %v1935 = vunpack.c.h.b16 %v428
        %v1936 = vunpack.c.l.b16 %v429
        %v1937 = vunpack.c.h.b16 %v429
        %v1938 = vunpack.c.l.b16 %v430
        %v1939 = vunpack.c.h.b16 %v430
        %v1940 = vunpack.c.l.b16 %v431
        %v1941 = vunpack.c.h.b16 %v431
        %v1942 = vunpack.c.l.b16 %v432
        %v1943 = vunpack.c.h.b16 %v432
        %v1944 = vunpack.c.l.b16 %v433
        %v1945 = vunpack.c.h.b16 %v433
        %v1946 = vunpack.c.l.b16 %v434
        %v1947 = vunpack.c.h.b16 %v434
        %v1948 = vunpack.c.l.b16 %v435
        %v1949 = vunpack.c.h.b16 %v435
        %v1950 = vunpack.c.l.b16 %v436
        %v1951 = vunpack.c.h.b16 %v436
        %v1952 = vunpack.c.l.b16 %v437
        %v1953 = vunpack.c.h.b16 %v437
        %v1954 = vunpack.c.l.b16 %v438
        %v1955 = vunpack.c.h.b16 %v438
        %v1956 = vunpack.c.l.b16 %v439
        %v1957 = vunpack.c.h.b16 %v439
        %v1958 = vunpack.c.l.b16 %v440
        %v1959 = vunpack.c.h.b16 %v440
        %v1960 = vunpack.c.l.b16 %v441
        %v1961 = vunpack.c.h.b16 %v441
        %v1962 = vunpack.c.l.b16 %v442
        %v1963 = vunpack.c.h.b16 %v442
        %v1964 = vunpack.c.l.b16 %v443
        %v1965 = vunpack.c.h.b16 %v443
        %v1966 = vunpack.c.l.b16 %v444
        %v1967 = vunpack.c.h.b16 %v444
        %v1968 = vunpack.c.l.b16 %v445
        %v1969 = vunpack.c.h.b16 %v445
        %v1970 = vunpack.c.l.b16 %v446
        %v1971 = vunpack.c.h.b16 %v446
        %v1972 = vunpack.c.l.b16 %v447
        %v1973 = vunpack.c.h.b16 %v447
        %v1974 = vunpack.c.l.b16 %v448
        %v1975 = vunpack.c.h.b16 %v448
        %v1976 = vunpack.c.l.b16 %v449
        %v1977 = vunpack.c.h.b16 %v449
        %v1978 = vunpack.c.l.b16 %v450
        %v1979 = vunpack.c.h.b16 %v450
        %v1980 = vunpack.c.l.b16 %v451
        %v1981 = vunpack.c.h.b16 %v451
        %v1982 = vunpack.c.l.b16 %v452
        %v1983 = vunpack.c.h.b16 %v452
        %v1984 = vunpack.c.l.b16 %v453
        %v1985 = vunpack.c.h.b16 %v453
        %v1986 = vunpack.c.l.b16 %v454
        %v1987 = vunpack.c.h.b16 %v454
        %v1988 = vunpack.c.l.b16 %v455
        %v1989 = vunpack.c.h.b16 %v455
        %v1990 = vunpack.c.l.b16 %v456
        %v1991 = vunpack.c.h.b16 %v456
        %v1992 = vunpack.c.l.b16 %v457
        %v1993 = vunpack.c.h.b16 %v457
        %v1994 = vunpack.c.l.b16 %v458
        %v1995 = vunpack.c.h.b16 %v458
        %v1996 = vunpack.c.l.b16 %v459
        %v1997 = vunpack.c.h.b16 %v459
        %v1998 = vunpack.c.l.b16 %v460
        %v1999 = vunpack.c.h.b16 %v460
        %v2000 = vunpack.c.l.b16 %v461
        %v2001 = vunpack.c.h.b16 %v461
        %v2002 = vunpack.c.l.b16 %v462
        %v2003 = vunpack.c.h.b16 %v462
        %v2004 = vunpack.c.l.b16 %v463
        %v2005 = vunpack.c.h.b16 %v463
        %v2006 = vunpack.c.l.b16 %v464
        %v2007 = vunpack.c.h.b16 %v464
        %v2008 = vunpack.c.l.b16 %v465
        %v2009 = vunpack.c.h.b16 %v465
        %v2010 = vunpack.c.l.b16 %v466
        %v2011 = vunpack.c.h.b16 %v466
        %v2012 = vunpack.c.l.b16 %v467
        %v2013 = vunpack.c.h.b16 %v467
        %v2014 = vunpack.c.l.b16 %v468
        %v2015 = vunpack.c.h.b16 %v468
        %v2016 = vunpack.c.l.b16 %v469
        %v2017 = vunpack.c.h.b16 %v469
        %v2018 = vunpack.c.l.b16 %v470
        %v2019 = vunpack.c.h.b16 %v470
        %v2020 = vunpack.c.l.b16 %v471
        %v2021 = vunpack.c.h.b16 %v471
        %v2022 = vunpack.c.l.b16 %v472
        %v2023 = vunpack.c.h.b16 %v472
        %v2024 = vunpack.c.l.b16 %v473
        %v2025 = vunpack.c.h.b16 %v473
        %v2026 = vunpack.c.l.b16 %v474
        %v2027 = vunpack.c.h.b16 %v474
        %v2028 = vunpack.c.l.b16 %v475
        %v2029 = vunpack.c.h.b16 %v475
        %v2030 = vunpack.c.l.b16 %v476
        %v2031 = vunpack.c.h.b16 %v476
        %v2032 = vunpack.c.l.b16 %v477
        %v2033 = vunpack.c.h.b16 %v477
        %v2034 = vunpack.c.l.b16 %v478
        %v2035 = vunpack.c.h.b16 %v478
        %v2036 = vunpack.c.l.b16 %v479
        %v2037 = vunpack.c.h.b16 %v479
        %v2038 = vunpack.c.l.b16 %v480
        %v2039 = vunpack.c.h.b16 %v480
        %v2040 = vunpack.c.l.b16 %v481
        %v2041 = vunpack.c.h.b16 %v481
        %v2042 = vunpack.c.l.b16 %v482
        %v2043 = vunpack.c.h.b16 %v482
        %v2044 = vunpack.c.l.b16 %v483
        %v2045 = vunpack.c.h.b16 %v483
        %v2046 = vunpack.c.l.b16 %v484
        %v2047 = vunpack.c.h.b16 %v484
        %v2048 = vunpack.c.l.b16 %v485
        %v2049 = vunpack.c.h.b16 %v485
        %v2050 = vunpack.c.l.b16 %v486
        %v2051 = vunpack.c.h.b16 %v486
        %v2052 = vunpack.c.l.b16 %v487
        %v2053 = vunpack.c.h.b16 %v487
        %v2054 = vunpack.c.l.b16 %v488
        %v2055 = vunpack.c.h.b16 %v488
        %v2056 = vunpack.c.l.b16 %v489
        %v2057 = vunpack.c.h.b16 %v489
        %v2058 = vunpack.c.l.b16 %v490
        %v2059 = vunpack.c.h.b16 %v490
        %v2060 = vunpack.c.l.b16 %v491
        %v2061 = vunpack.c.h.b16 %v491
        %v2062 = vunpack.c.l.b16 %v492
        %v2063 = vunpack.c.h.b16 %v492
        %v2064 = vunpack.c.l.b16 %v493
        %v2065 = vunpack.c.h.b16 %v493
        %v2066 = vunpack.c.l.b16 %v494
        %v2067 = vunpack.c.h.b16 %v494
        %v2068 = vunpack.c.l.b16 %v495
        %v2069 = vunpack.c.h.b16 %v495
        %v2070 = vunpack.c.l.b16 %v496
        %v2071 = vunpack.c.h.b16 %v496
        %v2072 = vunpack.c.l.b16 %v497
        %v2073 = vunpack.c.h.b16 %v497
        %v2074 = vunpack.c.l.b16 %v498
        %v2075 = vunpack.c.h.b16 %v498
        %v2076 = vunpack.c.l.b16 %v499
        %v2077 = vunpack.c.h.b16 %v499
        %v2078 = vunpack.c.l.b16 %v500
        %v2079 = vunpack.c.h.b16 %v500
        %v2080 = vunpack.c.l.b16 %v501
        %v2081 = vunpack.c.h.b16 %v501
        %v2082 = vunpack.c.l.b16 %v502
        %v2083 = vunpack.c.h.b16 %v502
        %v2084 = vunpack.c.l.b16 %v503
        %v2085 = vunpack.c.h.b16 %v503
        %v2086 = vunpack.c.l.b16 %v504
        %v2087 = vunpack.c.h.b16 %v504
        %v2088 = vunpack.c.l.b16 %v505
        %v2089 = vunpack.c.h.b16 %v505
        %v2090 = vunpack.c.l.b16 %v506
        %v2091 = vunpack.c.h.b16 %v506
        %v2092 = vunpack.c.l.b16 %v507
        %v2093 = vunpack.c.h.b16 %v507
        %v2094 = vunpack.c.l.b16 %v508
        %v2095 = vunpack.c.h.b16 %v508
        %v2096 = vunpack.c.l.b16 %v509
        %v2097 = vunpack.c.h.b16 %v509
        %v2098 = vunpack.c.l.b16 %v510
        %v2099 = vunpack.c.h.b16 %v510
        %v2100 = vunpack.c.l.b16 %v511
        %v2101 = vunpack.c.h.b16 %v511
        %v2102 = vunpack.c.l.b16 %v512
        %v2103 = vunpack.c.h.b16 %v512
        %v2104 = vunpack.c.l.b16 %v513
        %v2105 = vunpack.c.h.b16 %v513
        %v2106 = vunpack.c.l.b16 %v514
        %v2107 = vunpack.c.h.b16 %v514
        %v2108 = vunpack.c.l.b16 %v515
        %v2109 = vunpack.c.h.b16 %v515
        %v2110 = vunpack.c.l.b16 %v516
        %v2111 = vunpack.c.h.b16 %v516
        %v2112 = vunpack.c.l.b16 %v517
        %v2113 = vunpack.c.h.b16 %v517
        %v2114 = vunpack.c.l.b16 %v518
        %v2115 = vunpack.c.h.b16 %v518
        %v2116 = vunpack.c.l.b16 %v519
        %v2117 = vunpack.c.h.b16 %v519
        %v2118 = vunpack.c.l.b16 %v520
        %v2119 = vunpack.c.h.b16 %v520
        %v2120 = vunpack.c.l.b16 %v521
        %v2121 = vunpack.c.h.b16 %v521
        %v2122 = vunpack.c.l.b16 %v522
        %v2123 = vunpack.c.h.b16 %v522
        %v2124 = vunpack.c.l.b16 %v523
        %v2125 = vunpack.c.h.b16 %v523
        %v2126 = vunpack.c.l.b16 %v524
        %v2127 = vunpack.c.h.b16 %v524
        %v2128 = vunpack.c.l.b16 %v525
        %v2129 = vunpack.c.h.b16 %v525
        %v2130 = vunpack.c.l.b16 %v526
        %v2131 = vunpack.c.h.b16 %v526
        %v2132 = vunpack.c.l.b16 %v527
        %v2133 = vunpack.c.h.b16 %v527
        %v2134 = vunpack.c.l.b16 %v528
        %v2135 = vunpack.c.h.b16 %v528
        %v2136 = vunpack.c.l.b16 %v529
        %v2137 = vunpack.c.h.b16 %v529
        %v2138 = vunpack.c.l.b16 %v530
        %v2139 = vunpack.c.h.b16 %v530
        %v2140 = vunpack.c.l.b16 %v531
        %v2141 = vunpack.c.h.b16 %v531
        %v2142 = vunpack.c.l.b16 %v532
        %v2143 = vunpack.c.h.b16 %v532
        %v2144 = vunpack.c.l.b16 %v533
        %v2145 = vunpack.c.h.b16 %v533
        %v2146 = vunpack.c.l.b16 %v534
        %v2147 = vunpack.c.h.b16 %v534
        %v2148 = vunpack.c.l.b16 %v535
        %v2149 = vunpack.c.h.b16 %v535
        %v2150 = vunpack.c.l.b16 %v536
        %v2151 = vunpack.c.h.b16 %v536
        %v2152 = vunpack.c.l.b16 %v537
        %v2153 = vunpack.c.h.b16 %v537
        %v2154 = vunpack.c.l.b16 %v538
        %v2155 = vunpack.c.h.b16 %v538
        %v2156 = vunpack.c.l.b16 %v539
        %v2157 = vunpack.c.h.b16 %v539
        %v2158 = vunpack.c.l.b16 %v540
        %v2159 = vunpack.c.h.b16 %v540
        %v2160 = vunpack.c.l.b16 %v541
        %v2161 = vunpack.c.h.b16 %v541
        %v2162 = vunpack.c.l.b16 %v542
        %v2163 = vunpack.c.h.b16 %v542
        %v2164 = vunpack.c.l.b16 %v543
        %v2165 = vunpack.c.h.b16 %v543
        %v2166 = vunpack.c.l.b16 %v544
        %v2167 = vunpack.c.h.b16 %v544
        %v2168 = vunpack.c.l.b16 %v545
        %v2169 = vunpack.c.h.b16 %v545
        %v2170 = vunpack.c.l.b16 %v546
        %v2171 = vunpack.c.h.b16 %v546
        %v2172 = vunpack.c.l.b16 %v547
        %v2173 = vunpack.c.h.b16 %v547
        %v2174 = vunpack.c.l.b16 %v548
        %v2175 = vunpack.c.h.b16 %v548
        %v2176 = vunpack.c.l.b16 %v549
        %v2177 = vunpack.c.h.b16 %v549
        %v2178 = vunpack.c.l.b16 %v550
        %v2179 = vunpack.c.h.b16 %v550
        %v2180 = vunpack.c.l.b16 %v551
        %v2181 = vunpack.c.h.b16 %v551
        %v2182 = vunpack.c.l.b16 %v552
        %v2183 = vunpack.c.h.b16 %v552
        %v2184 = vunpack.c.l.b16 %v553
        %v2185 = vunpack.c.h.b16 %v553
        %v2186 = vunpack.c.l.b16 %v554
        %v2187 = vunpack.c.h.b16 %v554
        %v2188 = vunpack.c.l.b16 %v555
        %v2189 = vunpack.c.h.b16 %v555
        %v2190 = vunpack.c.l.b16 %v556
        %v2191 = vunpack.c.h.b16 %v556
        %v2192 = vunpack.c.l.b16 %v557
        %v2193 = vunpack.c.h.b16 %v557
        %v2194 = vunpack.c.l.b16 %v558
        %v2195 = vunpack.c.h.b16 %v558
        %v2196 = vunpack.c.l.b16 %v559
        %v2197 = vunpack.c.h.b16 %v559
        %v2198 = vunpack.c.l.b16 %v560
        %v2199 = vunpack.c.h.b16 %v560
        %v2200 = vunpack.c.l.b16 %v561
        %v2201 = vunpack.c.h.b16 %v561
        %v2202 = vunpack.c.l.b16 %v562
        %v2203 = vunpack.c.h.b16 %v562
        %v2204 = vunpack.c.l.b16 %v563
        %v2205 = vunpack.c.h.b16 %v563
        %v2206 = vunpack.c.l.b16 %v564
        %v2207 = vunpack.c.h.b16 %v564
        %v2208 = vunpack.c.l.b16 %v565
        %v2209 = vunpack.c.h.b16 %v565
        %v2210 = vunpack.c.l.b16 %v566
        %v2211 = vunpack.c.h.b16 %v566
        %v2212 = vunpack.c.l.b16 %v567
        %v2213 = vunpack.c.h.b16 %v567
        %v2214 = vunpack.c.l.b16 %v568
        %v2215 = vunpack.c.h.b16 %v568
        %v2216 = vunpack.c.l.b16 %v569
        %v2217 = vunpack.c.h.b16 %v569
        %v2218 = vunpack.c.l.b16 %v570
        %v2219 = vunpack.c.h.b16 %v570
        %v2220 = vunpack.c.l.b16 %v571
        %v2221 = vunpack.c.h.b16 %v571
        %v2222 = vunpack.c.l.b16 %v572
        %v2223 = vunpack.c.h.b16 %v572
        %v2224 = vunpack.c.l.b16 %v573
        %v2225 = vunpack.c.h.b16 %v573
        %v2226 = vunpack.c.l.b16 %v574
        %v2227 = vunpack.c.h.b16 %v574
        %v2228 = vunpack.c.l.b16 %v575
        %v2229 = vunpack.c.h.b16 %v575
        %v2230 = vunpack.c.l.b16 %v576
        %v2231 = vunpack.c.h.b16 %v576
        %v2232 = vunpack.c.l.b16 %v577
        %v2233 = vunpack.c.h.b16 %v577
        %v2234 = vunpack.c.l.b16 %v578
        %v2235 = vunpack.c.h.b16 %v578
        %v2236 = vunpack.c.l.b16 %v579
        %v2237 = vunpack.c.h.b16 %v579
        %v2238 = vunpack.c.l.b16 %v580
        %v2239 = vunpack.c.h.b16 %v580
        %v2240 = vunpack.c.l.b16 %v581
        %v2241 = vunpack.c.h.b16 %v581
        %v2242 = vunpack.c.l.b16 %v582
        %v2243 = vunpack.c.h.b16 %v582
        %v2244 = vunpack.c.l.b16 %v583
        %v2245 = vunpack.c.h.b16 %v583
        %v2246 = vunpack.c.l.b16 %v584
        %v2247 = vunpack.c.h.b16 %v584
        %v2248 = vunpack.c.l.b16 %v585
        %v2249 = vunpack.c.h.b16 %v585
        %v2250 = vunpack.c.l.b16 %v586
        %v2251 = vunpack.c.h.b16 %v586
        %v2252 = vunpack.c.l.b16 %v587
        %v2253 = vunpack.c.h.b16 %v587
        %v2254 = vunpack.c.l.b16 %v588
        %v2255 = vunpack.c.h.b16 %v588
        %v2256 = vunpack.c.l.b16 %v589
        %v2257 = vunpack.c.h.b16 %v589
        %v2258 = vunpack.c.l.b16 %v590
        %v2259 = vunpack.c.h.b16 %v590
        %v2260 = vunpack.c.l.b16 %v591
        %v2261 = vunpack.c.h.b16 %v591
        %v2262 = vunpack.c.l.b16 %v592
        %v2263 = vunpack.c.h.b16 %v592
        %v2264 = vunpack.c.l.b16 %v593
        %v2265 = vunpack.c.h.b16 %v593
        %v2266 = vunpack.c.l.b16 %v594
        %v2267 = vunpack.c.h.b16 %v594
        %v2268 = vunpack.c.l.b16 %v595
        %v2269 = vunpack.c.h.b16 %v595
        %v2270 = vunpack.c.l.b16 %v596
        %v2271 = vunpack.c.h.b16 %v596
        %v2272 = vunpack.c.l.b16 %v597
        %v2273 = vunpack.c.h.b16 %v597
        %v2274 = vunpack.c.l.b16 %v598
        %v2275 = vunpack.c.h.b16 %v598
        %v2276 = vunpack.c.l.b16 %v599
        %v2277 = vunpack.c.h.b16 %v599
        %v2278 = vunpack.c.l.b16 %v600
        %v2279 = vunpack.c.h.b16 %v600
        %v2280 = vunpack.c.l.b16 %v601
        %v2281 = vunpack.c.h.b16 %v601
        %v2282 = vunpack.c.l.b16 %v602
        %v2283 = vunpack.c.h.b16 %v602
        %v2284 = vunpack.c.l.b16 %v603
        %v2285 = vunpack.c.h.b16 %v603
        %v2286 = vunpack.c.l.b16 %v604
        %v2287 = vunpack.c.h.b16 %v604
        %v2288 = vunpack.c.l.b16 %v605
        %v2289 = vunpack.c.h.b16 %v605
        %v2290 = vunpack.c.l.b16 %v606
        %v2291 = vunpack.c.h.b16 %v606
        %v2292 = vunpack.c.l.b16 %v607
        %v2293 = vunpack.c.h.b16 %v607
        %v2294 = vunpack.c.l.b16 %v608
        %v2295 = vunpack.c.h.b16 %v608
        %v2296 = vunpack.c.l.b16 %v609
        %v2297 = vunpack.c.h.b16 %v609
        %v2298 = vunpack.c.l.b16 %v610
        %v2299 = vunpack.c.h.b16 %v610
        %v2300 = vunpack.c.l.b16 %v611
        %v2301 = vunpack.c.h.b16 %v611
        %v2302 = vunpack.c.l.b16 %v612
        %v2303 = vunpack.c.h.b16 %v612
        %v2304 = vunpack.c.l.b16 %v613
        %v2305 = vunpack.c.h.b16 %v613
        %v2306 = vunpack.c.l.b16 %v614
        %v2307 = vunpack.c.h.b16 %v614
        %v2308 = vunpack.c.l.b16 %v615
        %v2309 = vunpack.c.h.b16 %v615
        %v2310 = vunpack.c.l.b16 %v616
        %v2311 = vunpack.c.h.b16 %v616
        %v2312 = vunpack.c.l.b16 %v617
        %v2313 = vunpack.c.h.b16 %v617
        %v2314 = vunpack.c.l.b16 %v618
        %v2315 = vunpack.c.h.b16 %v618
        %v2316 = vunpack.c.l.b16 %v619
        %v2317 = vunpack.c.h.b16 %v619
        %v2318 = vunpack.c.l.b16 %v620
        %v2319 = vunpack.c.h.b16 %v620
        %v2320 = vunpack.c.l.b16 %v621
        %v2321 = vunpack.c.h.b16 %v621
        %v2322 = vunpack.c.l.b16 %v622
        %v2323 = vunpack.c.h.b16 %v622
        %v2324 = vunpack.c.l.b16 %v623
        %v2325 = vunpack.c.h.b16 %v623
        %v2326 = vunpack.c.l.b16 %v624
        %v2327 = vunpack.c.h.b16 %v624
        %v2328 = vunpack.c.l.b16 %v625
        %v2329 = vunpack.c.h.b16 %v625
        %v2330 = vunpack.c.l.b16 %v626
        %v2331 = vunpack.c.h.b16 %v626
        %v2332 = vunpack.c.l.b16 %v627
        %v2333 = vunpack.c.h.b16 %v627
        %v2334 = vunpack.c.l.b16 %v628
        %v2335 = vunpack.c.h.b16 %v628
        %v2336 = vunpack.c.l.b16 %v629
        %v2337 = vunpack.c.h.b16 %v629
        %v2338 = vunpack.c.l.b16 %v630
        %v2339 = vunpack.c.h.b16 %v630
        %v2340 = vunpack.c.l.b16 %v631
        %v2341 = vunpack.c.h.b16 %v631
        %v2342 = vunpack.c.l.b16 %v632
        %v2343 = vunpack.c.h.b16 %v632
        %v2344 = vunpack.c.l.b16 %v633
        %v2345 = vunpack.c.h.b16 %v633
        %v2346 = vunpack.c.l.b16 %v634
        %v2347 = vunpack.c.h.b16 %v634
        %v2348 = vunpack.c.l.b16 %v635
        %v2349 = vunpack.c.h.b16 %v635
        %v2350 = vunpack.c.l.b16 %v636
        %v2351 = vunpack.c.h.b16 %v636
        %v2352 = vunpack.c.l.b16 %v637
        %v2353 = vunpack.c.h.b16 %v637
        %v2354 = vunpack.c.l.b16 %v638
        %v2355 = vunpack.c.h.b16 %v638
        %v2356 = vunpack.c.l.b16 %v639
        %v2357 = vunpack.c.h.b16 %v639
        %v2358 = vunpack.c.l.b16 %v640
        %v2359 = vunpack.c.h.b16 %v640
        %v2360 = vunpack.c.l.b16 %v641
        %v2361 = vunpack.c.h.b16 %v641
        %v2362 = vunpack.c.l.b16 %v642
        %v2363 = vunpack.c.h.b16 %v642
        %v2364 = vunpack.c.l.b16 %v643
        %v2365 = vunpack.c.h.b16 %v643
        %v2366 = vunpack.c.l.b16 %v644
        %v2367 = vunpack.c.h.b16 %v644
        %v2368 = vpack.c.b16 %v1504, %v1480
        %v2369 = vpack.c.b16 %v1505, %v1481
        %v2370 = vpack.c.b16 %v1506, %v1482
        %v2371 = vpack.c.b16 %v1507, %v1483
        %v2372 = vpack.c.b16 %v1508, %v1484
        %v2373 = vpack.c.b16 %v1509, %v1485
        %v2374 = vpack.c.b16 %v1510, %v1486
        %v2375 = vpack.c.b16 %v1511, %v1487
        %v2376 = vpack.c.b16 %v1512, %v1488
        %v2377 = vpack.c.b16 %v1513, %v1489
        %v2378 = vpack.c.b16 %v1514, %v1490
        %v2379 = vpack.c.b16 %v1515, %v1491
        %v2380 = vpack.c.b16 %v1516, %v1492
        %v2381 = vpack.c.b16 %v1517, %v1493
        %v2382 = vpack.c.b16 %v1518, %v1494
        %v2383 = vpack.c.b16 %v1519, %v1495
        %v2384 = vpack.c.b16 %v1520, %v1496
        %v2385 = vpack.c.b16 %v1521, %v1497
        %v2386 = vpack.c.b16 %v1522, %v1498
        %v2387 = vpack.c.b16 %v1523, %v1499
        %v2388 = vpack.c.b16 %v1524, %v1500
        %v2389 = vpack.c.b16 %v1525, %v1501
        %v2390 = vpack.c.b16 %v1526, %v1502
        %v2391 = vpack.c.b16 %v1527, %v1503
        %v2392 = vpack.c.b16 %v1552, %v1528
        %v2393 = vpack.c.b16 %v1553, %v1529
        %v2394 = vpack.c.b16 %v1554, %v1530
        %v2395 = vpack.c.b16 %v1555, %v1531
        %v2396 = vpack.c.b16 %v1556, %v1532
        %v2397 = vpack.c.b16 %v1557, %v1533
        %v2398 = vpack.c.b16 %v1558, %v1534
        %v2399 = vpack.c.b16 %v1559, %v1535
        %v2400 = vpack.c.b16 %v1560, %v1536
        %v2401 = vpack.c.b16 %v1561, %v1537
        %v2402 = vpack.c.b16 %v1562, %v1538
        %v2403 = vpack.c.b16 %v1563, %v1539
        %v2404 = vpack.c.b16 %v1564, %v1540
        %v2405 = vpack.c.b16 %v1565, %v1541
        %v2406 = vpack.c.b16 %v1566, %v1542
        %v2407 = vpack.c.b16 %v1567, %v1543
        %v2408 = vpack.c.b16 %v1568, %v1544
        %v2409 = vpack.c.b16 %v1569, %v1545
        %v2410 = vpack.c.b16 %v1570, %v1546
        %v2411 = vpack.c.b16 %v1571, %v1547
        %v2412 = vpack.c.b16 %v1572, %v1548
        %v2413 = vpack.c.b16 %v1573, %v1549
        %v2414 = vpack.c.b16 %v1574, %v1550
        %v2415 = vpack.c.b16 %v1575, %v1551
        %v2416 = vpack.c.b16 %v1600, %v1576
        %v2417 = vpack.c.b16 %v1601, %v1577
        %v2418 = vpack.c.b16 %v1602, %v1578
        %v2419 = vpack.c.b16 %v1603, %v1579
        %v2420 = vpack.c.b16 %v1604, %v1580
        %v2421 = vpack.c.b16 %v1605, %v1581
        %v2422 = vpack.c.b16 %v1606, %v1582
        %v2423 = vpack.c.b16 %v1607, %v1583
        %v2424 = vpack.c.b16 %v1608, %v1584
        %v2425 = vpack.c.b16 %v1609, %v1585
        %v2426 = vpack.c.b16 %v1610, %v1586
        %v2427 = vpack.c.b16 %v1611, %v1587
        %v2428 = vpack.c.b16 %v1612, %v1588
        %v2429 = vpack.c.b16 %v1613, %v1589
        %v2430 = vpack.c.b16 %v1614, %v1590
        %v2431 = vpack.c.b16 %v1615, %v1591
        %v2432 = vpack.c.b16 %v1616, %v1592
        %v2433 = vpack.c.b16 %v1617, %v1593
        %v2434 = vpack.c.b16 %v1618, %v1594
        %v2435 = vpack.c.b16 %v1619, %v1595
        %v2436 = vpack.c.b16 %v1620, %v1596
        %v2437 = vpack.c.b16 %v1621, %v1597
        %v2438 = vpack.c.b16 %v1622, %v1598
        %v2439 = vpack.c.b16 %v1623, %v1599
        %v2440 = vpack.c.b16 %v1648, %v1624
        %v2441 = vpack.c.b16 %v1649, %v1625
        %v2442 = vpack.c.b16 %v1650, %v1626
        %v2443 = vpack.c.b16 %v1651, %v1627
        %v2444 = vpack.c.b16 %v1652, %v1628
        %v2445 = vpack.c.b16 %v1653, %v1629
        %v2446 = vpack.c.b16 %v1654, %v1630
        %v2447 = vpack.c.b16 %v1655, %v1631
        %v2448 = vpack.c.b16 %v1656, %v1632
        %v2449 = vpack.c.b16 %v1657, %v1633
        %v2450 = vpack.c.b16 %v1658, %v1634
        %v2451 = vpack.c.b16 %v1659, %v1635
        %v2452 = vpack.c.b16 %v1660, %v1636
        %v2453 = vpack.c.b16 %v1661, %v1637
        %v2454 = vpack.c.b16 %v1662, %v1638
        %v2455 = vpack.c.b16 %v1663, %v1639
        %v2456 = vpack.c.b16 %v1664, %v1640
        %v2457 = vpack.c.b16 %v1665, %v1641
        %v2458 = vpack.c.b16 %v1666, %v1642
        %v2459 = vpack.c.b16 %v1667, %v1643
        %v2460 = vpack.c.b16 %v1668, %v1644
        %v2461 = vpack.c.b16 %v1669, %v1645
        %v2462 = vpack.c.b16 %v1670, %v1646
        %v2463 = vpack.c.b16 %v1671, %v1647
        %v2464 = vpack.c.b16 %v1696, %v1672
        %v2465 = vpack.c.b16 %v1697, %v1673
        %v2466 = vpack.c.b16 %v1698, %v1674
        %v2467 = vpack.c.b16 %v1699, %v1675
        %v2468 = vpack.c.b16 %v1700, %v1676
        %v2469 = vpack.c.b16 %v1701, %v1677
        %v2470 = vpack.c.b16 %v1702, %v1678
        %v2471 = vpack.c.b16 %v1703, %v1679
        %v2472 = vpack.c.b16 %v1704, %v1680
        %v2473 = vpack.c.b16 %v1705, %v1681
        %v2474 = vpack.c.b16 %v1706, %v1682
        %v2475 = vpack.c.b16 %v1707, %v1683
        %v2476 = vpack.c.b16 %v1708, %v1684
        %v2477 = vpack.c.b16 %v1709, %v1685
        %v2478 = vpack.c.b16 %v1710, %v1686
        %v2479 = vpack.c.b16 %v1711, %v1687
        %v2480 = vpack.c.b16 %v1712, %v1688
        %v2481 = vpack.c.b16 %v1713, %v1689
        %v2482 = vpack.c.b16 %v1714, %v1690
        %v2483 = vpack.c.b16 %v1715, %v1691
        %v2484 = vpack.c.b16 %v1716, %v1692
        %v2485 = vpack.c.b16 %v1717, %v1693
        %v2486 = vpack.c.b16 %v1718, %v1694
        %v2487 = vpack.c.b16 %v1719, %v1695
        %v2488 = vpack.c.b16 %v1744, %v1720
        %v2489 = vpack.c.b16 %v1745, %v1721
        %v2490 = vpack.c.b16 %v1746, %v1722
        %v2491 = vpack.c.b16 %v1747, %v1723
        %v2492 = vpack.c.b16 %v1748, %v1724
        %v2493 = vpack.c.b16 %v1749, %v1725
        %v2494 = vpack.c.b16 %v1750, %v1726
        %v2495 = vpack.c.b16 %v1751, %v1727
        %v2496 = vpack.c.b16 %v1752, %v1728
        %v2497 = vpack.c.b16 %v1753, %v1729
        %v2498 = vpack.c.b16 %v1754, %v1730
        %v2499 = vpack.c.b16 %v1755, %v1731
        %v2500 = vpack.c.b16 %v1756, %v1732
        %v2501 = vpack.c.b16 %v1757, %v1733
        %v2502 = vpack.c.b16 %v1758, %v1734
        %v2503 = vpack.c.b16 %v1759, %v1735
        %v2504 = vpack.c.b16 %v1760, %v1736
        %v2505 = vpack.c.b16 %v1761, %v1737
        %v2506 = vpack.c.b16 %v1762, %v1738
        %v2507 = vpack.c.b16 %v1763, %v1739
        %v2508 = vpack.c.b16 %v1764, %v1740
        %v2509 = vpack.c.b16 %v1765, %v1741
        %v2510 = vpack.c.b16 %v1766, %v1742
        %v2511 = vpack.c.b16 %v1767, %v1743
        %v2512 = vpack.c.b16 %v1792, %v1768
        %v2513 = vpack.c.b16 %v1793, %v1769
        %v2514 = vpack.c.b16 %v1794, %v1770
        %v2515 = vpack.c.b16 %v1795, %v1771
        %v2516 = vpack.c.b16 %v1796, %v1772
        %v2517 = vpack.c.b16 %v1797, %v1773
        %v2518 = vpack.c.b16 %v1798, %v1774
        %v2519 = vpack.c.b16 %v1799, %v1775
        %v2520 = vpack.c.b16 %v1800, %v1776
        %v2521 = vpack.c.b16 %v1801, %v1777
        %v2522 = vpack.c.b16 %v1802, %v1778
        %v2523 = vpack.c.b16 %v1803, %v1779
        %v2524 = vpack.c.b16 %v1804, %v1780
        %v2525 = vpack.c.b16 %v1805, %v1781
        %v2526 = vpack.c.b16 %v1806, %v1782
        %v2527 = vpack.c.b16 %v1807, %v1783
        %v2528 = vpack.c.b16 %v1808, %v1784
        %v2529 = vpack.c.b16 %v1809, %v1785
        %v2530 = vpack.c.b16 %v1810, %v1786
        %v2531 = vpack.c.b16 %v1811, %v1787
        %v2532 = vpack.c.b16 %v1812, %v1788
        %v2533 = vpack.c.b16 %v1813, %v1789
        %v2534 = vpack.c.b16 %v1814, %v1790
        %v2535 = vpack.c.b16 %v1815, %v1791
        %v2536 = vpack.c.b16 %v1840, %v1816
        %v2537 = vpack.c.b16 %v1841, %v1817
        %v2538 = vpack.c.b16 %v1842, %v1818
        %v2539 = vpack.c.b16 %v1843, %v1819
        %v2540 = vpack.c.b16 %v1844, %v1820
        %v2541 = vpack.c.b16 %v1845, %v1821
        %v2542 = vpack.c.b16 %v1846, %v1822
        %v2543 = vpack.c.b16 %v1847, %v1823
        %v2544 = vpack.c.b16 %v1848, %v1824
        %v2545 = vpack.c.b16 %v1849, %v1825
        %v2546 = vpack.c.b16 %v1850, %v1826
        %v2547 = vpack.c.b16 %v1851, %v1827
        %v2548 = vpack.c.b16 %v1852, %v1828
        %v2549 = vpack.c.b16 %v1853, %v1829
        %v2550 = vpack.c.b16 %v1854, %v1830
        %v2551 = vpack.c.b16 %v1855, %v1831
        %v2552 = vpack.c.b16 %v1856, %v1832
        %v2553 = vpack.c.b16 %v1857, %v1833
        %v2554 = vpack.c.b16 %v1858, %v1834
        %v2555 = vpack.c.b16 %v1859, %v1835
        %v2556 = vpack.c.b16 %v1860, %v1836
        %v2557 = vpack.c.b16 %v1861, %v1837
        %v2558 = vpack.c.b16 %v1862, %v1838
        %v2559 = vpack.c.b16 %v1863, %v1839
        %v2560 = vpack.c.b16 %v1888, %v1864
        %v2561 = vpack.c.b16 %v1889, %v1865
        %v2562 = vpack.c.b16 %v1890, %v1866
        %v2563 = vpack.c.b16 %v1891, %v1867
        %v2564 = vpack.c.b16 %v1892, %v1868
        %v2565 = vpack.c.b16 %v1893, %v1869
        %v2566 = vpack.c.b16 %v1894, %v1870
        %v2567 = vpack.c.b16 %v1895, %v1871
        %v2568 = vpack.c.b16 %v1896, %v1872
        %v2569 = vpack.c.b16 %v1897, %v1873
        %v2570 = vpack.c.b16 %v1898, %v1874
        %v2571 = vpack.c.b16 %v1899, %v1875
        %v2572 = vpack.c.b16 %v1900, %v1876
        %v2573 = vpack.c.b16 %v1901, %v1877
        %v2574 = vpack.c.b16 %v1902, %v1878
        %v2575 = vpack.c.b16 %v1903, %v1879
        %v2576 = vpack.c.b16 %v1904, %v1880
        %v2577 = vpack.c.b16 %v1905, %v1881
        %v2578 = vpack.c.b16 %v1906, %v1882
        %v2579 = vpack.c.b16 %v1907, %v1883
        %v2580 = vpack.c.b16 %v1908, %v1884
        %v2581 = vpack.c.b16 %v1909, %v1885
        %v2582 = vpack.c.b16 %v1910, %v1886
        %v2583 = vpack.c.b16 %v1911, %v1887
        %v2584 = vpack.c.b16 %v1936, %v1912
        %v2585 = vpack.c.b16 %v1937, %v1913
        %v2586 = vpack.c.b16 %v1938, %v1914
        %v2587 = vpack.c.b16 %v1939, %v1915
        %v2588 = vpack.c.b16 %v1940, %v1916
        %v2589 = vpack.c.b16 %v1941, %v1917
        %v2590 = vpack.c.b16 %v1942, %v1918
        %v2591 = vpack.c.b16 %v1943, %v1919
        %v2592 = vpack.c.b16 %v1944, %v1920
        %v2593 = vpack.c.b16 %v1945, %v1921
        %v2594 = vpack.c.b16 %v1946, %v1922
        %v2595 = vpack.c.b16 %v1947, %v1923
        %v2596 = vpack.c.b16 %v1948, %v1924
        %v2597 = vpack.c.b16 %v1949, %v1925
        %v2598 = vpack.c.b16 %v1950, %v1926
        %v2599 = vpack.c.b16 %v1951, %v1927
        %v2600 = vpack.c.b16 %v1952, %v1928
        %v2601 = vpack.c.b16 %v1953, %v1929
        %v2602 = vpack.c.b16 %v1954, %v1930
        %v2603 = vpack.c.b16 %v1955, %v1931
        %v2604 = vpack.c.b16 %v1956, %v1932
        %v2605 = vpack.c.b16 %v1957, %v1933
        %v2606 = vpack.c.b16 %v1958, %v1934
        %v2607 = vpack.c.b16 %v1959, %v1935
        %v2608 = vpack.c.b16 %v1984, %v1960
        %v2609 = vpack.c.b16 %v1985, %v1961
        %v2610 = vpack.c.b16 %v1986, %v1962
        %v2611 = vpack.c.b16 %v1987, %v1963
        %v2612 = vpack.c.b16 %v1988, %v1964
        %v2613 = vpack.c.b16 %v1989, %v1965
        %v2614 = vpack.c.b16 %v1990, %v1966
        %v2615 = vpack.c.b16 %v1991, %v1967
        %v2616 = vpack.c.b16 %v1992, %v1968
        %v2617 = vpack.c.b16 %v1993, %v1969
        %v2618 = vpack.c.b16 %v1994, %v1970
        %v2619 = vpack.c.b16 %v1995, %v1971
        %v2620 = vpack.c.b16 %v1996, %v1972
        %v2621 = vpack.c.b16 %v1997, %v1973
        %v2622 = vpack.c.b16 %v1998, %v1974
        %v2623 = vpack.c.b16 %v1999, %v1975
        %v2624 = vpack.c.b16 %v2000, %v1976
        %v2625 = vpack.c.b16 %v2001, %v1977
        %v2626 = vpack.c.b16 %v2002, %v1978
        %v2627 = vpack.c.b16 %v2003, %v1979
        %v2628 = vpack.c.b16 %v2004, %v1980
        %v2629 = vpack.c.b16 %v2005, %v1981
        %v2630 = vpack.c.b16 %v2006, %v1982
        %v2631 = vpack.c.b16 %v2007, %v1983
        %v2632 = vpack.c.b16 %v2032, %v2008
        %v2633 = vpack.c.b16 %v2033, %v2009
        %v2634 = vpack.c.b16 %v2034, %v2010
        %v2635 = vpack.c.b16 %v2035, %v2011
        %v2636 = vpack.c.b16 %v2036, %v2012
        %v2637 = vpack.c.b16 %v2037, %v2013
        %v2638 = vpack.c.b16 %v2038, %v2014
        %v2639 = vpack.c.b16 %v2039, %v2015
        %v2640 = vpack.c.b16 %v2040, %v2016
        %v2641 = vpack.c.b16 %v2041, %v2017
        %v2642 = vpack.c.b16 %v2042, %v2018
        %v2643 = vpack.c.b16 %v2043, %v2019
        %v2644 = vpack.c.b16 %v2044, %v2020
        %v2645 = vpack.c.b16 %v2045, %v2021
        %v2646 = vpack.c.b16 %v2046, %v2022
        %v2647 = vpack.c.b16 %v2047, %v2023
        %v2648 = vpack.c.b16 %v2048, %v2024
        %v2649 = vpack.c.b16 %v2049, %v2025
        %v2650 = vpack.c.b16 %v2050, %v2026
        %v2651 = vpack.c.b16 %v2051, %v2027
        %v2652 = vpack.c.b16 %v2052, %v2028
        %v2653 = vpack.c.b16 %v2053, %v2029
        %v2654 = vpack.c.b16 %v2054, %v2030
        %v2655 = vpack.c.b16 %v2055, %v2031
        %v2656 = vpack.c.b16 %v2080, %v2056
        %v2657 = vpack.c.b16 %v2081, %v2057
        %v2658 = vpack.c.b16 %v2082, %v2058
        %v2659 = vpack.c.b16 %v2083, %v2059
        %v2660 = vpack.c.b16 %v2084, %v2060
        %v2661 = vpack.c.b16 %v2085, %v2061
        %v2662 = vpack.c.b16 %v2086, %v2062
        %v2663 = vpack.c.b16 %v2087, %v2063
        %v2664 = vpack.c.b16 %v2088, %v2064
        %v2665 = vpack.c.b16 %v2089, %v2065
        %v2666 = vpack.c.b16 %v2090, %v2066
        %v2667 = vpack.c.b16 %v2091, %v2067
        %v2668 = vpack.c.b16 %v2092, %v2068
        %v2669 = vpack.c.b16 %v2093, %v2069
        %v2670 = vpack.c.b16 %v2094, %v2070
        %v2671 = vpack.c.b16 %v2095, %v2071
        %v2672 = vpack.c.b16 %v2096, %v2072
        %v2673 = vpack.c.b16 %v2097, %v2073
        %v2674 = vpack.c.b16 %v2098, %v2074
        %v2675 = vpack.c.b16 %v2099, %v2075
        %v2676 = vpack.c.b16 %v2100, %v2076
        %v2677 = vpack.c.b16 %v2101, %v2077
        %v2678 = vpack.c.b16 %v2102, %v2078
        %v2679 = vpack.c.b16 %v2103, %v2079
        %v2680 = vpack.c.b16 %v2128, %v2104
        %v2681 = vpack.c.b16 %v2129, %v2105
        %v2682 = vpack.c.b16 %v2130, %v2106
        %v2683 = vpack.c.b16 %v2131, %v2107
        %v2684 = vpack.c.b16 %v2132, %v2108
        %v2685 = vpack.c.b16 %v2133, %v2109
        %v2686 = vpack.c.b16 %v2134, %v2110
        %v2687 = vpack.c.b16 %v2135, %v2111
        %v2688 = vpack.c.b16 %v2136, %v2112
        %v2689 = vpack.c.b16 %v2137, %v2113
        %v2690 = vpack.c.b16 %v2138, %v2114
        %v2691 = vpack.c.b16 %v2139, %v2115
        %v2692 = vpack.c.b16 %v2140, %v2116
        %v2693 = vpack.c.b16 %v2141, %v2117
        %v2694 = vpack.c.b16 %v2142, %v2118
        %v2695 = vpack.c.b16 %v2143, %v2119
        %v2696 = vpack.c.b16 %v2144, %v2120
        %v2697 = vpack.c.b16 %v2145, %v2121
        %v2698 = vpack.c.b16 %v2146, %v2122
        %v2699 = vpack.c.b16 %v2147, %v2123
        %v2700 = vpack.c.b16 %v2148, %v2124
        %v2701 = vpack.c.b16 %v2149, %v2125
        %v2702 = vpack.c.b16 %v2150, %v2126
        %v2703 = vpack.c.b16 %v2151, %v2127
        %v2704 = vpack.c.b16 %v2176, %v2152
        %v2705 = vpack.c.b16 %v2177, %v2153
        %v2706 = vpack.c.b16 %v2178, %v2154
        %v2707 = vpack.c.b16 %v2179, %v2155
        %v2708 = vpack.c.b16 %v2180, %v2156
        %v2709 = vpack.c.b16 %v2181, %v2157
        %v2710 = vpack.c.b16 %v2182, %v2158
        %v2711 = vpack.c.b16 %v2183, %v2159
        %v2712 = vpack.c.b16 %v2184, %v2160
        %v2713 = vpack.c.b16 %v2185, %v2161
        %v2714 = vpack.c.b16 %v2186, %v2162
        %v2715 = vpack.c.b16 %v2187, %v2163
        %v2716 = vpack.c.b16 %v2188, %v2164
        %v2717 = vpack.c.b16 %v2189, %v2165
        %v2718 = vpack.c.b16 %v2190, %v2166
        %v2719 = vpack.c.b16 %v2191, %v2167
        %v2720 = vpack.c.b16 %v2192, %v2168
        %v2721 = vpack.c.b16 %v2193, %v2169
        %v2722 = vpack.c.b16 %v2194, %v2170
        %v2723 = vpack.c.b16 %v2195, %v2171
        %v2724 = vpack.c.b16 %v2196, %v2172
        %v2725 = vpack.c.b16 %v2197, %v2173
        %v2726 = vpack.c.b16 %v2198, %v2174
        %v2727 = vpack.c.b16 %v2199, %v2175
        %v2728 = vpack.c.b16 %v2224, %v2200
        %v2729 = vpack.c.b16 %v2225, %v2201
        %v2730 = vpack.c.b16 %v2226, %v2202
        %v2731 = vpack.c.b16 %v2227, %v2203
        %v2732 = vpack.c.b16 %v2228, %v2204
        %v2733 = vpack.c.b16 %v2229, %v2205
        %v2734 = vpack.c.b16 %v2230, %v2206
        %v2735 = vpack.c.b16 %v2231, %v2207
        %v2736 = vpack.c.b16 %v2232, %v2208
        %v2737 = vpack.c.b16 %v2233, %v2209
        %v2738 = vpack.c.b16 %v2234, %v2210
        %v2739 = vpack.c.b16 %v2235, %v2211
        %v2740 = vpack.c.b16 %v2236, %v2212
        %v2741 = vpack.c.b16 %v2237, %v2213
        %v2742 = vpack.c.b16 %v2238, %v2214
        %v2743 = vpack.c.b16 %v2239, %v2215
        %v2744 = vpack.c.b16 %v2240, %v2216
        %v2745 = vpack.c.b16 %v2241, %v2217
        %v2746 = vpack.c.b16 %v2242, %v2218
        %v2747 = vpack.c.b16 %v2243, %v2219
        %v2748 = vpack.c.b16 %v2244, %v2220
        %v2749 = vpack.c.b16 %v2245, %v2221
        %v2750 = vpack.c.b16 %v2246, %v2222
        %v2751 = vpack.c.b16 %v2247, %v2223
        %v2752 = vpack.c.b16 %v2272, %v2248
        %v2753 = vpack.c.b16 %v2273, %v2249
        %v2754 = vpack.c.b16 %v2274, %v2250
        %v2755 = vpack.c.b16 %v2275, %v2251
        %v2756 = vpack.c.b16 %v2276, %v2252
        %v2757 = vpack.c.b16 %v2277, %v2253
        %v2758 = vpack.c.b16 %v2278, %v2254
        %v2759 = vpack.c.b16 %v2279, %v2255
        %v2760 = vpack.c.b16 %v2280, %v2256
        %v2761 = vpack.c.b16 %v2281, %v2257
        %v2762 = vpack.c.b16 %v2282, %v2258
        %v2763 = vpack.c.b16 %v2283, %v2259
        %v2764 = vpack.c.b16 %v2284, %v2260
        %v2765 = vpack.c.b16 %v2285, %v2261
        %v2766 = vpack.c.b16 %v2286, %v2262
        %v2767 = vpack.c.b16 %v2287, %v2263
        %v2768 = vpack.c.b16 %v2288, %v2264
        %v2769 = vpack.c.b16 %v2289, %v2265
        %v2770 = vpack.c.b16 %v2290, %v2266
        %v2771 = vpack.c.b16 %v2291, %v2267
        %v2772 = vpack.c.b16 %v2292, %v2268
        %v2773 = vpack.c.b16 %v2293, %v2269
        %v2774 = vpack.c.b16 %v2294, %v2270
        %v2775 = vpack.c.b16 %v2295, %v2271
        %v2776 = vpack.c.b16 %v2320, %v2296
        %v2777 = vpack.c.b16 %v2321, %v2297
        %v2778 = vpack.c.b16 %v2322, %v2298
        %v2779 = vpack.c.b16 %v2323, %v2299
        %v2780 = vpack.c.b16 %v2324, %v2300
        %v2781 = vpack.c.b16 %v2325, %v2301
        %v2782 = vpack.c.b16 %v2326, %v2302
        %v2783 = vpack.c.b16 %v2327, %v2303
        %v2784 = vpack.c.b16 %v2328, %v2304
        %v2785 = vpack.c.b16 %v2329, %v2305
        %v2786 = vpack.c.b16 %v2330, %v2306
        %v2787 = vpack.c.b16 %v2331, %v2307
        %v2788 = vpack.c.b16 %v2332, %v2308
        %v2789 = vpack.c.b16 %v2333, %v2309
        %v2790 = vpack.c.b16 %v2334, %v2310
        %v2791 = vpack.c.b16 %v2335, %v2311
        %v2792 = vpack.c.b16 %v2336, %v2312
        %v2793 = vpack.c.b16 %v2337, %v2313
        %v2794 = vpack.c.b16 %v2338, %v2314
        %v2795 = vpack.c.b16 %v2339, %v2315
        %v2796 = vpack.c.b16 %v2340, %v2316
        %v2797 = vpack.c.b16 %v2341, %v2317
        %v2798 = vpack.c.b16 %v2342, %v2318
        %v2799 = vpack.c.b16 %v2343, %v2319
        %v2800 = vpack.c.b16 %v2344, %v2344
        %v2801 = vpack.c.b16 %v2345, %v2345
        %v2802 = vpack.c.b16 %v2346, %v2346
        %v2803 = vpack.c.b16 %v2347, %v2347
        %v2804 = vpack.c.b16 %v2348, %v2348
        %v2805 = vpack.c.b16 %v2349, %v2349
        %v2806 = vpack.c.b16 %v2350, %v2350
        %v2807 = vpack.c.b16 %v2351, %v2351
        %v2808 = vpack.c.b16 %v2352, %v2352
        %v2809 = vpack.c.b16 %v2353, %v2353
        %v2810 = vpack.c.b16 %v2354, %v2354
        %v2811 = vpack.c.b16 %v2355, %v2355
        %v2812 = vpack.c.b16 %v2356, %v2356
        %v2813 = vpack.c.b16 %v2357, %v2357
        %v2814 = vpack.c.b16 %v2358, %v2358
        %v2815 = vpack.c.b16 %v2359, %v2359
        %v2816 = vpack.c.b16 %v2360, %v2360
        %v2817 = vpack.c.b16 %v2361, %v2361
        %v2818 = vpack.c.b16 %v2362, %v2362
        %v2819 = vpack.c.b16 %v2363, %v2363
        %v2820 = vpack.c.b16 %v2364, %v2364
        %v2821 = vpack.c.b16 %v2365, %v2365
        %v2822 = vpack.c.b16 %v2366, %v2366
        %v2823 = vpack.c.b16 %v2367, %v2367
        %v3664 = vunpack.c.l.b16 %v645
        %v3665 = vunpack.c.l.b16 %v646
        %v3666 = vunpack.c.l.b16 %v647
        %v3667 = vunpack.c.l.b16 %v648
        %v3668 = vunpack.c.l.b16 %v649
        %v3669 = vunpack.c.l.b16 %v650
        %v3670 = vunpack.c.l.b16 %v651
        %v3671 = vunpack.c.l.b16 %v652
        %v3672 = vunpack.c.l.b16 %v653
        %v3673 = vunpack.c.l.b16 %v654
        %v3674 = vunpack.c.l.b16 %v655
        %v3675 = vunpack.c.l.b16 %v656
        %v3676 = vunpack.c.l.b16 %v657
        %v3677 = vunpack.c.l.b16 %v658
        %v3678 = vunpack.c.l.b16 %v659
        %v3679 = vunpack.c.l.b16 %v660
        %v3680 = vunpack.c.l.b16 %v661
        %v3681 = vunpack.c.l.b16 %v662
        %v3682 = vunpack.c.l.b16 %v663
        %v3683 = vunpack.c.l.b16 %v664
        %v3684 = vunpack.c.l.b16 %v665
        %v3685 = vunpack.c.l.b16 %v666
        %v3686 = vunpack.c.l.b16 %v667
        %v3687 = vunpack.c.l.b16 %v668
        %v3688 = vunpack.c.l.b16 %v669
        %v3689 = vunpack.c.l.b16 %v670
        %v3690 = vunpack.c.l.b16 %v671
        %v3691 = vunpack.c.l.b16 %v672
        %v3692 = vunpack.c.l.b16 %v673
        %v3693 = vunpack.c.l.b16 %v674
        %v3694 = vunpack.c.l.b16 %v675
        %v3695 = vunpack.c.l.b16 %v676
        %v3696 = vunpack.c.l.b16 %v677
        %v3697 = vunpack.c.l.b16 %v678
        %v3698 = vunpack.c.l.b16 %v679
        %v3699 = vunpack.c.l.b16 %v680
        %v3700 = vunpack.c.l.b16 %v681
        %v3701 = vunpack.c.l.b16 %v682
        %v3702 = vunpack.c.l.b16 %v683
        %v3703 = vunpack.c.l.b16 %v684
        %v3704 = vunpack.c.l.b16 %v685
        %v3705 = vunpack.c.l.b16 %v686
        %v3706 = vunpack.c.l.b16 %v687
        %v3707 = vunpack.c.l.b16 %v688
        %v3708 = vunpack.c.l.b16 %v689
        %v3709 = vunpack.c.l.b16 %v690
        %v3710 = vunpack.c.l.b16 %v691
        %v3711 = vunpack.c.l.b16 %v692
        %v3712 = vunpack.c.l.b16 %v693
        %v3713 = vunpack.c.l.b16 %v694
        %v3714 = vunpack.c.l.b16 %v695
        %v3715 = vunpack.c.l.b16 %v696
        %v3716 = vunpack.c.l.b16 %v697
        %v3717 = vunpack.c.l.b16 %v698
        %v3718 = vunpack.c.l.b16 %v699
        %v3719 = vunpack.c.l.b16 %v700
        %v3720 = vunpack.c.l.b16 %v701
        %v3721 = vunpack.c.l.b16 %v702
        %v3722 = vunpack.c.l.b16 %v703
        %v3723 = vunpack.c.l.b16 %v704
        %v3724 = vunpack.c.l.b16 %v705
        %v3725 = vunpack.c.l.b16 %v706
        %v3726 = vunpack.c.l.b16 %v707
        %v3727 = vunpack.c.l.b16 %v708
        %v3728 = vunpack.c.l.b16 %v709
        %v3729 = vunpack.c.l.b16 %v710
        %v3730 = vunpack.c.l.b16 %v711
        %v3731 = vunpack.c.l.b16 %v712
        %v3732 = vunpack.c.l.b16 %v713
        %v3733 = vunpack.c.l.b16 %v714
        %v3734 = vunpack.c.l.b16 %v715
        %v3735 = vunpack.c.l.b16 %v716
        %v3736 = vunpack.c.l.b16 %v717
        %v3737 = vunpack.c.l.b16 %v718
        %v3738 = vunpack.c.l.b16 %v719
        %v3739 = vunpack.c.l.b16 %v720
        %v3740 = vunpack.c.l.b16 %v721
        %v3741 = vunpack.c.l.b16 %v722
        %v3742 = vunpack.c.l.b16 %v723
        %v3743 = vunpack.c.l.b16 %v724
        %v3744 = vunpack.c.l.b16 %v725
        %v3745 = vunpack.c.l.b16 %v726
        %v3746 = vunpack.c.l.b16 %v727
        %v3747 = vunpack.c.l.b16 %v728
        %v3748 = vunpack.c.l.b16 %v729
        %v3749 = vunpack.c.l.b16 %v730
        %v3750 = vunpack.c.l.b16 %v731
        %v3751 = vunpack.c.l.b16 %v732
        %v3752 = vunpack.c.l.b16 %v733
        %v3753 = vunpack.c.l.b16 %v734
        %v3754 = vunpack.c.l.b16 %v735
        %v3755 = vunpack.c.l.b16 %v736
        %v3756 = vunpack.c.l.b16 %v737
        %v3757 = vunpack.c.l.b16 %v738
        %v3758 = vunpack.c.l.b16 %v739
        %v3759 = vunpack.c.l.b16 %v740
        %v3760 = vunpack.c.l.b16 %v741
        %v3761 = vunpack.c.l.b16 %v742
        %v3762 = vunpack.c.l.b16 %v743
        %v3763 = vunpack.c.l.b16 %v744
        %v3764 = vunpack.c.l.b16 %v745
        %v3765 = vunpack.c.l.b16 %v746
        %v3766 = vunpack.c.l.b16 %v747
        %v3767 = vunpack.c.l.b16 %v748
        %v3768 = vunpack.c.l.b16 %v749
        %v3769 = vunpack.c.l.b16 %v750
        %v3770 = vunpack.c.l.b16 %v751
        %v3771 = vunpack.c.l.b16 %v752
        %v3772 = vunpack.c.l.b16 %v753
        %v3773 = vunpack.c.l.b16 %v754
        %v3774 = vunpack.c.l.b16 %v755
        %v3775 = vunpack.c.l.b16 %v756
        %v3776 = vunpack.c.l.b16 %v757
        %v3777 = vunpack.c.l.b16 %v758
        %v3778 = vunpack.c.l.b16 %v759
        %v3779 = vunpack.c.l.b16 %v760
        %v3780 = vunpack.c.l.b16 %v761
        %v3781 = vunpack.c.l.b16 %v762
        %v3782 = vunpack.c.l.b16 %v763
        %v3783 = vunpack.c.l.b16 %v764
        %v3784 = vunpack.c.l.b16 %v765
        %v3785 = vunpack.c.l.b16 %v766
        %v3786 = vunpack.c.l.b16 %v767
        %v3787 = vunpack.c.l.b16 %v768
        %v3788 = vunpack.c.l.b16 %v769
        %v3789 = vunpack.c.l.b16 %v770
        %v3790 = vunpack.c.l.b16 %v771
        %v3791 = vunpack.c.l.b16 %v772
        %v3792 = vunpack.c.l.b16 %v773
        %v3793 = vunpack.c.l.b16 %v774
        %v3794 = vunpack.c.l.b16 %v775
        %v3795 = vunpack.c.l.b16 %v776
        %v3796 = vunpack.c.l.b16 %v777
        %v3797 = vunpack.c.l.b16 %v778
        %v3798 = vunpack.c.l.b16 %v779
        %v3799 = vunpack.c.l.b16 %v780
        %v3800 = vunpack.c.l.b16 %v781
        %v3801 = vunpack.c.l.b16 %v782
        %v3802 = vunpack.c.l.b16 %v783
        %v3803 = vunpack.c.l.b16 %v784
        %v3804 = vunpack.c.l.b16 %v785
        %v3805 = vunpack.c.l.b16 %v786
        %v3806 = vunpack.c.l.b16 %v787
        %v3807 = vunpack.c.l.b16 %v788
        %v3808 = vunpack.c.l.b16 %v789
        %v3809 = vunpack.c.l.b16 %v790
        %v3810 = vunpack.c.l.b16 %v791
        %v3811 = vunpack.c.l.b16 %v792
        %v3812 = vunpack.c.l.b16 %v793
        %v3813 = vunpack.c.l.b16 %v794
        %v3814 = vunpack.c.l.b16 %v795
        %v3815 = vunpack.c.l.b16 %v796
        %v3816 = vunpack.c.l.b16 %v797
        %v3817 = vunpack.c.l.b16 %v798
        %v3818 = vunpack.c.l.b16 %v799
        %v3819 = vunpack.c.l.b16 %v800
        %v3820 = vunpack.c.l.b16 %v801
        %v3821 = vunpack.c.l.b16 %v802
        %v3822 = vunpack.c.l.b16 %v803
        %v3823 = vunpack.c.l.b16 %v804
        %v3824 = vunpack.c.l.b16 %v805
        %v3825 = vunpack.c.l.b16 %v806
        %v3826 = vunpack.c.l.b16 %v807
        %v3827 = vunpack.c.l.b16 %v808
        %v3828 = vunpack.c.l.b16 %v809
        %v3829 = vunpack.c.l.b16 %v810
        %v3830 = vunpack.c.l.b16 %v811
        %v3831 = vunpack.c.l.b16 %v812
        %v3832 = vunpack.c.l.b16 %v813
        %v3833 = vunpack.c.l.b16 %v814
        %v3834 = vunpack.c.l.b16 %v815
        %v3835 = vunpack.c.l.b16 %v816
        %v3836 = vunpack.c.l.b16 %v817
        %v3837 = vunpack.c.l.b16 %v818
        %v3838 = vunpack.c.l.b16 %v819
        %v3839 = vunpack.c.l.b16 %v820
        %v3840 = vunpack.c.l.b16 %v821
        %v3841 = vunpack.c.l.b16 %v822
        %v3842 = vunpack.c.l.b16 %v823
        %v3843 = vunpack.c.l.b16 %v824
        %v3844 = vunpack.c.l.b16 %v825
        %v3845 = vunpack.c.l.b16 %v826
        %v3846 = vunpack.c.l.b16 %v827
        %v3847 = vunpack.c.l.b16 %v828
        %v3848 = vunpack.c.l.b16 %v829
        %v3849 = vunpack.c.l.b16 %v830
        %v3850 = vunpack.c.l.b16 %v831
        %v3851 = vunpack.c.l.b16 %v832
        %v3852 = vunpack.c.l.b16 %v833
        %v3853 = vunpack.c.l.b16 %v834
        %v3854 = vunpack.c.l.b16 %v835
        %v3855 = vunpack.c.l.b16 %v836
        %v3856 = vunpack.c.l.b16 %v837
        %v3857 = vunpack.c.l.b16 %v838
        %v3858 = vunpack.c.l.b16 %v839
        %v3859 = vunpack.c.l.b16 %v840
        %v3860 = vunpack.c.l.b16 %v841
        %v3861 = vunpack.c.l.b16 %v842
        %v3862 = vunpack.c.l.b16 %v843
        %v3863 = vunpack.c.l.b16 %v844
        %v3864 = vunpack.c.l.b16 %v845
        %v3865 = vunpack.c.l.b16 %v846
        %v3866 = vunpack.c.l.b16 %v847
        %v3867 = vunpack.c.l.b16 %v848
        %v3868 = vunpack.c.l.b16 %v849
        %v3869 = vunpack.c.l.b16 %v850
        %v3870 = vunpack.c.l.b16 %v851
        %v3871 = vunpack.c.l.b16 %v852
        %v3872 = vunpack.c.l.b16 %v853
        %v3873 = vunpack.c.l.b16 %v854
        %v3874 = vunpack.c.l.b16 %v855
        %v3875 = vunpack.c.l.b16 %v856
        %v3876 = vunpack.c.l.b16 %v857
        %v3877 = vunpack.c.l.b16 %v858
        %v3878 = vunpack.c.l.b16 %v859
        %v3879 = vunpack.c.l.b16 %v860
        %v3880 = vunpack.c.l.b16 %v861
        %v3881 = vunpack.c.l.b16 %v862
        %v3882 = vunpack.c.l.b16 %v863
        %v3883 = vunpack.c.l.b16 %v864
        %v3884 = vunpack.c.l.b16 %v865
        %v3885 = vunpack.c.l.b16 %v866
        %v3886 = vunpack.c.l.b16 %v867
        %v3887 = vunpack.c.l.b16 %v868
        %v3888 = vunpack.c.l.b16 %v869
        %v3889 = vunpack.c.l.b16 %v870
        %v3890 = vunpack.c.l.b16 %v871
        %v3891 = vunpack.c.l.b16 %v872
        %v3892 = vunpack.c.l.b16 %v873
        %v3893 = vunpack.c.l.b16 %v874
        %v3894 = vunpack.c.l.b16 %v875
        %v3895 = vunpack.c.l.b16 %v876
        %v3896 = vunpack.c.l.b16 %v877
        %v3897 = vunpack.c.l.b16 %v878
        %v3898 = vunpack.c.l.b16 %v879
        %v3899 = vunpack.c.l.b16 %v880
        %v3900 = vunpack.c.l.b16 %v881
        %v3901 = vunpack.c.l.b16 %v882
        %v3902 = vunpack.c.l.b16 %v883
        %v3903 = vunpack.c.l.b16 %v884
        %v3904 = vunpack.c.l.b16 %v885
        %v3905 = vunpack.c.l.b16 %v886
        %v3906 = vunpack.c.l.b16 %v887
        %v3907 = vunpack.c.l.b16 %v888
        %v3908 = vunpack.c.l.b16 %v889
        %v3909 = vunpack.c.l.b16 %v890
        %v3910 = vunpack.c.l.b16 %v891
        %v3911 = vunpack.c.l.b16 %v892
        %v3912 = vunpack.c.l.b16 %v893
        %v3913 = vunpack.c.l.b16 %v894
        %v3914 = vunpack.c.l.b16 %v895
        %v3915 = vunpack.c.l.b16 %v896
        %v3916 = vunpack.c.l.b16 %v897
        %v3917 = vunpack.c.l.b16 %v898
        %v3918 = vunpack.c.l.b16 %v899
        %v3919 = vunpack.c.l.b16 %v900
        %v3920 = vunpack.c.l.b16 %v901
        %v3921 = vunpack.c.l.b16 %v902
        %v3922 = vunpack.c.l.b16 %v903
        %v3923 = vunpack.c.l.b16 %v904
        %v3924 = vunpack.c.l.b16 %v905
        %v3925 = vunpack.c.l.b16 %v906
        %v3926 = vunpack.c.l.b16 %v907
        %v3927 = vunpack.c.l.b16 %v908
        %v3928 = vunpack.c.l.b16 %v909
        %v3929 = vunpack.c.l.b16 %v910
        %v3930 = vunpack.c.l.b16 %v911
        %v3931 = vunpack.c.l.b16 %v912
        %v3932 = vunpack.c.l.b16 %v913
        %v3933 = vunpack.c.l.b16 %v914
        %v3934 = vunpack.c.l.b16 %v915
        %v3935 = vunpack.c.l.b16 %v916
        %v3936 = vunpack.c.l.b16 %v917
        %v3937 = vunpack.c.l.b16 %v918
        %v3938 = vunpack.c.l.b16 %v919
        %v3939 = vunpack.c.l.b16 %v920
        %v3940 = vunpack.c.l.b16 %v921
        %v3941 = vunpack.c.l.b16 %v922
        %v3942 = vunpack.c.l.b16 %v923
        %v3943 = vunpack.c.l.b16 %v924
        %v3944 = vunpack.c.l.b16 %v925
        %v3945 = vunpack.c.l.b16 %v926
        %v3946 = vunpack.c.l.b16 %v927
        %v3947 = vunpack.c.l.b16 %v928
        %v3948 = vunpack.c.l.b16 %v929
        %v3949 = vunpack.c.l.b16 %v930
        %v3950 = vunpack.c.l.b16 %v931
        %v3951 = vunpack.c.l.b16 %v932
        %v3952 = vunpack.c.l.b16 %v933
        %v3953 = vunpack.c.l.b16 %v934
        %v3954 = vunpack.c.l.b16 %v935
        %v3955 = vunpack.c.l.b16 %v936
        %v3956 = vunpack.c.l.b16 %v937
        %v3957 = vunpack.c.l.b16 %v938
        %v3958 = vunpack.c.l.b16 %v939
        %v3959 = vunpack.c.l.b16 %v940
        %v3960 = vunpack.c.l.b16 %v941
        %v3961 = vunpack.c.l.b16 %v942
        %v3962 = vunpack.c.l.b16 %v943
        %v3963 = vunpack.c.l.b16 %v944
        %v3964 = vunpack.c.l.b16 %v945
        %v3965 = vunpack.c.l.b16 %v946
        %v3966 = vunpack.c.l.b16 %v947
        %v3967 = vunpack.c.l.b16 %v948
        %v3968 = vunpack.c.l.b16 %v949
        %v3969 = vunpack.c.l.b16 %v950
        %v3970 = vunpack.c.l.b16 %v951
        %v3971 = vunpack.c.l.b16 %v952
        %v3972 = vunpack.c.l.b16 %v953
        %v3973 = vunpack.c.l.b16 %v954
        %v3974 = vunpack.c.l.b16 %v955
        %v3975 = vunpack.c.l.b16 %v956
        %v3976 = vunpack.c.l.b16 %v957
        %v3977 = vunpack.c.l.b16 %v958
        %v3978 = vunpack.c.l.b16 %v959
        %v3979 = vunpack.c.l.b16 %v960
        %v3980 = vunpack.c.l.b16 %v961
        %v3981 = vunpack.c.l.b16 %v962
        %v3982 = vunpack.c.l.b16 %v963
        %v3983 = vunpack.c.l.b16 %v964
        %v3984 = vunpack.c.l.b16 %v965
        %v3985 = vunpack.c.l.b16 %v966
        %v3986 = vunpack.c.l.b16 %v967
        %v3987 = vunpack.c.l.b16 %v968
        %v3988 = vunpack.c.l.b16 %v969
        %v3989 = vunpack.c.l.b16 %v970
        %v3990 = vunpack.c.l.b16 %v971
        %v3991 = vunpack.c.l.b16 %v972
        %v3992 = vunpack.c.l.b16 %v973
        %v3993 = vunpack.c.l.b16 %v974
        %v3994 = vunpack.c.l.b16 %v975
        %v3995 = vunpack.c.l.b16 %v976
        %v3996 = vunpack.c.l.b16 %v977
        %v3997 = vunpack.c.l.b16 %v978
        %v3998 = vunpack.c.l.b16 %v979
        %v3999 = vunpack.c.l.b16 %v980
        %v4000 = vunpack.c.l.b16 %v981
        %v4001 = vunpack.c.l.b16 %v982
        %v4002 = vunpack.c.l.b16 %v983
        %v4003 = vunpack.c.l.b16 %v984
        %v4004 = vunpack.c.l.b16 %v985
        %v4005 = vunpack.c.l.b16 %v986
        %v4006 = vunpack.c.l.b16 %v987
        %v4007 = vunpack.c.l.b16 %v988
        %v4008 = vunpack.c.l.b16 %v989
        %v4009 = vunpack.c.l.b16 %v990
        %v4010 = vunpack.c.l.b16 %v991
        %v4011 = vunpack.c.l.b16 %v992
        %v4012 = vunpack.c.l.b16 %v993
        %v4013 = vunpack.c.l.b16 %v994
        %v4014 = vunpack.c.l.b16 %v995
        %v4015 = vunpack.c.l.b16 %v996
        %v4016 = vunpack.c.l.b16 %v997
        %v4017 = vunpack.c.l.b16 %v998
        %v4018 = vunpack.c.l.b16 %v999
        %v4019 = vunpack.c.l.b16 %v1000
        %v4020 = vunpack.c.l.b16 %v1001
        %v4021 = vunpack.c.l.b16 %v1002
        %v4022 = vunpack.c.l.b16 %v1003
        %v4023 = vunpack.c.l.b16 %v1004
        %v4024 = vunpack.c.l.b16 %v1005
        %v4025 = vunpack.c.l.b16 %v1006
        %v4026 = vunpack.c.l.b16 %v1007
        %v4027 = vunpack.c.l.b16 %v1008
        %v4028 = vunpack.c.l.b16 %v1009
        %v4029 = vunpack.c.l.b16 %v1010
        %v4030 = vunpack.c.l.b16 %v1011
        %v4031 = vunpack.c.l.b16 %v1012
        %v4032 = vunpack.c.l.b16 %v1013
        %v4033 = vunpack.c.l.b16 %v1014
        %v4034 = vunpack.c.l.b16 %v1015
        %v4035 = vunpack.c.l.b16 %v1016
        %v4036 = vunpack.c.l.b16 %v1017
        %v4037 = vunpack.c.l.b16 %v1018
        %v4038 = vunpack.c.l.b16 %v1019
        %v4039 = vunpack.c.l.b16 %v1020
        %v4040 = vunpack.c.l.b16 %v1021
        %v4041 = vunpack.c.l.b16 %v1022
        %v4042 = vunpack.c.l.b16 %v1023
        %v4043 = vunpack.c.l.b16 %v1024
        %v4044 = vunpack.c.l.b16 %v1025
        %v4045 = vunpack.c.l.b16 %v1026
        %v4046 = vunpack.c.l.b16 %v1027
        %v4047 = vunpack.c.l.b16 %v1028
        %v4048 = vpack.c.b16 %v3665, %v3664
        %v4049 = vpack.c.b16 %v3667, %v3666
        %v4050 = vpack.c.b16 %v3669, %v3668
        %v4051 = vpack.c.b16 %v3671, %v3670
        %v4052 = vpack.c.b16 %v3673, %v3672
        %v4053 = vpack.c.b16 %v3675, %v3674
        %v4054 = vpack.c.b16 %v3677, %v3676
        %v4055 = vpack.c.b16 %v3679, %v3678
        %v4056 = vpack.c.b16 %v3681, %v3680
        %v4057 = vpack.c.b16 %v3683, %v3682
        %v4058 = vpack.c.b16 %v3685, %v3684
        %v4059 = vpack.c.b16 %v3687, %v3686
        %v4060 = vpack.c.b16 %v3689, %v3688
        %v4061 = vpack.c.b16 %v3691, %v3690
        %v4062 = vpack.c.b16 %v3693, %v3692
        %v4063 = vpack.c.b16 %v3695, %v3694
        %v4064 = vpack.c.b16 %v3697, %v3696
        %v4065 = vpack.c.b16 %v3699, %v3698
        %v4066 = vpack.c.b16 %v3701, %v3700
        %v4067 = vpack.c.b16 %v3703, %v3702
        %v4068 = vpack.c.b16 %v3705, %v3704
        %v4069 = vpack.c.b16 %v3707, %v3706
        %v4070 = vpack.c.b16 %v3709, %v3708
        %v4071 = vpack.c.b16 %v3711, %v3710
        %v4072 = vpack.c.b16 %v3713, %v3712
        %v4073 = vpack.c.b16 %v3715, %v3714
        %v4074 = vpack.c.b16 %v3717, %v3716
        %v4075 = vpack.c.b16 %v3719, %v3718
        %v4076 = vpack.c.b16 %v3721, %v3720
        %v4077 = vpack.c.b16 %v3723, %v3722
        %v4078 = vpack.c.b16 %v3725, %v3724
        %v4079 = vpack.c.b16 %v3727, %v3726
        %v4080 = vpack.c.b16 %v3729, %v3728
        %v4081 = vpack.c.b16 %v3731, %v3730
        %v4082 = vpack.c.b16 %v3733, %v3732
        %v4083 = vpack.c.b16 %v3735, %v3734
        %v4084 = vpack.c.b16 %v3737, %v3736
        %v4085 = vpack.c.b16 %v3739, %v3738
        %v4086 = vpack.c.b16 %v3741, %v3740
        %v4087 = vpack.c.b16 %v3743, %v3742
        %v4088 = vpack.c.b16 %v3745, %v3744
        %v4089 = vpack.c.b16 %v3747, %v3746
        %v4090 = vpack.c.b16 %v3749, %v3748
        %v4091 = vpack.c.b16 %v3751, %v3750
        %v4092 = vpack.c.b16 %v3753, %v3752
        %v4093 = vpack.c.b16 %v3755, %v3754
        %v4094 = vpack.c.b16 %v3757, %v3756
        %v4095 = vpack.c.b16 %v3759, %v3758
        %v4096 = vpack.c.b16 %v3761, %v3760
        %v4097 = vpack.c.b16 %v3763, %v3762
        %v4098 = vpack.c.b16 %v3765, %v3764
        %v4099 = vpack.c.b16 %v3767, %v3766
        %v4100 = vpack.c.b16 %v3769, %v3768
        %v4101 = vpack.c.b16 %v3771, %v3770
        %v4102 = vpack.c.b16 %v3773, %v3772
        %v4103 = vpack.c.b16 %v3775, %v3774
        %v4104 = vpack.c.b16 %v3777, %v3776
        %v4105 = vpack.c.b16 %v3779, %v3778
        %v4106 = vpack.c.b16 %v3781, %v3780
        %v4107 = vpack.c.b16 %v3783, %v3782
        %v4108 = vpack.c.b16 %v3785, %v3784
        %v4109 = vpack.c.b16 %v3787, %v3786
        %v4110 = vpack.c.b16 %v3789, %v3788
        %v4111 = vpack.c.b16 %v3791, %v3790
        %v4112 = vpack.c.b16 %v3793, %v3792
        %v4113 = vpack.c.b16 %v3795, %v3794
        %v4114 = vpack.c.b16 %v3797, %v3796
        %v4115 = vpack.c.b16 %v3799, %v3798
        %v4116 = vpack.c.b16 %v3801, %v3800
        %v4117 = vpack.c.b16 %v3803, %v3802
        %v4118 = vpack.c.b16 %v3805, %v3804
        %v4119 = vpack.c.b16 %v3807, %v3806
        %v4120 = vpack.c.b16 %v3809, %v3808
        %v4121 = vpack.c.b16 %v3811, %v3810
        %v4122 = vpack.c.b16 %v3813, %v3812
        %v4123 = vpack.c.b16 %v3815, %v3814
        %v4124 = vpack.c.b16 %v3817, %v3816
        %v4125 = vpack.c.b16 %v3819, %v3818
        %v4126 = vpack.c.b16 %v3821, %v3820
        %v4127 = vpack.c.b16 %v3823, %v3822
        %v4128 = vpack.c.b16 %v3825, %v3824
        %v4129 = vpack.c.b16 %v3827, %v3826
        %v4130 = vpack.c.b16 %v3829, %v3828
        %v4131 = vpack.c.b16 %v3831, %v3830
        %v4132 = vpack.c.b16 %v3833, %v3832
        %v4133 = vpack.c.b16 %v3835, %v3834
        %v4134 = vpack.c.b16 %v3837, %v3836
        %v4135 = vpack.c.b16 %v3839, %v3838
        %v4136 = vpack.c.b16 %v3841, %v3840
        %v4137 = vpack.c.b16 %v3843, %v3842
        %v4138 = vpack.c.b16 %v3845, %v3844
        %v4139 = vpack.c.b16 %v3847, %v3846
        %v4140 = vpack.c.b16 %v3849, %v3848
        %v4141 = vpack.c.b16 %v3851, %v3850
        %v4142 = vpack.c.b16 %v3853, %v3852
        %v4143 = vpack.c.b16 %v3855, %v3854
        %v4144 = vpack.c.b16 %v3857, %v3856
        %v4145 = vpack.c.b16 %v3859, %v3858
        %v4146 = vpack.c.b16 %v3861, %v3860
        %v4147 = vpack.c.b16 %v3863, %v3862
        %v4148 = vpack.c.b16 %v3865, %v3864
        %v4149 = vpack.c.b16 %v3867, %v3866
        %v4150 = vpack.c.b16 %v3869, %v3868
        %v4151 = vpack.c.b16 %v3871, %v3870
        %v4152 = vpack.c.b16 %v3873, %v3872
        %v4153 = vpack.c.b16 %v3875, %v3874
        %v4154 = vpack.c.b16 %v3877, %v3876
        %v4155 = vpack.c.b16 %v3879, %v3878
        %v4156 = vpack.c.b16 %v3881, %v3880
        %v4157 = vpack.c.b16 %v3883, %v3882
        %v4158 = vpack.c.b16 %v3885, %v3884
        %v4159 = vpack.c.b16 %v3887, %v3886
        %v4160 = vpack.c.b16 %v3889, %v3888
        %v4161 = vpack.c.b16 %v3891, %v3890
        %v4162 = vpack.c.b16 %v3893, %v3892
        %v4163 = vpack.c.b16 %v3895, %v3894
        %v4164 = vpack.c.b16 %v3897, %v3896
        %v4165 = vpack.c.b16 %v3899, %v3898
        %v4166 = vpack.c.b16 %v3901, %v3900
        %v4167 = vpack.c.b16 %v3903, %v3902
        %v4168 = vpack.c.b16 %v3905, %v3904
        %v4169 = vpack.c.b16 %v3907, %v3906
        %v4170 = vpack.c.b16 %v3909, %v3908
        %v4171 = vpack.c.b16 %v3911, %v3910
        %v4172 = vpack.c.b16 %v3913, %v3912
        %v4173 = vpack.c.b16 %v3915, %v3914
        %v4174 = vpack.c.b16 %v3917, %v3916
        %v4175 = vpack.c.b16 %v3919, %v3918
        %v4176 = vpack.c.b16 %v3921, %v3920
        %v4177 = vpack.c.b16 %v3923, %v3922
        %v4178 = vpack.c.b16 %v3925, %v3924
        %v4179 = vpack.c.b16 %v3927, %v3926
        %v4180 = vpack.c.b16 %v3929, %v3928
        %v4181 = vpack.c.b16 %v3931, %v3930
        %v4182 = vpack.c.b16 %v3933, %v3932
        %v4183 = vpack.c.b16 %v3935, %v3934
        %v4184 = vpack.c.b16 %v3937, %v3936
        %v4185 = vpack.c.b16 %v3939, %v3938
        %v4186 = vpack.c.b16 %v3941, %v3940
        %v4187 = vpack.c.b16 %v3943, %v3942
        %v4188 = vpack.c.b16 %v3945, %v3944
        %v4189 = vpack.c.b16 %v3947, %v3946
        %v4190 = vpack.c.b16 %v3949, %v3948
        %v4191 = vpack.c.b16 %v3951, %v3950
        %v4192 = vpack.c.b16 %v3953, %v3952
        %v4193 = vpack.c.b16 %v3955, %v3954
        %v4194 = vpack.c.b16 %v3957, %v3956
        %v4195 = vpack.c.b16 %v3959, %v3958
        %v4196 = vpack.c.b16 %v3961, %v3960
        %v4197 = vpack.c.b16 %v3963, %v3962
        %v4198 = vpack.c.b16 %v3965, %v3964
        %v4199 = vpack.c.b16 %v3967, %v3966
        %v4200 = vpack.c.b16 %v3969, %v3968
        %v4201 = vpack.c.b16 %v3971, %v3970
        %v4202 = vpack.c.b16 %v3973, %v3972
        %v4203 = vpack.c.b16 %v3975, %v3974
        %v4204 = vpack.c.b16 %v3977, %v3976
        %v4205 = vpack.c.b16 %v3979, %v3978
        %v4206 = vpack.c.b16 %v3981, %v3980
        %v4207 = vpack.c.b16 %v3983, %v3982
        %v4208 = vpack.c.b16 %v3985, %v3984
        %v4209 = vpack.c.b16 %v3987, %v3986
        %v4210 = vpack.c.b16 %v3989, %v3988
        %v4211 = vpack.c.b16 %v3991, %v3990
        %v4212 = vpack.c.b16 %v3993, %v3992
        %v4213 = vpack.c.b16 %v3995, %v3994
        %v4214 = vpack.c.b16 %v3997, %v3996
        %v4215 = vpack.c.b16 %v3999, %v3998
        %v4216 = vpack.c.b16 %v4001, %v4000
        %v4217 = vpack.c.b16 %v4003, %v4002
        %v4218 = vpack.c.b16 %v4005, %v4004
        %v4219 = vpack.c.b16 %v4007, %v4006
        %v4220 = vpack.c.b16 %v4009, %v4008
        %v4221 = vpack.c.b16 %v4011, %v4010
        %v4222 = vpack.c.b16 %v4013, %v4012
        %v4223 = vpack.c.b16 %v4015, %v4014
        %v4224 = vpack.c.b16 %v4017, %v4016
        %v4225 = vpack.c.b16 %v4019, %v4018
        %v4226 = vpack.c.b16 %v4021, %v4020
        %v4227 = vpack.c.b16 %v4023, %v4022
        %v4228 = vpack.c.b16 %v4025, %v4024
        %v4229 = vpack.c.b16 %v4027, %v4026
        %v4230 = vpack.c.b16 %v4029, %v4028
        %v4231 = vpack.c.b16 %v4031, %v4030
        %v4232 = vpack.c.b16 %v4033, %v4032
        %v4233 = vpack.c.b16 %v4035, %v4034
        %v4234 = vpack.c.b16 %v4037, %v4036
        %v4235 = vpack.c.b16 %v4039, %v4038
        %v4236 = vpack.c.b16 %v4041, %v4040
        %v4237 = vpack.c.b16 %v4043, %v4042
        %v4238 = vpack.c.b16 %v4045, %v4044
        %v4239 = vpack.c.b16 %v4047, %v4046
        %4432 = vmatprep.subr.bf16.mxu0 0
        %4433 = vmatpush1.bf16.msra.mxu0 %v4048
        %4434 = vmatprep.subr.bf16.mxu0 0
        %4435 = vmatpush1.bf16.msra.mxu0 %v4049
        %4436 = vmatprep.subr.bf16.mxu0 0
        %4437 = vmatpush1.bf16.msra.mxu0 %v4050
        %4438 = vmatprep.subr.bf16.mxu0 0
        %4439 = vmatpush1.bf16.msra.mxu0 %v4051
        %4440 = vmatprep.subr.bf16.mxu0 0
        %4441 = vmatpush1.bf16.msra.mxu0 %v4052
        %4442 = vmatprep.subr.bf16.mxu0 0
        %4443 = vmatpush1.bf16.msra.mxu0 %v4053
        %4444 = vmatprep.subr.bf16.mxu0 0
        %4445 = vmatpush1.bf16.msra.mxu0 %v4054
        %4446 = vmatprep.subr.bf16.mxu0 0
        %4447 = vmatpush1.bf16.msra.mxu0 %v4055
        %4448 = vmatprep.subr.bf16.mxu0 0
        %4449 = vmatpush1.bf16.msra.mxu0 %v4056
        %4450 = vmatprep.subr.bf16.mxu0 0
        %4451 = vmatpush1.bf16.msra.mxu0 %v4057
        %4452 = vmatprep.subr.bf16.mxu0 0
        %4453 = vmatpush1.bf16.msra.mxu0 %v4058
        %4454 = vmatprep.subr.bf16.mxu0 0
        %4455 = vmatpush1.bf16.msra.mxu0 %v4059
        %4456 = vmatprep.subr.bf16.mxu0 0
        %4457 = vmatpush1.bf16.msra.mxu0 %v4060
        %4458 = vmatprep.subr.bf16.mxu0 0
        %4459 = vmatpush1.bf16.msra.mxu0 %v4061
        %4460 = vmatprep.subr.bf16.mxu0 0
        %4461 = vmatpush1.bf16.msra.mxu0 %v4062
        %4462 = vmatprep.subr.bf16.mxu0 0
        %4463 = vmatpush1.bf16.msra.mxu0 %v4063
        %4464 = vmatprep.mubr.bf16.mxu0 %v2369
        %4465 = vmatmul.mubr.bf16.gmra.mrb[0].mxu0 %v2368
        %v4466 = vpop.f32.mrb[0].mxu0
        %v4467 = vadd.f32 %v1034, %v4466
        %v4468 = vpop.f32.mrb[0].mxu0
        %v4469 = vpop.f32.mrb[0].mxu0
        %v4470 = vadd.f32 %v1034, %v4469
        %v4471 = vpop.f32.mrb[0].mxu0
        %4472 = vmatprep.mubr.bf16.mxu0 %v2393
        %4473 = vmatmul.mubr.bf16.gmra.mrb[0].mxu0 %v2392
        %v4474 = vpop.f32.mrb[0].mxu0
        %v4475 = vadd.f32 %v1034, %v4474
        %v4476 = vpop.f32.mrb[0].mxu0
        %v4477 = vpop.f32.mrb[0].mxu0
        %v4478 = vadd.f32 %v1034, %v4477
        %v4479 = vpop.f32.mrb[0].mxu0
        %4480 = vmatprep.mubr.bf16.mxu0 %v2417
        %4481 = vmatmul.mubr.bf16.gmra.mrb[0].mxu0 %v2416
        %v4482 = vpop.f32.mrb[0].mxu0
        %v4483 = vadd.f32 %v1034, %v4482
        %v4484 = vpop.f32.mrb[0].mxu0
        %v4485 = vpop.f32.mrb[0].mxu0
        %v4486 = vadd.f32 %v1034, %v4485
        %v4487 = vpop.f32.mrb[0].mxu0
        %4488 = vmatprep.mubr.bf16.mxu0 %v2441
        %4489 = vmatmul.mubr.bf16.gmra.mrb[0].mxu0 %v2440
        %v4490 = vpop.f32.mrb[0].mxu0
        %v4491 = vadd.f32 %v1034, %v4490
        %v4492 = vpop.f32.mrb[0].mxu0
        %v4493 = vpop.f32.mrb[0].mxu0
        %v4494 = vadd.f32 %v1034, %v4493
        %v4495 = vpop.f32.mrb[0].mxu0
        %4496 = vmatprep.mubr.bf16.mxu0 %v2465
        %4497 = vmatmul.mubr.bf16.gmra.mrb[0].mxu0 %v2464
        %v4498 = vpop.f32.mrb[0].mxu0
        %v4499 = vadd.f32 %v1034, %v4498
        %v4500 = vpop.f32.mrb[0].mxu0
        %v4501 = vpop.f32.mrb[0].mxu0
        %v4502 = vadd.f32 %v1034, %v4501
        %v4503 = vpop.f32.mrb[0].mxu0
        %4504 = vmatprep.mubr.bf16.mxu0 %v2489
        %4505 = vmatmul.mubr.bf16.gmra.mrb[0].mxu0 %v2488
        %v4506 = vpop.f32.mrb[0].mxu0
        %v4507 = vadd.f32 %v1034, %v4506
        %v4508 = vpop.f32.mrb[0].mxu0
        %v4509 = vpop.f32.mrb[0].mxu0
        %v4510 = vadd.f32 %v1034, %v4509
        %v4511 = vpop.f32.mrb[0].mxu0
        %4512 = vmatprep.mubr.bf16.mxu0 %v2513
        %4513 = vmatmul.mubr.bf16.gmra.mrb[0].mxu0 %v2512
        %v4514 = vpop.f32.mrb[0].mxu0
        %v4515 = vadd.f32 %v1034, %v4514
        %v4516 = vpop.f32.mrb[0].mxu0
        %v4517 = vpop.f32.mrb[0].mxu0
        %v4518 = vadd.f32 %v1034, %v4517
        %v4519 = vpop.f32.mrb[0].mxu0
        %4520 = vmatprep.mubr.bf16.mxu0 %v2537
        %4521 = vmatmul.mubr.bf16.gmra.mrb[0].mxu0 %v2536
        %v4522 = vpop.f32.mrb[0].mxu0
        %v4523 = vadd.f32 %v1034, %v4522
        %v4524 = vpop.f32.mrb[0].mxu0
        %v4525 = vpop.f32.mrb[0].mxu0
        %v4526 = vadd.f32 %v1034, %v4525
        %v4527 = vpop.f32.mrb[0].mxu0
        %4528 = vmatprep.mubr.bf16.mxu0 %v2561
        %4529 = vmatmul.mubr.bf16.gmra.mrb[0].mxu0 %v2560
        %v4530 = vpop.f32.mrb[0].mxu0
        %v4531 = vadd.f32 %v1034, %v4530
        %v4532 = vpop.f32.mrb[0].mxu0
        %v4533 = vpop.f32.mrb[0].mxu0
        %v4534 = vadd.f32 %v1034, %v4533
        %v4535 = vpop.f32.mrb[0].mxu0
        %4536 = vmatprep.mubr.bf16.mxu0 %v2585
        %4537 = vmatmul.mubr.bf16.gmra.mrb[0].mxu0 %v2584
        %v4538 = vpop.f32.mrb[0].mxu0
        %v4539 = vadd.f32 %v1034, %v4538
        %v4540 = vpop.f32.mrb[0].mxu0
        %v4541 = vpop.f32.mrb[0].mxu0
        %v4542 = vadd.f32 %v1034, %v4541
        %v4543 = vpop.f32.mrb[0].mxu0
        %4544 = vmatprep.mubr.bf16.mxu0 %v2609
        %4545 = vmatmul.mubr.bf16.gmra.mrb[0].mxu0 %v2608
        %v4546 = vpop.f32.mrb[0].mxu0
        %v4547 = vadd.f32 %v1034, %v4546
        %v4548 = vpop.f32.mrb[0].mxu0
        %v4549 = vpop.f32.mrb[0].mxu0
        %v4550 = vadd.f32 %v1034, %v4549
        %v4551 = vpop.f32.mrb[0].mxu0
        %4552 = vmatprep.mubr.bf16.mxu0 %v2633
        %4553 = vmatmul.mubr.bf16.gmra.mrb[0].mxu0 %v2632
        %v4554 = vpop.f32.mrb[0].mxu0
        %v4555 = vadd.f32 %v1034, %v4554
        %v4556 = vpop.f32.mrb[0].mxu0
        %v4557 = vpop.f32.mrb[0].mxu0
        %v4558 = vadd.f32 %v1034, %v4557
        %v4559 = vpop.f32.mrb[0].mxu0
        %4560 = vmatprep.mubr.bf16.mxu0 %v2657
        %4561 = vmatmul.mubr.bf16.gmra.mrb[0].mxu0 %v2656
        %v4562 = vpop.f32.mrb[0].mxu0
        %v4563 = vadd.f32 %v1034, %v4562
        %v4564 = vpop.f32.mrb[0].mxu0
        %v4565 = vpop.f32.mrb[0].mxu0
        %v4566 = vadd.f32 %v1034, %v4565
        %v4567 = vpop.f32.mrb[0].mxu0
        %4568 = vmatprep.mubr.bf16.mxu0 %v2681
        %4569 = vmatmul.mubr.bf16.gmra.mrb[0].mxu0 %v2680
        %v4570 = vpop.f32.mrb[0].mxu0
        %v4571 = vadd.f32 %v1034, %v4570
        %v4572 = vpop.f32.mrb[0].mxu0
        %v4573 = vpop.f32.mrb[0].mxu0
        %v4574 = vadd.f32 %v1034, %v4573
        %v4575 = vpop.f32.mrb[0].mxu0
        %4576 = vmatprep.mubr.bf16.mxu0 %v2705
        %4577 = vmatmul.mubr.bf16.gmra.mrb[0].mxu0 %v2704
        %v4578 = vpop.f32.mrb[0].mxu0
        %v4579 = vadd.f32 %v1034, %v4578
        %v4580 = vpop.f32.mrb[0].mxu0
        %v4581 = vpop.f32.mrb[0].mxu0
        %v4582 = vadd.f32 %v1034, %v4581
        %v4583 = vpop.f32.mrb[0].mxu0
        %4584 = vmatprep.mubr.bf16.mxu0 %v2729
        %4585 = vmatmul.mubr.bf16.gmra.mrb[0].mxu0 %v2728
        %v4586 = vpop.f32.mrb[0].mxu0
        %v4587 = vadd.f32 %v1034, %v4586
        %v4588 = vpop.f32.mrb[0].mxu0
        %v4589 = vpop.f32.mrb[0].mxu0
        %v4590 = vadd.f32 %v1034, %v4589
        %v4591 = vpop.f32.mrb[0].mxu0
        %4592 = vmatprep.mubr.bf16.mxu0 %v2753
        %4593 = vmatmul.mubr.bf16.gmra.mrb[0].mxu0 %v2752
        %v4594 = vpop.f32.mrb[0].mxu0
        %v4595 = vadd.f32 %v1034, %v4594
        %v4596 = vpop.f32.mrb[0].mxu0
        %v4597 = vpop.f32.mrb[0].mxu0
        %v4598 = vadd.f32 %v1034, %v4597
        %v4599 = vpop.f32.mrb[0].mxu0
        %4600 = vmatprep.mubr.bf16.mxu0 %v2777
        %4601 = vmatmul.mubr.bf16.gmra.mrb[0].mxu0 %v2776
        %v4602 = vpop.f32.mrb[0].mxu0
        %v4603 = vadd.f32 %v1034, %v4602
        %v4604 = vpop.f32.mrb[0].mxu0
        %v4605 = vpop.f32.mrb[0].mxu0
        %v4606 = vadd.f32 %v1034, %v4605
        %v4607 = vpop.f32.mrb[0].mxu0
        %4608 = vmatprep.mubr.bf16.mxu0 %v2801
        %4609 = vmatmul.mubr.bf16.gmra.mrb[0].mxu0 %v2800
        %v4610 = vpop.f32.mrb[0].mxu0
        %v4611 = vadd.f32 %v1034, %v4610
        %v4612 = vpop.f32.mrb[0].mxu0
        %v4613 = vpop.f32.mrb[0].mxu0
        %v4614 = vpop.f32.mrb[0].mxu0
        %4615 = vdwg.mxu0
        %4616 = vmatprep.subr.bf16.mxu0 0
        %4617 = vmatpush1.bf16.msra.mxu0 %v4064
        %4618 = vmatprep.subr.bf16.mxu0 0
        %4619 = vmatpush1.bf16.msra.mxu0 %v4065
        %4620 = vmatprep.subr.bf16.mxu0 0
        %4621 = vmatpush1.bf16.msra.mxu0 %v4066
        %4622 = vmatprep.subr.bf16.mxu0 0
        %4623 = vmatpush1.bf16.msra.mxu0 %v4067
        %4624 = vmatprep.subr.bf16.mxu0 0
        %4625 = vmatpush1.bf16.msra.mxu0 %v4068
        %4626 = vmatprep.subr.bf16.mxu0 0
        %4627 = vmatpush1.bf16.msra.mxu0 %v4069
        %4628 = vmatprep.subr.bf16.mxu0 0
        %4629 = vmatpush1.bf16.msra.mxu0 %v4070
        %4630 = vmatprep.subr.bf16.mxu0 0
        %4631 = vmatpush1.bf16.msra.mxu0 %v4071
        %4632 = vmatprep.subr.bf16.mxu0 0
        %4633 = vmatpush1.bf16.msra.mxu0 %v4072
        %4634 = vmatprep.subr.bf16.mxu0 0
        %4635 = vmatpush1.bf16.msra.mxu0 %v4073
        %4636 = vmatprep.subr.bf16.mxu0 0
        %4637 = vmatpush1.bf16.msra.mxu0 %v4074
        %4638 = vmatprep.subr.bf16.mxu0 0
        %4639 = vmatpush1.bf16.msra.mxu0 %v4075
        %4640 = vmatprep.subr.bf16.mxu0 0
        %4641 = vmatpush1.bf16.msra.mxu0 %v4076
        %4642 = vmatprep.subr.bf16.mxu0 0
        %4643 = vmatpush1.bf16.msra.mxu0 %v4077
        %4644 = vmatprep.subr.bf16.mxu0 0
        %4645 = vmatpush1.bf16.msra.mxu0 %v4078
        %4646 = vmatprep.subr.bf16.mxu0 0
        %4647 = vmatpush1.bf16.msra.mxu0 %v4079
        %4648 = vmatprep.mubr.bf16.mxu0 %v2371
        %4649 = vmatmul.mubr.bf16.gmra.mrb[0].mxu0 %v2370
        %v4650 = vpop.f32.mrb[0].mxu0
        %v4651 = vadd.f32 %v4467, %v4650
        %v4652 = vpop.f32.mrb[0].mxu0
        %v4653 = vpop.f32.mrb[0].mxu0
        %v4654 = vadd.f32 %v4470, %v4653
        %v4655 = vpop.f32.mrb[0].mxu0
        %4656 = vmatprep.mubr.bf16.mxu0 %v2395
        %4657 = vmatmul.mubr.bf16.gmra.mrb[0].mxu0 %v2394
        %v4658 = vpop.f32.mrb[0].mxu0
        %v4659 = vadd.f32 %v4475, %v4658
        %v4660 = vpop.f32.mrb[0].mxu0
        %v4661 = vpop.f32.mrb[0].mxu0
        %v4662 = vadd.f32 %v4478, %v4661
        %v4663 = vpop.f32.mrb[0].mxu0
        %4664 = vmatprep.mubr.bf16.mxu0 %v2419
        %4665 = vmatmul.mubr.bf16.gmra.mrb[0].mxu0 %v2418
        %v4666 = vpop.f32.mrb[0].mxu0
        %v4667 = vadd.f32 %v4483, %v4666
        %v4668 = vpop.f32.mrb[0].mxu0
        %v4669 = vpop.f32.mrb[0].mxu0
        %v4670 = vadd.f32 %v4486, %v4669
        %v4671 = vpop.f32.mrb[0].mxu0
        %4672 = vmatprep.mubr.bf16.mxu0 %v2443
        %4673 = vmatmul.mubr.bf16.gmra.mrb[0].mxu0 %v2442
        %v4674 = vpop.f32.mrb[0].mxu0
        %v4675 = vadd.f32 %v4491, %v4674
        %v4676 = vpop.f32.mrb[0].mxu0
        %v4677 = vpop.f32.mrb[0].mxu0
        %v4678 = vadd.f32 %v4494, %v4677
        %v4679 = vpop.f32.mrb[0].mxu0
        %4680 = vmatprep.mubr.bf16.mxu0 %v2467
        %4681 = vmatmul.mubr.bf16.gmra.mrb[0].mxu0 %v2466
        %v4682 = vpop.f32.mrb[0].mxu0
        %v4683 = vadd.f32 %v4499, %v4682
        %v4684 = vpop.f32.mrb[0].mxu0
        %v4685 = vpop.f32.mrb[0].mxu0
        %v4686 = vadd.f32 %v4502, %v4685
        %v4687 = vpop.f32.mrb[0].mxu0
        %4688 = vmatprep.mubr.bf16.mxu0 %v2491
        %4689 = vmatmul.mubr.bf16.gmra.mrb[0].mxu0 %v2490
        %v4690 = vpop.f32.mrb[0].mxu0
        %v4691 = vadd.f32 %v4507, %v4690
        %v4692 = vpop.f32.mrb[0].mxu0
        %v4693 = vpop.f32.mrb[0].mxu0
        %v4694 = vadd.f32 %v4510, %v4693
        %v4695 = vpop.f32.mrb[0].mxu0
        %4696 = vmatprep.mubr.bf16.mxu0 %v2515
        %4697 = vmatmul.mubr.bf16.gmra.mrb[0].mxu0 %v2514
        %v4698 = vpop.f32.mrb[0].mxu0
        %v4699 = vadd.f32 %v4515, %v4698
        %v4700 = vpop.f32.mrb[0].mxu0
        %v4701 = vpop.f32.mrb[0].mxu0
        %v4702 = vadd.f32 %v4518, %v4701
        %v4703 = vpop.f32.mrb[0].mxu0
        %4704 = vmatprep.mubr.bf16.mxu0 %v2539
        %4705 = vmatmul.mubr.bf16.gmra.mrb[0].mxu0 %v2538
        %v4706 = vpop.f32.mrb[0].mxu0
        %v4707 = vadd.f32 %v4523, %v4706
        %v4708 = vpop.f32.mrb[0].mxu0
        %v4709 = vpop.f32.mrb[0].mxu0
        %v4710 = vadd.f32 %v4526, %v4709
        %v4711 = vpop.f32.mrb[0].mxu0
        %4712 = vmatprep.mubr.bf16.mxu0 %v2563
        %4713 = vmatmul.mubr.bf16.gmra.mrb[0].mxu0 %v2562
        %v4714 = vpop.f32.mrb[0].mxu0
        %v4715 = vadd.f32 %v4531, %v4714
        %v4716 = vpop.f32.mrb[0].mxu0
        %v4717 = vpop.f32.mrb[0].mxu0
        %v4718 = vadd.f32 %v4534, %v4717
        %v4719 = vpop.f32.mrb[0].mxu0
        %4720 = vmatprep.mubr.bf16.mxu0 %v2587
        %4721 = vmatmul.mubr.bf16.gmra.mrb[0].mxu0 %v2586
        %v4722 = vpop.f32.mrb[0].mxu0
        %v4723 = vadd.f32 %v4539, %v4722
        %v4724 = vpop.f32.mrb[0].mxu0
        %v4725 = vpop.f32.mrb[0].mxu0
        %v4726 = vadd.f32 %v4542, %v4725
        %v4727 = vpop.f32.mrb[0].mxu0
        %4728 = vmatprep.mubr.bf16.mxu0 %v2611
        %4729 = vmatmul.mubr.bf16.gmra.mrb[0].mxu0 %v2610
        %v4730 = vpop.f32.mrb[0].mxu0
        %v4731 = vadd.f32 %v4547, %v4730
        %v4732 = vpop.f32.mrb[0].mxu0
        %v4733 = vpop.f32.mrb[0].mxu0
        %v4734 = vadd.f32 %v4550, %v4733
        %v4735 = vpop.f32.mrb[0].mxu0
        %4736 = vmatprep.mubr.bf16.mxu0 %v2635
        %4737 = vmatmul.mubr.bf16.gmra.mrb[0].mxu0 %v2634
        %v4738 = vpop.f32.mrb[0].mxu0
        %v4739 = vadd.f32 %v4555, %v4738
        %v4740 = vpop.f32.mrb[0].mxu0
        %v4741 = vpop.f32.mrb[0].mxu0
        %v4742 = vadd.f32 %v4558, %v4741
        %v4743 = vpop.f32.mrb[0].mxu0
        %4744 = vmatprep.mubr.bf16.mxu0 %v2659
        %4745 = vmatmul.mubr.bf16.gmra.mrb[0].mxu0 %v2658
        %v4746 = vpop.f32.mrb[0].mxu0
        %v4747 = vadd.f32 %v4563, %v4746
        %v4748 = vpop.f32.mrb[0].mxu0
        %v4749 = vpop.f32.mrb[0].mxu0
        %v4750 = vadd.f32 %v4566, %v4749
        %v4751 = vpop.f32.mrb[0].mxu0
        %4752 = vmatprep.mubr.bf16.mxu0 %v2683
        %4753 = vmatmul.mubr.bf16.gmra.mrb[0].mxu0 %v2682
        %v4754 = vpop.f32.mrb[0].mxu0
        %v4755 = vadd.f32 %v4571, %v4754
        %v4756 = vpop.f32.mrb[0].mxu0
        %v4757 = vpop.f32.mrb[0].mxu0
        %v4758 = vadd.f32 %v4574, %v4757
        %v4759 = vpop.f32.mrb[0].mxu0
        %4760 = vmatprep.mubr.bf16.mxu0 %v2707
        %4761 = vmatmul.mubr.bf16.gmra.mrb[0].mxu0 %v2706
        %v4762 = vpop.f32.mrb[0].mxu0
        %v4763 = vadd.f32 %v4579, %v4762
        %v4764 = vpop.f32.mrb[0].mxu0
        %v4765 = vpop.f32.mrb[0].mxu0
        %v4766 = vadd.f32 %v4582, %v4765
        %v4767 = vpop.f32.mrb[0].mxu0
        %4768 = vmatprep.mubr.bf16.mxu0 %v2731
        %4769 = vmatmul.mubr.bf16.gmra.mrb[0].mxu0 %v2730
        %v4770 = vpop.f32.mrb[0].mxu0
        %v4771 = vadd.f32 %v4587, %v4770
        %v4772 = vpop.f32.mrb[0].mxu0
        %v4773 = vpop.f32.mrb[0].mxu0
        %v4774 = vadd.f32 %v4590, %v4773
        %v4775 = vpop.f32.mrb[0].mxu0
        %4776 = vmatprep.mubr.bf16.mxu0 %v2755
        %4777 = vmatmul.mubr.bf16.gmra.mrb[0].mxu0 %v2754
        %v4778 = vpop.f32.mrb[0].mxu0
        %v4779 = vadd.f32 %v4595, %v4778
        %v4780 = vpop.f32.mrb[0].mxu0
        %v4781 = vpop.f32.mrb[0].mxu0
        %v4782 = vadd.f32 %v4598, %v4781
        %v4783 = vpop.f32.mrb[0].mxu0
        %4784 = vmatprep.mubr.bf16.mxu0 %v2779
        %4785 = vmatmul.mubr.bf16.gmra.mrb[0].mxu0 %v2778
        %v4786 = vpop.f32.mrb[0].mxu0
        %v4787 = vadd.f32 %v4603, %v4786
        %v4788 = vpop.f32.mrb[0].mxu0
        %v4789 = vpop.f32.mrb[0].mxu0
        %v4790 = vadd.f32 %v4606, %v4789
        %v4791 = vpop.f32.mrb[0].mxu0
        %4792 = vmatprep.mubr.bf16.mxu0 %v2803
        %4793 = vmatmul.mubr.bf16.gmra.mrb[0].mxu0 %v2802
        %v4794 = vpop.f32.mrb[0].mxu0
        %v4795 = vadd.f32 %v4611, %v4794
        %v4796 = vpop.f32.mrb[0].mxu0
        %v4797 = vpop.f32.mrb[0].mxu0
        %v4798 = vpop.f32.mrb[0].mxu0
        %4799 = vdwg.mxu0
        %4800 = vmatprep.subr.bf16.mxu0 0
        %4801 = vmatpush1.bf16.msra.mxu0 %v4080
        %4802 = vmatprep.subr.bf16.mxu0 0
        %4803 = vmatpush1.bf16.msra.mxu0 %v4081
        %4804 = vmatprep.subr.bf16.mxu0 0
        %4805 = vmatpush1.bf16.msra.mxu0 %v4082
        %4806 = vmatprep.subr.bf16.mxu0 0
        %4807 = vmatpush1.bf16.msra.mxu0 %v4083
        %4808 = vmatprep.subr.bf16.mxu0 0
        %4809 = vmatpush1.bf16.msra.mxu0 %v4084
        %4810 = vmatprep.subr.bf16.mxu0 0
        %4811 = vmatpush1.bf16.msra.mxu0 %v4085
        %4812 = vmatprep.subr.bf16.mxu0 0
        %4813 = vmatpush1.bf16.msra.mxu0 %v4086
        %4814 = vmatprep.subr.bf16.mxu0 0
        %4815 = vmatpush1.bf16.msra.mxu0 %v4087
        %4816 = vmatprep.subr.bf16.mxu0 0
        %4817 = vmatpush1.bf16.msra.mxu0 %v4088
        %4818 = vmatprep.subr.bf16.mxu0 0
        %4819 = vmatpush1.bf16.msra.mxu0 %v4089
        %4820 = vmatprep.subr.bf16.mxu0 0
        %4821 = vmatpush1.bf16.msra.mxu0 %v4090
        %4822 = vmatprep.subr.bf16.mxu0 0
        %4823 = vmatpush1.bf16.msra.mxu0 %v4091
        %4824 = vmatprep.subr.bf16.mxu0 0
        %4825 = vmatpush1.bf16.msra.mxu0 %v4092
        %4826 = vmatprep.subr.bf16.mxu0 0
        %4827 = vmatpush1.bf16.msra.mxu0 %v4093
        %4828 = vmatprep.subr.bf16.mxu0 0
        %4829 = vmatpush1.bf16.msra.mxu0 %v4094
        %4830 = vmatprep.subr.bf16.mxu0 0
        %4831 = vmatpush1.bf16.msra.mxu0 %v4095
        %4832 = vmatprep.mubr.bf16.mxu0 %v2373
        %4833 = vmatmul.mubr.bf16.gmra.mrb[0].mxu0 %v2372
        %v4834 = vpop.f32.mrb[0].mxu0
        %v4835 = vadd.f32 %v4651, %v4834
        %v4836 = vpop.f32.mrb[0].mxu0
        %v4837 = vpop.f32.mrb[0].mxu0
        %v4838 = vadd.f32 %v4654, %v4837
        %v4839 = vpop.f32.mrb[0].mxu0
        %4840 = vmatprep.mubr.bf16.mxu0 %v2397
        %4841 = vmatmul.mubr.bf16.gmra.mrb[0].mxu0 %v2396
        %v4842 = vpop.f32.mrb[0].mxu0
        %v4843 = vadd.f32 %v4659, %v4842
        %v4844 = vpop.f32.mrb[0].mxu0
        %v4845 = vpop.f32.mrb[0].mxu0
        %v4846 = vadd.f32 %v4662, %v4845
        %v4847 = vpop.f32.mrb[0].mxu0
        %4848 = vmatprep.mubr.bf16.mxu0 %v2421
        %4849 = vmatmul.mubr.bf16.gmra.mrb[0].mxu0 %v2420
        %v4850 = vpop.f32.mrb[0].mxu0
        %v4851 = vadd.f32 %v4667, %v4850
        %v4852 = vpop.f32.mrb[0].mxu0
        %v4853 = vpop.f32.mrb[0].mxu0
        %v4854 = vadd.f32 %v4670, %v4853
        %v4855 = vpop.f32.mrb[0].mxu0
        %4856 = vmatprep.mubr.bf16.mxu0 %v2445
        %4857 = vmatmul.mubr.bf16.gmra.mrb[0].mxu0 %v2444
        %v4858 = vpop.f32.mrb[0].mxu0
        %v4859 = vadd.f32 %v4675, %v4858
        %v4860 = vpop.f32.mrb[0].mxu0
        %v4861 = vpop.f32.mrb[0].mxu0
        %v4862 = vadd.f32 %v4678, %v4861
        %v4863 = vpop.f32.mrb[0].mxu0
        %4864 = vmatprep.mubr.bf16.mxu0 %v2469
        %4865 = vmatmul.mubr.bf16.gmra.mrb[0].mxu0 %v2468
        %v4866 = vpop.f32.mrb[0].mxu0
        %v4867 = vadd.f32 %v4683, %v4866
        %v4868 = vpop.f32.mrb[0].mxu0
        %v4869 = vpop.f32.mrb[0].mxu0
        %v4870 = vadd.f32 %v4686, %v4869
        %v4871 = vpop.f32.mrb[0].mxu0
        %4872 = vmatprep.mubr.bf16.mxu0 %v2493
        %4873 = vmatmul.mubr.bf16.gmra.mrb[0].mxu0 %v2492
        %v4874 = vpop.f32.mrb[0].mxu0
        %v4875 = vadd.f32 %v4691, %v4874
        %v4876 = vpop.f32.mrb[0].mxu0
        %v4877 = vpop.f32.mrb[0].mxu0
        %v4878 = vadd.f32 %v4694, %v4877
        %v4879 = vpop.f32.mrb[0].mxu0
        %4880 = vmatprep.mubr.bf16.mxu0 %v2517
        %4881 = vmatmul.mubr.bf16.gmra.mrb[0].mxu0 %v2516
        %v4882 = vpop.f32.mrb[0].mxu0
        %v4883 = vadd.f32 %v4699, %v4882
        %v4884 = vpop.f32.mrb[0].mxu0
        %v4885 = vpop.f32.mrb[0].mxu0
        %v4886 = vadd.f32 %v4702, %v4885
        %v4887 = vpop.f32.mrb[0].mxu0
        %4888 = vmatprep.mubr.bf16.mxu0 %v2541
        %4889 = vmatmul.mubr.bf16.gmra.mrb[0].mxu0 %v2540
        %v4890 = vpop.f32.mrb[0].mxu0
        %v4891 = vadd.f32 %v4707, %v4890
        %v4892 = vpop.f32.mrb[0].mxu0
        %v4893 = vpop.f32.mrb[0].mxu0
        %v4894 = vadd.f32 %v4710, %v4893
        %v4895 = vpop.f32.mrb[0].mxu0
        %4896 = vmatprep.mubr.bf16.mxu0 %v2565
        %4897 = vmatmul.mubr.bf16.gmra.mrb[0].mxu0 %v2564
        %v4898 = vpop.f32.mrb[0].mxu0
        %v4899 = vadd.f32 %v4715, %v4898
        %v4900 = vpop.f32.mrb[0].mxu0
        %v4901 = vpop.f32.mrb[0].mxu0
        %v4902 = vadd.f32 %v4718, %v4901
        %v4903 = vpop.f32.mrb[0].mxu0
        %4904 = vmatprep.mubr.bf16.mxu0 %v2589
        %4905 = vmatmul.mubr.bf16.gmra.mrb[0].mxu0 %v2588
        %v4906 = vpop.f32.mrb[0].mxu0
        %v4907 = vadd.f32 %v4723, %v4906
        %v4908 = vpop.f32.mrb[0].mxu0
        %v4909 = vpop.f32.mrb[0].mxu0
        %v4910 = vadd.f32 %v4726, %v4909
        %v4911 = vpop.f32.mrb[0].mxu0
        %4912 = vmatprep.mubr.bf16.mxu0 %v2613
        %4913 = vmatmul.mubr.bf16.gmra.mrb[0].mxu0 %v2612
        %v4914 = vpop.f32.mrb[0].mxu0
        %v4915 = vadd.f32 %v4731, %v4914
        %v4916 = vpop.f32.mrb[0].mxu0
        %v4917 = vpop.f32.mrb[0].mxu0
        %v4918 = vadd.f32 %v4734, %v4917
        %v4919 = vpop.f32.mrb[0].mxu0
        %4920 = vmatprep.mubr.bf16.mxu0 %v2637
        %4921 = vmatmul.mubr.bf16.gmra.mrb[0].mxu0 %v2636
        %v4922 = vpop.f32.mrb[0].mxu0
        %v4923 = vadd.f32 %v4739, %v4922
        %v4924 = vpop.f32.mrb[0].mxu0
        %v4925 = vpop.f32.mrb[0].mxu0
        %v4926 = vadd.f32 %v4742, %v4925
        %v4927 = vpop.f32.mrb[0].mxu0
        %4928 = vmatprep.mubr.bf16.mxu0 %v2661
        %4929 = vmatmul.mubr.bf16.gmra.mrb[0].mxu0 %v2660
        %v4930 = vpop.f32.mrb[0].mxu0
        %v4931 = vadd.f32 %v4747, %v4930
        %v4932 = vpop.f32.mrb[0].mxu0
        %v4933 = vpop.f32.mrb[0].mxu0
        %v4934 = vadd.f32 %v4750, %v4933
        %v4935 = vpop.f32.mrb[0].mxu0
        %4936 = vmatprep.mubr.bf16.mxu0 %v2685
        %4937 = vmatmul.mubr.bf16.gmra.mrb[0].mxu0 %v2684
        %v4938 = vpop.f32.mrb[0].mxu0
        %v4939 = vadd.f32 %v4755, %v4938
        %v4940 = vpop.f32.mrb[0].mxu0
        %v4941 = vpop.f32.mrb[0].mxu0
        %v4942 = vadd.f32 %v4758, %v4941
        %v4943 = vpop.f32.mrb[0].mxu0
        %4944 = vmatprep.mubr.bf16.mxu0 %v2709
        %4945 = vmatmul.mubr.bf16.gmra.mrb[0].mxu0 %v2708
        %v4946 = vpop.f32.mrb[0].mxu0
        %v4947 = vadd.f32 %v4763, %v4946
        %v4948 = vpop.f32.mrb[0].mxu0
        %v4949 = vpop.f32.mrb[0].mxu0
        %v4950 = vadd.f32 %v4766, %v4949
        %v4951 = vpop.f32.mrb[0].mxu0
        %4952 = vmatprep.mubr.bf16.mxu0 %v2733
        %4953 = vmatmul.mubr.bf16.gmra.mrb[0].mxu0 %v2732
        %v4954 = vpop.f32.mrb[0].mxu0
        %v4955 = vadd.f32 %v4771, %v4954
        %v4956 = vpop.f32.mrb[0].mxu0
        %v4957 = vpop.f32.mrb[0].mxu0
        %v4958 = vadd.f32 %v4774, %v4957
        %v4959 = vpop.f32.mrb[0].mxu0
        %4960 = vmatprep.mubr.bf16.mxu0 %v2757
        %4961 = vmatmul.mubr.bf16.gmra.mrb[0].mxu0 %v2756
        %v4962 = vpop.f32.mrb[0].mxu0
        %v4963 = vadd.f32 %v4779, %v4962
        %v4964 = vpop.f32.mrb[0].mxu0
        %v4965 = vpop.f32.mrb[0].mxu0
        %v4966 = vadd.f32 %v4782, %v4965
        %v4967 = vpop.f32.mrb[0].mxu0
        %4968 = vmatprep.mubr.bf16.mxu0 %v2781
        %4969 = vmatmul.mubr.bf16.gmra.mrb[0].mxu0 %v2780
        %v4970 = vpop.f32.mrb[0].mxu0
        %v4971 = vadd.f32 %v4787, %v4970
        %v4972 = vpop.f32.mrb[0].mxu0
        %v4973 = vpop.f32.mrb[0].mxu0
        %v4974 = vadd.f32 %v4790, %v4973
        %v4975 = vpop.f32.mrb[0].mxu0
        %4976 = vmatprep.mubr.bf16.mxu0 %v2805
        %4977 = vmatmul.mubr.bf16.gmra.mrb[0].mxu0 %v2804
        %v4978 = vpop.f32.mrb[0].mxu0
        %v4979 = vadd.f32 %v4795, %v4978
        %v4980 = vpop.f32.mrb[0].mxu0
        %v4981 = vpop.f32.mrb[0].mxu0
        %v4982 = vpop.f32.mrb[0].mxu0
        %4983 = vdwg.mxu0
        %4984 = vmatprep.subr.bf16.mxu0 0
        %4985 = vmatpush1.bf16.msra.mxu0 %v4096
        %4986 = vmatprep.subr.bf16.mxu0 0
        %4987 = vmatpush1.bf16.msra.mxu0 %v4097
        %4988 = vmatprep.subr.bf16.mxu0 0
        %4989 = vmatpush1.bf16.msra.mxu0 %v4098
        %4990 = vmatprep.subr.bf16.mxu0 0
        %4991 = vmatpush1.bf16.msra.mxu0 %v4099
        %4992 = vmatprep.subr.bf16.mxu0 0
        %4993 = vmatpush1.bf16.msra.mxu0 %v4100
        %4994 = vmatprep.subr.bf16.mxu0 0
        %4995 = vmatpush1.bf16.msra.mxu0 %v4101
        %4996 = vmatprep.subr.bf16.mxu0 0
        %4997 = vmatpush1.bf16.msra.mxu0 %v4102
        %4998 = vmatprep.subr.bf16.mxu0 0
        %4999 = vmatpush1.bf16.msra.mxu0 %v4103
        %5000 = vmatprep.subr.bf16.mxu0 0
        %5001 = vmatpush1.bf16.msra.mxu0 %v4104
        %5002 = vmatprep.subr.bf16.mxu0 0
        %5003 = vmatpush1.bf16.msra.mxu0 %v4105
        %5004 = vmatprep.subr.bf16.mxu0 0
        %5005 = vmatpush1.bf16.msra.mxu0 %v4106
        %5006 = vmatprep.subr.bf16.mxu0 0
        %5007 = vmatpush1.bf16.msra.mxu0 %v4107
        %5008 = vmatprep.subr.bf16.mxu0 0
        %5009 = vmatpush1.bf16.msra.mxu0 %v4108
        %5010 = vmatprep.subr.bf16.mxu0 0
        %5011 = vmatpush1.bf16.msra.mxu0 %v4109
        %5012 = vmatprep.subr.bf16.mxu0 0
        %5013 = vmatpush1.bf16.msra.mxu0 %v4110
        %5014 = vmatprep.subr.bf16.mxu0 0
        %5015 = vmatpush1.bf16.msra.mxu0 %v4111
        %5016 = vmatprep.mubr.bf16.mxu0 %v2375
        %5017 = vmatmul.mubr.bf16.gmra.mrb[0].mxu0 %v2374
        %v5018 = vpop.f32.mrb[0].mxu0
        %v5019 = vadd.f32 %v4835, %v5018
        %v5020 = vpop.f32.mrb[0].mxu0
        %v5021 = vpop.f32.mrb[0].mxu0
        %v5022 = vadd.f32 %v4838, %v5021
        %v5023 = vpop.f32.mrb[0].mxu0
        %5024 = vmatprep.mubr.bf16.mxu0 %v2399
        %5025 = vmatmul.mubr.bf16.gmra.mrb[0].mxu0 %v2398
        %v5026 = vpop.f32.mrb[0].mxu0
        %v5027 = vadd.f32 %v4843, %v5026
        %v5028 = vpop.f32.mrb[0].mxu0
        %v5029 = vpop.f32.mrb[0].mxu0
        %v5030 = vadd.f32 %v4846, %v5029
        %v5031 = vpop.f32.mrb[0].mxu0
        %5032 = vmatprep.mubr.bf16.mxu0 %v2423
        %5033 = vmatmul.mubr.bf16.gmra.mrb[0].mxu0 %v2422
        %v5034 = vpop.f32.mrb[0].mxu0
        %v5035 = vadd.f32 %v4851, %v5034
        %v5036 = vpop.f32.mrb[0].mxu0
        %v5037 = vpop.f32.mrb[0].mxu0
        %v5038 = vadd.f32 %v4854, %v5037
        %v5039 = vpop.f32.mrb[0].mxu0
        %5040 = vmatprep.mubr.bf16.mxu0 %v2447
        %5041 = vmatmul.mubr.bf16.gmra.mrb[0].mxu0 %v2446
        %v5042 = vpop.f32.mrb[0].mxu0
        %v5043 = vadd.f32 %v4859, %v5042
        %v5044 = vpop.f32.mrb[0].mxu0
        %v5045 = vpop.f32.mrb[0].mxu0
        %v5046 = vadd.f32 %v4862, %v5045
        %v5047 = vpop.f32.mrb[0].mxu0
        %5048 = vmatprep.mubr.bf16.mxu0 %v2471
        %5049 = vmatmul.mubr.bf16.gmra.mrb[0].mxu0 %v2470
        %v5050 = vpop.f32.mrb[0].mxu0
        %v5051 = vadd.f32 %v4867, %v5050
        %v5052 = vpop.f32.mrb[0].mxu0
        %v5053 = vpop.f32.mrb[0].mxu0
        %v5054 = vadd.f32 %v4870, %v5053
        %v5055 = vpop.f32.mrb[0].mxu0
        %5056 = vmatprep.mubr.bf16.mxu0 %v2495
        %5057 = vmatmul.mubr.bf16.gmra.mrb[0].mxu0 %v2494
        %v5058 = vpop.f32.mrb[0].mxu0
        %v5059 = vadd.f32 %v4875, %v5058
        %v5060 = vpop.f32.mrb[0].mxu0
        %v5061 = vpop.f32.mrb[0].mxu0
        %v5062 = vadd.f32 %v4878, %v5061
        %v5063 = vpop.f32.mrb[0].mxu0
        %5064 = vmatprep.mubr.bf16.mxu0 %v2519
        %5065 = vmatmul.mubr.bf16.gmra.mrb[0].mxu0 %v2518
        %v5066 = vpop.f32.mrb[0].mxu0
        %v5067 = vadd.f32 %v4883, %v5066
        %v5068 = vpop.f32.mrb[0].mxu0
        %v5069 = vpop.f32.mrb[0].mxu0
        %v5070 = vadd.f32 %v4886, %v5069
        %v5071 = vpop.f32.mrb[0].mxu0
        %5072 = vmatprep.mubr.bf16.mxu0 %v2543
        %5073 = vmatmul.mubr.bf16.gmra.mrb[0].mxu0 %v2542
        %v5074 = vpop.f32.mrb[0].mxu0
        %v5075 = vadd.f32 %v4891, %v5074
        %v5076 = vpop.f32.mrb[0].mxu0
        %v5077 = vpop.f32.mrb[0].mxu0
        %v5078 = vadd.f32 %v4894, %v5077
        %v5079 = vpop.f32.mrb[0].mxu0
        %5080 = vmatprep.mubr.bf16.mxu0 %v2567
        %5081 = vmatmul.mubr.bf16.gmra.mrb[0].mxu0 %v2566
        %v5082 = vpop.f32.mrb[0].mxu0
        %v5083 = vadd.f32 %v4899, %v5082
        %v5084 = vpop.f32.mrb[0].mxu0
        %v5085 = vpop.f32.mrb[0].mxu0
        %v5086 = vadd.f32 %v4902, %v5085
        %v5087 = vpop.f32.mrb[0].mxu0
        %5088 = vmatprep.mubr.bf16.mxu0 %v2591
        %5089 = vmatmul.mubr.bf16.gmra.mrb[0].mxu0 %v2590
        %v5090 = vpop.f32.mrb[0].mxu0
        %v5091 = vadd.f32 %v4907, %v5090
        %v5092 = vpop.f32.mrb[0].mxu0
        %v5093 = vpop.f32.mrb[0].mxu0
        %v5094 = vadd.f32 %v4910, %v5093
        %v5095 = vpop.f32.mrb[0].mxu0
        %5096 = vmatprep.mubr.bf16.mxu0 %v2615
        %5097 = vmatmul.mubr.bf16.gmra.mrb[0].mxu0 %v2614
        %v5098 = vpop.f32.mrb[0].mxu0
        %v5099 = vadd.f32 %v4915, %v5098
        %v5100 = vpop.f32.mrb[0].mxu0
        %v5101 = vpop.f32.mrb[0].mxu0
        %v5102 = vadd.f32 %v4918, %v5101
        %v5103 = vpop.f32.mrb[0].mxu0
        %5104 = vmatprep.mubr.bf16.mxu0 %v2639
        %5105 = vmatmul.mubr.bf16.gmra.mrb[0].mxu0 %v2638
        %v5106 = vpop.f32.mrb[0].mxu0
        %v5107 = vadd.f32 %v4923, %v5106
        %v5108 = vpop.f32.mrb[0].mxu0
        %v5109 = vpop.f32.mrb[0].mxu0
        %v5110 = vadd.f32 %v4926, %v5109
        %v5111 = vpop.f32.mrb[0].mxu0
        %5112 = vmatprep.mubr.bf16.mxu0 %v2663
        %5113 = vmatmul.mubr.bf16.gmra.mrb[0].mxu0 %v2662
        %v5114 = vpop.f32.mrb[0].mxu0
        %v5115 = vadd.f32 %v4931, %v5114
        %v5116 = vpop.f32.mrb[0].mxu0
        %v5117 = vpop.f32.mrb[0].mxu0
        %v5118 = vadd.f32 %v4934, %v5117
        %v5119 = vpop.f32.mrb[0].mxu0
        %5120 = vmatprep.mubr.bf16.mxu0 %v2687
        %5121 = vmatmul.mubr.bf16.gmra.mrb[0].mxu0 %v2686
        %v5122 = vpop.f32.mrb[0].mxu0
        %v5123 = vadd.f32 %v4939, %v5122
        %v5124 = vpop.f32.mrb[0].mxu0
        %v5125 = vpop.f32.mrb[0].mxu0
        %v5126 = vadd.f32 %v4942, %v5125
        %v5127 = vpop.f32.mrb[0].mxu0
        %5128 = vmatprep.mubr.bf16.mxu0 %v2711
        %5129 = vmatmul.mubr.bf16.gmra.mrb[0].mxu0 %v2710
        %v5130 = vpop.f32.mrb[0].mxu0
        %v5131 = vadd.f32 %v4947, %v5130
        %v5132 = vpop.f32.mrb[0].mxu0
        %v5133 = vpop.f32.mrb[0].mxu0
        %v5134 = vadd.f32 %v4950, %v5133
        %v5135 = vpop.f32.mrb[0].mxu0
        %5136 = vmatprep.mubr.bf16.mxu0 %v2735
        %5137 = vmatmul.mubr.bf16.gmra.mrb[0].mxu0 %v2734
        %v5138 = vpop.f32.mrb[0].mxu0
        %v5139 = vadd.f32 %v4955, %v5138
        %v5140 = vpop.f32.mrb[0].mxu0
        %v5141 = vpop.f32.mrb[0].mxu0
        %v5142 = vadd.f32 %v4958, %v5141
        %v5143 = vpop.f32.mrb[0].mxu0
        %5144 = vmatprep.mubr.bf16.mxu0 %v2759
        %5145 = vmatmul.mubr.bf16.gmra.mrb[0].mxu0 %v2758
        %v5146 = vpop.f32.mrb[0].mxu0
        %v5147 = vadd.f32 %v4963, %v5146
        %v5148 = vpop.f32.mrb[0].mxu0
        %v5149 = vpop.f32.mrb[0].mxu0
        %v5150 = vadd.f32 %v4966, %v5149
        %v5151 = vpop.f32.mrb[0].mxu0
        %5152 = vmatprep.mubr.bf16.mxu0 %v2783
        %5153 = vmatmul.mubr.bf16.gmra.mrb[0].mxu0 %v2782
        %v5154 = vpop.f32.mrb[0].mxu0
        %v5155 = vadd.f32 %v4971, %v5154
        %v5156 = vpop.f32.mrb[0].mxu0
        %v5157 = vpop.f32.mrb[0].mxu0
        %v5158 = vadd.f32 %v4974, %v5157
        %v5159 = vpop.f32.mrb[0].mxu0
        %5160 = vmatprep.mubr.bf16.mxu0 %v2807
        %5161 = vmatmul.mubr.bf16.gmra.mrb[0].mxu0 %v2806
        %v5162 = vpop.f32.mrb[0].mxu0
        %v5163 = vadd.f32 %v4979, %v5162
        %v5164 = vpop.f32.mrb[0].mxu0
        %v5165 = vpop.f32.mrb[0].mxu0
        %v5166 = vpop.f32.mrb[0].mxu0
        %5167 = vdwg.mxu0
        %5168 = vmatprep.subr.bf16.mxu0 0
        %5169 = vmatpush1.bf16.msra.mxu0 %v4112
        %5170 = vmatprep.subr.bf16.mxu0 0
        %5171 = vmatpush1.bf16.msra.mxu0 %v4113
        %5172 = vmatprep.subr.bf16.mxu0 0
        %5173 = vmatpush1.bf16.msra.mxu0 %v4114
        %5174 = vmatprep.subr.bf16.mxu0 0
        %5175 = vmatpush1.bf16.msra.mxu0 %v4115
        %5176 = vmatprep.subr.bf16.mxu0 0
        %5177 = vmatpush1.bf16.msra.mxu0 %v4116
        %5178 = vmatprep.subr.bf16.mxu0 0
        %5179 = vmatpush1.bf16.msra.mxu0 %v4117
        %5180 = vmatprep.subr.bf16.mxu0 0
        %5181 = vmatpush1.bf16.msra.mxu0 %v4118
        %5182 = vmatprep.subr.bf16.mxu0 0
        %5183 = vmatpush1.bf16.msra.mxu0 %v4119
        %5184 = vmatprep.subr.bf16.mxu0 0
        %5185 = vmatpush1.bf16.msra.mxu0 %v4120
        %5186 = vmatprep.subr.bf16.mxu0 0
        %5187 = vmatpush1.bf16.msra.mxu0 %v4121
        %5188 = vmatprep.subr.bf16.mxu0 0
        %5189 = vmatpush1.bf16.msra.mxu0 %v4122
        %5190 = vmatprep.subr.bf16.mxu0 0
        %5191 = vmatpush1.bf16.msra.mxu0 %v4123
        %5192 = vmatprep.subr.bf16.mxu0 0
        %5193 = vmatpush1.bf16.msra.mxu0 %v4124
        %5194 = vmatprep.subr.bf16.mxu0 0
        %5195 = vmatpush1.bf16.msra.mxu0 %v4125
        %5196 = vmatprep.subr.bf16.mxu0 0
        %5197 = vmatpush1.bf16.msra.mxu0 %v4126
        %5198 = vmatprep.subr.bf16.mxu0 0
        %5199 = vmatpush1.bf16.msra.mxu0 %v4127
        %5200 = vmatprep.mubr.bf16.mxu0 %v2377
        %5201 = vmatmul.mubr.bf16.gmra.mrb[0].mxu0 %v2376
        %v5202 = vpop.f32.mrb[0].mxu0
        %v5203 = vadd.f32 %v5019, %v5202
        %v5204 = vpop.f32.mrb[0].mxu0
        %v5205 = vpop.f32.mrb[0].mxu0
        %v5206 = vadd.f32 %v5022, %v5205
        %v5207 = vpop.f32.mrb[0].mxu0
        %5208 = vmatprep.mubr.bf16.mxu0 %v2401
        %5209 = vmatmul.mubr.bf16.gmra.mrb[0].mxu0 %v2400
        %v5210 = vpop.f32.mrb[0].mxu0
        %v5211 = vadd.f32 %v5027, %v5210
        %v5212 = vpop.f32.mrb[0].mxu0
        %v5213 = vpop.f32.mrb[0].mxu0
        %v5214 = vadd.f32 %v5030, %v5213
        %v5215 = vpop.f32.mrb[0].mxu0
        %5216 = vmatprep.mubr.bf16.mxu0 %v2425
        %5217 = vmatmul.mubr.bf16.gmra.mrb[0].mxu0 %v2424
        %v5218 = vpop.f32.mrb[0].mxu0
        %v5219 = vadd.f32 %v5035, %v5218
        %v5220 = vpop.f32.mrb[0].mxu0
        %v5221 = vpop.f32.mrb[0].mxu0
        %v5222 = vadd.f32 %v5038, %v5221
        %v5223 = vpop.f32.mrb[0].mxu0
        %5224 = vmatprep.mubr.bf16.mxu0 %v2449
        %5225 = vmatmul.mubr.bf16.gmra.mrb[0].mxu0 %v2448
        %v5226 = vpop.f32.mrb[0].mxu0
        %v5227 = vadd.f32 %v5043, %v5226
        %v5228 = vpop.f32.mrb[0].mxu0
        %v5229 = vpop.f32.mrb[0].mxu0
        %v5230 = vadd.f32 %v5046, %v5229
        %v5231 = vpop.f32.mrb[0].mxu0
        %5232 = vmatprep.mubr.bf16.mxu0 %v2473
        %5233 = vmatmul.mubr.bf16.gmra.mrb[0].mxu0 %v2472
        %v5234 = vpop.f32.mrb[0].mxu0
        %v5235 = vadd.f32 %v5051, %v5234
        %v5236 = vpop.f32.mrb[0].mxu0
        %v5237 = vpop.f32.mrb[0].mxu0
        %v5238 = vadd.f32 %v5054, %v5237
        %v5239 = vpop.f32.mrb[0].mxu0
        %5240 = vmatprep.mubr.bf16.mxu0 %v2497
        %5241 = vmatmul.mubr.bf16.gmra.mrb[0].mxu0 %v2496
        %v5242 = vpop.f32.mrb[0].mxu0
        %v5243 = vadd.f32 %v5059, %v5242
        %v5244 = vpop.f32.mrb[0].mxu0
        %v5245 = vpop.f32.mrb[0].mxu0
        %v5246 = vadd.f32 %v5062, %v5245
        %v5247 = vpop.f32.mrb[0].mxu0
        %5248 = vmatprep.mubr.bf16.mxu0 %v2521
        %5249 = vmatmul.mubr.bf16.gmra.mrb[0].mxu0 %v2520
        %v5250 = vpop.f32.mrb[0].mxu0
        %v5251 = vadd.f32 %v5067, %v5250
        %v5252 = vpop.f32.mrb[0].mxu0
        %v5253 = vpop.f32.mrb[0].mxu0
        %v5254 = vadd.f32 %v5070, %v5253
        %v5255 = vpop.f32.mrb[0].mxu0
        %5256 = vmatprep.mubr.bf16.mxu0 %v2545
        %5257 = vmatmul.mubr.bf16.gmra.mrb[0].mxu0 %v2544
        %v5258 = vpop.f32.mrb[0].mxu0
        %v5259 = vadd.f32 %v5075, %v5258
        %v5260 = vpop.f32.mrb[0].mxu0
        %v5261 = vpop.f32.mrb[0].mxu0
        %v5262 = vadd.f32 %v5078, %v5261
        %v5263 = vpop.f32.mrb[0].mxu0
        %5264 = vmatprep.mubr.bf16.mxu0 %v2569
        %5265 = vmatmul.mubr.bf16.gmra.mrb[0].mxu0 %v2568
        %v5266 = vpop.f32.mrb[0].mxu0
        %v5267 = vadd.f32 %v5083, %v5266
        %v5268 = vpop.f32.mrb[0].mxu0
        %v5269 = vpop.f32.mrb[0].mxu0
        %v5270 = vadd.f32 %v5086, %v5269
        %v5271 = vpop.f32.mrb[0].mxu0
        %5272 = vmatprep.mubr.bf16.mxu0 %v2593
        %5273 = vmatmul.mubr.bf16.gmra.mrb[0].mxu0 %v2592
        %v5274 = vpop.f32.mrb[0].mxu0
        %v5275 = vadd.f32 %v5091, %v5274
        %v5276 = vpop.f32.mrb[0].mxu0
        %v5277 = vpop.f32.mrb[0].mxu0
        %v5278 = vadd.f32 %v5094, %v5277
        %v5279 = vpop.f32.mrb[0].mxu0
        %5280 = vmatprep.mubr.bf16.mxu0 %v2617
        %5281 = vmatmul.mubr.bf16.gmra.mrb[0].mxu0 %v2616
        %v5282 = vpop.f32.mrb[0].mxu0
        %v5283 = vadd.f32 %v5099, %v5282
        %v5284 = vpop.f32.mrb[0].mxu0
        %v5285 = vpop.f32.mrb[0].mxu0
        %v5286 = vadd.f32 %v5102, %v5285
        %v5287 = vpop.f32.mrb[0].mxu0
        %5288 = vmatprep.mubr.bf16.mxu0 %v2641
        %5289 = vmatmul.mubr.bf16.gmra.mrb[0].mxu0 %v2640
        %v5290 = vpop.f32.mrb[0].mxu0
        %v5291 = vadd.f32 %v5107, %v5290
        %v5292 = vpop.f32.mrb[0].mxu0
        %v5293 = vpop.f32.mrb[0].mxu0
        %v5294 = vadd.f32 %v5110, %v5293
        %v5295 = vpop.f32.mrb[0].mxu0
        %5296 = vmatprep.mubr.bf16.mxu0 %v2665
        %5297 = vmatmul.mubr.bf16.gmra.mrb[0].mxu0 %v2664
        %v5298 = vpop.f32.mrb[0].mxu0
        %v5299 = vadd.f32 %v5115, %v5298
        %v5300 = vpop.f32.mrb[0].mxu0
        %v5301 = vpop.f32.mrb[0].mxu0
        %v5302 = vadd.f32 %v5118, %v5301
        %v5303 = vpop.f32.mrb[0].mxu0
        %5304 = vmatprep.mubr.bf16.mxu0 %v2689
        %5305 = vmatmul.mubr.bf16.gmra.mrb[0].mxu0 %v2688
        %v5306 = vpop.f32.mrb[0].mxu0
        %v5307 = vadd.f32 %v5123, %v5306
        %v5308 = vpop.f32.mrb[0].mxu0
        %v5309 = vpop.f32.mrb[0].mxu0
        %v5310 = vadd.f32 %v5126, %v5309
        %v5311 = vpop.f32.mrb[0].mxu0
        %5312 = vmatprep.mubr.bf16.mxu0 %v2713
        %5313 = vmatmul.mubr.bf16.gmra.mrb[0].mxu0 %v2712
        %v5314 = vpop.f32.mrb[0].mxu0
        %v5315 = vadd.f32 %v5131, %v5314
        %v5316 = vpop.f32.mrb[0].mxu0
        %v5317 = vpop.f32.mrb[0].mxu0
        %v5318 = vadd.f32 %v5134, %v5317
        %v5319 = vpop.f32.mrb[0].mxu0
        %5320 = vmatprep.mubr.bf16.mxu0 %v2737
        %5321 = vmatmul.mubr.bf16.gmra.mrb[0].mxu0 %v2736
        %v5322 = vpop.f32.mrb[0].mxu0
        %v5323 = vadd.f32 %v5139, %v5322
        %v5324 = vpop.f32.mrb[0].mxu0
        %v5325 = vpop.f32.mrb[0].mxu0
        %v5326 = vadd.f32 %v5142, %v5325
        %v5327 = vpop.f32.mrb[0].mxu0
        %5328 = vmatprep.mubr.bf16.mxu0 %v2761
        %5329 = vmatmul.mubr.bf16.gmra.mrb[0].mxu0 %v2760
        %v5330 = vpop.f32.mrb[0].mxu0
        %v5331 = vadd.f32 %v5147, %v5330
        %v5332 = vpop.f32.mrb[0].mxu0
        %v5333 = vpop.f32.mrb[0].mxu0
        %v5334 = vadd.f32 %v5150, %v5333
        %v5335 = vpop.f32.mrb[0].mxu0
        %5336 = vmatprep.mubr.bf16.mxu0 %v2785
        %5337 = vmatmul.mubr.bf16.gmra.mrb[0].mxu0 %v2784
        %v5338 = vpop.f32.mrb[0].mxu0
        %v5339 = vadd.f32 %v5155, %v5338
        %v5340 = vpop.f32.mrb[0].mxu0
        %v5341 = vpop.f32.mrb[0].mxu0
        %v5342 = vadd.f32 %v5158, %v5341
        %v5343 = vpop.f32.mrb[0].mxu0
        %5344 = vmatprep.mubr.bf16.mxu0 %v2809
        %5345 = vmatmul.mubr.bf16.gmra.mrb[0].mxu0 %v2808
        %v5346 = vpop.f32.mrb[0].mxu0
        %v5347 = vadd.f32 %v5163, %v5346
        %v5348 = vpop.f32.mrb[0].mxu0
        %v5349 = vpop.f32.mrb[0].mxu0
        %v5350 = vpop.f32.mrb[0].mxu0
        %5351 = vdwg.mxu0
        %5352 = vmatprep.subr.bf16.mxu0 0
        %5353 = vmatpush1.bf16.msra.mxu0 %v4128
        %5354 = vmatprep.subr.bf16.mxu0 0
        %5355 = vmatpush1.bf16.msra.mxu0 %v4129
        %5356 = vmatprep.subr.bf16.mxu0 0
        %5357 = vmatpush1.bf16.msra.mxu0 %v4130
        %5358 = vmatprep.subr.bf16.mxu0 0
        %5359 = vmatpush1.bf16.msra.mxu0 %v4131
        %5360 = vmatprep.subr.bf16.mxu0 0
        %5361 = vmatpush1.bf16.msra.mxu0 %v4132
        %5362 = vmatprep.subr.bf16.mxu0 0
        %5363 = vmatpush1.bf16.msra.mxu0 %v4133
        %5364 = vmatprep.subr.bf16.mxu0 0
        %5365 = vmatpush1.bf16.msra.mxu0 %v4134
        %5366 = vmatprep.subr.bf16.mxu0 0
        %5367 = vmatpush1.bf16.msra.mxu0 %v4135
        %5368 = vmatprep.subr.bf16.mxu0 0
        %5369 = vmatpush1.bf16.msra.mxu0 %v4136
        %5370 = vmatprep.subr.bf16.mxu0 0
        %5371 = vmatpush1.bf16.msra.mxu0 %v4137
        %5372 = vmatprep.subr.bf16.mxu0 0
        %5373 = vmatpush1.bf16.msra.mxu0 %v4138
        %5374 = vmatprep.subr.bf16.mxu0 0
        %5375 = vmatpush1.bf16.msra.mxu0 %v4139
        %5376 = vmatprep.subr.bf16.mxu0 0
        %5377 = vmatpush1.bf16.msra.mxu0 %v4140
        %5378 = vmatprep.subr.bf16.mxu0 0
        %5379 = vmatpush1.bf16.msra.mxu0 %v4141
        %5380 = vmatprep.subr.bf16.mxu0 0
        %5381 = vmatpush1.bf16.msra.mxu0 %v4142
        %5382 = vmatprep.subr.bf16.mxu0 0
        %5383 = vmatpush1.bf16.msra.mxu0 %v4143
        %5384 = vmatprep.mubr.bf16.mxu0 %v2379
        %5385 = vmatmul.mubr.bf16.gmra.mrb[0].mxu0 %v2378
        %v5386 = vpop.f32.mrb[0].mxu0
        %v5387 = vadd.f32 %v5203, %v5386
        %v5388 = vpop.f32.mrb[0].mxu0
        %v5389 = vpop.f32.mrb[0].mxu0
        %v5390 = vadd.f32 %v5206, %v5389
        %v5391 = vpop.f32.mrb[0].mxu0
        %5392 = vmatprep.mubr.bf16.mxu0 %v2403
        %5393 = vmatmul.mubr.bf16.gmra.mrb[0].mxu0 %v2402
        %v5394 = vpop.f32.mrb[0].mxu0
        %v5395 = vadd.f32 %v5211, %v5394
        %v5396 = vpop.f32.mrb[0].mxu0
        %v5397 = vpop.f32.mrb[0].mxu0
        %v5398 = vadd.f32 %v5214, %v5397
        %v5399 = vpop.f32.mrb[0].mxu0
        %5400 = vmatprep.mubr.bf16.mxu0 %v2427
        %5401 = vmatmul.mubr.bf16.gmra.mrb[0].mxu0 %v2426
        %v5402 = vpop.f32.mrb[0].mxu0
        %v5403 = vadd.f32 %v5219, %v5402
        %v5404 = vpop.f32.mrb[0].mxu0
        %v5405 = vpop.f32.mrb[0].mxu0
        %v5406 = vadd.f32 %v5222, %v5405
        %v5407 = vpop.f32.mrb[0].mxu0
        %5408 = vmatprep.mubr.bf16.mxu0 %v2451
        %5409 = vmatmul.mubr.bf16.gmra.mrb[0].mxu0 %v2450
        %v5410 = vpop.f32.mrb[0].mxu0
        %v5411 = vadd.f32 %v5227, %v5410
        %v5412 = vpop.f32.mrb[0].mxu0
        %v5413 = vpop.f32.mrb[0].mxu0
        %v5414 = vadd.f32 %v5230, %v5413
        %v5415 = vpop.f32.mrb[0].mxu0
        %5416 = vmatprep.mubr.bf16.mxu0 %v2475
        %5417 = vmatmul.mubr.bf16.gmra.mrb[0].mxu0 %v2474
        %v5418 = vpop.f32.mrb[0].mxu0
        %v5419 = vadd.f32 %v5235, %v5418
        %v5420 = vpop.f32.mrb[0].mxu0
        %v5421 = vpop.f32.mrb[0].mxu0
        %v5422 = vadd.f32 %v5238, %v5421
        %v5423 = vpop.f32.mrb[0].mxu0
        %5424 = vmatprep.mubr.bf16.mxu0 %v2499
        %5425 = vmatmul.mubr.bf16.gmra.mrb[0].mxu0 %v2498
        %v5426 = vpop.f32.mrb[0].mxu0
        %v5427 = vadd.f32 %v5243, %v5426
        %v5428 = vpop.f32.mrb[0].mxu0
        %v5429 = vpop.f32.mrb[0].mxu0
        %v5430 = vadd.f32 %v5246, %v5429
        %v5431 = vpop.f32.mrb[0].mxu0
        %5432 = vmatprep.mubr.bf16.mxu0 %v2523
        %5433 = vmatmul.mubr.bf16.gmra.mrb[0].mxu0 %v2522
        %v5434 = vpop.f32.mrb[0].mxu0
        %v5435 = vadd.f32 %v5251, %v5434
        %v5436 = vpop.f32.mrb[0].mxu0
        %v5437 = vpop.f32.mrb[0].mxu0
        %v5438 = vadd.f32 %v5254, %v5437
        %v5439 = vpop.f32.mrb[0].mxu0
        %5440 = vmatprep.mubr.bf16.mxu0 %v2547
        %5441 = vmatmul.mubr.bf16.gmra.mrb[0].mxu0 %v2546
        %v5442 = vpop.f32.mrb[0].mxu0
        %v5443 = vadd.f32 %v5259, %v5442
        %v5444 = vpop.f32.mrb[0].mxu0
        %v5445 = vpop.f32.mrb[0].mxu0
        %v5446 = vadd.f32 %v5262, %v5445
        %v5447 = vpop.f32.mrb[0].mxu0
        %5448 = vmatprep.mubr.bf16.mxu0 %v2571
        %5449 = vmatmul.mubr.bf16.gmra.mrb[0].mxu0 %v2570
        %v5450 = vpop.f32.mrb[0].mxu0
        %v5451 = vadd.f32 %v5267, %v5450
        %v5452 = vpop.f32.mrb[0].mxu0
        %v5453 = vpop.f32.mrb[0].mxu0
        %v5454 = vadd.f32 %v5270, %v5453
        %v5455 = vpop.f32.mrb[0].mxu0
        %5456 = vmatprep.mubr.bf16.mxu0 %v2595
        %5457 = vmatmul.mubr.bf16.gmra.mrb[0].mxu0 %v2594
        %v5458 = vpop.f32.mrb[0].mxu0
        %v5459 = vadd.f32 %v5275, %v5458
        %v5460 = vpop.f32.mrb[0].mxu0
        %v5461 = vpop.f32.mrb[0].mxu0
        %v5462 = vadd.f32 %v5278, %v5461
        %v5463 = vpop.f32.mrb[0].mxu0
        %5464 = vmatprep.mubr.bf16.mxu0 %v2619
        %5465 = vmatmul.mubr.bf16.gmra.mrb[0].mxu0 %v2618
        %v5466 = vpop.f32.mrb[0].mxu0
        %v5467 = vadd.f32 %v5283, %v5466
        %v5468 = vpop.f32.mrb[0].mxu0
        %v5469 = vpop.f32.mrb[0].mxu0
        %v5470 = vadd.f32 %v5286, %v5469
        %v5471 = vpop.f32.mrb[0].mxu0
        %5472 = vmatprep.mubr.bf16.mxu0 %v2643
        %5473 = vmatmul.mubr.bf16.gmra.mrb[0].mxu0 %v2642
        %v5474 = vpop.f32.mrb[0].mxu0
        %v5475 = vadd.f32 %v5291, %v5474
        %v5476 = vpop.f32.mrb[0].mxu0
        %v5477 = vpop.f32.mrb[0].mxu0
        %v5478 = vadd.f32 %v5294, %v5477
        %v5479 = vpop.f32.mrb[0].mxu0
        %5480 = vmatprep.mubr.bf16.mxu0 %v2667
        %5481 = vmatmul.mubr.bf16.gmra.mrb[0].mxu0 %v2666
        %v5482 = vpop.f32.mrb[0].mxu0
        %v5483 = vadd.f32 %v5299, %v5482
        %v5484 = vpop.f32.mrb[0].mxu0
        %v5485 = vpop.f32.mrb[0].mxu0
        %v5486 = vadd.f32 %v5302, %v5485
        %v5487 = vpop.f32.mrb[0].mxu0
        %5488 = vmatprep.mubr.bf16.mxu0 %v2691
        %5489 = vmatmul.mubr.bf16.gmra.mrb[0].mxu0 %v2690
        %v5490 = vpop.f32.mrb[0].mxu0
        %v5491 = vadd.f32 %v5307, %v5490
        %v5492 = vpop.f32.mrb[0].mxu0
        %v5493 = vpop.f32.mrb[0].mxu0
        %v5494 = vadd.f32 %v5310, %v5493
        %v5495 = vpop.f32.mrb[0].mxu0
        %5496 = vmatprep.mubr.bf16.mxu0 %v2715
        %5497 = vmatmul.mubr.bf16.gmra.mrb[0].mxu0 %v2714
        %v5498 = vpop.f32.mrb[0].mxu0
        %v5499 = vadd.f32 %v5315, %v5498
        %v5500 = vpop.f32.mrb[0].mxu0
        %v5501 = vpop.f32.mrb[0].mxu0
        %v5502 = vadd.f32 %v5318, %v5501
        %v5503 = vpop.f32.mrb[0].mxu0
        %5504 = vmatprep.mubr.bf16.mxu0 %v2739
        %5505 = vmatmul.mubr.bf16.gmra.mrb[0].mxu0 %v2738
        %v5506 = vpop.f32.mrb[0].mxu0
        %v5507 = vadd.f32 %v5323, %v5506
        %v5508 = vpop.f32.mrb[0].mxu0
        %v5509 = vpop.f32.mrb[0].mxu0
        %v5510 = vadd.f32 %v5326, %v5509
        %v5511 = vpop.f32.mrb[0].mxu0
        %5512 = vmatprep.mubr.bf16.mxu0 %v2763
        %5513 = vmatmul.mubr.bf16.gmra.mrb[0].mxu0 %v2762
        %v5514 = vpop.f32.mrb[0].mxu0
        %v5515 = vadd.f32 %v5331, %v5514
        %v5516 = vpop.f32.mrb[0].mxu0
        %v5517 = vpop.f32.mrb[0].mxu0
        %v5518 = vadd.f32 %v5334, %v5517
        %v5519 = vpop.f32.mrb[0].mxu0
        %5520 = vmatprep.mubr.bf16.mxu0 %v2787
        %5521 = vmatmul.mubr.bf16.gmra.mrb[0].mxu0 %v2786
        %v5522 = vpop.f32.mrb[0].mxu0
        %v5523 = vadd.f32 %v5339, %v5522
        %v5524 = vpop.f32.mrb[0].mxu0
        %v5525 = vpop.f32.mrb[0].mxu0
        %v5526 = vadd.f32 %v5342, %v5525
        %v5527 = vpop.f32.mrb[0].mxu0
        %5528 = vmatprep.mubr.bf16.mxu0 %v2811
        %5529 = vmatmul.mubr.bf16.gmra.mrb[0].mxu0 %v2810
        %v5530 = vpop.f32.mrb[0].mxu0
        %v5531 = vadd.f32 %v5347, %v5530
        %v5532 = vpop.f32.mrb[0].mxu0
        %v5533 = vpop.f32.mrb[0].mxu0
        %v5534 = vpop.f32.mrb[0].mxu0
        %5535 = vdwg.mxu0
        %5536 = vmatprep.subr.bf16.mxu0 0
        %5537 = vmatpush1.bf16.msra.mxu0 %v4144
        %5538 = vmatprep.subr.bf16.mxu0 0
        %5539 = vmatpush1.bf16.msra.mxu0 %v4145
        %5540 = vmatprep.subr.bf16.mxu0 0
        %5541 = vmatpush1.bf16.msra.mxu0 %v4146
        %5542 = vmatprep.subr.bf16.mxu0 0
        %5543 = vmatpush1.bf16.msra.mxu0 %v4147
        %5544 = vmatprep.subr.bf16.mxu0 0
        %5545 = vmatpush1.bf16.msra.mxu0 %v4148
        %5546 = vmatprep.subr.bf16.mxu0 0
        %5547 = vmatpush1.bf16.msra.mxu0 %v4149
        %5548 = vmatprep.subr.bf16.mxu0 0
        %5549 = vmatpush1.bf16.msra.mxu0 %v4150
        %5550 = vmatprep.subr.bf16.mxu0 0
        %5551 = vmatpush1.bf16.msra.mxu0 %v4151
        %5552 = vmatprep.subr.bf16.mxu0 0
        %5553 = vmatpush1.bf16.msra.mxu0 %v4152
        %5554 = vmatprep.subr.bf16.mxu0 0
        %5555 = vmatpush1.bf16.msra.mxu0 %v4153
        %5556 = vmatprep.subr.bf16.mxu0 0
        %5557 = vmatpush1.bf16.msra.mxu0 %v4154
        %5558 = vmatprep.subr.bf16.mxu0 0
        %5559 = vmatpush1.bf16.msra.mxu0 %v4155
        %5560 = vmatprep.subr.bf16.mxu0 0
        %5561 = vmatpush1.bf16.msra.mxu0 %v4156
        %5562 = vmatprep.subr.bf16.mxu0 0
        %5563 = vmatpush1.bf16.msra.mxu0 %v4157
        %5564 = vmatprep.subr.bf16.mxu0 0
        %5565 = vmatpush1.bf16.msra.mxu0 %v4158
        %5566 = vmatprep.subr.bf16.mxu0 0
        %5567 = vmatpush1.bf16.msra.mxu0 %v4159
        %5568 = vmatprep.mubr.bf16.mxu0 %v2381
        %5569 = vmatmul.mubr.bf16.gmra.mrb[0].mxu0 %v2380
        %v5570 = vpop.f32.mrb[0].mxu0
        %v5571 = vadd.f32 %v5387, %v5570
        %v5572 = vpop.f32.mrb[0].mxu0
        %v5573 = vpop.f32.mrb[0].mxu0
        %v5574 = vadd.f32 %v5390, %v5573
        %v5575 = vpop.f32.mrb[0].mxu0
        %5576 = vmatprep.mubr.bf16.mxu0 %v2405
        %5577 = vmatmul.mubr.bf16.gmra.mrb[0].mxu0 %v2404
        %v5578 = vpop.f32.mrb[0].mxu0
        %v5579 = vadd.f32 %v5395, %v5578
        %v5580 = vpop.f32.mrb[0].mxu0
        %v5581 = vpop.f32.mrb[0].mxu0
        %v5582 = vadd.f32 %v5398, %v5581
        %v5583 = vpop.f32.mrb[0].mxu0
        %5584 = vmatprep.mubr.bf16.mxu0 %v2429
        %5585 = vmatmul.mubr.bf16.gmra.mrb[0].mxu0 %v2428
        %v5586 = vpop.f32.mrb[0].mxu0
        %v5587 = vadd.f32 %v5403, %v5586
        %v5588 = vpop.f32.mrb[0].mxu0
        %v5589 = vpop.f32.mrb[0].mxu0
        %v5590 = vadd.f32 %v5406, %v5589
        %v5591 = vpop.f32.mrb[0].mxu0
        %5592 = vmatprep.mubr.bf16.mxu0 %v2453
        %5593 = vmatmul.mubr.bf16.gmra.mrb[0].mxu0 %v2452
        %v5594 = vpop.f32.mrb[0].mxu0
        %v5595 = vadd.f32 %v5411, %v5594
        %v5596 = vpop.f32.mrb[0].mxu0
        %v5597 = vpop.f32.mrb[0].mxu0
        %v5598 = vadd.f32 %v5414, %v5597
        %v5599 = vpop.f32.mrb[0].mxu0
        %5600 = vmatprep.mubr.bf16.mxu0 %v2477
        %5601 = vmatmul.mubr.bf16.gmra.mrb[0].mxu0 %v2476
        %v5602 = vpop.f32.mrb[0].mxu0
        %v5603 = vadd.f32 %v5419, %v5602
        %v5604 = vpop.f32.mrb[0].mxu0
        %v5605 = vpop.f32.mrb[0].mxu0
        %v5606 = vadd.f32 %v5422, %v5605
        %v5607 = vpop.f32.mrb[0].mxu0
        %5608 = vmatprep.mubr.bf16.mxu0 %v2501
        %5609 = vmatmul.mubr.bf16.gmra.mrb[0].mxu0 %v2500
        %v5610 = vpop.f32.mrb[0].mxu0
        %v5611 = vadd.f32 %v5427, %v5610
        %v5612 = vpop.f32.mrb[0].mxu0
        %v5613 = vpop.f32.mrb[0].mxu0
        %v5614 = vadd.f32 %v5430, %v5613
        %v5615 = vpop.f32.mrb[0].mxu0
        %5616 = vmatprep.mubr.bf16.mxu0 %v2525
        %5617 = vmatmul.mubr.bf16.gmra.mrb[0].mxu0 %v2524
        %v5618 = vpop.f32.mrb[0].mxu0
        %v5619 = vadd.f32 %v5435, %v5618
        %v5620 = vpop.f32.mrb[0].mxu0
        %v5621 = vpop.f32.mrb[0].mxu0
        %v5622 = vadd.f32 %v5438, %v5621
        %v5623 = vpop.f32.mrb[0].mxu0
        %5624 = vmatprep.mubr.bf16.mxu0 %v2549
        %5625 = vmatmul.mubr.bf16.gmra.mrb[0].mxu0 %v2548
        %v5626 = vpop.f32.mrb[0].mxu0
        %v5627 = vadd.f32 %v5443, %v5626
        %v5628 = vpop.f32.mrb[0].mxu0
        %v5629 = vpop.f32.mrb[0].mxu0
        %v5630 = vadd.f32 %v5446, %v5629
        %v5631 = vpop.f32.mrb[0].mxu0
        %5632 = vmatprep.mubr.bf16.mxu0 %v2573
        %5633 = vmatmul.mubr.bf16.gmra.mrb[0].mxu0 %v2572
        %v5634 = vpop.f32.mrb[0].mxu0
        %v5635 = vadd.f32 %v5451, %v5634
        %v5636 = vpop.f32.mrb[0].mxu0
        %v5637 = vpop.f32.mrb[0].mxu0
        %v5638 = vadd.f32 %v5454, %v5637
        %v5639 = vpop.f32.mrb[0].mxu0
        %5640 = vmatprep.mubr.bf16.mxu0 %v2597
        %5641 = vmatmul.mubr.bf16.gmra.mrb[0].mxu0 %v2596
        %v5642 = vpop.f32.mrb[0].mxu0
        %v5643 = vadd.f32 %v5459, %v5642
        %v5644 = vpop.f32.mrb[0].mxu0
        %v5645 = vpop.f32.mrb[0].mxu0
        %v5646 = vadd.f32 %v5462, %v5645
        %v5647 = vpop.f32.mrb[0].mxu0
        %5648 = vmatprep.mubr.bf16.mxu0 %v2621
        %5649 = vmatmul.mubr.bf16.gmra.mrb[0].mxu0 %v2620
        %v5650 = vpop.f32.mrb[0].mxu0
        %v5651 = vadd.f32 %v5467, %v5650
        %v5652 = vpop.f32.mrb[0].mxu0
        %v5653 = vpop.f32.mrb[0].mxu0
        %v5654 = vadd.f32 %v5470, %v5653
        %v5655 = vpop.f32.mrb[0].mxu0
        %5656 = vmatprep.mubr.bf16.mxu0 %v2645
        %5657 = vmatmul.mubr.bf16.gmra.mrb[0].mxu0 %v2644
        %v5658 = vpop.f32.mrb[0].mxu0
        %v5659 = vadd.f32 %v5475, %v5658
        %v5660 = vpop.f32.mrb[0].mxu0
        %v5661 = vpop.f32.mrb[0].mxu0
        %v5662 = vadd.f32 %v5478, %v5661
        %v5663 = vpop.f32.mrb[0].mxu0
        %5664 = vmatprep.mubr.bf16.mxu0 %v2669
        %5665 = vmatmul.mubr.bf16.gmra.mrb[0].mxu0 %v2668
        %v5666 = vpop.f32.mrb[0].mxu0
        %v5667 = vadd.f32 %v5483, %v5666
        %v5668 = vpop.f32.mrb[0].mxu0
        %v5669 = vpop.f32.mrb[0].mxu0
        %v5670 = vadd.f32 %v5486, %v5669
        %v5671 = vpop.f32.mrb[0].mxu0
        %5672 = vmatprep.mubr.bf16.mxu0 %v2693
        %5673 = vmatmul.mubr.bf16.gmra.mrb[0].mxu0 %v2692
        %v5674 = vpop.f32.mrb[0].mxu0
        %v5675 = vadd.f32 %v5491, %v5674
        %v5676 = vpop.f32.mrb[0].mxu0
        %v5677 = vpop.f32.mrb[0].mxu0
        %v5678 = vadd.f32 %v5494, %v5677
        %v5679 = vpop.f32.mrb[0].mxu0
        %5680 = vmatprep.mubr.bf16.mxu0 %v2717
        %5681 = vmatmul.mubr.bf16.gmra.mrb[0].mxu0 %v2716
        %v5682 = vpop.f32.mrb[0].mxu0
        %v5683 = vadd.f32 %v5499, %v5682
        %v5684 = vpop.f32.mrb[0].mxu0
        %v5685 = vpop.f32.mrb[0].mxu0
        %v5686 = vadd.f32 %v5502, %v5685
        %v5687 = vpop.f32.mrb[0].mxu0
        %5688 = vmatprep.mubr.bf16.mxu0 %v2741
        %5689 = vmatmul.mubr.bf16.gmra.mrb[0].mxu0 %v2740
        %v5690 = vpop.f32.mrb[0].mxu0
        %v5691 = vadd.f32 %v5507, %v5690
        %v5692 = vpop.f32.mrb[0].mxu0
        %v5693 = vpop.f32.mrb[0].mxu0
        %v5694 = vadd.f32 %v5510, %v5693
        %v5695 = vpop.f32.mrb[0].mxu0
        %5696 = vmatprep.mubr.bf16.mxu0 %v2765
        %5697 = vmatmul.mubr.bf16.gmra.mrb[0].mxu0 %v2764
        %v5698 = vpop.f32.mrb[0].mxu0
        %v5699 = vadd.f32 %v5515, %v5698
        %v5700 = vpop.f32.mrb[0].mxu0
        %v5701 = vpop.f32.mrb[0].mxu0
        %v5702 = vadd.f32 %v5518, %v5701
        %v5703 = vpop.f32.mrb[0].mxu0
        %5704 = vmatprep.mubr.bf16.mxu0 %v2789
        %5705 = vmatmul.mubr.bf16.gmra.mrb[0].mxu0 %v2788
        %v5706 = vpop.f32.mrb[0].mxu0
        %v5707 = vadd.f32 %v5523, %v5706
        %v5708 = vpop.f32.mrb[0].mxu0
        %v5709 = vpop.f32.mrb[0].mxu0
        %v5710 = vadd.f32 %v5526, %v5709
        %v5711 = vpop.f32.mrb[0].mxu0
        %5712 = vmatprep.mubr.bf16.mxu0 %v2813
        %5713 = vmatmul.mubr.bf16.gmra.mrb[0].mxu0 %v2812
        %v5714 = vpop.f32.mrb[0].mxu0
        %v5715 = vadd.f32 %v5531, %v5714
        %v5716 = vpop.f32.mrb[0].mxu0
        %v5717 = vpop.f32.mrb[0].mxu0
        %v5718 = vpop.f32.mrb[0].mxu0
        %5719 = vdwg.mxu0
        %5720 = vmatprep.subr.bf16.mxu0 0
        %5721 = vmatpush1.bf16.msra.mxu0 %v4160
        %5722 = vmatprep.subr.bf16.mxu0 0
        %5723 = vmatpush1.bf16.msra.mxu0 %v4161
        %5724 = vmatprep.subr.bf16.mxu0 0
        %5725 = vmatpush1.bf16.msra.mxu0 %v4162
        %5726 = vmatprep.subr.bf16.mxu0 0
        %5727 = vmatpush1.bf16.msra.mxu0 %v4163
        %5728 = vmatprep.subr.bf16.mxu0 0
        %5729 = vmatpush1.bf16.msra.mxu0 %v4164
        %5730 = vmatprep.subr.bf16.mxu0 0
        %5731 = vmatpush1.bf16.msra.mxu0 %v4165
        %5732 = vmatprep.subr.bf16.mxu0 0
        %5733 = vmatpush1.bf16.msra.mxu0 %v4166
        %5734 = vmatprep.subr.bf16.mxu0 0
        %5735 = vmatpush1.bf16.msra.mxu0 %v4167
        %5736 = vmatprep.subr.bf16.mxu0 0
        %5737 = vmatpush1.bf16.msra.mxu0 %v4168
        %5738 = vmatprep.subr.bf16.mxu0 0
        %5739 = vmatpush1.bf16.msra.mxu0 %v4169
        %5740 = vmatprep.subr.bf16.mxu0 0
        %5741 = vmatpush1.bf16.msra.mxu0 %v4170
        %5742 = vmatprep.subr.bf16.mxu0 0
        %5743 = vmatpush1.bf16.msra.mxu0 %v4171
        %5744 = vmatprep.subr.bf16.mxu0 0
        %5745 = vmatpush1.bf16.msra.mxu0 %v4172
        %5746 = vmatprep.subr.bf16.mxu0 0
        %5747 = vmatpush1.bf16.msra.mxu0 %v4173
        %5748 = vmatprep.subr.bf16.mxu0 0
        %5749 = vmatpush1.bf16.msra.mxu0 %v4174
        %5750 = vmatprep.subr.bf16.mxu0 0
        %5751 = vmatpush1.bf16.msra.mxu0 %v4175
        %5752 = vmatprep.mubr.bf16.mxu0 %v2383
        %5753 = vmatmul.mubr.bf16.gmra.mrb[0].mxu0 %v2382
        %v5754 = vpop.f32.mrb[0].mxu0
        %v5755 = vadd.f32 %v5571, %v5754
        %v5756 = vpop.f32.mrb[0].mxu0
        %v5757 = vpop.f32.mrb[0].mxu0
        %v5758 = vadd.f32 %v5574, %v5757
        %v5759 = vpop.f32.mrb[0].mxu0
        %5760 = vmatprep.mubr.bf16.mxu0 %v2407
        %5761 = vmatmul.mubr.bf16.gmra.mrb[0].mxu0 %v2406
        %v5762 = vpop.f32.mrb[0].mxu0
        %v5763 = vadd.f32 %v5579, %v5762
        %v5764 = vpop.f32.mrb[0].mxu0
        %v5765 = vpop.f32.mrb[0].mxu0
        %v5766 = vadd.f32 %v5582, %v5765
        %v5767 = vpop.f32.mrb[0].mxu0
        %5768 = vmatprep.mubr.bf16.mxu0 %v2431
        %5769 = vmatmul.mubr.bf16.gmra.mrb[0].mxu0 %v2430
        %v5770 = vpop.f32.mrb[0].mxu0
        %v5771 = vadd.f32 %v5587, %v5770
        %v5772 = vpop.f32.mrb[0].mxu0
        %v5773 = vpop.f32.mrb[0].mxu0
        %v5774 = vadd.f32 %v5590, %v5773
        %v5775 = vpop.f32.mrb[0].mxu0
        %5776 = vmatprep.mubr.bf16.mxu0 %v2455
        %5777 = vmatmul.mubr.bf16.gmra.mrb[0].mxu0 %v2454
        %v5778 = vpop.f32.mrb[0].mxu0
        %v5779 = vadd.f32 %v5595, %v5778
        %v5780 = vpop.f32.mrb[0].mxu0
        %v5781 = vpop.f32.mrb[0].mxu0
        %v5782 = vadd.f32 %v5598, %v5781
        %v5783 = vpop.f32.mrb[0].mxu0
        %5784 = vmatprep.mubr.bf16.mxu0 %v2479
        %5785 = vmatmul.mubr.bf16.gmra.mrb[0].mxu0 %v2478
        %v5786 = vpop.f32.mrb[0].mxu0
        %v5787 = vadd.f32 %v5603, %v5786
        %v5788 = vpop.f32.mrb[0].mxu0
        %v5789 = vpop.f32.mrb[0].mxu0
        %v5790 = vadd.f32 %v5606, %v5789
        %v5791 = vpop.f32.mrb[0].mxu0
        %5792 = vmatprep.mubr.bf16.mxu0 %v2503
        %5793 = vmatmul.mubr.bf16.gmra.mrb[0].mxu0 %v2502
        %v5794 = vpop.f32.mrb[0].mxu0
        %v5795 = vadd.f32 %v5611, %v5794
        %v5796 = vpop.f32.mrb[0].mxu0
        %v5797 = vpop.f32.mrb[0].mxu0
        %v5798 = vadd.f32 %v5614, %v5797
        %v5799 = vpop.f32.mrb[0].mxu0
        %5800 = vmatprep.mubr.bf16.mxu0 %v2527
        %5801 = vmatmul.mubr.bf16.gmra.mrb[0].mxu0 %v2526
        %v5802 = vpop.f32.mrb[0].mxu0
        %v5803 = vadd.f32 %v5619, %v5802
        %v5804 = vpop.f32.mrb[0].mxu0
        %v5805 = vpop.f32.mrb[0].mxu0
        %v5806 = vadd.f32 %v5622, %v5805
        %v5807 = vpop.f32.mrb[0].mxu0
        %5808 = vmatprep.mubr.bf16.mxu0 %v2551
        %5809 = vmatmul.mubr.bf16.gmra.mrb[0].mxu0 %v2550
        %v5810 = vpop.f32.mrb[0].mxu0
        %v5811 = vadd.f32 %v5627, %v5810
        %v5812 = vpop.f32.mrb[0].mxu0
        %v5813 = vpop.f32.mrb[0].mxu0
        %v5814 = vadd.f32 %v5630, %v5813
        %v5815 = vpop.f32.mrb[0].mxu0
        %5816 = vmatprep.mubr.bf16.mxu0 %v2575
        %5817 = vmatmul.mubr.bf16.gmra.mrb[0].mxu0 %v2574
        %v5818 = vpop.f32.mrb[0].mxu0
        %v5819 = vadd.f32 %v5635, %v5818
        %v5820 = vpop.f32.mrb[0].mxu0
        %v5821 = vpop.f32.mrb[0].mxu0
        %v5822 = vadd.f32 %v5638, %v5821
        %v5823 = vpop.f32.mrb[0].mxu0
        %5824 = vmatprep.mubr.bf16.mxu0 %v2599
        %5825 = vmatmul.mubr.bf16.gmra.mrb[0].mxu0 %v2598
        %v5826 = vpop.f32.mrb[0].mxu0
        %v5827 = vadd.f32 %v5643, %v5826
        %v5828 = vpop.f32.mrb[0].mxu0
        %v5829 = vpop.f32.mrb[0].mxu0
        %v5830 = vadd.f32 %v5646, %v5829
        %v5831 = vpop.f32.mrb[0].mxu0
        %5832 = vmatprep.mubr.bf16.mxu0 %v2623
        %5833 = vmatmul.mubr.bf16.gmra.mrb[0].mxu0 %v2622
        %v5834 = vpop.f32.mrb[0].mxu0
        %v5835 = vadd.f32 %v5651, %v5834
        %v5836 = vpop.f32.mrb[0].mxu0
        %v5837 = vpop.f32.mrb[0].mxu0
        %v5838 = vadd.f32 %v5654, %v5837
        %v5839 = vpop.f32.mrb[0].mxu0
        %5840 = vmatprep.mubr.bf16.mxu0 %v2647
        %5841 = vmatmul.mubr.bf16.gmra.mrb[0].mxu0 %v2646
        %v5842 = vpop.f32.mrb[0].mxu0
        %v5843 = vadd.f32 %v5659, %v5842
        %v5844 = vpop.f32.mrb[0].mxu0
        %v5845 = vpop.f32.mrb[0].mxu0
        %v5846 = vadd.f32 %v5662, %v5845
        %v5847 = vpop.f32.mrb[0].mxu0
        %5848 = vmatprep.mubr.bf16.mxu0 %v2671
        %5849 = vmatmul.mubr.bf16.gmra.mrb[0].mxu0 %v2670
        %v5850 = vpop.f32.mrb[0].mxu0
        %v5851 = vadd.f32 %v5667, %v5850
        %v5852 = vpop.f32.mrb[0].mxu0
        %v5853 = vpop.f32.mrb[0].mxu0
        %v5854 = vadd.f32 %v5670, %v5853
        %v5855 = vpop.f32.mrb[0].mxu0
        %5856 = vmatprep.mubr.bf16.mxu0 %v2695
        %5857 = vmatmul.mubr.bf16.gmra.mrb[0].mxu0 %v2694
        %v5858 = vpop.f32.mrb[0].mxu0
        %v5859 = vadd.f32 %v5675, %v5858
        %v5860 = vpop.f32.mrb[0].mxu0
        %v5861 = vpop.f32.mrb[0].mxu0
        %v5862 = vadd.f32 %v5678, %v5861
        %v5863 = vpop.f32.mrb[0].mxu0
        %5864 = vmatprep.mubr.bf16.mxu0 %v2719
        %5865 = vmatmul.mubr.bf16.gmra.mrb[0].mxu0 %v2718
        %v5866 = vpop.f32.mrb[0].mxu0
        %v5867 = vadd.f32 %v5683, %v5866
        %v5868 = vpop.f32.mrb[0].mxu0
        %v5869 = vpop.f32.mrb[0].mxu0
        %v5870 = vadd.f32 %v5686, %v5869
        %v5871 = vpop.f32.mrb[0].mxu0
        %5872 = vmatprep.mubr.bf16.mxu0 %v2743
        %5873 = vmatmul.mubr.bf16.gmra.mrb[0].mxu0 %v2742
        %v5874 = vpop.f32.mrb[0].mxu0
        %v5875 = vadd.f32 %v5691, %v5874
        %v5876 = vpop.f32.mrb[0].mxu0
        %v5877 = vpop.f32.mrb[0].mxu0
        %v5878 = vadd.f32 %v5694, %v5877
        %v5879 = vpop.f32.mrb[0].mxu0
        %5880 = vmatprep.mubr.bf16.mxu0 %v2767
        %5881 = vmatmul.mubr.bf16.gmra.mrb[0].mxu0 %v2766
        %v5882 = vpop.f32.mrb[0].mxu0
        %v5883 = vadd.f32 %v5699, %v5882
        %v5884 = vpop.f32.mrb[0].mxu0
        %v5885 = vpop.f32.mrb[0].mxu0
        %v5886 = vadd.f32 %v5702, %v5885
        %v5887 = vpop.f32.mrb[0].mxu0
        %5888 = vmatprep.mubr.bf16.mxu0 %v2791
        %5889 = vmatmul.mubr.bf16.gmra.mrb[0].mxu0 %v2790
        %v5890 = vpop.f32.mrb[0].mxu0
        %v5891 = vadd.f32 %v5707, %v5890
        %v5892 = vpop.f32.mrb[0].mxu0
        %v5893 = vpop.f32.mrb[0].mxu0
        %v5894 = vadd.f32 %v5710, %v5893
        %v5895 = vpop.f32.mrb[0].mxu0
        %5896 = vmatprep.mubr.bf16.mxu0 %v2815
        %5897 = vmatmul.mubr.bf16.gmra.mrb[0].mxu0 %v2814
        %v5898 = vpop.f32.mrb[0].mxu0
        %v5899 = vadd.f32 %v5715, %v5898
        %v5900 = vpop.f32.mrb[0].mxu0
        %v5901 = vpop.f32.mrb[0].mxu0
        %v5902 = vpop.f32.mrb[0].mxu0
        %5903 = vdwg.mxu0
        %5904 = vmatprep.subr.bf16.mxu0 0
        %5905 = vmatpush1.bf16.msra.mxu0 %v4176
        %5906 = vmatprep.subr.bf16.mxu0 0
        %5907 = vmatpush1.bf16.msra.mxu0 %v4177
        %5908 = vmatprep.subr.bf16.mxu0 0
        %5909 = vmatpush1.bf16.msra.mxu0 %v4178
        %5910 = vmatprep.subr.bf16.mxu0 0
        %5911 = vmatpush1.bf16.msra.mxu0 %v4179
        %5912 = vmatprep.subr.bf16.mxu0 0
        %5913 = vmatpush1.bf16.msra.mxu0 %v4180
        %5914 = vmatprep.subr.bf16.mxu0 0
        %5915 = vmatpush1.bf16.msra.mxu0 %v4181
        %5916 = vmatprep.subr.bf16.mxu0 0
        %5917 = vmatpush1.bf16.msra.mxu0 %v4182
        %5918 = vmatprep.subr.bf16.mxu0 0
        %5919 = vmatpush1.bf16.msra.mxu0 %v4183
        %5920 = vmatprep.subr.bf16.mxu0 0
        %5921 = vmatpush1.bf16.msra.mxu0 %v4184
        %5922 = vmatprep.subr.bf16.mxu0 0
        %5923 = vmatpush1.bf16.msra.mxu0 %v4185
        %5924 = vmatprep.subr.bf16.mxu0 0
        %5925 = vmatpush1.bf16.msra.mxu0 %v4186
        %5926 = vmatprep.subr.bf16.mxu0 0
        %5927 = vmatpush1.bf16.msra.mxu0 %v4187
        %5928 = vmatprep.subr.bf16.mxu0 0
        %5929 = vmatpush1.bf16.msra.mxu0 %v4188
        %5930 = vmatprep.subr.bf16.mxu0 0
        %5931 = vmatpush1.bf16.msra.mxu0 %v4189
        %5932 = vmatprep.subr.bf16.mxu0 0
        %5933 = vmatpush1.bf16.msra.mxu0 %v4190
        %5934 = vmatprep.subr.bf16.mxu0 0
        %5935 = vmatpush1.bf16.msra.mxu0 %v4191
        %5936 = vmatprep.mubr.bf16.mxu0 %v2385
        %5937 = vmatmul.mubr.bf16.gmra.mrb[0].mxu0 %v2384
        %v5938 = vpop.f32.mrb[0].mxu0
        %v5939 = vadd.f32 %v5755, %v5938
        %v5940 = vpop.f32.mrb[0].mxu0
        %v5941 = vpop.f32.mrb[0].mxu0
        %v5942 = vadd.f32 %v5758, %v5941
        %v5943 = vpop.f32.mrb[0].mxu0
        %5944 = vmatprep.mubr.bf16.mxu0 %v2409
        %5945 = vmatmul.mubr.bf16.gmra.mrb[0].mxu0 %v2408
        %v5946 = vpop.f32.mrb[0].mxu0
        %v5947 = vadd.f32 %v5763, %v5946
        %v5948 = vpop.f32.mrb[0].mxu0
        %v5949 = vpop.f32.mrb[0].mxu0
        %v5950 = vadd.f32 %v5766, %v5949
        %v5951 = vpop.f32.mrb[0].mxu0
        %5952 = vmatprep.mubr.bf16.mxu0 %v2433
        %5953 = vmatmul.mubr.bf16.gmra.mrb[0].mxu0 %v2432
        %v5954 = vpop.f32.mrb[0].mxu0
        %v5955 = vadd.f32 %v5771, %v5954
        %v5956 = vpop.f32.mrb[0].mxu0
        %v5957 = vpop.f32.mrb[0].mxu0
        %v5958 = vadd.f32 %v5774, %v5957
        %v5959 = vpop.f32.mrb[0].mxu0
        %5960 = vmatprep.mubr.bf16.mxu0 %v2457
        %5961 = vmatmul.mubr.bf16.gmra.mrb[0].mxu0 %v2456
        %v5962 = vpop.f32.mrb[0].mxu0
        %v5963 = vadd.f32 %v5779, %v5962
        %v5964 = vpop.f32.mrb[0].mxu0
        %v5965 = vpop.f32.mrb[0].mxu0
        %v5966 = vadd.f32 %v5782, %v5965
        %v5967 = vpop.f32.mrb[0].mxu0
        %5968 = vmatprep.mubr.bf16.mxu0 %v2481
        %5969 = vmatmul.mubr.bf16.gmra.mrb[0].mxu0 %v2480
        %v5970 = vpop.f32.mrb[0].mxu0
        %v5971 = vadd.f32 %v5787, %v5970
        %v5972 = vpop.f32.mrb[0].mxu0
        %v5973 = vpop.f32.mrb[0].mxu0
        %v5974 = vadd.f32 %v5790, %v5973
        %v5975 = vpop.f32.mrb[0].mxu0
        %5976 = vmatprep.mubr.bf16.mxu0 %v2505
        %5977 = vmatmul.mubr.bf16.gmra.mrb[0].mxu0 %v2504
        %v5978 = vpop.f32.mrb[0].mxu0
        %v5979 = vadd.f32 %v5795, %v5978
        %v5980 = vpop.f32.mrb[0].mxu0
        %v5981 = vpop.f32.mrb[0].mxu0
        %v5982 = vadd.f32 %v5798, %v5981
        %v5983 = vpop.f32.mrb[0].mxu0
        %5984 = vmatprep.mubr.bf16.mxu0 %v2529
        %5985 = vmatmul.mubr.bf16.gmra.mrb[0].mxu0 %v2528
        %v5986 = vpop.f32.mrb[0].mxu0
        %v5987 = vadd.f32 %v5803, %v5986
        %v5988 = vpop.f32.mrb[0].mxu0
        %v5989 = vpop.f32.mrb[0].mxu0
        %v5990 = vadd.f32 %v5806, %v5989
        %v5991 = vpop.f32.mrb[0].mxu0
        %5992 = vmatprep.mubr.bf16.mxu0 %v2553
        %5993 = vmatmul.mubr.bf16.gmra.mrb[0].mxu0 %v2552
        %v5994 = vpop.f32.mrb[0].mxu0
        %v5995 = vadd.f32 %v5811, %v5994
        %v5996 = vpop.f32.mrb[0].mxu0
        %v5997 = vpop.f32.mrb[0].mxu0
        %v5998 = vadd.f32 %v5814, %v5997
        %v5999 = vpop.f32.mrb[0].mxu0
        %6000 = vmatprep.mubr.bf16.mxu0 %v2577
        %6001 = vmatmul.mubr.bf16.gmra.mrb[0].mxu0 %v2576
        %v6002 = vpop.f32.mrb[0].mxu0
        %v6003 = vadd.f32 %v5819, %v6002
        %v6004 = vpop.f32.mrb[0].mxu0
        %v6005 = vpop.f32.mrb[0].mxu0
        %v6006 = vadd.f32 %v5822, %v6005
        %v6007 = vpop.f32.mrb[0].mxu0
        %6008 = vmatprep.mubr.bf16.mxu0 %v2601
        %6009 = vmatmul.mubr.bf16.gmra.mrb[0].mxu0 %v2600
        %v6010 = vpop.f32.mrb[0].mxu0
        %v6011 = vadd.f32 %v5827, %v6010
        %v6012 = vpop.f32.mrb[0].mxu0
        %v6013 = vpop.f32.mrb[0].mxu0
        %v6014 = vadd.f32 %v5830, %v6013
        %v6015 = vpop.f32.mrb[0].mxu0
        %6016 = vmatprep.mubr.bf16.mxu0 %v2625
        %6017 = vmatmul.mubr.bf16.gmra.mrb[0].mxu0 %v2624
        %v6018 = vpop.f32.mrb[0].mxu0
        %v6019 = vadd.f32 %v5835, %v6018
        %v6020 = vpop.f32.mrb[0].mxu0
        %v6021 = vpop.f32.mrb[0].mxu0
        %v6022 = vadd.f32 %v5838, %v6021
        %v6023 = vpop.f32.mrb[0].mxu0
        %6024 = vmatprep.mubr.bf16.mxu0 %v2649
        %6025 = vmatmul.mubr.bf16.gmra.mrb[0].mxu0 %v2648
        %v6026 = vpop.f32.mrb[0].mxu0
        %v6027 = vadd.f32 %v5843, %v6026
        %v6028 = vpop.f32.mrb[0].mxu0
        %v6029 = vpop.f32.mrb[0].mxu0
        %v6030 = vadd.f32 %v5846, %v6029
        %v6031 = vpop.f32.mrb[0].mxu0
        %6032 = vmatprep.mubr.bf16.mxu0 %v2673
        %6033 = vmatmul.mubr.bf16.gmra.mrb[0].mxu0 %v2672
        %v6034 = vpop.f32.mrb[0].mxu0
        %v6035 = vadd.f32 %v5851, %v6034
        %v6036 = vpop.f32.mrb[0].mxu0
        %v6037 = vpop.f32.mrb[0].mxu0
        %v6038 = vadd.f32 %v5854, %v6037
        %v6039 = vpop.f32.mrb[0].mxu0
        %6040 = vmatprep.mubr.bf16.mxu0 %v2697
        %6041 = vmatmul.mubr.bf16.gmra.mrb[0].mxu0 %v2696
        %v6042 = vpop.f32.mrb[0].mxu0
        %v6043 = vadd.f32 %v5859, %v6042
        %v6044 = vpop.f32.mrb[0].mxu0
        %v6045 = vpop.f32.mrb[0].mxu0
        %v6046 = vadd.f32 %v5862, %v6045
        %v6047 = vpop.f32.mrb[0].mxu0
        %6048 = vmatprep.mubr.bf16.mxu0 %v2721
        %6049 = vmatmul.mubr.bf16.gmra.mrb[0].mxu0 %v2720
        %v6050 = vpop.f32.mrb[0].mxu0
        %v6051 = vadd.f32 %v5867, %v6050
        %v6052 = vpop.f32.mrb[0].mxu0
        %v6053 = vpop.f32.mrb[0].mxu0
        %v6054 = vadd.f32 %v5870, %v6053
        %v6055 = vpop.f32.mrb[0].mxu0
        %6056 = vmatprep.mubr.bf16.mxu0 %v2745
        %6057 = vmatmul.mubr.bf16.gmra.mrb[0].mxu0 %v2744
        %v6058 = vpop.f32.mrb[0].mxu0
        %v6059 = vadd.f32 %v5875, %v6058
        %v6060 = vpop.f32.mrb[0].mxu0
        %v6061 = vpop.f32.mrb[0].mxu0
        %v6062 = vadd.f32 %v5878, %v6061
        %v6063 = vpop.f32.mrb[0].mxu0
        %6064 = vmatprep.mubr.bf16.mxu0 %v2769
        %6065 = vmatmul.mubr.bf16.gmra.mrb[0].mxu0 %v2768
        %v6066 = vpop.f32.mrb[0].mxu0
        %v6067 = vadd.f32 %v5883, %v6066
        %v6068 = vpop.f32.mrb[0].mxu0
        %v6069 = vpop.f32.mrb[0].mxu0
        %v6070 = vadd.f32 %v5886, %v6069
        %v6071 = vpop.f32.mrb[0].mxu0
        %6072 = vmatprep.mubr.bf16.mxu0 %v2793
        %6073 = vmatmul.mubr.bf16.gmra.mrb[0].mxu0 %v2792
        %v6074 = vpop.f32.mrb[0].mxu0
        %v6075 = vadd.f32 %v5891, %v6074
        %v6076 = vpop.f32.mrb[0].mxu0
        %v6077 = vpop.f32.mrb[0].mxu0
        %v6078 = vadd.f32 %v5894, %v6077
        %v6079 = vpop.f32.mrb[0].mxu0
        %6080 = vmatprep.mubr.bf16.mxu0 %v2817
        %6081 = vmatmul.mubr.bf16.gmra.mrb[0].mxu0 %v2816
        %v6082 = vpop.f32.mrb[0].mxu0
        %v6083 = vadd.f32 %v5899, %v6082
        %v6084 = vpop.f32.mrb[0].mxu0
        %v6085 = vpop.f32.mrb[0].mxu0
        %v6086 = vpop.f32.mrb[0].mxu0
        %6087 = vdwg.mxu0
        %6088 = vmatprep.subr.bf16.mxu0 0
        %6089 = vmatpush1.bf16.msra.mxu0 %v4192
        %6090 = vmatprep.subr.bf16.mxu0 0
        %6091 = vmatpush1.bf16.msra.mxu0 %v4193
        %6092 = vmatprep.subr.bf16.mxu0 0
        %6093 = vmatpush1.bf16.msra.mxu0 %v4194
        %6094 = vmatprep.subr.bf16.mxu0 0
        %6095 = vmatpush1.bf16.msra.mxu0 %v4195
        %6096 = vmatprep.subr.bf16.mxu0 0
        %6097 = vmatpush1.bf16.msra.mxu0 %v4196
        %6098 = vmatprep.subr.bf16.mxu0 0
        %6099 = vmatpush1.bf16.msra.mxu0 %v4197
        %6100 = vmatprep.subr.bf16.mxu0 0
        %6101 = vmatpush1.bf16.msra.mxu0 %v4198
        %6102 = vmatprep.subr.bf16.mxu0 0
        %6103 = vmatpush1.bf16.msra.mxu0 %v4199
        %6104 = vmatprep.subr.bf16.mxu0 0
        %6105 = vmatpush1.bf16.msra.mxu0 %v4200
        %6106 = vmatprep.subr.bf16.mxu0 0
        %6107 = vmatpush1.bf16.msra.mxu0 %v4201
        %6108 = vmatprep.subr.bf16.mxu0 0
        %6109 = vmatpush1.bf16.msra.mxu0 %v4202
        %6110 = vmatprep.subr.bf16.mxu0 0
        %6111 = vmatpush1.bf16.msra.mxu0 %v4203
        %6112 = vmatprep.subr.bf16.mxu0 0
        %6113 = vmatpush1.bf16.msra.mxu0 %v4204
        %6114 = vmatprep.subr.bf16.mxu0 0
        %6115 = vmatpush1.bf16.msra.mxu0 %v4205
        %6116 = vmatprep.subr.bf16.mxu0 0
        %6117 = vmatpush1.bf16.msra.mxu0 %v4206
        %6118 = vmatprep.subr.bf16.mxu0 0
        %6119 = vmatpush1.bf16.msra.mxu0 %v4207
        %6120 = vmatprep.mubr.bf16.mxu0 %v2387
        %6121 = vmatmul.mubr.bf16.gmra.mrb[0].mxu0 %v2386
        %v6122 = vpop.f32.mrb[0].mxu0
        %v6123 = vadd.f32 %v5939, %v6122
        %v6124 = vpop.f32.mrb[0].mxu0
        %v6125 = vpop.f32.mrb[0].mxu0
        %v6126 = vadd.f32 %v5942, %v6125
        %v6127 = vpop.f32.mrb[0].mxu0
        %6128 = vmatprep.mubr.bf16.mxu0 %v2411
        %6129 = vmatmul.mubr.bf16.gmra.mrb[0].mxu0 %v2410
        %v6130 = vpop.f32.mrb[0].mxu0
        %v6131 = vadd.f32 %v5947, %v6130
        %v6132 = vpop.f32.mrb[0].mxu0
        %v6133 = vpop.f32.mrb[0].mxu0
        %v6134 = vadd.f32 %v5950, %v6133
        %v6135 = vpop.f32.mrb[0].mxu0
        %6136 = vmatprep.mubr.bf16.mxu0 %v2435
        %6137 = vmatmul.mubr.bf16.gmra.mrb[0].mxu0 %v2434
        %v6138 = vpop.f32.mrb[0].mxu0
        %v6139 = vadd.f32 %v5955, %v6138
        %v6140 = vpop.f32.mrb[0].mxu0
        %v6141 = vpop.f32.mrb[0].mxu0
        %v6142 = vadd.f32 %v5958, %v6141
        %v6143 = vpop.f32.mrb[0].mxu0
        %6144 = vmatprep.mubr.bf16.mxu0 %v2459
        %6145 = vmatmul.mubr.bf16.gmra.mrb[0].mxu0 %v2458
        %v6146 = vpop.f32.mrb[0].mxu0
        %v6147 = vadd.f32 %v5963, %v6146
        %v6148 = vpop.f32.mrb[0].mxu0
        %v6149 = vpop.f32.mrb[0].mxu0
        %v6150 = vadd.f32 %v5966, %v6149
        %v6151 = vpop.f32.mrb[0].mxu0
        %6152 = vmatprep.mubr.bf16.mxu0 %v2483
        %6153 = vmatmul.mubr.bf16.gmra.mrb[0].mxu0 %v2482
        %v6154 = vpop.f32.mrb[0].mxu0
        %v6155 = vadd.f32 %v5971, %v6154
        %v6156 = vpop.f32.mrb[0].mxu0
        %v6157 = vpop.f32.mrb[0].mxu0
        %v6158 = vadd.f32 %v5974, %v6157
        %v6159 = vpop.f32.mrb[0].mxu0
        %6160 = vmatprep.mubr.bf16.mxu0 %v2507
        %6161 = vmatmul.mubr.bf16.gmra.mrb[0].mxu0 %v2506
        %v6162 = vpop.f32.mrb[0].mxu0
        %v6163 = vadd.f32 %v5979, %v6162
        %v6164 = vpop.f32.mrb[0].mxu0
        %v6165 = vpop.f32.mrb[0].mxu0
        %v6166 = vadd.f32 %v5982, %v6165
        %v6167 = vpop.f32.mrb[0].mxu0
        %6168 = vmatprep.mubr.bf16.mxu0 %v2531
        %6169 = vmatmul.mubr.bf16.gmra.mrb[0].mxu0 %v2530
        %v6170 = vpop.f32.mrb[0].mxu0
        %v6171 = vadd.f32 %v5987, %v6170
        %v6172 = vpop.f32.mrb[0].mxu0
        %v6173 = vpop.f32.mrb[0].mxu0
        %v6174 = vadd.f32 %v5990, %v6173
        %v6175 = vpop.f32.mrb[0].mxu0
        %6176 = vmatprep.mubr.bf16.mxu0 %v2555
        %6177 = vmatmul.mubr.bf16.gmra.mrb[0].mxu0 %v2554
        %v6178 = vpop.f32.mrb[0].mxu0
        %v6179 = vadd.f32 %v5995, %v6178
        %v6180 = vpop.f32.mrb[0].mxu0
        %v6181 = vpop.f32.mrb[0].mxu0
        %v6182 = vadd.f32 %v5998, %v6181
        %v6183 = vpop.f32.mrb[0].mxu0
        %6184 = vmatprep.mubr.bf16.mxu0 %v2579
        %6185 = vmatmul.mubr.bf16.gmra.mrb[0].mxu0 %v2578
        %v6186 = vpop.f32.mrb[0].mxu0
        %v6187 = vadd.f32 %v6003, %v6186
        %v6188 = vpop.f32.mrb[0].mxu0
        %v6189 = vpop.f32.mrb[0].mxu0
        %v6190 = vadd.f32 %v6006, %v6189
        %v6191 = vpop.f32.mrb[0].mxu0
        %6192 = vmatprep.mubr.bf16.mxu0 %v2603
        %6193 = vmatmul.mubr.bf16.gmra.mrb[0].mxu0 %v2602
        %v6194 = vpop.f32.mrb[0].mxu0
        %v6195 = vadd.f32 %v6011, %v6194
        %v6196 = vpop.f32.mrb[0].mxu0
        %v6197 = vpop.f32.mrb[0].mxu0
        %v6198 = vadd.f32 %v6014, %v6197
        %v6199 = vpop.f32.mrb[0].mxu0
        %6200 = vmatprep.mubr.bf16.mxu0 %v2627
        %6201 = vmatmul.mubr.bf16.gmra.mrb[0].mxu0 %v2626
        %v6202 = vpop.f32.mrb[0].mxu0
        %v6203 = vadd.f32 %v6019, %v6202
        %v6204 = vpop.f32.mrb[0].mxu0
        %v6205 = vpop.f32.mrb[0].mxu0
        %v6206 = vadd.f32 %v6022, %v6205
        %v6207 = vpop.f32.mrb[0].mxu0
        %6208 = vmatprep.mubr.bf16.mxu0 %v2651
        %6209 = vmatmul.mubr.bf16.gmra.mrb[0].mxu0 %v2650
        %v6210 = vpop.f32.mrb[0].mxu0
        %v6211 = vadd.f32 %v6027, %v6210
        %v6212 = vpop.f32.mrb[0].mxu0
        %v6213 = vpop.f32.mrb[0].mxu0
        %v6214 = vadd.f32 %v6030, %v6213
        %v6215 = vpop.f32.mrb[0].mxu0
        %6216 = vmatprep.mubr.bf16.mxu0 %v2675
        %6217 = vmatmul.mubr.bf16.gmra.mrb[0].mxu0 %v2674
        %v6218 = vpop.f32.mrb[0].mxu0
        %v6219 = vadd.f32 %v6035, %v6218
        %v6220 = vpop.f32.mrb[0].mxu0
        %v6221 = vpop.f32.mrb[0].mxu0
        %v6222 = vadd.f32 %v6038, %v6221
        %v6223 = vpop.f32.mrb[0].mxu0
        %6224 = vmatprep.mubr.bf16.mxu0 %v2699
        %6225 = vmatmul.mubr.bf16.gmra.mrb[0].mxu0 %v2698
        %v6226 = vpop.f32.mrb[0].mxu0
        %v6227 = vadd.f32 %v6043, %v6226
        %v6228 = vpop.f32.mrb[0].mxu0
        %v6229 = vpop.f32.mrb[0].mxu0
        %v6230 = vadd.f32 %v6046, %v6229
        %v6231 = vpop.f32.mrb[0].mxu0
        %6232 = vmatprep.mubr.bf16.mxu0 %v2723
        %6233 = vmatmul.mubr.bf16.gmra.mrb[0].mxu0 %v2722
        %v6234 = vpop.f32.mrb[0].mxu0
        %v6235 = vadd.f32 %v6051, %v6234
        %v6236 = vpop.f32.mrb[0].mxu0
        %v6237 = vpop.f32.mrb[0].mxu0
        %v6238 = vadd.f32 %v6054, %v6237
        %v6239 = vpop.f32.mrb[0].mxu0
        %6240 = vmatprep.mubr.bf16.mxu0 %v2747
        %6241 = vmatmul.mubr.bf16.gmra.mrb[0].mxu0 %v2746
        %v6242 = vpop.f32.mrb[0].mxu0
        %v6243 = vadd.f32 %v6059, %v6242
        %v6244 = vpop.f32.mrb[0].mxu0
        %v6245 = vpop.f32.mrb[0].mxu0
        %v6246 = vadd.f32 %v6062, %v6245
        %v6247 = vpop.f32.mrb[0].mxu0
        %6248 = vmatprep.mubr.bf16.mxu0 %v2771
        %6249 = vmatmul.mubr.bf16.gmra.mrb[0].mxu0 %v2770
        %v6250 = vpop.f32.mrb[0].mxu0
        %v6251 = vadd.f32 %v6067, %v6250
        %v6252 = vpop.f32.mrb[0].mxu0
        %v6253 = vpop.f32.mrb[0].mxu0
        %v6254 = vadd.f32 %v6070, %v6253
        %v6255 = vpop.f32.mrb[0].mxu0
        %6256 = vmatprep.mubr.bf16.mxu0 %v2795
        %6257 = vmatmul.mubr.bf16.gmra.mrb[0].mxu0 %v2794
        %v6258 = vpop.f32.mrb[0].mxu0
        %v6259 = vadd.f32 %v6075, %v6258
        %v6260 = vpop.f32.mrb[0].mxu0
        %v6261 = vpop.f32.mrb[0].mxu0
        %v6262 = vadd.f32 %v6078, %v6261
        %v6263 = vpop.f32.mrb[0].mxu0
        %6264 = vmatprep.mubr.bf16.mxu0 %v2819
        %6265 = vmatmul.mubr.bf16.gmra.mrb[0].mxu0 %v2818
        %v6266 = vpop.f32.mrb[0].mxu0
        %v6267 = vadd.f32 %v6083, %v6266
        %v6268 = vpop.f32.mrb[0].mxu0
        %v6269 = vpop.f32.mrb[0].mxu0
        %v6270 = vpop.f32.mrb[0].mxu0
        %6271 = vdwg.mxu0
        %6272 = vmatprep.subr.bf16.mxu0 0
        %6273 = vmatpush1.bf16.msra.mxu0 %v4208
        %6274 = vmatprep.subr.bf16.mxu0 0
        %6275 = vmatpush1.bf16.msra.mxu0 %v4209
        %6276 = vmatprep.subr.bf16.mxu0 0
        %6277 = vmatpush1.bf16.msra.mxu0 %v4210
        %6278 = vmatprep.subr.bf16.mxu0 0
        %6279 = vmatpush1.bf16.msra.mxu0 %v4211
        %6280 = vmatprep.subr.bf16.mxu0 0
        %6281 = vmatpush1.bf16.msra.mxu0 %v4212
        %6282 = vmatprep.subr.bf16.mxu0 0
        %6283 = vmatpush1.bf16.msra.mxu0 %v4213
        %6284 = vmatprep.subr.bf16.mxu0 0
        %6285 = vmatpush1.bf16.msra.mxu0 %v4214
        %6286 = vmatprep.subr.bf16.mxu0 0
        %6287 = vmatpush1.bf16.msra.mxu0 %v4215
        %6288 = vmatprep.subr.bf16.mxu0 0
        %6289 = vmatpush1.bf16.msra.mxu0 %v4216
        %6290 = vmatprep.subr.bf16.mxu0 0
        %6291 = vmatpush1.bf16.msra.mxu0 %v4217
        %6292 = vmatprep.subr.bf16.mxu0 0
        %6293 = vmatpush1.bf16.msra.mxu0 %v4218
        %6294 = vmatprep.subr.bf16.mxu0 0
        %6295 = vmatpush1.bf16.msra.mxu0 %v4219
        %6296 = vmatprep.subr.bf16.mxu0 0
        %6297 = vmatpush1.bf16.msra.mxu0 %v4220
        %6298 = vmatprep.subr.bf16.mxu0 0
        %6299 = vmatpush1.bf16.msra.mxu0 %v4221
        %6300 = vmatprep.subr.bf16.mxu0 0
        %6301 = vmatpush1.bf16.msra.mxu0 %v4222
        %6302 = vmatprep.subr.bf16.mxu0 0
        %6303 = vmatpush1.bf16.msra.mxu0 %v4223
        %6304 = vmatprep.mubr.bf16.mxu0 %v2389
        %6305 = vmatmul.mubr.bf16.gmra.mrb[0].mxu0 %v2388
        %v6306 = vpop.f32.mrb[0].mxu0
        %v6307 = vadd.f32 %v6123, %v6306
        %v6308 = vpop.f32.mrb[0].mxu0
        %v6309 = vpop.f32.mrb[0].mxu0
        %v6310 = vadd.f32 %v6126, %v6309
        %v6311 = vpop.f32.mrb[0].mxu0
        %6312 = vmatprep.mubr.bf16.mxu0 %v2413
        %6313 = vmatmul.mubr.bf16.gmra.mrb[0].mxu0 %v2412
        %v6314 = vpop.f32.mrb[0].mxu0
        %v6315 = vadd.f32 %v6131, %v6314
        %v6316 = vpop.f32.mrb[0].mxu0
        %v6317 = vpop.f32.mrb[0].mxu0
        %v6318 = vadd.f32 %v6134, %v6317
        %v6319 = vpop.f32.mrb[0].mxu0
        %6320 = vmatprep.mubr.bf16.mxu0 %v2437
        %6321 = vmatmul.mubr.bf16.gmra.mrb[0].mxu0 %v2436
        %v6322 = vpop.f32.mrb[0].mxu0
        %v6323 = vadd.f32 %v6139, %v6322
        %v6324 = vpop.f32.mrb[0].mxu0
        %v6325 = vpop.f32.mrb[0].mxu0
        %v6326 = vadd.f32 %v6142, %v6325
        %v6327 = vpop.f32.mrb[0].mxu0
        %6328 = vmatprep.mubr.bf16.mxu0 %v2461
        %6329 = vmatmul.mubr.bf16.gmra.mrb[0].mxu0 %v2460
        %v6330 = vpop.f32.mrb[0].mxu0
        %v6331 = vadd.f32 %v6147, %v6330
        %v6332 = vpop.f32.mrb[0].mxu0
        %v6333 = vpop.f32.mrb[0].mxu0
        %v6334 = vadd.f32 %v6150, %v6333
        %v6335 = vpop.f32.mrb[0].mxu0
        %6336 = vmatprep.mubr.bf16.mxu0 %v2485
        %6337 = vmatmul.mubr.bf16.gmra.mrb[0].mxu0 %v2484
        %v6338 = vpop.f32.mrb[0].mxu0
        %v6339 = vadd.f32 %v6155, %v6338
        %v6340 = vpop.f32.mrb[0].mxu0
        %v6341 = vpop.f32.mrb[0].mxu0
        %v6342 = vadd.f32 %v6158, %v6341
        %v6343 = vpop.f32.mrb[0].mxu0
        %6344 = vmatprep.mubr.bf16.mxu0 %v2509
        %6345 = vmatmul.mubr.bf16.gmra.mrb[0].mxu0 %v2508
        %v6346 = vpop.f32.mrb[0].mxu0
        %v6347 = vadd.f32 %v6163, %v6346
        %v6348 = vpop.f32.mrb[0].mxu0
        %v6349 = vpop.f32.mrb[0].mxu0
        %v6350 = vadd.f32 %v6166, %v6349
        %v6351 = vpop.f32.mrb[0].mxu0
        %6352 = vmatprep.mubr.bf16.mxu0 %v2533
        %6353 = vmatmul.mubr.bf16.gmra.mrb[0].mxu0 %v2532
        %v6354 = vpop.f32.mrb[0].mxu0
        %v6355 = vadd.f32 %v6171, %v6354
        %v6356 = vpop.f32.mrb[0].mxu0
        %v6357 = vpop.f32.mrb[0].mxu0
        %v6358 = vadd.f32 %v6174, %v6357
        %v6359 = vpop.f32.mrb[0].mxu0
        %6360 = vmatprep.mubr.bf16.mxu0 %v2557
        %6361 = vmatmul.mubr.bf16.gmra.mrb[0].mxu0 %v2556
        %v6362 = vpop.f32.mrb[0].mxu0
        %v6363 = vadd.f32 %v6179, %v6362
        %v6364 = vpop.f32.mrb[0].mxu0
        %v6365 = vpop.f32.mrb[0].mxu0
        %v6366 = vadd.f32 %v6182, %v6365
        %v6367 = vpop.f32.mrb[0].mxu0
        %6368 = vmatprep.mubr.bf16.mxu0 %v2581
        %6369 = vmatmul.mubr.bf16.gmra.mrb[0].mxu0 %v2580
        %v6370 = vpop.f32.mrb[0].mxu0
        %v6371 = vadd.f32 %v6187, %v6370
        %v6372 = vpop.f32.mrb[0].mxu0
        %v6373 = vpop.f32.mrb[0].mxu0
        %v6374 = vadd.f32 %v6190, %v6373
        %v6375 = vpop.f32.mrb[0].mxu0
        %6376 = vmatprep.mubr.bf16.mxu0 %v2605
        %6377 = vmatmul.mubr.bf16.gmra.mrb[0].mxu0 %v2604
        %v6378 = vpop.f32.mrb[0].mxu0
        %v6379 = vadd.f32 %v6195, %v6378
        %v6380 = vpop.f32.mrb[0].mxu0
        %v6381 = vpop.f32.mrb[0].mxu0
        %v6382 = vadd.f32 %v6198, %v6381
        %v6383 = vpop.f32.mrb[0].mxu0
        %6384 = vmatprep.mubr.bf16.mxu0 %v2629
        %6385 = vmatmul.mubr.bf16.gmra.mrb[0].mxu0 %v2628
        %v6386 = vpop.f32.mrb[0].mxu0
        %v6387 = vadd.f32 %v6203, %v6386
        %v6388 = vpop.f32.mrb[0].mxu0
        %v6389 = vpop.f32.mrb[0].mxu0
        %v6390 = vadd.f32 %v6206, %v6389
        %v6391 = vpop.f32.mrb[0].mxu0
        %6392 = vmatprep.mubr.bf16.mxu0 %v2653
        %6393 = vmatmul.mubr.bf16.gmra.mrb[0].mxu0 %v2652
        %v6394 = vpop.f32.mrb[0].mxu0
        %v6395 = vadd.f32 %v6211, %v6394
        %v6396 = vpop.f32.mrb[0].mxu0
        %v6397 = vpop.f32.mrb[0].mxu0
        %v6398 = vadd.f32 %v6214, %v6397
        %v6399 = vpop.f32.mrb[0].mxu0
        %6400 = vmatprep.mubr.bf16.mxu0 %v2677
        %6401 = vmatmul.mubr.bf16.gmra.mrb[0].mxu0 %v2676
        %v6402 = vpop.f32.mrb[0].mxu0
        %v6403 = vadd.f32 %v6219, %v6402
        %v6404 = vpop.f32.mrb[0].mxu0
        %v6405 = vpop.f32.mrb[0].mxu0
        %v6406 = vadd.f32 %v6222, %v6405
        %v6407 = vpop.f32.mrb[0].mxu0
        %6408 = vmatprep.mubr.bf16.mxu0 %v2701
        %6409 = vmatmul.mubr.bf16.gmra.mrb[0].mxu0 %v2700
        %v6410 = vpop.f32.mrb[0].mxu0
        %v6411 = vadd.f32 %v6227, %v6410
        %v6412 = vpop.f32.mrb[0].mxu0
        %v6413 = vpop.f32.mrb[0].mxu0
        %v6414 = vadd.f32 %v6230, %v6413
        %v6415 = vpop.f32.mrb[0].mxu0
        %6416 = vmatprep.mubr.bf16.mxu0 %v2725
        %6417 = vmatmul.mubr.bf16.gmra.mrb[0].mxu0 %v2724
        %v6418 = vpop.f32.mrb[0].mxu0
        %v6419 = vadd.f32 %v6235, %v6418
        %v6420 = vpop.f32.mrb[0].mxu0
        %v6421 = vpop.f32.mrb[0].mxu0
        %v6422 = vadd.f32 %v6238, %v6421
        %v6423 = vpop.f32.mrb[0].mxu0
        %6424 = vmatprep.mubr.bf16.mxu0 %v2749
        %6425 = vmatmul.mubr.bf16.gmra.mrb[0].mxu0 %v2748
        %v6426 = vpop.f32.mrb[0].mxu0
        %v6427 = vadd.f32 %v6243, %v6426
        %v6428 = vpop.f32.mrb[0].mxu0
        %v6429 = vpop.f32.mrb[0].mxu0
        %v6430 = vadd.f32 %v6246, %v6429
        %v6431 = vpop.f32.mrb[0].mxu0
        %6432 = vmatprep.mubr.bf16.mxu0 %v2773
        %6433 = vmatmul.mubr.bf16.gmra.mrb[0].mxu0 %v2772
        %v6434 = vpop.f32.mrb[0].mxu0
        %v6435 = vadd.f32 %v6251, %v6434
        %v6436 = vpop.f32.mrb[0].mxu0
        %v6437 = vpop.f32.mrb[0].mxu0
        %v6438 = vadd.f32 %v6254, %v6437
        %v6439 = vpop.f32.mrb[0].mxu0
        %6440 = vmatprep.mubr.bf16.mxu0 %v2797
        %6441 = vmatmul.mubr.bf16.gmra.mrb[0].mxu0 %v2796
        %v6442 = vpop.f32.mrb[0].mxu0
        %v6443 = vadd.f32 %v6259, %v6442
        %v6444 = vpop.f32.mrb[0].mxu0
        %v6445 = vpop.f32.mrb[0].mxu0
        %v6446 = vadd.f32 %v6262, %v6445
        %v6447 = vpop.f32.mrb[0].mxu0
        %6448 = vmatprep.mubr.bf16.mxu0 %v2821
        %6449 = vmatmul.mubr.bf16.gmra.mrb[0].mxu0 %v2820
        %v6450 = vpop.f32.mrb[0].mxu0
        %v6451 = vadd.f32 %v6267, %v6450
        %v6452 = vpop.f32.mrb[0].mxu0
        %v6453 = vpop.f32.mrb[0].mxu0
        %v6454 = vpop.f32.mrb[0].mxu0
        %6455 = vdwg.mxu0
        %6456 = vmatprep.subr.bf16.mxu0 0
        %6457 = vmatpush1.bf16.msra.mxu0 %v4224
        %6458 = vmatprep.subr.bf16.mxu0 0
        %6459 = vmatpush1.bf16.msra.mxu0 %v4225
        %6460 = vmatprep.subr.bf16.mxu0 0
        %6461 = vmatpush1.bf16.msra.mxu0 %v4226
        %6462 = vmatprep.subr.bf16.mxu0 0
        %6463 = vmatpush1.bf16.msra.mxu0 %v4227
        %6464 = vmatprep.subr.bf16.mxu0 0
        %6465 = vmatpush1.bf16.msra.mxu0 %v4228
        %6466 = vmatprep.subr.bf16.mxu0 0
        %6467 = vmatpush1.bf16.msra.mxu0 %v4229
        %6468 = vmatprep.subr.bf16.mxu0 0
        %6469 = vmatpush1.bf16.msra.mxu0 %v4230
        %6470 = vmatprep.subr.bf16.mxu0 0
        %6471 = vmatpush1.bf16.msra.mxu0 %v4231
        %6472 = vmatprep.subr.bf16.mxu0 0
        %6473 = vmatpush1.bf16.msra.mxu0 %v4232
        %6474 = vmatprep.subr.bf16.mxu0 0
        %6475 = vmatpush1.bf16.msra.mxu0 %v4233
        %6476 = vmatprep.subr.bf16.mxu0 0
        %6477 = vmatpush1.bf16.msra.mxu0 %v4234
        %6478 = vmatprep.subr.bf16.mxu0 0
        %6479 = vmatpush1.bf16.msra.mxu0 %v4235
        %6480 = vmatprep.subr.bf16.mxu0 0
        %6481 = vmatpush1.bf16.msra.mxu0 %v4236
        %6482 = vmatprep.subr.bf16.mxu0 0
        %6483 = vmatpush1.bf16.msra.mxu0 %v4237
        %6484 = vmatprep.subr.bf16.mxu0 0
        %6485 = vmatpush1.bf16.msra.mxu0 %v4238
        %6486 = vmatprep.subr.bf16.mxu0 0
        %6487 = vmatpush1.bf16.msra.mxu0 %v4239
        %6488 = vmatprep.mubr.bf16.mxu0 %v2391
        %6489 = vmatmul.mubr.bf16.gmra.mrb[0].mxu0 %v2390
        %v6490 = vpop.f32.mrb[0].mxu0
        %v6491 = vadd.f32 %v6307, %v6490
        %v6492 = vpop.f32.mrb[0].mxu0
        %v6493 = vpop.f32.mrb[0].mxu0
        %v6494 = vadd.f32 %v6310, %v6493
        %v6495 = vpop.f32.mrb[0].mxu0
        %6496 = vmatprep.mubr.bf16.mxu0 %v2415
        %6497 = vmatmul.mubr.bf16.gmra.mrb[0].mxu0 %v2414
        %v6498 = vpop.f32.mrb[0].mxu0
        %v6499 = vadd.f32 %v6315, %v6498
        %v6500 = vpop.f32.mrb[0].mxu0
        %v6501 = vpop.f32.mrb[0].mxu0
        %v6502 = vadd.f32 %v6318, %v6501
        %v6503 = vpop.f32.mrb[0].mxu0
        %6504 = vmatprep.mubr.bf16.mxu0 %v2439
        %6505 = vmatmul.mubr.bf16.gmra.mrb[0].mxu0 %v2438
        %v6506 = vpop.f32.mrb[0].mxu0
        %v6507 = vadd.f32 %v6323, %v6506
        %v6508 = vpop.f32.mrb[0].mxu0
        %v6509 = vpop.f32.mrb[0].mxu0
        %v6510 = vadd.f32 %v6326, %v6509
        %v6511 = vpop.f32.mrb[0].mxu0
        %6512 = vmatprep.mubr.bf16.mxu0 %v2463
        %6513 = vmatmul.mubr.bf16.gmra.mrb[0].mxu0 %v2462
        %v6514 = vpop.f32.mrb[0].mxu0
        %v6515 = vadd.f32 %v6331, %v6514
        %v6516 = vpop.f32.mrb[0].mxu0
        %v6517 = vpop.f32.mrb[0].mxu0
        %v6518 = vadd.f32 %v6334, %v6517
        %v6519 = vpop.f32.mrb[0].mxu0
        %6520 = vmatprep.mubr.bf16.mxu0 %v2487
        %6521 = vmatmul.mubr.bf16.gmra.mrb[0].mxu0 %v2486
        %v6522 = vpop.f32.mrb[0].mxu0
        %v6523 = vadd.f32 %v6339, %v6522
        %v6524 = vpop.f32.mrb[0].mxu0
        %v6525 = vpop.f32.mrb[0].mxu0
        %v6526 = vadd.f32 %v6342, %v6525
        %v6527 = vpop.f32.mrb[0].mxu0
        %6528 = vmatprep.mubr.bf16.mxu0 %v2511
        %6529 = vmatmul.mubr.bf16.gmra.mrb[0].mxu0 %v2510
        %v6530 = vpop.f32.mrb[0].mxu0
        %v6531 = vadd.f32 %v6347, %v6530
        %v6532 = vpop.f32.mrb[0].mxu0
        %v6533 = vpop.f32.mrb[0].mxu0
        %v6534 = vadd.f32 %v6350, %v6533
        %v6535 = vpop.f32.mrb[0].mxu0
        %6536 = vmatprep.mubr.bf16.mxu0 %v2535
        %6537 = vmatmul.mubr.bf16.gmra.mrb[0].mxu0 %v2534
        %v6538 = vpop.f32.mrb[0].mxu0
        %v6539 = vadd.f32 %v6355, %v6538
        %v6540 = vpop.f32.mrb[0].mxu0
        %v6541 = vpop.f32.mrb[0].mxu0
        %v6542 = vadd.f32 %v6358, %v6541
        %v6543 = vpop.f32.mrb[0].mxu0
        %6544 = vmatprep.mubr.bf16.mxu0 %v2559
        %6545 = vmatmul.mubr.bf16.gmra.mrb[0].mxu0 %v2558
        %v6546 = vpop.f32.mrb[0].mxu0
        %v6547 = vadd.f32 %v6363, %v6546
        %v6548 = vpop.f32.mrb[0].mxu0
        %v6549 = vpop.f32.mrb[0].mxu0
        %v6550 = vadd.f32 %v6366, %v6549
        %v6551 = vpop.f32.mrb[0].mxu0
        %6552 = vmatprep.mubr.bf16.mxu0 %v2583
        %6553 = vmatmul.mubr.bf16.gmra.mrb[0].mxu0 %v2582
        %v6554 = vpop.f32.mrb[0].mxu0
        %v6555 = vadd.f32 %v6371, %v6554
        %v6556 = vpop.f32.mrb[0].mxu0
        %v6557 = vpop.f32.mrb[0].mxu0
        %v6558 = vadd.f32 %v6374, %v6557
        %v6559 = vpop.f32.mrb[0].mxu0
        %6560 = vmatprep.mubr.bf16.mxu0 %v2607
        %6561 = vmatmul.mubr.bf16.gmra.mrb[0].mxu0 %v2606
        %v6562 = vpop.f32.mrb[0].mxu0
        %v6563 = vadd.f32 %v6379, %v6562
        %v6564 = vpop.f32.mrb[0].mxu0
        %v6565 = vpop.f32.mrb[0].mxu0
        %v6566 = vadd.f32 %v6382, %v6565
        %v6567 = vpop.f32.mrb[0].mxu0
        %6568 = vmatprep.mubr.bf16.mxu0 %v2631
        %6569 = vmatmul.mubr.bf16.gmra.mrb[0].mxu0 %v2630
        %v6570 = vpop.f32.mrb[0].mxu0
        %v6571 = vadd.f32 %v6387, %v6570
        %v6572 = vpop.f32.mrb[0].mxu0
        %v6573 = vpop.f32.mrb[0].mxu0
        %v6574 = vadd.f32 %v6390, %v6573
        %v6575 = vpop.f32.mrb[0].mxu0
        %6576 = vmatprep.mubr.bf16.mxu0 %v2655
        %6577 = vmatmul.mubr.bf16.gmra.mrb[0].mxu0 %v2654
        %v6578 = vpop.f32.mrb[0].mxu0
        %v6579 = vadd.f32 %v6395, %v6578
        %v6580 = vpop.f32.mrb[0].mxu0
        %v6581 = vpop.f32.mrb[0].mxu0
        %v6582 = vadd.f32 %v6398, %v6581
        %v6583 = vpop.f32.mrb[0].mxu0
        %6584 = vmatprep.mubr.bf16.mxu0 %v2679
        %6585 = vmatmul.mubr.bf16.gmra.mrb[0].mxu0 %v2678
        %v6586 = vpop.f32.mrb[0].mxu0
        %v6587 = vadd.f32 %v6403, %v6586
        %v6588 = vpop.f32.mrb[0].mxu0
        %v6589 = vpop.f32.mrb[0].mxu0
        %v6590 = vadd.f32 %v6406, %v6589
        %v6591 = vpop.f32.mrb[0].mxu0
        %6592 = vmatprep.mubr.bf16.mxu0 %v2703
        %6593 = vmatmul.mubr.bf16.gmra.mrb[0].mxu0 %v2702
        %v6594 = vpop.f32.mrb[0].mxu0
        %v6595 = vadd.f32 %v6411, %v6594
        %v6596 = vpop.f32.mrb[0].mxu0
        %v6597 = vpop.f32.mrb[0].mxu0
        %v6598 = vadd.f32 %v6414, %v6597
        %v6599 = vpop.f32.mrb[0].mxu0
        %6600 = vmatprep.mubr.bf16.mxu0 %v2727
        %6601 = vmatmul.mubr.bf16.gmra.mrb[0].mxu0 %v2726
        %v6602 = vpop.f32.mrb[0].mxu0
        %v6603 = vadd.f32 %v6419, %v6602
        %v6604 = vpop.f32.mrb[0].mxu0
        %v6605 = vpop.f32.mrb[0].mxu0
        %v6606 = vadd.f32 %v6422, %v6605
        %v6607 = vpop.f32.mrb[0].mxu0
        %6608 = vmatprep.mubr.bf16.mxu0 %v2751
        %6609 = vmatmul.mubr.bf16.gmra.mrb[0].mxu0 %v2750
        %v6610 = vpop.f32.mrb[0].mxu0
        %v6611 = vadd.f32 %v6427, %v6610
        %v6612 = vpop.f32.mrb[0].mxu0
        %v6613 = vpop.f32.mrb[0].mxu0
        %v6614 = vadd.f32 %v6430, %v6613
        %v6615 = vpop.f32.mrb[0].mxu0
        %6616 = vmatprep.mubr.bf16.mxu0 %v2775
        %6617 = vmatmul.mubr.bf16.gmra.mrb[0].mxu0 %v2774
        %v6618 = vpop.f32.mrb[0].mxu0
        %v6619 = vadd.f32 %v6435, %v6618
        %v6620 = vpop.f32.mrb[0].mxu0
        %v6621 = vpop.f32.mrb[0].mxu0
        %v6622 = vadd.f32 %v6438, %v6621
        %v6623 = vpop.f32.mrb[0].mxu0
        %6624 = vmatprep.mubr.bf16.mxu0 %v2799
        %6625 = vmatmul.mubr.bf16.gmra.mrb[0].mxu0 %v2798
        %v6626 = vpop.f32.mrb[0].mxu0
        %v6627 = vadd.f32 %v6443, %v6626
        %v6628 = vpop.f32.mrb[0].mxu0
        %v6629 = vpop.f32.mrb[0].mxu0
        %v6630 = vadd.f32 %v6446, %v6629
        %v6631 = vpop.f32.mrb[0].mxu0
        %6632 = vmatprep.mubr.bf16.mxu0 %v2823
        %6633 = vmatmul.mubr.bf16.gmra.mrb[0].mxu0 %v2822
        %v6634 = vpop.f32.mrb[0].mxu0
        %v6635 = vadd.f32 %v6451, %v6634
        %v6636 = vpop.f32.mrb[0].mxu0
        %v6637 = vpop.f32.mrb[0].mxu0
        %v6638 = vpop.f32.mrb[0].mxu0
        %6639 = vdwg.mxu0
        %v6640 = vpack.c.bf16 %v6494, %v6491
        %v6641 = vpack.c.bf16 %v6502, %v6499
        %v6642 = vpack.c.bf16 %v6510, %v6507
        %v6643 = vpack.c.bf16 %v6518, %v6515
        %v6644 = vpack.c.bf16 %v6526, %v6523
        %v6645 = vpack.c.bf16 %v6534, %v6531
        %v6646 = vpack.c.bf16 %v6542, %v6539
        %v6647 = vpack.c.bf16 %v6550, %v6547
        %v6648 = vpack.c.bf16 %v6558, %v6555
        %v6649 = vpack.c.bf16 %v6566, %v6563
        %v6650 = vpack.c.bf16 %v6574, %v6571
        %v6651 = vpack.c.bf16 %v6582, %v6579
        %v6652 = vpack.c.bf16 %v6590, %v6587
        %v6653 = vpack.c.bf16 %v6598, %v6595
        %v6654 = vpack.c.bf16 %v6606, %v6603
        %v6655 = vpack.c.bf16 %v6614, %v6611
        %v6656 = vpack.c.bf16 %v6622, %v6619
        %v6657 = vpack.c.bf16 %v6630, %v6627
        %v6658 = vpack.c.bf16 %v6635, %v6635
        %v6678 = vunpack.c.l.b16 %v6640
        %v6679 = vunpack.c.h.b16 %v6640
        %v6680 = vunpack.c.l.b16 %v6641
        %v6681 = vunpack.c.h.b16 %v6641
        %v6682 = vunpack.c.l.b16 %v6642
        %v6683 = vunpack.c.h.b16 %v6642
        %v6684 = vunpack.c.l.b16 %v6643
        %v6685 = vunpack.c.h.b16 %v6643
        %v6686 = vunpack.c.l.b16 %v6644
        %v6687 = vunpack.c.h.b16 %v6644
        %v6688 = vunpack.c.l.b16 %v6645
        %v6689 = vunpack.c.h.b16 %v6645
        %v6690 = vunpack.c.l.b16 %v6646
        %v6691 = vunpack.c.h.b16 %v6646
        %v6692 = vunpack.c.l.b16 %v6647
        %v6693 = vunpack.c.h.b16 %v6647
        %v6694 = vunpack.c.l.b16 %v6648
        %v6695 = vunpack.c.h.b16 %v6648
        %v6696 = vunpack.c.l.b16 %v6649
        %v6697 = vunpack.c.h.b16 %v6649
        %v6698 = vunpack.c.l.b16 %v6650
        %v6699 = vunpack.c.h.b16 %v6650
        %v6700 = vunpack.c.l.b16 %v6651
        %v6701 = vunpack.c.h.b16 %v6651
        %v6702 = vunpack.c.l.b16 %v6652
        %v6703 = vunpack.c.h.b16 %v6652
        %v6704 = vunpack.c.l.b16 %v6653
        %v6705 = vunpack.c.h.b16 %v6653
        %v6706 = vunpack.c.l.b16 %v6654
        %v6707 = vunpack.c.h.b16 %v6654
        %v6708 = vunpack.c.l.b16 %v6655
        %v6709 = vunpack.c.h.b16 %v6655
        %v6710 = vunpack.c.l.b16 %v6656
        %v6711 = vunpack.c.h.b16 %v6656
        %v6712 = vunpack.c.l.b16 %v6657
        %v6713 = vunpack.c.h.b16 %v6657
        %v6714 = vunpack.c.l.b16 %v6658
        %v6715 = vpack.c.b16 %v6678, %v6678
        %v6716 = vpack.c.b16 %v6679, %v6679
        %v6717 = vpack.c.b16 %v6680, %v6680
        %v6718 = vpack.c.b16 %v6681, %v6681
        %v6719 = vpack.c.b16 %v6682, %v6682
        %v6720 = vpack.c.b16 %v6683, %v6683
        %v6721 = vpack.c.b16 %v6684, %v6684
        %v6722 = vpack.c.b16 %v6685, %v6685
        %v6723 = vpack.c.b16 %v6686, %v6686
        %v6724 = vpack.c.b16 %v6687, %v6687
        %v6725 = vpack.c.b16 %v6688, %v6688
        %v6726 = vpack.c.b16 %v6689, %v6689
        %v6727 = vpack.c.b16 %v6690, %v6690
        %v6728 = vpack.c.b16 %v6691, %v6691
        %v6729 = vpack.c.b16 %v6692, %v6692
        %v6730 = vpack.c.b16 %v6693, %v6693
        %v6731 = vpack.c.b16 %v6694, %v6694
        %v6732 = vpack.c.b16 %v6695, %v6695
        %v6733 = vpack.c.b16 %v6696, %v6696
        %v6734 = vpack.c.b16 %v6697, %v6697
        %v6735 = vpack.c.b16 %v6698, %v6698
        %v6736 = vpack.c.b16 %v6699, %v6699
        %v6737 = vpack.c.b16 %v6700, %v6700
        %v6738 = vpack.c.b16 %v6701, %v6701
        %v6739 = vpack.c.b16 %v6702, %v6702
        %v6740 = vpack.c.b16 %v6703, %v6703
        %v6741 = vpack.c.b16 %v6704, %v6704
        %v6742 = vpack.c.b16 %v6705, %v6705
        %v6743 = vpack.c.b16 %v6706, %v6706
        %v6744 = vpack.c.b16 %v6707, %v6707
        %v6745 = vpack.c.b16 %v6708, %v6708
        %v6746 = vpack.c.b16 %v6709, %v6709
        %v6747 = vpack.c.b16 %v6710, %v6710
        %v6748 = vpack.c.b16 %v6711, %v6711
        %v6749 = vpack.c.b16 %v6712, %v6712
        %v6750 = vpack.c.b16 %v6713, %v6713
        %v6751 = vpack.c.b16 %v6714, %v6714
        %6789 = vst [vmem:[%s177] sm:$0xf] %v6715
        %6790 = vst [vmem:[%s177 + $0x4] sm:$0xf] %v6716
        %6791 = vst [vmem:[%s177 + $0x8] sm:$0xf] %v6717
        %6792 = vst [vmem:[%s177 + $0xc] sm:$0xf] %v6718
        %6793 = vst [vmem:[%s177 + $0x10] sm:$0xf] %v6719
        %6794 = vst [vmem:[%s177 + $0x14] sm:$0xf] %v6720
        %6795 = vst [vmem:[%s177 + $0x18] sm:$0xf] %v6721
        %6796 = vst [vmem:[%s177 + $0x1c] sm:$0xf] %v6722
        %6797 = vst [vmem:[%s177 + $0x20] sm:$0xf] %v6723
        %6798 = vst [vmem:[%s177 + $0x24] sm:$0xf] %v6724
        %6799 = vst [vmem:[%s177 + $0x28] sm:$0xf] %v6725
        %6800 = vst [vmem:[%s177 + $0x2c] sm:$0xf] %v6726
        %6801 = vst [vmem:[%s177 + $0x30] sm:$0xf] %v6727
        %6802 = vst [vmem:[%s177 + $0x34] sm:$0xf] %v6728
        %6803 = vst [vmem:[%s177 + $0x38] sm:$0xf] %v6729
        %6804 = vst [vmem:[%s177 + $0x3c] sm:$0xf] %v6730
        %6805 = vst [vmem:[%s177 + $0x40] sm:$0xf] %v6731
        %6806 = vst [vmem:[%s177 + $0x44] sm:$0xf] %v6732
        %6807 = vst [vmem:[%s177 + $0x48] sm:$0xf] %v6733
        %6808 = vst [vmem:[%s177 + $0x4c] sm:$0xf] %v6734
        %6809 = vst [vmem:[%s177 + $0x50] sm:$0xf] %v6735
        %6810 = vst [vmem:[%s177 + $0x54] sm:$0xf] %v6736
        %6811 = vst [vmem:[%s177 + $0x58] sm:$0xf] %v6737
        %6812 = vst [vmem:[%s177 + $0x5c] sm:$0xf] %v6738
        %6813 = vst [vmem:[%s177 + $0x60] sm:$0xf] %v6739
        %6814 = vst [vmem:[%s177 + $0x64] sm:$0xf] %v6740
        %6815 = vst [vmem:[%s177 + $0x68] sm:$0xf] %v6741
        %6816 = vst [vmem:[%s177 + $0x6c] sm:$0xf] %v6742
        %6817 = vst [vmem:[%s177 + $0x70] sm:$0xf] %v6743
        %6818 = vst [vmem:[%s177 + $0x74] sm:$0xf] %v6744
        %6819 = vst [vmem:[%s177 + $0x78] sm:$0xf] %v6745
        %6820 = vst [vmem:[%s177 + $0x7c] sm:$0xf] %v6746
        %6821 = vst [vmem:[%s177 + $0x80] sm:$0xf] %v6747
        %6822 = vst [vmem:[%s177 + $0x84] sm:$0xf] %v6748
        %6823 = vst [vmem:[%s177 + $0x88] sm:$0xf] %v6749
        %6824 = vst [vmem:[%s177 + $0x8c] sm:$0xf] %v6750
        %6825 = vst [vmem:[%s177 + $0x90] sm:$0xf] %v6751
        %s6826 = sand.u32 %s90, 1
        %s6827 = sand.u32 %s90, 1
        %s6828 = smul.addr %s6827, 148
        %s6829 = scalar_lea.vmem [#allocation2], %s6828
        // Predicated region
        $region33: #{_forward_init.3} parent=31 // pred_check
          %p6830 = pneg %p100
        $region34: #{_forward_init.3} parent=31 // pred_check_branch
          %6832 = sbr.rel (%p6830) target = $region36
        $region35: #{_forward_init.3} parent=31 // pred_region
          %s6833 = smul.u32 37, %s14
          %s6834 = ssub.s32 73, %s6833
          %p6835 = scmp.lt.s32.totalorder %s6834, 37
          %s6836 = scalar_select %p6835, %s6834, 37
          %s6837 = smul.u32 64, %s6836
          %p6838 = scmp.ne.s32.totalorder 0, %s6837
          %s6839 = smul.addr %s6833, 4
          %s6840 = scalar_lea.vmem %s3, %s6839
          // Predicated region
          $region37: #{_forward_init.3} parent=35 // pred_check
            %p6841 = pneg %p6838
          $region38: #{_forward_init.3} parent=35 // pred_check_branch
            %6843 = sbr.rel (%p6841) target = $region40
          $region39: #{_forward_init.3} parent=35 // pred_region
            // Predicated region
            $region41: #{_forward_init.3} parent=39 // pred_check
              _
            $region42: #{_forward_init.3} parent=39 // pred_check_branch
              %6845 = sbr.rel target = $region44
            $region43: #{_forward_init.3} parent=39 // pred_region
              // Predicated region
              $region63: #{_forward_init.3} parent=43 // pred_check
                _
              $region64: #{_forward_init.3} parent=43 // pred_check_branch
                %6967 = sbr.rel (0) target = $region66
              $region65: #{_forward_init.3} parent=43 // pred_region
                %s6969 = sdiv.u32.pop %s6836, 37
                %s6970 = srem.u32.pop %s6836, 37
                // While loop
                $region67: #{_forward_init.3} parent=65 // loop_pre_header
                  _
                $region68: #{_forward_init.3} parent=65 // loop_header
                  %s6972 = sphi 0, %s6974
                  %p6973 = scmp.ge.s32.totalorder %s6972, %s6969
                  %s6977 = sphi 0, %s7056
                  %s6978 = sphi %s6829, %s7059
                  %s6979 = sphi %s6840, %s7060
                $region69: #{_forward_init.3} parent=65 // loop_header_branch
                  %6976 = sbr.rel (%p6973) target = $region73
                $region70: #{_forward_init.3} parent=65 // loop_body
                  %v6980 = vld [vmem:[%s6978] sm:$0xf]
                  %6981 = vst [vmem:[%s6979] sm:$0xf] %v6980
                  %v6982 = vld [vmem:[%s6978 + $0x4] sm:$0xf]
                  %6983 = vst [vmem:[%s6979 + $0x4] sm:$0xf] %v6982
                  %v6984 = vld [vmem:[%s6978 + $0x8] sm:$0xf]
                  %6985 = vst [vmem:[%s6979 + $0x8] sm:$0xf] %v6984
                  %v6986 = vld [vmem:[%s6978 + $0xc] sm:$0xf]
                  %6987 = vst [vmem:[%s6979 + $0xc] sm:$0xf] %v6986
                  %v6988 = vld [vmem:[%s6978 + $0x10] sm:$0xf]
                  %6989 = vst [vmem:[%s6979 + $0x10] sm:$0xf] %v6988
                  %v6990 = vld [vmem:[%s6978 + $0x14] sm:$0xf]
                  %6991 = vst [vmem:[%s6979 + $0x14] sm:$0xf] %v6990
                  %v6992 = vld [vmem:[%s6978 + $0x18] sm:$0xf]
                  %6993 = vst [vmem:[%s6979 + $0x18] sm:$0xf] %v6992
                  %v6994 = vld [vmem:[%s6978 + $0x1c] sm:$0xf]
                  %6995 = vst [vmem:[%s6979 + $0x1c] sm:$0xf] %v6994
                  %v6996 = vld [vmem:[%s6978 + $0x20] sm:$0xf]
                  %6997 = vst [vmem:[%s6979 + $0x20] sm:$0xf] %v6996
                  %v6998 = vld [vmem:[%s6978 + $0x24] sm:$0xf]
                  %6999 = vst [vmem:[%s6979 + $0x24] sm:$0xf] %v6998
                  %v7000 = vld [vmem:[%s6978 + $0x28] sm:$0xf]
                  %7001 = vst [vmem:[%s6979 + $0x28] sm:$0xf] %v7000
                  %v7002 = vld [vmem:[%s6978 + $0x2c] sm:$0xf]
                  %7003 = vst [vmem:[%s6979 + $0x2c] sm:$0xf] %v7002
                  %v7004 = vld [vmem:[%s6978 + $0x30] sm:$0xf]
                  %7005 = vst [vmem:[%s6979 + $0x30] sm:$0xf] %v7004
                  %v7006 = vld [vmem:[%s6978 + $0x34] sm:$0xf]
                  %7007 = vst [vmem:[%s6979 + $0x34] sm:$0xf] %v7006
                  %v7008 = vld [vmem:[%s6978 + $0x38] sm:$0xf]
                  %7009 = vst [vmem:[%s6979 + $0x38] sm:$0xf] %v7008
                  %v7010 = vld [vmem:[%s6978 + $0x3c] sm:$0xf]
                  %7011 = vst [vmem:[%s6979 + $0x3c] sm:$0xf] %v7010
                  %v7012 = vld [vmem:[%s6978 + $0x40] sm:$0xf]
                  %7013 = vst [vmem:[%s6979 + $0x40] sm:$0xf] %v7012
                  %v7014 = vld [vmem:[%s6978 + $0x44] sm:$0xf]
                  %7015 = vst [vmem:[%s6979 + $0x44] sm:$0xf] %v7014
                  %v7016 = vld [vmem:[%s6978 + $0x48] sm:$0xf]
                  %7017 = vst [vmem:[%s6979 + $0x48] sm:$0xf] %v7016
                  %v7018 = vld [vmem:[%s6978 + $0x4c] sm:$0xf]
                  %7019 = vst [vmem:[%s6979 + $0x4c] sm:$0xf] %v7018
                  %v7020 = vld [vmem:[%s6978 + $0x50] sm:$0xf]
                  %7021 = vst [vmem:[%s6979 + $0x50] sm:$0xf] %v7020
                  %v7022 = vld [vmem:[%s6978 + $0x54] sm:$0xf]
                  %7023 = vst [vmem:[%s6979 + $0x54] sm:$0xf] %v7022
                  %v7024 = vld [vmem:[%s6978 + $0x58] sm:$0xf]
                  %7025 = vst [vmem:[%s6979 + $0x58] sm:$0xf] %v7024
                  %v7026 = vld [vmem:[%s6978 + $0x5c] sm:$0xf]
                  %7027 = vst [vmem:[%s6979 + $0x5c] sm:$0xf] %v7026
                  %v7028 = vld [vmem:[%s6978 + $0x60] sm:$0xf]
                  %7029 = vst [vmem:[%s6979 + $0x60] sm:$0xf] %v7028
                  %v7030 = vld [vmem:[%s6978 + $0x64] sm:$0xf]
                  %7031 = vst [vmem:[%s6979 + $0x64] sm:$0xf] %v7030
                  %v7032 = vld [vmem:[%s6978 + $0x68] sm:$0xf]
                  %7033 = vst [vmem:[%s6979 + $0x68] sm:$0xf] %v7032
                  %v7034 = vld [vmem:[%s6978 + $0x6c] sm:$0xf]
                  %7035 = vst [vmem:[%s6979 + $0x6c] sm:$0xf] %v7034
                  %v7036 = vld [vmem:[%s6978 + $0x70] sm:$0xf]
                  %7037 = vst [vmem:[%s6979 + $0x70] sm:$0xf] %v7036
                  %v7038 = vld [vmem:[%s6978 + $0x74] sm:$0xf]
                  %7039 = vst [vmem:[%s6979 + $0x74] sm:$0xf] %v7038
                  %v7040 = vld [vmem:[%s6978 + $0x78] sm:$0xf]
                  %7041 = vst [vmem:[%s6979 + $0x78] sm:$0xf] %v7040
                  %v7042 = vld [vmem:[%s6978 + $0x7c] sm:$0xf]
                  %7043 = vst [vmem:[%s6979 + $0x7c] sm:$0xf] %v7042
                  %v7044 = vld [vmem:[%s6978 + $0x80] sm:$0xf]
                  %7045 = vst [vmem:[%s6979 + $0x80] sm:$0xf] %v7044
                  %v7046 = vld [vmem:[%s6978 + $0x84] sm:$0xf]
                  %7047 = vst [vmem:[%s6979 + $0x84] sm:$0xf] %v7046
                  %v7048 = vld [vmem:[%s6978 + $0x88] sm:$0xf]
                  %7049 = vst [vmem:[%s6979 + $0x88] sm:$0xf] %v7048
                  %v7050 = vld [vmem:[%s6978 + $0x8c] sm:$0xf]
                  %7051 = vst [vmem:[%s6979 + $0x8c] sm:$0xf] %v7050
                  %v7052 = vld [vmem:[%s6978 + $0x90] sm:$0xf]
                  %7053 = vst [vmem:[%s6979 + $0x90] sm:$0xf] %v7052
                  %s7054 = sadd.s32 1, %s6977
                  %p7055 = scmp.ge.s32.totalorder %s7054, %s6969
                  %s7056 = scalar_select %p7055, 0, %s7054
                  %s7057 = smul.u32 %s7056, 148
                  %s7058 = smul.u32 %s7056, 148
                  %s7059 = scalar_lea.vmem %s6829, %s7057 [#allocation2]
                  %s7060 = scalar_lea.vmem %s6840, %s7058
                $region71: #{_forward_init.3} parent=65 // loop_footer
                  %s6974 = sadd.s32 %s6972, 1
                $region72: #{_forward_init.3} parent=65 // loop_footer_branch
                  %6971 = sbr.rel target = $region68
                $region73: #{_forward_init.3} parent=65 // loop_exit
                  _
                %s7061 = sdiv.u32.pop %s6836, 37
                %s7062 = srem.u32.pop %s6836, 37
                %s7063 = smul.u32 %s7061, 37
                %s7064 = smul.u32 4, %s7063
                %s7065 = scalar_lea.vmem %s6829, %s7064 [#allocation2]
                %s7066 = smul.u32 4, %s7063
                %s7067 = scalar_lea.vmem %s6840, %s7066
                // While loop
                $region74: #{_forward_init.3} parent=65 // loop_pre_header
                  _
                $region75: #{_forward_init.3} parent=65 // loop_header
                  %s7069 = sphi 0, %s7071
                  %p7070 = scmp.ge.s32.totalorder %s7069, %s7062
                  %s7074 = sphi 0, %s7081
                  %s7075 = sphi %s7065, %s7084
                  %s7076 = sphi %s7067, %s7085
                $region76: #{_forward_init.3} parent=65 // loop_header_branch
                  %7073 = sbr.rel (%p7070) target = $region80
                $region77: #{_forward_init.3} parent=65 // loop_body
                  %v7077 = vld [vmem:[%s7075] sm:$0xf]
                  %7078 = vst [vmem:[%s7076] sm:$0xf] %v7077
                  %s7079 = sadd.s32 1, %s7074
                  %p7080 = scmp.ge.s32.totalorder %s7079, %s7062
                  %s7081 = scalar_select %p7080, 0, %s7079
                  %s7082 = smul.u32 %s7081, 4
                  %s7083 = smul.u32 %s7081, 4
                  %s7084 = scalar_lea.vmem %s7065, %s7082 [#allocation2]
                  %s7085 = scalar_lea.vmem %s7067, %s7083
                $region78: #{_forward_init.3} parent=65 // loop_footer
                  %s7071 = sadd.s32 %s7069, 1
                $region79: #{_forward_init.3} parent=65 // loop_footer_branch
                  %7068 = sbr.rel target = $region75
                $region80: #{_forward_init.3} parent=65 // loop_exit
                  _
              $region66: #{_forward_init.3} parent=43 // pred_fallthru
                _
            $region44: #{_forward_init.3} parent=39 // pred_fallthru
              _
            // Predicated region
            $region45: #{_forward_init.3} parent=39 // pred_check
              _
            $region46: #{_forward_init.3} parent=39 // pred_check_branch
              %6847 = sbr.rel (0) target = $region48
            $region47: #{_forward_init.3} parent=39 // pred_region
              %s6849 = sdiv.u32.pop %s6836, 37
              %s6850 = srem.u32.pop %s6836, 37
              // While loop
              $region49: #{_forward_init.3} parent=47 // loop_pre_header
                _
              $region50: #{_forward_init.3} parent=47 // loop_header
                %s6852 = sphi 0, %s6854
                %p6853 = scmp.ge.s32.totalorder %s6852, %s6849
                %s6857 = sphi 0, %s6936
                %s6858 = sphi %s6829, %s6939
                %s6859 = sphi %s6840, %s6940
              $region51: #{_forward_init.3} parent=47 // loop_header_branch
                %6856 = sbr.rel (%p6853) target = $region55
              $region52: #{_forward_init.3} parent=47 // loop_body
                %v6860 = vld [vmem:[%s6858] sm:$0xf]
                %6861 = vst [vmem:[%s6859] sm:$0xf] %v6860
                %v6862 = vld [vmem:[%s6858 + $0x4] sm:$0xf]
                %6863 = vst [vmem:[%s6859 + $0x4] sm:$0xf] %v6862
                %v6864 = vld [vmem:[%s6858 + $0x8] sm:$0xf]
                %6865 = vst [vmem:[%s6859 + $0x8] sm:$0xf] %v6864
                %v6866 = vld [vmem:[%s6858 + $0xc] sm:$0xf]
                %6867 = vst [vmem:[%s6859 + $0xc] sm:$0xf] %v6866
                %v6868 = vld [vmem:[%s6858 + $0x10] sm:$0xf]
                %6869 = vst [vmem:[%s6859 + $0x10] sm:$0xf] %v6868
                %v6870 = vld [vmem:[%s6858 + $0x14] sm:$0xf]
                %6871 = vst [vmem:[%s6859 + $0x14] sm:$0xf] %v6870
                %v6872 = vld [vmem:[%s6858 + $0x18] sm:$0xf]
                %6873 = vst [vmem:[%s6859 + $0x18] sm:$0xf] %v6872
                %v6874 = vld [vmem:[%s6858 + $0x1c] sm:$0xf]
                %6875 = vst [vmem:[%s6859 + $0x1c] sm:$0xf] %v6874
                %v6876 = vld [vmem:[%s6858 + $0x20] sm:$0xf]
                %6877 = vst [vmem:[%s6859 + $0x20] sm:$0xf] %v6876
                %v6878 = vld [vmem:[%s6858 + $0x24] sm:$0xf]
                %6879 = vst [vmem:[%s6859 + $0x24] sm:$0xf] %v6878
                %v6880 = vld [vmem:[%s6858 + $0x28] sm:$0xf]
                %6881 = vst [vmem:[%s6859 + $0x28] sm:$0xf] %v6880
                %v6882 = vld [vmem:[%s6858 + $0x2c] sm:$0xf]
                %6883 = vst [vmem:[%s6859 + $0x2c] sm:$0xf] %v6882
                %v6884 = vld [vmem:[%s6858 + $0x30] sm:$0xf]
                %6885 = vst [vmem:[%s6859 + $0x30] sm:$0xf] %v6884
                %v6886 = vld [vmem:[%s6858 + $0x34] sm:$0xf]
                %6887 = vst [vmem:[%s6859 + $0x34] sm:$0xf] %v6886
                %v6888 = vld [vmem:[%s6858 + $0x38] sm:$0xf]
                %6889 = vst [vmem:[%s6859 + $0x38] sm:$0xf] %v6888
                %v6890 = vld [vmem:[%s6858 + $0x3c] sm:$0xf]
                %6891 = vst [vmem:[%s6859 + $0x3c] sm:$0xf] %v6890
                %v6892 = vld [vmem:[%s6858 + $0x40] sm:$0xf]
                %6893 = vst [vmem:[%s6859 + $0x40] sm:$0xf] %v6892
                %v6894 = vld [vmem:[%s6858 + $0x44] sm:$0xf]
                %6895 = vst [vmem:[%s6859 + $0x44] sm:$0xf] %v6894
                %v6896 = vld [vmem:[%s6858 + $0x48] sm:$0xf]
                %6897 = vst [vmem:[%s6859 + $0x48] sm:$0xf] %v6896
                %v6898 = vld [vmem:[%s6858 + $0x4c] sm:$0xf]
                %6899 = vst [vmem:[%s6859 + $0x4c] sm:$0xf] %v6898
                %v6900 = vld [vmem:[%s6858 + $0x50] sm:$0xf]
                %6901 = vst [vmem:[%s6859 + $0x50] sm:$0xf] %v6900
                %v6902 = vld [vmem:[%s6858 + $0x54] sm:$0xf]
                %6903 = vst [vmem:[%s6859 + $0x54] sm:$0xf] %v6902
                %v6904 = vld [vmem:[%s6858 + $0x58] sm:$0xf]
                %6905 = vst [vmem:[%s6859 + $0x58] sm:$0xf] %v6904
                %v6906 = vld [vmem:[%s6858 + $0x5c] sm:$0xf]
                %6907 = vst [vmem:[%s6859 + $0x5c] sm:$0xf] %v6906
                %v6908 = vld [vmem:[%s6858 + $0x60] sm:$0xf]
                %6909 = vst [vmem:[%s6859 + $0x60] sm:$0xf] %v6908
                %v6910 = vld [vmem:[%s6858 + $0x64] sm:$0xf]
                %6911 = vst [vmem:[%s6859 + $0x64] sm:$0xf] %v6910
                %v6912 = vld [vmem:[%s6858 + $0x68] sm:$0xf]
                %6913 = vst [vmem:[%s6859 + $0x68] sm:$0xf] %v6912
                %v6914 = vld [vmem:[%s6858 + $0x6c] sm:$0xf]
                %6915 = vst [vmem:[%s6859 + $0x6c] sm:$0xf] %v6914
                %v6916 = vld [vmem:[%s6858 + $0x70] sm:$0xf]
                %6917 = vst [vmem:[%s6859 + $0x70] sm:$0xf] %v6916
                %v6918 = vld [vmem:[%s6858 + $0x74] sm:$0xf]
                %6919 = vst [vmem:[%s6859 + $0x74] sm:$0xf] %v6918
                %v6920 = vld [vmem:[%s6858 + $0x78] sm:$0xf]
                %6921 = vst [vmem:[%s6859 + $0x78] sm:$0xf] %v6920
                %v6922 = vld [vmem:[%s6858 + $0x7c] sm:$0xf]
                %6923 = vst [vmem:[%s6859 + $0x7c] sm:$0xf] %v6922
                %v6924 = vld [vmem:[%s6858 + $0x80] sm:$0xf]
                %6925 = vst [vmem:[%s6859 + $0x80] sm:$0xf] %v6924
                %v6926 = vld [vmem:[%s6858 + $0x84] sm:$0xf]
                %6927 = vst [vmem:[%s6859 + $0x84] sm:$0xf] %v6926
                %v6928 = vld [vmem:[%s6858 + $0x88] sm:$0xf]
                %6929 = vst [vmem:[%s6859 + $0x88] sm:$0xf] %v6928
                %v6930 = vld [vmem:[%s6858 + $0x8c] sm:$0xf]
                %6931 = vst [vmem:[%s6859 + $0x8c] sm:$0xf] %v6930
                %v6932 = vld [vmem:[%s6858 + $0x90] sm:$0xf]
                %6933 = vst [vmem:[%s6859 + $0x90] sm:$0xf] %v6932
                %s6934 = sadd.s32 1, %s6857
                %p6935 = scmp.ge.s32.totalorder %s6934, %s6849
                %s6936 = scalar_select %p6935, 0, %s6934
                %s6937 = smul.u32 %s6936, 148
                %s6938 = smul.u32 %s6936, 148
                %s6939 = scalar_lea.vmem %s6829, %s6937 [#allocation2]
                %s6940 = scalar_lea.vmem %s6840, %s6938
              $region53: #{_forward_init.3} parent=47 // loop_footer
                %s6854 = sadd.s32 %s6852, 1
              $region54: #{_forward_init.3} parent=47 // loop_footer_branch
                %6851 = sbr.rel target = $region50
              $region55: #{_forward_init.3} parent=47 // loop_exit
                _
              %s6941 = sdiv.u32.pop %s6836, 37
              %s6942 = srem.u32.pop %s6836, 37
              %s6943 = smul.u32 %s6941, 37
              %s6944 = smul.u32 4, %s6943
              %s6945 = scalar_lea.vmem %s6829, %s6944 [#allocation2]
              %s6946 = smul.u32 4, %s6943
              %s6947 = scalar_lea.vmem %s6840, %s6946
              // While loop
              $region56: #{_forward_init.3} parent=47 // loop_pre_header
                _
              $region57: #{_forward_init.3} parent=47 // loop_header
                %s6949 = sphi 0, %s6951
                %p6950 = scmp.ge.s32.totalorder %s6949, %s6942
                %s6954 = sphi 0, %s6961
                %s6955 = sphi %s6945, %s6964
                %s6956 = sphi %s6947, %s6965
              $region58: #{_forward_init.3} parent=47 // loop_header_branch
                %6953 = sbr.rel (%p6950) target = $region62
              $region59: #{_forward_init.3} parent=47 // loop_body
                %v6957 = vld [vmem:[%s6955] sm:$0xf]
                %6958 = vst [vmem:[%s6956] sm:$0xf] %v6957
                %s6959 = sadd.s32 1, %s6954
                %p6960 = scmp.ge.s32.totalorder %s6959, %s6942
                %s6961 = scalar_select %p6960, 0, %s6959
                %s6962 = smul.u32 %s6961, 4
                %s6963 = smul.u32 %s6961, 4
                %s6964 = scalar_lea.vmem %s6945, %s6962 [#allocation2]
                %s6965 = scalar_lea.vmem %s6947, %s6963
              $region60: #{_forward_init.3} parent=47 // loop_footer
                %s6951 = sadd.s32 %s6949, 1
              $region61: #{_forward_init.3} parent=47 // loop_footer_branch
                %6948 = sbr.rel target = $region57
              $region62: #{_forward_init.3} parent=47 // loop_exit
                _
            $region48: #{_forward_init.3} parent=39 // pred_fallthru
              _
          $region40: #{_forward_init.3} parent=35 // pred_fallthru
            _
          %7086 = vnop
        $region36: #{_forward_init.3} parent=31 // pred_fallthru
          _
      $region32: #{_forward_init.3} parent=5 // pred_fallthru
        _
      %p7087 = scmp.le.s32.totalorder 2, %s9
      // Predicated region
      $region81: #{_forward_init.3} parent=5 // pred_check
        %p7088 = pneg %p7087
      $region82: #{_forward_init.3} parent=5 // pred_check_branch
        %7090 = sbr.rel (%p7088) target = $region84
      $region83: #{_forward_init.3} parent=5 // pred_region
        %s7091 = ssub.s32 %s9, 2
        // Predicated region
        $region85: #{_forward_init.3} parent=83 // pred_check
          %p7092 = pneg %p106
        $region86: #{_forward_init.3} parent=83 // pred_check_branch
          %7094 = sbr.rel (%p7092) target = $region88
        $region87: #{_forward_init.3} parent=83 // pred_region
          %s7095 = sand.u32 %s91, 1
          %s7096 = sand.u32 %s91, 1
          %s7097 = smul.addr %s7096, 148
          %s7098 = scalar_lea.vmem [#allocation2], %s7097
        $region88: #{_forward_init.3} parent=83 // pred_fallthru
          _
      $region84: #{_forward_init.3} parent=5 // pred_fallthru
        _
    $region6: #{_forward_init.3} parent=1 // loop_footer
      %s13 = sadd.s32 1, %s9
    $region7: #{_forward_init.3} parent=1 // loop_footer_branch
      %8 = sbr.rel target = $region3
    $region8: #{_forward_init.3} parent=1 // loop_exit
      _

// kernel: _forward_init.4
$region0: #{_forward_init.4}
  #allocation0 [shape = 'u32[]', space=smem, size = 0x4, offset = 0x4, fixed_abs, tag = 'smem constant byte address 0x4 - core index']
  #allocation1 [shape = 'u32[144,128]{1,0:T(1,128)}', space=vmem, size = 0x12000, scoped, tag = 'internal scratch']
  %s0 = inlined_call_operand.vmem [shape: bf16[56,2048], index: 0, kind: input, shape index: {}]
  %s1 = inlined_call_operand.vmem [shape: bf16[2048,128], index: 1, kind: input, shape index: {}]
  %s2 = inlined_call_operand.vmem [shape: f32[1,128], index: 2, kind: input, shape index: {}]
  %s3 = inlined_call_operand.vmem [shape: bf16[56,128], index: 3, kind: output, shape index: {}]
  %s4 = sld [smem:[#allocation0]]
  $region22: #{_forward_init.4} parent=0
    _
  %s6 = ssub.s32 1, %s4
  %s7 = scalar_select 0, %s6, %s4
  // Predicated region
  $region2: #{_forward_init.4} parent=0 // pred_check
    _
  $region3: #{_forward_init.4} parent=0 // pred_check_branch
    %9 = sbr.rel (0) target = $region5
  $region4: #{_forward_init.4} parent=0 // pred_region
    _
  $region5: #{_forward_init.4} parent=0 // pred_fallthru
    _
  // Predicated region
  $region6: #{_forward_init.4} parent=0 // pred_check
    _
  $region7: #{_forward_init.4} parent=0 // pred_check_branch
    %11 = sbr.rel (0) target = $region9
  $region8: #{_forward_init.4} parent=0 // pred_region
    _
  $region9: #{_forward_init.4} parent=0 // pred_fallthru
    _
  // Predicated region
  $region10: #{_forward_init.4} parent=0 // pred_check
    _
  $region11: #{_forward_init.4} parent=0 // pred_check_branch
    %13 = sbr.rel (0) target = $region13
  $region12: #{_forward_init.4} parent=0 // pred_region
    _
  $region13: #{_forward_init.4} parent=0 // pred_fallthru
    _
  %v15 = vld [vmem:[%s0] sm:$0xff]
  %v16 = vld [vmem:[%s0 + $0x8] sm:$0xff]
  %v17 = vld [vmem:[%s0 + $0x10] sm:$0xff]
  %v18 = vld [vmem:[%s0 + $0x18] sm:$0xff]
  %v19 = vld [vmem:[%s0 + $0x20] sm:$0xff]
  %v20 = vld [vmem:[%s0 + $0x28] sm:$0xff]
  %v21 = vld [vmem:[%s0 + $0x30] sm:$0xff]
  %v22 = vld [vmem:[%s0 + $0x38] sm:$0xff]
  %v23 = vld [vmem:[%s0 + $0x40] sm:$0xff]
  %v24 = vld [vmem:[%s0 + $0x48] sm:$0xff]
  %v25 = vld [vmem:[%s0 + $0x50] sm:$0xff]
  %v26 = vld [vmem:[%s0 + $0x58] sm:$0xff]
  %v27 = vld [vmem:[%s0 + $0x60] sm:$0xff]
  %v28 = vld [vmem:[%s0 + $0x68] sm:$0xff]
  %v29 = vld [vmem:[%s0 + $0x70] sm:$0xff]
  %v30 = vld [vmem:[%s0 + $0x78] sm:$0xff]
  %v31 = vld [vmem:[%s0 + $0x80] sm:$0xff]
  %v32 = vld [vmem:[%s0 + $0x88] sm:$0xff]
  %v33 = vld [vmem:[%s0 + $0x90] sm:$0xff]
  %v34 = vld [vmem:[%s0 + $0x98] sm:$0xff]
  %v35 = vld [vmem:[%s0 + $0xa0] sm:$0xff]
  %v36 = vld [vmem:[%s0 + $0xa8] sm:$0xff]
  %v37 = vld [vmem:[%s0 + $0xb0] sm:$0xff]
  %v38 = vld [vmem:[%s0 + $0xb8] sm:$0xff]
  %v39 = vld [vmem:[%s0 + $0xc0] sm:$0xff]
  %v40 = vld [vmem:[%s0 + $0xc8] sm:$0xff]
  %v41 = vld [vmem:[%s0 + $0xd0] sm:$0xff]
  %v42 = vld [vmem:[%s0 + $0xd8] sm:$0xff]
  %v43 = vld [vmem:[%s0 + $0xe0] sm:$0xff]
  %v44 = vld [vmem:[%s0 + $0xe8] sm:$0xff]
  %v45 = vld [vmem:[%s0 + $0xf0] sm:$0xff]
  %v46 = vld [vmem:[%s0 + $0xf8] sm:$0xff]
  %v47 = vld [vmem:[%s0 + $0x100] sm:$0xff]
  %v48 = vld [vmem:[%s0 + $0x108] sm:$0xff]
  %v49 = vld [vmem:[%s0 + $0x110] sm:$0xff]
  %v50 = vld [vmem:[%s0 + $0x118] sm:$0xff]
  %v51 = vld [vmem:[%s0 + $0x120] sm:$0xff]
  %v52 = vld [vmem:[%s0 + $0x128] sm:$0xff]
  %v53 = vld [vmem:[%s0 + $0x130] sm:$0xff]
  %v54 = vld [vmem:[%s0 + $0x138] sm:$0xff]
  %v55 = vld [vmem:[%s0 + $0x140] sm:$0xff]
  %v56 = vld [vmem:[%s0 + $0x148] sm:$0xff]
  %v57 = vld [vmem:[%s0 + $0x150] sm:$0xff]
  %v58 = vld [vmem:[%s0 + $0x158] sm:$0xff]
  %v59 = vld [vmem:[%s0 + $0x160] sm:$0xff]
  %v60 = vld [vmem:[%s0 + $0x168] sm:$0xff]
  %v61 = vld [vmem:[%s0 + $0x170] sm:$0xff]
  %v62 = vld [vmem:[%s0 + $0x178] sm:$0xff]
  %v63 = vld [vmem:[%s0 + $0x180] sm:$0xff]
  %v64 = vld [vmem:[%s0 + $0x188] sm:$0xff]
  %v65 = vld [vmem:[%s0 + $0x190] sm:$0xff]
  %v66 = vld [vmem:[%s0 + $0x198] sm:$0xff]
  %v67 = vld [vmem:[%s0 + $0x1a0] sm:$0xff]
  %v68 = vld [vmem:[%s0 + $0x1a8] sm:$0xff]
  %v69 = vld [vmem:[%s0 + $0x1b0] sm:$0xff]
  %v70 = vld [vmem:[%s0 + $0x1b8] sm:$0xff]
  %v71 = vld [vmem:[%s1] sm:$0xf]
  %v72 = vld [vmem:[%s1 + $0x4] sm:$0xf]
  %v73 = vld [vmem:[%s1 + $0x8] sm:$0xf]
  %v74 = vld [vmem:[%s1 + $0xc] sm:$0xf]
  %v75 = vld [vmem:[%s1 + $0x10] sm:$0xf]
  %v76 = vld [vmem:[%s1 + $0x14] sm:$0xf]
  %v77 = vld [vmem:[%s1 + $0x18] sm:$0xf]
  %v78 = vld [vmem:[%s1 + $0x1c] sm:$0xf]
  %v79 = vld [vmem:[%s1 + $0x20] sm:$0xf]
  %v80 = vld [vmem:[%s1 + $0x24] sm:$0xf]
  %v81 = vld [vmem:[%s1 + $0x28] sm:$0xf]
  %v82 = vld [vmem:[%s1 + $0x2c] sm:$0xf]
  %v83 = vld [vmem:[%s1 + $0x30] sm:$0xf]
  %v84 = vld [vmem:[%s1 + $0x34] sm:$0xf]
  %v85 = vld [vmem:[%s1 + $0x38] sm:$0xf]
  %v86 = vld [vmem:[%s1 + $0x3c] sm:$0xf]
  %v87 = vld [vmem:[%s1 + $0x40] sm:$0xf]
  %v88 = vld [vmem:[%s1 + $0x44] sm:$0xf]
  %v89 = vld [vmem:[%s1 + $0x48] sm:$0xf]
  %v90 = vld [vmem:[%s1 + $0x4c] sm:$0xf]
  %v91 = vld [vmem:[%s1 + $0x50] sm:$0xf]
  %v92 = vld [vmem:[%s1 + $0x54] sm:$0xf]
  %v93 = vld [vmem:[%s1 + $0x58] sm:$0xf]
  %v94 = vld [vmem:[%s1 + $0x5c] sm:$0xf]
  %v95 = vld [vmem:[%s1 + $0x60] sm:$0xf]
  %v96 = vld [vmem:[%s1 + $0x64] sm:$0xf]
  %v97 = vld [vmem:[%s1 + $0x68] sm:$0xf]
  %v98 = vld [vmem:[%s1 + $0x6c] sm:$0xf]
  %v99 = vld [vmem:[%s1 + $0x70] sm:$0xf]
  %v100 = vld [vmem:[%s1 + $0x74] sm:$0xf]
  %v101 = vld [vmem:[%s1 + $0x78] sm:$0xf]
  %v102 = vld [vmem:[%s1 + $0x7c] sm:$0xf]
  %v103 = vld [vmem:[%s1 + $0x80] sm:$0xf]
  %v104 = vld [vmem:[%s1 + $0x84] sm:$0xf]
  %v105 = vld [vmem:[%s1 + $0x88] sm:$0xf]
  %v106 = vld [vmem:[%s1 + $0x8c] sm:$0xf]
  %v107 = vld [vmem:[%s1 + $0x90] sm:$0xf]
  %v108 = vld [vmem:[%s1 + $0x94] sm:$0xf]
  %v109 = vld [vmem:[%s1 + $0x98] sm:$0xf]
  %v110 = vld [vmem:[%s1 + $0x9c] sm:$0xf]
  %v111 = vld [vmem:[%s1 + $0xa0] sm:$0xf]
  %v112 = vld [vmem:[%s1 + $0xa4] sm:$0xf]
  %v113 = vld [vmem:[%s1 + $0xa8] sm:$0xf]
  %v114 = vld [vmem:[%s1 + $0xac] sm:$0xf]
  %v115 = vld [vmem:[%s1 + $0xb0] sm:$0xf]
  %v116 = vld [vmem:[%s1 + $0xb4] sm:$0xf]
  %v117 = vld [vmem:[%s1 + $0xb8] sm:$0xf]
  %v118 = vld [vmem:[%s1 + $0xbc] sm:$0xf]
  %v119 = vld [vmem:[%s1 + $0xc0] sm:$0xf]
  %v120 = vld [vmem:[%s1 + $0xc4] sm:$0xf]
  %v121 = vld [vmem:[%s1 + $0xc8] sm:$0xf]
  %v122 = vld [vmem:[%s1 + $0xcc] sm:$0xf]
  %v123 = vld [vmem:[%s1 + $0xd0] sm:$0xf]
  %v124 = vld [vmem:[%s1 + $0xd4] sm:$0xf]
  %v125 = vld [vmem:[%s1 + $0xd8] sm:$0xf]
  %v126 = vld [vmem:[%s1 + $0xdc] sm:$0xf]
  %v127 = vld [vmem:[%s1 + $0xe0] sm:$0xf]
  %v128 = vld [vmem:[%s1 + $0xe4] sm:$0xf]
  %v129 = vld [vmem:[%s1 + $0xe8] sm:$0xf]
  %v130 = vld [vmem:[%s1 + $0xec] sm:$0xf]
  %v131 = vld [vmem:[%s1 + $0xf0] sm:$0xf]
  %v132 = vld [vmem:[%s1 + $0xf4] sm:$0xf]
  %v133 = vld [vmem:[%s1 + $0xf8] sm:$0xf]
  %v134 = vld [vmem:[%s1 + $0xfc] sm:$0xf]
  %v135 = vld [vmem:[%s1 + $0x100] sm:$0xf]
  %v136 = vld [vmem:[%s1 + $0x104] sm:$0xf]
  %v137 = vld [vmem:[%s1 + $0x108] sm:$0xf]
  %v138 = vld [vmem:[%s1 + $0x10c] sm:$0xf]
  %v139 = vld [vmem:[%s1 + $0x110] sm:$0xf]
  %v140 = vld [vmem:[%s1 + $0x114] sm:$0xf]
  %v141 = vld [vmem:[%s1 + $0x118] sm:$0xf]
  %v142 = vld [vmem:[%s1 + $0x11c] sm:$0xf]
  %v143 = vld [vmem:[%s1 + $0x120] sm:$0xf]
  %v144 = vld [vmem:[%s1 + $0x124] sm:$0xf]
  %v145 = vld [vmem:[%s1 + $0x128] sm:$0xf]
  %v146 = vld [vmem:[%s1 + $0x12c] sm:$0xf]
  %v147 = vld [vmem:[%s1 + $0x130] sm:$0xf]
  %v148 = vld [vmem:[%s1 + $0x134] sm:$0xf]
  %v149 = vld [vmem:[%s1 + $0x138] sm:$0xf]
  %v150 = vld [vmem:[%s1 + $0x13c] sm:$0xf]
  %v151 = vld [vmem:[%s1 + $0x140] sm:$0xf]
  %v152 = vld [vmem:[%s1 + $0x144] sm:$0xf]
  %v153 = vld [vmem:[%s1 + $0x148] sm:$0xf]
  %v154 = vld [vmem:[%s1 + $0x14c] sm:$0xf]
  %v155 = vld [vmem:[%s1 + $0x150] sm:$0xf]
  %v156 = vld [vmem:[%s1 + $0x154] sm:$0xf]
  %v157 = vld [vmem:[%s1 + $0x158] sm:$0xf]
  %v158 = vld [vmem:[%s1 + $0x15c] sm:$0xf]
  %v159 = vld [vmem:[%s1 + $0x160] sm:$0xf]
  %v160 = vld [vmem:[%s1 + $0x164] sm:$0xf]
  %v161 = vld [vmem:[%s1 + $0x168] sm:$0xf]
  %v162 = vld [vmem:[%s1 + $0x16c] sm:$0xf]
  %v163 = vld [vmem:[%s1 + $0x170] sm:$0xf]
  %v164 = vld [vmem:[%s1 + $0x174] sm:$0xf]
  %v165 = vld [vmem:[%s1 + $0x178] sm:$0xf]
  %v166 = vld [vmem:[%s1 + $0x17c] sm:$0xf]
  %v167 = vld [vmem:[%s1 + $0x180] sm:$0xf]
  %v168 = vld [vmem:[%s1 + $0x184] sm:$0xf]
  %v169 = vld [vmem:[%s1 + $0x188] sm:$0xf]
  %v170 = vld [vmem:[%s1 + $0x18c] sm:$0xf]
  %v171 = vld [vmem:[%s1 + $0x190] sm:$0xf]
  %v172 = vld [vmem:[%s1 + $0x194] sm:$0xf]
  %v173 = vld [vmem:[%s1 + $0x198] sm:$0xf]
  %v174 = vld [vmem:[%s1 + $0x19c] sm:$0xf]
  %v175 = vld [vmem:[%s1 + $0x1a0] sm:$0xf]
  %v176 = vld [vmem:[%s1 + $0x1a4] sm:$0xf]
  %v177 = vld [vmem:[%s1 + $0x1a8] sm:$0xf]
  %v178 = vld [vmem:[%s1 + $0x1ac] sm:$0xf]
  %v179 = vld [vmem:[%s1 + $0x1b0] sm:$0xf]
  %v180 = vld [vmem:[%s1 + $0x1b4] sm:$0xf]
  %v181 = vld [vmem:[%s1 + $0x1b8] sm:$0xf]
  %v182 = vld [vmem:[%s1 + $0x1bc] sm:$0xf]
  %v183 = vld [vmem:[%s1 + $0x1c0] sm:$0xf]
  %v184 = vld [vmem:[%s1 + $0x1c4] sm:$0xf]
  %v185 = vld [vmem:[%s1 + $0x1c8] sm:$0xf]
  %v186 = vld [vmem:[%s1 + $0x1cc] sm:$0xf]
  %v187 = vld [vmem:[%s1 + $0x1d0] sm:$0xf]
  %v188 = vld [vmem:[%s1 + $0x1d4] sm:$0xf]
  %v189 = vld [vmem:[%s1 + $0x1d8] sm:$0xf]
  %v190 = vld [vmem:[%s1 + $0x1dc] sm:$0xf]
  %v191 = vld [vmem:[%s1 + $0x1e0] sm:$0xf]
  %v192 = vld [vmem:[%s1 + $0x1e4] sm:$0xf]
  %v193 = vld [vmem:[%s1 + $0x1e8] sm:$0xf]
  %v194 = vld [vmem:[%s1 + $0x1ec] sm:$0xf]
  %v195 = vld [vmem:[%s1 + $0x1f0] sm:$0xf]
  %v196 = vld [vmem:[%s1 + $0x1f4] sm:$0xf]
  %v197 = vld [vmem:[%s1 + $0x1f8] sm:$0xf]
  %v198 = vld [vmem:[%s1 + $0x1fc] sm:$0xf]
  %v199 = vld [vmem:[%s1 + $0x200] sm:$0xf]
  %v200 = vld [vmem:[%s1 + $0x204] sm:$0xf]
  %v201 = vld [vmem:[%s1 + $0x208] sm:$0xf]
  %v202 = vld [vmem:[%s1 + $0x20c] sm:$0xf]
  %v203 = vld [vmem:[%s1 + $0x210] sm:$0xf]
  %v204 = vld [vmem:[%s1 + $0x214] sm:$0xf]
  %v205 = vld [vmem:[%s1 + $0x218] sm:$0xf]
  %v206 = vld [vmem:[%s1 + $0x21c] sm:$0xf]
  %v207 = vld [vmem:[%s1 + $0x220] sm:$0xf]
  %v208 = vld [vmem:[%s1 + $0x224] sm:$0xf]
  %v209 = vld [vmem:[%s1 + $0x228] sm:$0xf]
  %v210 = vld [vmem:[%s1 + $0x22c] sm:$0xf]
  %v211 = vld [vmem:[%s1 + $0x230] sm:$0xf]
  %v212 = vld [vmem:[%s1 + $0x234] sm:$0xf]
  %v213 = vld [vmem:[%s1 + $0x238] sm:$0xf]
  %v214 = vld [vmem:[%s1 + $0x23c] sm:$0xf]
  %v215 = vld [vmem:[%s1 + $0x240] sm:$0xf]
  %v216 = vld [vmem:[%s1 + $0x244] sm:$0xf]
  %v217 = vld [vmem:[%s1 + $0x248] sm:$0xf]
  %v218 = vld [vmem:[%s1 + $0x24c] sm:$0xf]
  %v219 = vld [vmem:[%s1 + $0x250] sm:$0xf]
  %v220 = vld [vmem:[%s1 + $0x254] sm:$0xf]
  %v221 = vld [vmem:[%s1 + $0x258] sm:$0xf]
  %v222 = vld [vmem:[%s1 + $0x25c] sm:$0xf]
  %v223 = vld [vmem:[%s1 + $0x260] sm:$0xf]
  %v224 = vld [vmem:[%s1 + $0x264] sm:$0xf]
  %v225 = vld [vmem:[%s1 + $0x268] sm:$0xf]
  %v226 = vld [vmem:[%s1 + $0x26c] sm:$0xf]
  %v227 = vld [vmem:[%s1 + $0x270] sm:$0xf]
  %v228 = vld [vmem:[%s1 + $0x274] sm:$0xf]
  %v229 = vld [vmem:[%s1 + $0x278] sm:$0xf]
  %v230 = vld [vmem:[%s1 + $0x27c] sm:$0xf]
  %v231 = vld [vmem:[%s1 + $0x280] sm:$0xf]
  %v232 = vld [vmem:[%s1 + $0x284] sm:$0xf]
  %v233 = vld [vmem:[%s1 + $0x288] sm:$0xf]
  %v234 = vld [vmem:[%s1 + $0x28c] sm:$0xf]
  %v235 = vld [vmem:[%s1 + $0x290] sm:$0xf]
  %v236 = vld [vmem:[%s1 + $0x294] sm:$0xf]
  %v237 = vld [vmem:[%s1 + $0x298] sm:$0xf]
  %v238 = vld [vmem:[%s1 + $0x29c] sm:$0xf]
  %v239 = vld [vmem:[%s1 + $0x2a0] sm:$0xf]
  %v240 = vld [vmem:[%s1 + $0x2a4] sm:$0xf]
  %v241 = vld [vmem:[%s1 + $0x2a8] sm:$0xf]
  %v242 = vld [vmem:[%s1 + $0x2ac] sm:$0xf]
  %v243 = vld [vmem:[%s1 + $0x2b0] sm:$0xf]
  %v244 = vld [vmem:[%s1 + $0x2b4] sm:$0xf]
  %v245 = vld [vmem:[%s1 + $0x2b8] sm:$0xf]
  %v246 = vld [vmem:[%s1 + $0x2bc] sm:$0xf]
  %v247 = vld [vmem:[%s1 + $0x2c0] sm:$0xf]
  %v248 = vld [vmem:[%s1 + $0x2c4] sm:$0xf]
  %v249 = vld [vmem:[%s1 + $0x2c8] sm:$0xf]
  %v250 = vld [vmem:[%s1 + $0x2cc] sm:$0xf]
  %v251 = vld [vmem:[%s1 + $0x2d0] sm:$0xf]
  %v252 = vld [vmem:[%s1 + $0x2d4] sm:$0xf]
  %v253 = vld [vmem:[%s1 + $0x2d8] sm:$0xf]
  %v254 = vld [vmem:[%s1 + $0x2dc] sm:$0xf]
  %v255 = vld [vmem:[%s1 + $0x2e0] sm:$0xf]
  %v256 = vld [vmem:[%s1 + $0x2e4] sm:$0xf]
  %v257 = vld [vmem:[%s1 + $0x2e8] sm:$0xf]
  %v258 = vld [vmem:[%s1 + $0x2ec] sm:$0xf]
  %v259 = vld [vmem:[%s1 + $0x2f0] sm:$0xf]
  %v260 = vld [vmem:[%s1 + $0x2f4] sm:$0xf]
  %v261 = vld [vmem:[%s1 + $0x2f8] sm:$0xf]
  %v262 = vld [vmem:[%s1 + $0x2fc] sm:$0xf]
  %v263 = vld [vmem:[%s1 + $0x300] sm:$0xf]
  %v264 = vld [vmem:[%s1 + $0x304] sm:$0xf]
  %v265 = vld [vmem:[%s1 + $0x308] sm:$0xf]
  %v266 = vld [vmem:[%s1 + $0x30c] sm:$0xf]
  %v267 = vld [vmem:[%s1 + $0x310] sm:$0xf]
  %v268 = vld [vmem:[%s1 + $0x314] sm:$0xf]
  %v269 = vld [vmem:[%s1 + $0x318] sm:$0xf]
  %v270 = vld [vmem:[%s1 + $0x31c] sm:$0xf]
  %v271 = vld [vmem:[%s1 + $0x320] sm:$0xf]
  %v272 = vld [vmem:[%s1 + $0x324] sm:$0xf]
  %v273 = vld [vmem:[%s1 + $0x328] sm:$0xf]
  %v274 = vld [vmem:[%s1 + $0x32c] sm:$0xf]
  %v275 = vld [vmem:[%s1 + $0x330] sm:$0xf]
  %v276 = vld [vmem:[%s1 + $0x334] sm:$0xf]
  %v277 = vld [vmem:[%s1 + $0x338] sm:$0xf]
  %v278 = vld [vmem:[%s1 + $0x33c] sm:$0xf]
  %v279 = vld [vmem:[%s1 + $0x340] sm:$0xf]
  %v280 = vld [vmem:[%s1 + $0x344] sm:$0xf]
  %v281 = vld [vmem:[%s1 + $0x348] sm:$0xf]
  %v282 = vld [vmem:[%s1 + $0x34c] sm:$0xf]
  %v283 = vld [vmem:[%s1 + $0x350] sm:$0xf]
  %v284 = vld [vmem:[%s1 + $0x354] sm:$0xf]
  %v285 = vld [vmem:[%s1 + $0x358] sm:$0xf]
  %v286 = vld [vmem:[%s1 + $0x35c] sm:$0xf]
  %v287 = vld [vmem:[%s1 + $0x360] sm:$0xf]
  %v288 = vld [vmem:[%s1 + $0x364] sm:$0xf]
  %v289 = vld [vmem:[%s1 + $0x368] sm:$0xf]
  %v290 = vld [vmem:[%s1 + $0x36c] sm:$0xf]
  %v291 = vld [vmem:[%s1 + $0x370] sm:$0xf]
  %v292 = vld [vmem:[%s1 + $0x374] sm:$0xf]
  %v293 = vld [vmem:[%s1 + $0x378] sm:$0xf]
  %v294 = vld [vmem:[%s1 + $0x37c] sm:$0xf]
  %v295 = vld [vmem:[%s1 + $0x380] sm:$0xf]
  %v296 = vld [vmem:[%s1 + $0x384] sm:$0xf]
  %v297 = vld [vmem:[%s1 + $0x388] sm:$0xf]
  %v298 = vld [vmem:[%s1 + $0x38c] sm:$0xf]
  %v299 = vld [vmem:[%s1 + $0x390] sm:$0xf]
  %v300 = vld [vmem:[%s1 + $0x394] sm:$0xf]
  %v301 = vld [vmem:[%s1 + $0x398] sm:$0xf]
  %v302 = vld [vmem:[%s1 + $0x39c] sm:$0xf]
  %v303 = vld [vmem:[%s1 + $0x3a0] sm:$0xf]
  %v304 = vld [vmem:[%s1 + $0x3a4] sm:$0xf]
  %v305 = vld [vmem:[%s1 + $0x3a8] sm:$0xf]
  %v306 = vld [vmem:[%s1 + $0x3ac] sm:$0xf]
  %v307 = vld [vmem:[%s1 + $0x3b0] sm:$0xf]
  %v308 = vld [vmem:[%s1 + $0x3b4] sm:$0xf]
  %v309 = vld [vmem:[%s1 + $0x3b8] sm:$0xf]
  %v310 = vld [vmem:[%s1 + $0x3bc] sm:$0xf]
  %v311 = vld [vmem:[%s1 + $0x3c0] sm:$0xf]
  %v312 = vld [vmem:[%s1 + $0x3c4] sm:$0xf]
  %v313 = vld [vmem:[%s1 + $0x3c8] sm:$0xf]
  %v314 = vld [vmem:[%s1 + $0x3cc] sm:$0xf]
  %v315 = vld [vmem:[%s1 + $0x3d0] sm:$0xf]
  %v316 = vld [vmem:[%s1 + $0x3d4] sm:$0xf]
  %v317 = vld [vmem:[%s1 + $0x3d8] sm:$0xf]
  %v318 = vld [vmem:[%s1 + $0x3dc] sm:$0xf]
  %v319 = vld [vmem:[%s1 + $0x3e0] sm:$0xf]
  %v320 = vld [vmem:[%s1 + $0x3e4] sm:$0xf]
  %v321 = vld [vmem:[%s1 + $0x3e8] sm:$0xf]
  %v322 = vld [vmem:[%s1 + $0x3ec] sm:$0xf]
  %v323 = vld [vmem:[%s1 + $0x3f0] sm:$0xf]
  %v324 = vld [vmem:[%s1 + $0x3f4] sm:$0xf]
  %v325 = vld [vmem:[%s1 + $0x3f8] sm:$0xf]
  %v326 = vld [vmem:[%s1 + $0x3fc] sm:$0xf]
  %v327 = vld [vmem:[%s2] sm:$0x1]
  %v329 = vlaneseq
  %v330 = vshrl.u32 %v329, 7
  %v331 = vsub.s32 0, %v330
  %v332 = vrot.slane %v327, %v331
  %v390 = vunpack.c.l.b16 %v15
  %v391 = vunpack.c.h.b16 %v15
  %v392 = vunpack.c.l.b16 %v16
  %v393 = vunpack.c.h.b16 %v16
  %v394 = vunpack.c.l.b16 %v17
  %v395 = vunpack.c.h.b16 %v17
  %v396 = vunpack.c.l.b16 %v18
  %v397 = vunpack.c.h.b16 %v18
  %v398 = vunpack.c.l.b16 %v19
  %v399 = vunpack.c.h.b16 %v19
  %v400 = vunpack.c.l.b16 %v20
  %v401 = vunpack.c.h.b16 %v20
  %v402 = vunpack.c.l.b16 %v21
  %v403 = vunpack.c.h.b16 %v21
  %v404 = vunpack.c.l.b16 %v22
  %v405 = vunpack.c.h.b16 %v22
  %v406 = vunpack.c.l.b16 %v23
  %v407 = vunpack.c.h.b16 %v23
  %v408 = vunpack.c.l.b16 %v24
  %v409 = vunpack.c.h.b16 %v24
  %v410 = vunpack.c.l.b16 %v25
  %v411 = vunpack.c.h.b16 %v25
  %v412 = vunpack.c.l.b16 %v26
  %v413 = vunpack.c.h.b16 %v26
  %v414 = vunpack.c.l.b16 %v27
  %v415 = vunpack.c.h.b16 %v27
  %v416 = vunpack.c.l.b16 %v28
  %v417 = vunpack.c.h.b16 %v28
  %v418 = vunpack.c.l.b16 %v29
  %v419 = vunpack.c.h.b16 %v29
  %v420 = vunpack.c.l.b16 %v30
  %v421 = vunpack.c.h.b16 %v30
  %v422 = vunpack.c.l.b16 %v31
  %v423 = vunpack.c.h.b16 %v31
  %v424 = vunpack.c.l.b16 %v32
  %v425 = vunpack.c.h.b16 %v32
  %v426 = vunpack.c.l.b16 %v33
  %v427 = vunpack.c.h.b16 %v33
  %v428 = vunpack.c.l.b16 %v34
  %v429 = vunpack.c.h.b16 %v34
  %v430 = vunpack.c.l.b16 %v35
  %v431 = vunpack.c.h.b16 %v35
  %v432 = vunpack.c.l.b16 %v36
  %v433 = vunpack.c.h.b16 %v36
  %v434 = vunpack.c.l.b16 %v37
  %v435 = vunpack.c.h.b16 %v37
  %v436 = vunpack.c.l.b16 %v38
  %v437 = vunpack.c.h.b16 %v38
  %v438 = vunpack.c.l.b16 %v39
  %v439 = vunpack.c.h.b16 %v39
  %v440 = vunpack.c.l.b16 %v40
  %v441 = vunpack.c.h.b16 %v40
  %v442 = vunpack.c.l.b16 %v41
  %v443 = vunpack.c.h.b16 %v41
  %v444 = vunpack.c.l.b16 %v42
  %v445 = vunpack.c.h.b16 %v42
  %v446 = vunpack.c.l.b16 %v43
  %v447 = vunpack.c.h.b16 %v43
  %v448 = vunpack.c.l.b16 %v44
  %v449 = vunpack.c.h.b16 %v44
  %v450 = vunpack.c.l.b16 %v45
  %v451 = vunpack.c.h.b16 %v45
  %v452 = vunpack.c.l.b16 %v46
  %v453 = vunpack.c.h.b16 %v46
  %v454 = vunpack.c.l.b16 %v47
  %v455 = vunpack.c.h.b16 %v47
  %v456 = vunpack.c.l.b16 %v48
  %v457 = vunpack.c.h.b16 %v48
  %v458 = vunpack.c.l.b16 %v49
  %v459 = vunpack.c.h.b16 %v49
  %v460 = vunpack.c.l.b16 %v50
  %v461 = vunpack.c.h.b16 %v50
  %v462 = vunpack.c.l.b16 %v51
  %v463 = vunpack.c.h.b16 %v51
  %v464 = vunpack.c.l.b16 %v52
  %v465 = vunpack.c.h.b16 %v52
  %v466 = vunpack.c.l.b16 %v53
  %v467 = vunpack.c.h.b16 %v53
  %v468 = vunpack.c.l.b16 %v54
  %v469 = vunpack.c.h.b16 %v54
  %v470 = vunpack.c.l.b16 %v55
  %v471 = vunpack.c.h.b16 %v55
  %v472 = vunpack.c.l.b16 %v56
  %v473 = vunpack.c.h.b16 %v56
  %v474 = vunpack.c.l.b16 %v57
  %v475 = vunpack.c.h.b16 %v57
  %v476 = vunpack.c.l.b16 %v58
  %v477 = vunpack.c.h.b16 %v58
  %v478 = vunpack.c.l.b16 %v59
  %v479 = vunpack.c.h.b16 %v59
  %v480 = vunpack.c.l.b16 %v60
  %v481 = vunpack.c.h.b16 %v60
  %v482 = vunpack.c.l.b16 %v61
  %v483 = vunpack.c.h.b16 %v61
  %v484 = vunpack.c.l.b16 %v62
  %v485 = vunpack.c.h.b16 %v62
  %v486 = vunpack.c.l.b16 %v63
  %v487 = vunpack.c.h.b16 %v63
  %v488 = vunpack.c.l.b16 %v64
  %v489 = vunpack.c.h.b16 %v64
  %v490 = vunpack.c.l.b16 %v65
  %v491 = vunpack.c.h.b16 %v65
  %v492 = vunpack.c.l.b16 %v66
  %v493 = vunpack.c.h.b16 %v66
  %v494 = vunpack.c.l.b16 %v67
  %v495 = vunpack.c.h.b16 %v67
  %v496 = vunpack.c.l.b16 %v68
  %v497 = vunpack.c.h.b16 %v68
  %v498 = vunpack.c.l.b16 %v69
  %v499 = vunpack.c.h.b16 %v69
  %v500 = vunpack.c.l.b16 %v70
  %v501 = vunpack.c.h.b16 %v70
  %v502 = vpack.c.b16 %v406, %v390
  %v503 = vpack.c.b16 %v407, %v391
  %v504 = vpack.c.b16 %v408, %v392
  %v505 = vpack.c.b16 %v409, %v393
  %v506 = vpack.c.b16 %v410, %v394
  %v507 = vpack.c.b16 %v411, %v395
  %v508 = vpack.c.b16 %v412, %v396
  %v509 = vpack.c.b16 %v413, %v397
  %v510 = vpack.c.b16 %v414, %v398
  %v511 = vpack.c.b16 %v415, %v399
  %v512 = vpack.c.b16 %v416, %v400
  %v513 = vpack.c.b16 %v417, %v401
  %v514 = vpack.c.b16 %v418, %v402
  %v515 = vpack.c.b16 %v419, %v403
  %v516 = vpack.c.b16 %v420, %v404
  %v517 = vpack.c.b16 %v421, %v405
  %v518 = vpack.c.b16 %v438, %v422
  %v519 = vpack.c.b16 %v439, %v423
  %v520 = vpack.c.b16 %v440, %v424
  %v521 = vpack.c.b16 %v441, %v425
  %v522 = vpack.c.b16 %v442, %v426
  %v523 = vpack.c.b16 %v443, %v427
  %v524 = vpack.c.b16 %v444, %v428
  %v525 = vpack.c.b16 %v445, %v429
  %v526 = vpack.c.b16 %v446, %v430
  %v527 = vpack.c.b16 %v447, %v431
  %v528 = vpack.c.b16 %v448, %v432
  %v529 = vpack.c.b16 %v449, %v433
  %v530 = vpack.c.b16 %v450, %v434
  %v531 = vpack.c.b16 %v451, %v435
  %v532 = vpack.c.b16 %v452, %v436
  %v533 = vpack.c.b16 %v453, %v437
  %v534 = vpack.c.b16 %v470, %v454
  %v535 = vpack.c.b16 %v471, %v455
  %v536 = vpack.c.b16 %v472, %v456
  %v537 = vpack.c.b16 %v473, %v457
  %v538 = vpack.c.b16 %v474, %v458
  %v539 = vpack.c.b16 %v475, %v459
  %v540 = vpack.c.b16 %v476, %v460
  %v541 = vpack.c.b16 %v477, %v461
  %v542 = vpack.c.b16 %v478, %v462
  %v543 = vpack.c.b16 %v479, %v463
  %v544 = vpack.c.b16 %v480, %v464
  %v545 = vpack.c.b16 %v481, %v465
  %v546 = vpack.c.b16 %v482, %v466
  %v547 = vpack.c.b16 %v483, %v467
  %v548 = vpack.c.b16 %v484, %v468
  %v549 = vpack.c.b16 %v485, %v469
  %v550 = vpack.c.b16 %v486, %v486
  %v551 = vpack.c.b16 %v487, %v487
  %v552 = vpack.c.b16 %v488, %v488
  %v553 = vpack.c.b16 %v489, %v489
  %v554 = vpack.c.b16 %v490, %v490
  %v555 = vpack.c.b16 %v491, %v491
  %v556 = vpack.c.b16 %v492, %v492
  %v557 = vpack.c.b16 %v493, %v493
  %v558 = vpack.c.b16 %v494, %v494
  %v559 = vpack.c.b16 %v495, %v495
  %v560 = vpack.c.b16 %v496, %v496
  %v561 = vpack.c.b16 %v497, %v497
  %v562 = vpack.c.b16 %v498, %v498
  %v563 = vpack.c.b16 %v499, %v499
  %v564 = vpack.c.b16 %v500, %v500
  %v565 = vpack.c.b16 %v501, %v501
  %v886 = vunpack.c.l.b16 %v71
  %v887 = vunpack.c.l.b16 %v72
  %v888 = vunpack.c.l.b16 %v73
  %v889 = vunpack.c.l.b16 %v74
  %v890 = vunpack.c.l.b16 %v75
  %v891 = vunpack.c.l.b16 %v76
  %v892 = vunpack.c.l.b16 %v77
  %v893 = vunpack.c.l.b16 %v78
  %v894 = vunpack.c.l.b16 %v79
  %v895 = vunpack.c.l.b16 %v80
  %v896 = vunpack.c.l.b16 %v81
  %v897 = vunpack.c.l.b16 %v82
  %v898 = vunpack.c.l.b16 %v83
  %v899 = vunpack.c.l.b16 %v84
  %v900 = vunpack.c.l.b16 %v85
  %v901 = vunpack.c.l.b16 %v86
  %v902 = vunpack.c.l.b16 %v87
  %v903 = vunpack.c.l.b16 %v88
  %v904 = vunpack.c.l.b16 %v89
  %v905 = vunpack.c.l.b16 %v90
  %v906 = vunpack.c.l.b16 %v91
  %v907 = vunpack.c.l.b16 %v92
  %v908 = vunpack.c.l.b16 %v93
  %v909 = vunpack.c.l.b16 %v94
  %v910 = vunpack.c.l.b16 %v95
  %v911 = vunpack.c.l.b16 %v96
  %v912 = vunpack.c.l.b16 %v97
  %v913 = vunpack.c.l.b16 %v98
  %v914 = vunpack.c.l.b16 %v99
  %v915 = vunpack.c.l.b16 %v100
  %v916 = vunpack.c.l.b16 %v101
  %v917 = vunpack.c.l.b16 %v102
  %v918 = vunpack.c.l.b16 %v103
  %v919 = vunpack.c.l.b16 %v104
  %v920 = vunpack.c.l.b16 %v105
  %v921 = vunpack.c.l.b16 %v106
  %v922 = vunpack.c.l.b16 %v107
  %v923 = vunpack.c.l.b16 %v108
  %v924 = vunpack.c.l.b16 %v109
  %v925 = vunpack.c.l.b16 %v110
  %v926 = vunpack.c.l.b16 %v111
  %v927 = vunpack.c.l.b16 %v112
  %v928 = vunpack.c.l.b16 %v113
  %v929 = vunpack.c.l.b16 %v114
  %v930 = vunpack.c.l.b16 %v115
  %v931 = vunpack.c.l.b16 %v116
  %v932 = vunpack.c.l.b16 %v117
  %v933 = vunpack.c.l.b16 %v118
  %v934 = vunpack.c.l.b16 %v119
  %v935 = vunpack.c.l.b16 %v120
  %v936 = vunpack.c.l.b16 %v121
  %v937 = vunpack.c.l.b16 %v122
  %v938 = vunpack.c.l.b16 %v123
  %v939 = vunpack.c.l.b16 %v124
  %v940 = vunpack.c.l.b16 %v125
  %v941 = vunpack.c.l.b16 %v126
  %v942 = vunpack.c.l.b16 %v127
  %v943 = vunpack.c.l.b16 %v128
  %v944 = vunpack.c.l.b16 %v129
  %v945 = vunpack.c.l.b16 %v130
  %v946 = vunpack.c.l.b16 %v131
  %v947 = vunpack.c.l.b16 %v132
  %v948 = vunpack.c.l.b16 %v133
  %v949 = vunpack.c.l.b16 %v134
  %v950 = vunpack.c.l.b16 %v135
  %v951 = vunpack.c.l.b16 %v136
  %v952 = vunpack.c.l.b16 %v137
  %v953 = vunpack.c.l.b16 %v138
  %v954 = vunpack.c.l.b16 %v139
  %v955 = vunpack.c.l.b16 %v140
  %v956 = vunpack.c.l.b16 %v141
  %v957 = vunpack.c.l.b16 %v142
  %v958 = vunpack.c.l.b16 %v143
  %v959 = vunpack.c.l.b16 %v144
  %v960 = vunpack.c.l.b16 %v145
  %v961 = vunpack.c.l.b16 %v146
  %v962 = vunpack.c.l.b16 %v147
  %v963 = vunpack.c.l.b16 %v148
  %v964 = vunpack.c.l.b16 %v149
  %v965 = vunpack.c.l.b16 %v150
  %v966 = vunpack.c.l.b16 %v151
  %v967 = vunpack.c.l.b16 %v152
  %v968 = vunpack.c.l.b16 %v153
  %v969 = vunpack.c.l.b16 %v154
  %v970 = vunpack.c.l.b16 %v155
  %v971 = vunpack.c.l.b16 %v156
  %v972 = vunpack.c.l.b16 %v157
  %v973 = vunpack.c.l.b16 %v158
  %v974 = vunpack.c.l.b16 %v159
  %v975 = vunpack.c.l.b16 %v160
  %v976 = vunpack.c.l.b16 %v161
  %v977 = vunpack.c.l.b16 %v162
  %v978 = vunpack.c.l.b16 %v163
  %v979 = vunpack.c.l.b16 %v164
  %v980 = vunpack.c.l.b16 %v165
  %v981 = vunpack.c.l.b16 %v166
  %v982 = vunpack.c.l.b16 %v167
  %v983 = vunpack.c.l.b16 %v168
  %v984 = vunpack.c.l.b16 %v169
  %v985 = vunpack.c.l.b16 %v170
  %v986 = vunpack.c.l.b16 %v171
  %v987 = vunpack.c.l.b16 %v172
  %v988 = vunpack.c.l.b16 %v173
  %v989 = vunpack.c.l.b16 %v174
  %v990 = vunpack.c.l.b16 %v175
  %v991 = vunpack.c.l.b16 %v176
  %v992 = vunpack.c.l.b16 %v177
  %v993 = vunpack.c.l.b16 %v178
  %v994 = vunpack.c.l.b16 %v179
  %v995 = vunpack.c.l.b16 %v180
  %v996 = vunpack.c.l.b16 %v181
  %v997 = vunpack.c.l.b16 %v182
  %v998 = vunpack.c.l.b16 %v183
  %v999 = vunpack.c.l.b16 %v184
  %v1000 = vunpack.c.l.b16 %v185
  %v1001 = vunpack.c.l.b16 %v186
  %v1002 = vunpack.c.l.b16 %v187
  %v1003 = vunpack.c.l.b16 %v188
  %v1004 = vunpack.c.l.b16 %v189
  %v1005 = vunpack.c.l.b16 %v190
  %v1006 = vunpack.c.l.b16 %v191
  %v1007 = vunpack.c.l.b16 %v192
  %v1008 = vunpack.c.l.b16 %v193
  %v1009 = vunpack.c.l.b16 %v194
  %v1010 = vunpack.c.l.b16 %v195
  %v1011 = vunpack.c.l.b16 %v196
  %v1012 = vunpack.c.l.b16 %v197
  %v1013 = vunpack.c.l.b16 %v198
  %v1014 = vunpack.c.l.b16 %v199
  %v1015 = vunpack.c.l.b16 %v200
  %v1016 = vunpack.c.l.b16 %v201
  %v1017 = vunpack.c.l.b16 %v202
  %v1018 = vunpack.c.l.b16 %v203
  %v1019 = vunpack.c.l.b16 %v204
  %v1020 = vunpack.c.l.b16 %v205
  %v1021 = vunpack.c.l.b16 %v206
  %v1022 = vunpack.c.l.b16 %v207
  %v1023 = vunpack.c.l.b16 %v208
  %v1024 = vunpack.c.l.b16 %v209
  %v1025 = vunpack.c.l.b16 %v210
  %v1026 = vunpack.c.l.b16 %v211
  %v1027 = vunpack.c.l.b16 %v212
  %v1028 = vunpack.c.l.b16 %v213
  %v1029 = vunpack.c.l.b16 %v214
  %v1030 = vunpack.c.l.b16 %v215
  %v1031 = vunpack.c.l.b16 %v216
  %v1032 = vunpack.c.l.b16 %v217
  %v1033 = vunpack.c.l.b16 %v218
  %v1034 = vunpack.c.l.b16 %v219
  %v1035 = vunpack.c.l.b16 %v220
  %v1036 = vunpack.c.l.b16 %v221
  %v1037 = vunpack.c.l.b16 %v222
  %v1038 = vunpack.c.l.b16 %v223
  %v1039 = vunpack.c.l.b16 %v224
  %v1040 = vunpack.c.l.b16 %v225
  %v1041 = vunpack.c.l.b16 %v226
  %v1042 = vunpack.c.l.b16 %v227
  %v1043 = vunpack.c.l.b16 %v228
  %v1044 = vunpack.c.l.b16 %v229
  %v1045 = vunpack.c.l.b16 %v230
  %v1046 = vunpack.c.l.b16 %v231
  %v1047 = vunpack.c.l.b16 %v232
  %v1048 = vunpack.c.l.b16 %v233
  %v1049 = vunpack.c.l.b16 %v234
  %v1050 = vunpack.c.l.b16 %v235
  %v1051 = vunpack.c.l.b16 %v236
  %v1052 = vunpack.c.l.b16 %v237
  %v1053 = vunpack.c.l.b16 %v238
  %v1054 = vunpack.c.l.b16 %v239
  %v1055 = vunpack.c.l.b16 %v240
  %v1056 = vunpack.c.l.b16 %v241
  %v1057 = vunpack.c.l.b16 %v242
  %v1058 = vunpack.c.l.b16 %v243
  %v1059 = vunpack.c.l.b16 %v244
  %v1060 = vunpack.c.l.b16 %v245
  %v1061 = vunpack.c.l.b16 %v246
  %v1062 = vunpack.c.l.b16 %v247
  %v1063 = vunpack.c.l.b16 %v248
  %v1064 = vunpack.c.l.b16 %v249
  %v1065 = vunpack.c.l.b16 %v250
  %v1066 = vunpack.c.l.b16 %v251
  %v1067 = vunpack.c.l.b16 %v252
  %v1068 = vunpack.c.l.b16 %v253
  %v1069 = vunpack.c.l.b16 %v254
  %v1070 = vunpack.c.l.b16 %v255
  %v1071 = vunpack.c.l.b16 %v256
  %v1072 = vunpack.c.l.b16 %v257
  %v1073 = vunpack.c.l.b16 %v258
  %v1074 = vunpack.c.l.b16 %v259
  %v1075 = vunpack.c.l.b16 %v260
  %v1076 = vunpack.c.l.b16 %v261
  %v1077 = vunpack.c.l.b16 %v262
  %v1078 = vunpack.c.l.b16 %v263
  %v1079 = vunpack.c.l.b16 %v264
  %v1080 = vunpack.c.l.b16 %v265
  %v1081 = vunpack.c.l.b16 %v266
  %v1082 = vunpack.c.l.b16 %v267
  %v1083 = vunpack.c.l.b16 %v268
  %v1084 = vunpack.c.l.b16 %v269
  %v1085 = vunpack.c.l.b16 %v270
  %v1086 = vunpack.c.l.b16 %v271
  %v1087 = vunpack.c.l.b16 %v272
  %v1088 = vunpack.c.l.b16 %v273
  %v1089 = vunpack.c.l.b16 %v274
  %v1090 = vunpack.c.l.b16 %v275
  %v1091 = vunpack.c.l.b16 %v276
  %v1092 = vunpack.c.l.b16 %v277
  %v1093 = vunpack.c.l.b16 %v278
  %v1094 = vunpack.c.l.b16 %v279
  %v1095 = vunpack.c.l.b16 %v280
  %v1096 = vunpack.c.l.b16 %v281
  %v1097 = vunpack.c.l.b16 %v282
  %v1098 = vunpack.c.l.b16 %v283
  %v1099 = vunpack.c.l.b16 %v284
  %v1100 = vunpack.c.l.b16 %v285
  %v1101 = vunpack.c.l.b16 %v286
  %v1102 = vunpack.c.l.b16 %v287
  %v1103 = vunpack.c.l.b16 %v288
  %v1104 = vunpack.c.l.b16 %v289
  %v1105 = vunpack.c.l.b16 %v290
  %v1106 = vunpack.c.l.b16 %v291
  %v1107 = vunpack.c.l.b16 %v292
  %v1108 = vunpack.c.l.b16 %v293
  %v1109 = vunpack.c.l.b16 %v294
  %v1110 = vunpack.c.l.b16 %v295
  %v1111 = vunpack.c.l.b16 %v296
  %v1112 = vunpack.c.l.b16 %v297
  %v1113 = vunpack.c.l.b16 %v298
  %v1114 = vunpack.c.l.b16 %v299
  %v1115 = vunpack.c.l.b16 %v300
  %v1116 = vunpack.c.l.b16 %v301
  %v1117 = vunpack.c.l.b16 %v302
  %v1118 = vunpack.c.l.b16 %v303
  %v1119 = vunpack.c.l.b16 %v304
  %v1120 = vunpack.c.l.b16 %v305
  %v1121 = vunpack.c.l.b16 %v306
  %v1122 = vunpack.c.l.b16 %v307
  %v1123 = vunpack.c.l.b16 %v308
  %v1124 = vunpack.c.l.b16 %v309
  %v1125 = vunpack.c.l.b16 %v310
  %v1126 = vunpack.c.l.b16 %v311
  %v1127 = vunpack.c.l.b16 %v312
  %v1128 = vunpack.c.l.b16 %v313
  %v1129 = vunpack.c.l.b16 %v314
  %v1130 = vunpack.c.l.b16 %v315
  %v1131 = vunpack.c.l.b16 %v316
  %v1132 = vunpack.c.l.b16 %v317
  %v1133 = vunpack.c.l.b16 %v318
  %v1134 = vunpack.c.l.b16 %v319
  %v1135 = vunpack.c.l.b16 %v320
  %v1136 = vunpack.c.l.b16 %v321
  %v1137 = vunpack.c.l.b16 %v322
  %v1138 = vunpack.c.l.b16 %v323
  %v1139 = vunpack.c.l.b16 %v324
  %v1140 = vunpack.c.l.b16 %v325
  %v1141 = vunpack.c.l.b16 %v326
  %v1142 = vpack.c.b16 %v887, %v886
  %v1143 = vpack.c.b16 %v889, %v888
  %v1144 = vpack.c.b16 %v891, %v890
  %v1145 = vpack.c.b16 %v893, %v892
  %v1146 = vpack.c.b16 %v895, %v894
  %v1147 = vpack.c.b16 %v897, %v896
  %v1148 = vpack.c.b16 %v899, %v898
  %v1149 = vpack.c.b16 %v901, %v900
  %v1150 = vpack.c.b16 %v903, %v902
  %v1151 = vpack.c.b16 %v905, %v904
  %v1152 = vpack.c.b16 %v907, %v906
  %v1153 = vpack.c.b16 %v909, %v908
  %v1154 = vpack.c.b16 %v911, %v910
  %v1155 = vpack.c.b16 %v913, %v912
  %v1156 = vpack.c.b16 %v915, %v914
  %v1157 = vpack.c.b16 %v917, %v916
  %v1158 = vpack.c.b16 %v919, %v918
  %v1159 = vpack.c.b16 %v921, %v920
  %v1160 = vpack.c.b16 %v923, %v922
  %v1161 = vpack.c.b16 %v925, %v924
  %v1162 = vpack.c.b16 %v927, %v926
  %v1163 = vpack.c.b16 %v929, %v928
  %v1164 = vpack.c.b16 %v931, %v930
  %v1165 = vpack.c.b16 %v933, %v932
  %v1166 = vpack.c.b16 %v935, %v934
  %v1167 = vpack.c.b16 %v937, %v936
  %v1168 = vpack.c.b16 %v939, %v938
  %v1169 = vpack.c.b16 %v941, %v940
  %v1170 = vpack.c.b16 %v943, %v942
  %v1171 = vpack.c.b16 %v945, %v944
  %v1172 = vpack.c.b16 %v947, %v946
  %v1173 = vpack.c.b16 %v949, %v948
  %v1174 = vpack.c.b16 %v951, %v950
  %v1175 = vpack.c.b16 %v953, %v952
  %v1176 = vpack.c.b16 %v955, %v954
  %v1177 = vpack.c.b16 %v957, %v956
  %v1178 = vpack.c.b16 %v959, %v958
  %v1179 = vpack.c.b16 %v961, %v960
  %v1180 = vpack.c.b16 %v963, %v962
  %v1181 = vpack.c.b16 %v965, %v964
  %v1182 = vpack.c.b16 %v967, %v966
  %v1183 = vpack.c.b16 %v969, %v968
  %v1184 = vpack.c.b16 %v971, %v970
  %v1185 = vpack.c.b16 %v973, %v972
  %v1186 = vpack.c.b16 %v975, %v974
  %v1187 = vpack.c.b16 %v977, %v976
  %v1188 = vpack.c.b16 %v979, %v978
  %v1189 = vpack.c.b16 %v981, %v980
  %v1190 = vpack.c.b16 %v983, %v982
  %v1191 = vpack.c.b16 %v985, %v984
  %v1192 = vpack.c.b16 %v987, %v986
  %v1193 = vpack.c.b16 %v989, %v988
  %v1194 = vpack.c.b16 %v991, %v990
  %v1195 = vpack.c.b16 %v993, %v992
  %v1196 = vpack.c.b16 %v995, %v994
  %v1197 = vpack.c.b16 %v997, %v996
  %v1198 = vpack.c.b16 %v999, %v998
  %v1199 = vpack.c.b16 %v1001, %v1000
  %v1200 = vpack.c.b16 %v1003, %v1002
  %v1201 = vpack.c.b16 %v1005, %v1004
  %v1202 = vpack.c.b16 %v1007, %v1006
  %v1203 = vpack.c.b16 %v1009, %v1008
  %v1204 = vpack.c.b16 %v1011, %v1010
  %v1205 = vpack.c.b16 %v1013, %v1012
  %v1206 = vpack.c.b16 %v1015, %v1014
  %v1207 = vpack.c.b16 %v1017, %v1016
  %v1208 = vpack.c.b16 %v1019, %v1018
  %v1209 = vpack.c.b16 %v1021, %v1020
  %v1210 = vpack.c.b16 %v1023, %v1022
  %v1211 = vpack.c.b16 %v1025, %v1024
  %v1212 = vpack.c.b16 %v1027, %v1026
  %v1213 = vpack.c.b16 %v1029, %v1028
  %v1214 = vpack.c.b16 %v1031, %v1030
  %v1215 = vpack.c.b16 %v1033, %v1032
  %v1216 = vpack.c.b16 %v1035, %v1034
  %v1217 = vpack.c.b16 %v1037, %v1036
  %v1218 = vpack.c.b16 %v1039, %v1038
  %v1219 = vpack.c.b16 %v1041, %v1040
  %v1220 = vpack.c.b16 %v1043, %v1042
  %v1221 = vpack.c.b16 %v1045, %v1044
  %v1222 = vpack.c.b16 %v1047, %v1046
  %v1223 = vpack.c.b16 %v1049, %v1048
  %v1224 = vpack.c.b16 %v1051, %v1050
  %v1225 = vpack.c.b16 %v1053, %v1052
  %v1226 = vpack.c.b16 %v1055, %v1054
  %v1227 = vpack.c.b16 %v1057, %v1056
  %v1228 = vpack.c.b16 %v1059, %v1058
  %v1229 = vpack.c.b16 %v1061, %v1060
  %v1230 = vpack.c.b16 %v1063, %v1062
  %v1231 = vpack.c.b16 %v1065, %v1064
  %v1232 = vpack.c.b16 %v1067, %v1066
  %v1233 = vpack.c.b16 %v1069, %v1068
  %v1234 = vpack.c.b16 %v1071, %v1070
  %v1235 = vpack.c.b16 %v1073, %v1072
  %v1236 = vpack.c.b16 %v1075, %v1074
  %v1237 = vpack.c.b16 %v1077, %v1076
  %v1238 = vpack.c.b16 %v1079, %v1078
  %v1239 = vpack.c.b16 %v1081, %v1080
  %v1240 = vpack.c.b16 %v1083, %v1082
  %v1241 = vpack.c.b16 %v1085, %v1084
  %v1242 = vpack.c.b16 %v1087, %v1086
  %v1243 = vpack.c.b16 %v1089, %v1088
  %v1244 = vpack.c.b16 %v1091, %v1090
  %v1245 = vpack.c.b16 %v1093, %v1092
  %v1246 = vpack.c.b16 %v1095, %v1094
  %v1247 = vpack.c.b16 %v1097, %v1096
  %v1248 = vpack.c.b16 %v1099, %v1098
  %v1249 = vpack.c.b16 %v1101, %v1100
  %v1250 = vpack.c.b16 %v1103, %v1102
  %v1251 = vpack.c.b16 %v1105, %v1104
  %v1252 = vpack.c.b16 %v1107, %v1106
  %v1253 = vpack.c.b16 %v1109, %v1108
  %v1254 = vpack.c.b16 %v1111, %v1110
  %v1255 = vpack.c.b16 %v1113, %v1112
  %v1256 = vpack.c.b16 %v1115, %v1114
  %v1257 = vpack.c.b16 %v1117, %v1116
  %v1258 = vpack.c.b16 %v1119, %v1118
  %v1259 = vpack.c.b16 %v1121, %v1120
  %v1260 = vpack.c.b16 %v1123, %v1122
  %v1261 = vpack.c.b16 %v1125, %v1124
  %v1262 = vpack.c.b16 %v1127, %v1126
  %v1263 = vpack.c.b16 %v1129, %v1128
  %v1264 = vpack.c.b16 %v1131, %v1130
  %v1265 = vpack.c.b16 %v1133, %v1132
  %v1266 = vpack.c.b16 %v1135, %v1134
  %v1267 = vpack.c.b16 %v1137, %v1136
  %v1268 = vpack.c.b16 %v1139, %v1138
  %v1269 = vpack.c.b16 %v1141, %v1140
  %1398 = vmatprep.subr.bf16.mxu0 0
  %1399 = vmatpush1.bf16.msra.mxu0 %v1142
  %1400 = vmatprep.subr.bf16.mxu0 0
  %1401 = vmatpush1.bf16.msra.mxu0 %v1143
  %1402 = vmatprep.subr.bf16.mxu0 0
  %1403 = vmatpush1.bf16.msra.mxu0 %v1144
  %1404 = vmatprep.subr.bf16.mxu0 0
  %1405 = vmatpush1.bf16.msra.mxu0 %v1145
  %1406 = vmatprep.subr.bf16.mxu0 0
  %1407 = vmatpush1.bf16.msra.mxu0 %v1146
  %1408 = vmatprep.subr.bf16.mxu0 0
  %1409 = vmatpush1.bf16.msra.mxu0 %v1147
  %1410 = vmatprep.subr.bf16.mxu0 0
  %1411 = vmatpush1.bf16.msra.mxu0 %v1148
  %1412 = vmatprep.subr.bf16.mxu0 0
  %1413 = vmatpush1.bf16.msra.mxu0 %v1149
  %1414 = vmatprep.subr.bf16.mxu0 0
  %1415 = vmatpush1.bf16.msra.mxu0 %v1150
  %1416 = vmatprep.subr.bf16.mxu0 0
  %1417 = vmatpush1.bf16.msra.mxu0 %v1151
  %1418 = vmatprep.subr.bf16.mxu0 0
  %1419 = vmatpush1.bf16.msra.mxu0 %v1152
  %1420 = vmatprep.subr.bf16.mxu0 0
  %1421 = vmatpush1.bf16.msra.mxu0 %v1153
  %1422 = vmatprep.subr.bf16.mxu0 0
  %1423 = vmatpush1.bf16.msra.mxu0 %v1154
  %1424 = vmatprep.subr.bf16.mxu0 0
  %1425 = vmatpush1.bf16.msra.mxu0 %v1155
  %1426 = vmatprep.subr.bf16.mxu0 0
  %1427 = vmatpush1.bf16.msra.mxu0 %v1156
  %1428 = vmatprep.subr.bf16.mxu0 0
  %1429 = vmatpush1.bf16.msra.mxu0 %v1157
  %1430 = vmatprep.mubr.bf16.mxu0 %v503
  %1431 = vmatmul.mubr.bf16.gmra.mrb[0].mxu0 %v502
  %v1432 = vpop.f32.mrb[0].mxu0
  %v1433 = vadd.f32 %v332, %v1432
  %v1434 = vpop.f32.mrb[0].mxu0
  %v1435 = vpop.f32.mrb[0].mxu0
  %v1436 = vadd.f32 %v332, %v1435
  %v1437 = vpop.f32.mrb[0].mxu0
  %1438 = vmatprep.mubr.bf16.mxu0 %v519
  %1439 = vmatmul.mubr.bf16.gmra.mrb[0].mxu0 %v518
  %v1440 = vpop.f32.mrb[0].mxu0
  %v1441 = vadd.f32 %v332, %v1440
  %v1442 = vpop.f32.mrb[0].mxu0
  %v1443 = vpop.f32.mrb[0].mxu0
  %v1444 = vadd.f32 %v332, %v1443
  %v1445 = vpop.f32.mrb[0].mxu0
  %1446 = vmatprep.mubr.bf16.mxu0 %v535
  %1447 = vmatmul.mubr.bf16.gmra.mrb[0].mxu0 %v534
  %v1448 = vpop.f32.mrb[0].mxu0
  %v1449 = vadd.f32 %v332, %v1448
  %v1450 = vpop.f32.mrb[0].mxu0
  %v1451 = vpop.f32.mrb[0].mxu0
  %v1452 = vadd.f32 %v332, %v1451
  %v1453 = vpop.f32.mrb[0].mxu0
  %1454 = vmatprep.mubr.bf16.mxu0 %v551
  %1455 = vmatmul.mubr.bf16.gmra.mrb[0].mxu0 %v550
  %v1456 = vpop.f32.mrb[0].mxu0
  %v1457 = vadd.f32 %v332, %v1456
  %v1458 = vpop.f32.mrb[0].mxu0
  %v1459 = vpop.f32.mrb[0].mxu0
  %v1460 = vpop.f32.mrb[0].mxu0
  %1461 = vdwg.mxu0
  %1462 = vmatprep.subr.bf16.mxu0 0
  %1463 = vmatpush1.bf16.msra.mxu0 %v1158
  %1464 = vmatprep.subr.bf16.mxu0 0
  %1465 = vmatpush1.bf16.msra.mxu0 %v1159
  %1466 = vmatprep.subr.bf16.mxu0 0
  %1467 = vmatpush1.bf16.msra.mxu0 %v1160
  %1468 = vmatprep.subr.bf16.mxu0 0
  %1469 = vmatpush1.bf16.msra.mxu0 %v1161
  %1470 = vmatprep.subr.bf16.mxu0 0
  %1471 = vmatpush1.bf16.msra.mxu0 %v1162
  %1472 = vmatprep.subr.bf16.mxu0 0
  %1473 = vmatpush1.bf16.msra.mxu0 %v1163
  %1474 = vmatprep.subr.bf16.mxu0 0
  %1475 = vmatpush1.bf16.msra.mxu0 %v1164
  %1476 = vmatprep.subr.bf16.mxu0 0
  %1477 = vmatpush1.bf16.msra.mxu0 %v1165
  %1478 = vmatprep.subr.bf16.mxu0 0
  %1479 = vmatpush1.bf16.msra.mxu0 %v1166
  %1480 = vmatprep.subr.bf16.mxu0 0
  %1481 = vmatpush1.bf16.msra.mxu0 %v1167
  %1482 = vmatprep.subr.bf16.mxu0 0
  %1483 = vmatpush1.bf16.msra.mxu0 %v1168
  %1484 = vmatprep.subr.bf16.mxu0 0
  %1485 = vmatpush1.bf16.msra.mxu0 %v1169
  %1486 = vmatprep.subr.bf16.mxu0 0
  %1487 = vmatpush1.bf16.msra.mxu0 %v1170
  %1488 = vmatprep.subr.bf16.mxu0 0
  %1489 = vmatpush1.bf16.msra.mxu0 %v1171
  %1490 = vmatprep.subr.bf16.mxu0 0
  %1491 = vmatpush1.bf16.msra.mxu0 %v1172
  %1492 = vmatprep.subr.bf16.mxu0 0
  %1493 = vmatpush1.bf16.msra.mxu0 %v1173
  %1494 = vmatprep.mubr.bf16.mxu0 %v505
  %1495 = vmatmul.mubr.bf16.gmra.mrb[0].mxu0 %v504
  %v1496 = vpop.f32.mrb[0].mxu0
  %v1497 = vadd.f32 %v1433, %v1496
  %v1498 = vpop.f32.mrb[0].mxu0
  %v1499 = vpop.f32.mrb[0].mxu0
  %v1500 = vadd.f32 %v1436, %v1499
  %v1501 = vpop.f32.mrb[0].mxu0
  %1502 = vmatprep.mubr.bf16.mxu0 %v521
  %1503 = vmatmul.mubr.bf16.gmra.mrb[0].mxu0 %v520
  %v1504 = vpop.f32.mrb[0].mxu0
  %v1505 = vadd.f32 %v1441, %v1504
  %v1506 = vpop.f32.mrb[0].mxu0
  %v1507 = vpop.f32.mrb[0].mxu0
  %v1508 = vadd.f32 %v1444, %v1507
  %v1509 = vpop.f32.mrb[0].mxu0
  %1510 = vmatprep.mubr.bf16.mxu0 %v537
  %1511 = vmatmul.mubr.bf16.gmra.mrb[0].mxu0 %v536
  %v1512 = vpop.f32.mrb[0].mxu0
  %v1513 = vadd.f32 %v1449, %v1512
  %v1514 = vpop.f32.mrb[0].mxu0
  %v1515 = vpop.f32.mrb[0].mxu0
  %v1516 = vadd.f32 %v1452, %v1515
  %v1517 = vpop.f32.mrb[0].mxu0
  %1518 = vmatprep.mubr.bf16.mxu0 %v553
  %1519 = vmatmul.mubr.bf16.gmra.mrb[0].mxu0 %v552
  %v1520 = vpop.f32.mrb[0].mxu0
  %v1521 = vadd.f32 %v1457, %v1520
  %v1522 = vpop.f32.mrb[0].mxu0
  %v1523 = vpop.f32.mrb[0].mxu0
  %v1524 = vpop.f32.mrb[0].mxu0
  %1525 = vdwg.mxu0
  %1526 = vmatprep.subr.bf16.mxu0 0
  %1527 = vmatpush1.bf16.msra.mxu0 %v1174
  %1528 = vmatprep.subr.bf16.mxu0 0
  %1529 = vmatpush1.bf16.msra.mxu0 %v1175
  %1530 = vmatprep.subr.bf16.mxu0 0
  %1531 = vmatpush1.bf16.msra.mxu0 %v1176
  %1532 = vmatprep.subr.bf16.mxu0 0
  %1533 = vmatpush1.bf16.msra.mxu0 %v1177
  %1534 = vmatprep.subr.bf16.mxu0 0
  %1535 = vmatpush1.bf16.msra.mxu0 %v1178
  %1536 = vmatprep.subr.bf16.mxu0 0
  %1537 = vmatpush1.bf16.msra.mxu0 %v1179
  %1538 = vmatprep.subr.bf16.mxu0 0
  %1539 = vmatpush1.bf16.msra.mxu0 %v1180
  %1540 = vmatprep.subr.bf16.mxu0 0
  %1541 = vmatpush1.bf16.msra.mxu0 %v1181
  %1542 = vmatprep.subr.bf16.mxu0 0
  %1543 = vmatpush1.bf16.msra.mxu0 %v1182
  %1544 = vmatprep.subr.bf16.mxu0 0
  %1545 = vmatpush1.bf16.msra.mxu0 %v1183
  %1546 = vmatprep.subr.bf16.mxu0 0
  %1547 = vmatpush1.bf16.msra.mxu0 %v1184
  %1548 = vmatprep.subr.bf16.mxu0 0
  %1549 = vmatpush1.bf16.msra.mxu0 %v1185
  %1550 = vmatprep.subr.bf16.mxu0 0
  %1551 = vmatpush1.bf16.msra.mxu0 %v1186
  %1552 = vmatprep.subr.bf16.mxu0 0
  %1553 = vmatpush1.bf16.msra.mxu0 %v1187
  %1554 = vmatprep.subr.bf16.mxu0 0
  %1555 = vmatpush1.bf16.msra.mxu0 %v1188
  %1556 = vmatprep.subr.bf16.mxu0 0
  %1557 = vmatpush1.bf16.msra.mxu0 %v1189
  %1558 = vmatprep.mubr.bf16.mxu0 %v507
  %1559 = vmatmul.mubr.bf16.gmra.mrb[0].mxu0 %v506
  %v1560 = vpop.f32.mrb[0].mxu0
  %v1561 = vadd.f32 %v1497, %v1560
  %v1562 = vpop.f32.mrb[0].mxu0
  %v1563 = vpop.f32.mrb[0].mxu0
  %v1564 = vadd.f32 %v1500, %v1563
  %v1565 = vpop.f32.mrb[0].mxu0
  %1566 = vmatprep.mubr.bf16.mxu0 %v523
  %1567 = vmatmul.mubr.bf16.gmra.mrb[0].mxu0 %v522
  %v1568 = vpop.f32.mrb[0].mxu0
  %v1569 = vadd.f32 %v1505, %v1568
  %v1570 = vpop.f32.mrb[0].mxu0
  %v1571 = vpop.f32.mrb[0].mxu0
  %v1572 = vadd.f32 %v1508, %v1571
  %v1573 = vpop.f32.mrb[0].mxu0
  %1574 = vmatprep.mubr.bf16.mxu0 %v539
  %1575 = vmatmul.mubr.bf16.gmra.mrb[0].mxu0 %v538
  %v1576 = vpop.f32.mrb[0].mxu0
  %v1577 = vadd.f32 %v1513, %v1576
  %v1578 = vpop.f32.mrb[0].mxu0
  %v1579 = vpop.f32.mrb[0].mxu0
  %v1580 = vadd.f32 %v1516, %v1579
  %v1581 = vpop.f32.mrb[0].mxu0
  %1582 = vmatprep.mubr.bf16.mxu0 %v555
  %1583 = vmatmul.mubr.bf16.gmra.mrb[0].mxu0 %v554
  %v1584 = vpop.f32.mrb[0].mxu0
  %v1585 = vadd.f32 %v1521, %v1584
  %v1586 = vpop.f32.mrb[0].mxu0
  %v1587 = vpop.f32.mrb[0].mxu0
  %v1588 = vpop.f32.mrb[0].mxu0
  %1589 = vdwg.mxu0
  %1590 = vmatprep.subr.bf16.mxu0 0
  %1591 = vmatpush1.bf16.msra.mxu0 %v1190
  %1592 = vmatprep.subr.bf16.mxu0 0
  %1593 = vmatpush1.bf16.msra.mxu0 %v1191
  %1594 = vmatprep.subr.bf16.mxu0 0
  %1595 = vmatpush1.bf16.msra.mxu0 %v1192
  %1596 = vmatprep.subr.bf16.mxu0 0
  %1597 = vmatpush1.bf16.msra.mxu0 %v1193
  %1598 = vmatprep.subr.bf16.mxu0 0
  %1599 = vmatpush1.bf16.msra.mxu0 %v1194
  %1600 = vmatprep.subr.bf16.mxu0 0
  %1601 = vmatpush1.bf16.msra.mxu0 %v1195
  %1602 = vmatprep.subr.bf16.mxu0 0
  %1603 = vmatpush1.bf16.msra.mxu0 %v1196
  %1604 = vmatprep.subr.bf16.mxu0 0
  %1605 = vmatpush1.bf16.msra.mxu0 %v1197
  %1606 = vmatprep.subr.bf16.mxu0 0
  %1607 = vmatpush1.bf16.msra.mxu0 %v1198
  %1608 = vmatprep.subr.bf16.mxu0 0
  %1609 = vmatpush1.bf16.msra.mxu0 %v1199
  %1610 = vmatprep.subr.bf16.mxu0 0
  %1611 = vmatpush1.bf16.msra.mxu0 %v1200
  %1612 = vmatprep.subr.bf16.mxu0 0
  %1613 = vmatpush1.bf16.msra.mxu0 %v1201
  %1614 = vmatprep.subr.bf16.mxu0 0
  %1615 = vmatpush1.bf16.msra.mxu0 %v1202
  %1616 = vmatprep.subr.bf16.mxu0 0
  %1617 = vmatpush1.bf16.msra.mxu0 %v1203
  %1618 = vmatprep.subr.bf16.mxu0 0
  %1619 = vmatpush1.bf16.msra.mxu0 %v1204
  %1620 = vmatprep.subr.bf16.mxu0 0
  %1621 = vmatpush1.bf16.msra.mxu0 %v1205
  %1622 = vmatprep.mubr.bf16.mxu0 %v509
  %1623 = vmatmul.mubr.bf16.gmra.mrb[0].mxu0 %v508
  %v1624 = vpop.f32.mrb[0].mxu0
  %v1625 = vadd.f32 %v1561, %v1624
  %v1626 = vpop.f32.mrb[0].mxu0
  %v1627 = vpop.f32.mrb[0].mxu0
  %v1628 = vadd.f32 %v1564, %v1627
  %v1629 = vpop.f32.mrb[0].mxu0
  %1630 = vmatprep.mubr.bf16.mxu0 %v525
  %1631 = vmatmul.mubr.bf16.gmra.mrb[0].mxu0 %v524
  %v1632 = vpop.f32.mrb[0].mxu0
  %v1633 = vadd.f32 %v1569, %v1632
  %v1634 = vpop.f32.mrb[0].mxu0
  %v1635 = vpop.f32.mrb[0].mxu0
  %v1636 = vadd.f32 %v1572, %v1635
  %v1637 = vpop.f32.mrb[0].mxu0
  %1638 = vmatprep.mubr.bf16.mxu0 %v541
  %1639 = vmatmul.mubr.bf16.gmra.mrb[0].mxu0 %v540
  %v1640 = vpop.f32.mrb[0].mxu0
  %v1641 = vadd.f32 %v1577, %v1640
  %v1642 = vpop.f32.mrb[0].mxu0
  %v1643 = vpop.f32.mrb[0].mxu0
  %v1644 = vadd.f32 %v1580, %v1643
  %v1645 = vpop.f32.mrb[0].mxu0
  %1646 = vmatprep.mubr.bf16.mxu0 %v557
  %1647 = vmatmul.mubr.bf16.gmra.mrb[0].mxu0 %v556
  %v1648 = vpop.f32.mrb[0].mxu0
  %v1649 = vadd.f32 %v1585, %v1648
  %v1650 = vpop.f32.mrb[0].mxu0
  %v1651 = vpop.f32.mrb[0].mxu0
  %v1652 = vpop.f32.mrb[0].mxu0
  %1653 = vdwg.mxu0
  %1654 = vmatprep.subr.bf16.mxu0 0
  %1655 = vmatpush1.bf16.msra.mxu0 %v1206
  %1656 = vmatprep.subr.bf16.mxu0 0
  %1657 = vmatpush1.bf16.msra.mxu0 %v1207
  %1658 = vmatprep.subr.bf16.mxu0 0
  %1659 = vmatpush1.bf16.msra.mxu0 %v1208
  %1660 = vmatprep.subr.bf16.mxu0 0
  %1661 = vmatpush1.bf16.msra.mxu0 %v1209
  %1662 = vmatprep.subr.bf16.mxu0 0
  %1663 = vmatpush1.bf16.msra.mxu0 %v1210
  %1664 = vmatprep.subr.bf16.mxu0 0
  %1665 = vmatpush1.bf16.msra.mxu0 %v1211
  %1666 = vmatprep.subr.bf16.mxu0 0
  %1667 = vmatpush1.bf16.msra.mxu0 %v1212
  %1668 = vmatprep.subr.bf16.mxu0 0
  %1669 = vmatpush1.bf16.msra.mxu0 %v1213
  %1670 = vmatprep.subr.bf16.mxu0 0
  %1671 = vmatpush1.bf16.msra.mxu0 %v1214
  %1672 = vmatprep.subr.bf16.mxu0 0
  %1673 = vmatpush1.bf16.msra.mxu0 %v1215
  %1674 = vmatprep.subr.bf16.mxu0 0
  %1675 = vmatpush1.bf16.msra.mxu0 %v1216
  %1676 = vmatprep.subr.bf16.mxu0 0
  %1677 = vmatpush1.bf16.msra.mxu0 %v1217
  %1678 = vmatprep.subr.bf16.mxu0 0
  %1679 = vmatpush1.bf16.msra.mxu0 %v1218
  %1680 = vmatprep.subr.bf16.mxu0 0
  %1681 = vmatpush1.bf16.msra.mxu0 %v1219
  %1682 = vmatprep.subr.bf16.mxu0 0
  %1683 = vmatpush1.bf16.msra.mxu0 %v1220
  %1684 = vmatprep.subr.bf16.mxu0 0
  %1685 = vmatpush1.bf16.msra.mxu0 %v1221
  %1686 = vmatprep.mubr.bf16.mxu0 %v511
  %1687 = vmatmul.mubr.bf16.gmra.mrb[0].mxu0 %v510
  %v1688 = vpop.f32.mrb[0].mxu0
  %v1689 = vadd.f32 %v1625, %v1688
  %v1690 = vpop.f32.mrb[0].mxu0
  %v1691 = vpop.f32.mrb[0].mxu0
  %v1692 = vadd.f32 %v1628, %v1691
  %v1693 = vpop.f32.mrb[0].mxu0
  %1694 = vmatprep.mubr.bf16.mxu0 %v527
  %1695 = vmatmul.mubr.bf16.gmra.mrb[0].mxu0 %v526
  %v1696 = vpop.f32.mrb[0].mxu0
  %v1697 = vadd.f32 %v1633, %v1696
  %v1698 = vpop.f32.mrb[0].mxu0
  %v1699 = vpop.f32.mrb[0].mxu0
  %v1700 = vadd.f32 %v1636, %v1699
  %v1701 = vpop.f32.mrb[0].mxu0
  %1702 = vmatprep.mubr.bf16.mxu0 %v543
  %1703 = vmatmul.mubr.bf16.gmra.mrb[0].mxu0 %v542
  %v1704 = vpop.f32.mrb[0].mxu0
  %v1705 = vadd.f32 %v1641, %v1704
  %v1706 = vpop.f32.mrb[0].mxu0
  %v1707 = vpop.f32.mrb[0].mxu0
  %v1708 = vadd.f32 %v1644, %v1707
  %v1709 = vpop.f32.mrb[0].mxu0
  %1710 = vmatprep.mubr.bf16.mxu0 %v559
  %1711 = vmatmul.mubr.bf16.gmra.mrb[0].mxu0 %v558
  %v1712 = vpop.f32.mrb[0].mxu0
  %v1713 = vadd.f32 %v1649, %v1712
  %v1714 = vpop.f32.mrb[0].mxu0
  %v1715 = vpop.f32.mrb[0].mxu0
  %v1716 = vpop.f32.mrb[0].mxu0
  %1717 = vdwg.mxu0
  %1718 = vmatprep.subr.bf16.mxu0 0
  %1719 = vmatpush1.bf16.msra.mxu0 %v1222
  %1720 = vmatprep.subr.bf16.mxu0 0
  %1721 = vmatpush1.bf16.msra.mxu0 %v1223
  %1722 = vmatprep.subr.bf16.mxu0 0
  %1723 = vmatpush1.bf16.msra.mxu0 %v1224
  %1724 = vmatprep.subr.bf16.mxu0 0
  %1725 = vmatpush1.bf16.msra.mxu0 %v1225
  %1726 = vmatprep.subr.bf16.mxu0 0
  %1727 = vmatpush1.bf16.msra.mxu0 %v1226
  %1728 = vmatprep.subr.bf16.mxu0 0
  %1729 = vmatpush1.bf16.msra.mxu0 %v1227
  %1730 = vmatprep.subr.bf16.mxu0 0
  %1731 = vmatpush1.bf16.msra.mxu0 %v1228
  %1732 = vmatprep.subr.bf16.mxu0 0
  %1733 = vmatpush1.bf16.msra.mxu0 %v1229
  %1734 = vmatprep.subr.bf16.mxu0 0
  %1735 = vmatpush1.bf16.msra.mxu0 %v1230
  %1736 = vmatprep.subr.bf16.mxu0 0
  %1737 = vmatpush1.bf16.msra.mxu0 %v1231
  %1738 = vmatprep.subr.bf16.mxu0 0
  %1739 = vmatpush1.bf16.msra.mxu0 %v1232
  %1740 = vmatprep.subr.bf16.mxu0 0
  %1741 = vmatpush1.bf16.msra.mxu0 %v1233
  %1742 = vmatprep.subr.bf16.mxu0 0
  %1743 = vmatpush1.bf16.msra.mxu0 %v1234
  %1744 = vmatprep.subr.bf16.mxu0 0
  %1745 = vmatpush1.bf16.msra.mxu0 %v1235
  %1746 = vmatprep.subr.bf16.mxu0 0
  %1747 = vmatpush1.bf16.msra.mxu0 %v1236
  %1748 = vmatprep.subr.bf16.mxu0 0
  %1749 = vmatpush1.bf16.msra.mxu0 %v1237
  %1750 = vmatprep.mubr.bf16.mxu0 %v513
  %1751 = vmatmul.mubr.bf16.gmra.mrb[0].mxu0 %v512
  %v1752 = vpop.f32.mrb[0].mxu0
  %v1753 = vadd.f32 %v1689, %v1752
  %v1754 = vpop.f32.mrb[0].mxu0
  %v1755 = vpop.f32.mrb[0].mxu0
  %v1756 = vadd.f32 %v1692, %v1755
  %v1757 = vpop.f32.mrb[0].mxu0
  %1758 = vmatprep.mubr.bf16.mxu0 %v529
  %1759 = vmatmul.mubr.bf16.gmra.mrb[0].mxu0 %v528
  %v1760 = vpop.f32.mrb[0].mxu0
  %v1761 = vadd.f32 %v1697, %v1760
  %v1762 = vpop.f32.mrb[0].mxu0
  %v1763 = vpop.f32.mrb[0].mxu0
  %v1764 = vadd.f32 %v1700, %v1763
  %v1765 = vpop.f32.mrb[0].mxu0
  %1766 = vmatprep.mubr.bf16.mxu0 %v545
  %1767 = vmatmul.mubr.bf16.gmra.mrb[0].mxu0 %v544
  %v1768 = vpop.f32.mrb[0].mxu0
  %v1769 = vadd.f32 %v1705, %v1768
  %v1770 = vpop.f32.mrb[0].mxu0
  %v1771 = vpop.f32.mrb[0].mxu0
  %v1772 = vadd.f32 %v1708, %v1771
  %v1773 = vpop.f32.mrb[0].mxu0
  %1774 = vmatprep.mubr.bf16.mxu0 %v561
  %1775 = vmatmul.mubr.bf16.gmra.mrb[0].mxu0 %v560
  %v1776 = vpop.f32.mrb[0].mxu0
  %v1777 = vadd.f32 %v1713, %v1776
  %v1778 = vpop.f32.mrb[0].mxu0
  %v1779 = vpop.f32.mrb[0].mxu0
  %v1780 = vpop.f32.mrb[0].mxu0
  %1781 = vdwg.mxu0
  %1782 = vmatprep.subr.bf16.mxu0 0
  %1783 = vmatpush1.bf16.msra.mxu0 %v1238
  %1784 = vmatprep.subr.bf16.mxu0 0
  %1785 = vmatpush1.bf16.msra.mxu0 %v1239
  %1786 = vmatprep.subr.bf16.mxu0 0
  %1787 = vmatpush1.bf16.msra.mxu0 %v1240
  %1788 = vmatprep.subr.bf16.mxu0 0
  %1789 = vmatpush1.bf16.msra.mxu0 %v1241
  %1790 = vmatprep.subr.bf16.mxu0 0
  %1791 = vmatpush1.bf16.msra.mxu0 %v1242
  %1792 = vmatprep.subr.bf16.mxu0 0
  %1793 = vmatpush1.bf16.msra.mxu0 %v1243
  %1794 = vmatprep.subr.bf16.mxu0 0
  %1795 = vmatpush1.bf16.msra.mxu0 %v1244
  %1796 = vmatprep.subr.bf16.mxu0 0
  %1797 = vmatpush1.bf16.msra.mxu0 %v1245
  %1798 = vmatprep.subr.bf16.mxu0 0
  %1799 = vmatpush1.bf16.msra.mxu0 %v1246
  %1800 = vmatprep.subr.bf16.mxu0 0
  %1801 = vmatpush1.bf16.msra.mxu0 %v1247
  %1802 = vmatprep.subr.bf16.mxu0 0
  %1803 = vmatpush1.bf16.msra.mxu0 %v1248
  %1804 = vmatprep.subr.bf16.mxu0 0
  %1805 = vmatpush1.bf16.msra.mxu0 %v1249
  %1806 = vmatprep.subr.bf16.mxu0 0
  %1807 = vmatpush1.bf16.msra.mxu0 %v1250
  %1808 = vmatprep.subr.bf16.mxu0 0
  %1809 = vmatpush1.bf16.msra.mxu0 %v1251
  %1810 = vmatprep.subr.bf16.mxu0 0
  %1811 = vmatpush1.bf16.msra.mxu0 %v1252
  %1812 = vmatprep.subr.bf16.mxu0 0
  %1813 = vmatpush1.bf16.msra.mxu0 %v1253
  %1814 = vmatprep.mubr.bf16.mxu0 %v515
  %1815 = vmatmul.mubr.bf16.gmra.mrb[0].mxu0 %v514
  %v1816 = vpop.f32.mrb[0].mxu0
  %v1817 = vadd.f32 %v1753, %v1816
  %v1818 = vpop.f32.mrb[0].mxu0
  %v1819 = vpop.f32.mrb[0].mxu0
  %v1820 = vadd.f32 %v1756, %v1819
  %v1821 = vpop.f32.mrb[0].mxu0
  %1822 = vmatprep.mubr.bf16.mxu0 %v531
  %1823 = vmatmul.mubr.bf16.gmra.mrb[0].mxu0 %v530
  %v1824 = vpop.f32.mrb[0].mxu0
  %v1825 = vadd.f32 %v1761, %v1824
  %v1826 = vpop.f32.mrb[0].mxu0
  %v1827 = vpop.f32.mrb[0].mxu0
  %v1828 = vadd.f32 %v1764, %v1827
  %v1829 = vpop.f32.mrb[0].mxu0
  %1830 = vmatprep.mubr.bf16.mxu0 %v547
  %1831 = vmatmul.mubr.bf16.gmra.mrb[0].mxu0 %v546
  %v1832 = vpop.f32.mrb[0].mxu0
  %v1833 = vadd.f32 %v1769, %v1832
  %v1834 = vpop.f32.mrb[0].mxu0
  %v1835 = vpop.f32.mrb[0].mxu0
  %v1836 = vadd.f32 %v1772, %v1835
  %v1837 = vpop.f32.mrb[0].mxu0
  %1838 = vmatprep.mubr.bf16.mxu0 %v563
  %1839 = vmatmul.mubr.bf16.gmra.mrb[0].mxu0 %v562
  %v1840 = vpop.f32.mrb[0].mxu0
  %v1841 = vadd.f32 %v1777, %v1840
  %v1842 = vpop.f32.mrb[0].mxu0
  %v1843 = vpop.f32.mrb[0].mxu0
  %v1844 = vpop.f32.mrb[0].mxu0
  %1845 = vdwg.mxu0
  %1846 = vmatprep.subr.bf16.mxu0 0
  %1847 = vmatpush1.bf16.msra.mxu0 %v1254
  %1848 = vmatprep.subr.bf16.mxu0 0
  %1849 = vmatpush1.bf16.msra.mxu0 %v1255
  %1850 = vmatprep.subr.bf16.mxu0 0
  %1851 = vmatpush1.bf16.msra.mxu0 %v1256
  %1852 = vmatprep.subr.bf16.mxu0 0
  %1853 = vmatpush1.bf16.msra.mxu0 %v1257
  %1854 = vmatprep.subr.bf16.mxu0 0
  %1855 = vmatpush1.bf16.msra.mxu0 %v1258
  %1856 = vmatprep.subr.bf16.mxu0 0
  %1857 = vmatpush1.bf16.msra.mxu0 %v1259
  %1858 = vmatprep.subr.bf16.mxu0 0
  %1859 = vmatpush1.bf16.msra.mxu0 %v1260
  %1860 = vmatprep.subr.bf16.mxu0 0
  %1861 = vmatpush1.bf16.msra.mxu0 %v1261
  %1862 = vmatprep.subr.bf16.mxu0 0
  %1863 = vmatpush1.bf16.msra.mxu0 %v1262
  %1864 = vmatprep.subr.bf16.mxu0 0
  %1865 = vmatpush1.bf16.msra.mxu0 %v1263
  %1866 = vmatprep.subr.bf16.mxu0 0
  %1867 = vmatpush1.bf16.msra.mxu0 %v1264
  %1868 = vmatprep.subr.bf16.mxu0 0
  %1869 = vmatpush1.bf16.msra.mxu0 %v1265
  %1870 = vmatprep.subr.bf16.mxu0 0
  %1871 = vmatpush1.bf16.msra.mxu0 %v1266
  %1872 = vmatprep.subr.bf16.mxu0 0
  %1873 = vmatpush1.bf16.msra.mxu0 %v1267
  %1874 = vmatprep.subr.bf16.mxu0 0
  %1875 = vmatpush1.bf16.msra.mxu0 %v1268
  %1876 = vmatprep.subr.bf16.mxu0 0
  %1877 = vmatpush1.bf16.msra.mxu0 %v1269
  %1878 = vmatprep.mubr.bf16.mxu0 %v517
  %1879 = vmatmul.mubr.bf16.gmra.mrb[0].mxu0 %v516
  %v1880 = vpop.f32.mrb[0].mxu0
  %v1881 = vadd.f32 %v1817, %v1880
  %v1882 = vpop.f32.mrb[0].mxu0
  %v1883 = vpop.f32.mrb[0].mxu0
  %v1884 = vadd.f32 %v1820, %v1883
  %v1885 = vpop.f32.mrb[0].mxu0
  %1886 = vmatprep.mubr.bf16.mxu0 %v533
  %1887 = vmatmul.mubr.bf16.gmra.mrb[0].mxu0 %v532
  %v1888 = vpop.f32.mrb[0].mxu0
  %v1889 = vadd.f32 %v1825, %v1888
  %v1890 = vpop.f32.mrb[0].mxu0
  %v1891 = vpop.f32.mrb[0].mxu0
  %v1892 = vadd.f32 %v1828, %v1891
  %v1893 = vpop.f32.mrb[0].mxu0
  %1894 = vmatprep.mubr.bf16.mxu0 %v549
  %1895 = vmatmul.mubr.bf16.gmra.mrb[0].mxu0 %v548
  %v1896 = vpop.f32.mrb[0].mxu0
  %v1897 = vadd.f32 %v1833, %v1896
  %v1898 = vpop.f32.mrb[0].mxu0
  %v1899 = vpop.f32.mrb[0].mxu0
  %v1900 = vadd.f32 %v1836, %v1899
  %v1901 = vpop.f32.mrb[0].mxu0
  %1902 = vmatprep.mubr.bf16.mxu0 %v565
  %1903 = vmatmul.mubr.bf16.gmra.mrb[0].mxu0 %v564
  %v1904 = vpop.f32.mrb[0].mxu0
  %v1905 = vadd.f32 %v1841, %v1904
  %v1906 = vpop.f32.mrb[0].mxu0
  %v1907 = vpop.f32.mrb[0].mxu0
  %v1908 = vpop.f32.mrb[0].mxu0
  %1909 = vdwg.mxu0
  %v1910 = vpack.c.bf16 %v1884, %v1881
  %v1911 = vpack.c.bf16 %v1892, %v1889
  %v1912 = vpack.c.bf16 %v1900, %v1897
  %v1913 = vpack.c.bf16 %v1905, %v1905
  %v1918 = vunpack.c.l.b16 %v1910
  %v1919 = vunpack.c.h.b16 %v1910
  %v1920 = vunpack.c.l.b16 %v1911
  %v1921 = vunpack.c.h.b16 %v1911
  %v1922 = vunpack.c.l.b16 %v1912
  %v1923 = vunpack.c.h.b16 %v1912
  %v1924 = vunpack.c.l.b16 %v1913
  %v1925 = vpack.c.b16 %v1918, %v1918
  %v1926 = vpack.c.b16 %v1919, %v1919
  %v1927 = vpack.c.b16 %v1920, %v1920
  %v1928 = vpack.c.b16 %v1921, %v1921
  %v1929 = vpack.c.b16 %v1922, %v1922
  %v1930 = vpack.c.b16 %v1923, %v1923
  %v1931 = vpack.c.b16 %v1924, %v1924
  %1939 = vst [vmem:[%s3] sm:$0xf] %v1925
  %1940 = vst [vmem:[%s3 + $0x4] sm:$0xf] %v1926
  %1941 = vst [vmem:[%s3 + $0x8] sm:$0xf] %v1927
  %1942 = vst [vmem:[%s3 + $0xc] sm:$0xf] %v1928
  %1943 = vst [vmem:[%s3 + $0x10] sm:$0xf] %v1929
  %1944 = vst [vmem:[%s3 + $0x14] sm:$0xf] %v1930
  %1945 = vst [vmem:[%s3 + $0x18] sm:$0xf] %v1931
  // Predicated region
  $region14: #{_forward_init.4} parent=0 // pred_check
    _
  $region15: #{_forward_init.4} parent=0 // pred_check_branch
    %1947 = sbr.rel (0) target = $region17
  $region16: #{_forward_init.4} parent=0 // pred_region
    _
  $region17: #{_forward_init.4} parent=0 // pred_fallthru
    _
  // Predicated region
  $region18: #{_forward_init.4} parent=0 // pred_check
    _
  $region19: #{_forward_init.4} parent=0 // pred_check_branch
    %1949 = sbr.rel (0) target = $region21
  $region20: #{_forward_init.4} parent=0 // pred_region
    _
  $region21: #{_forward_init.4} parent=0 // pred_fallthru
    _

// kernel: _forward_init.5
$region0: #{_forward_init.5}
  #allocation0 [shape = 'u32[]', space=smem, size = 0x4, offset = 0x4, fixed_abs, tag = 'smem constant byte address 0x4 - core index']
  #allocation1 [shape = 'u32[144,128]{1,0:T(1,128)}', space=vmem, size = 0x12000, scoped, tag = 'internal scratch']
  %s0 = inlined_call_operand.vmem [shape: bf16[32,256], index: 0, kind: input, shape index: {}]
  %s1 = inlined_call_operand.vmem [shape: bf16[256,128], index: 1, kind: input, shape index: {}]
  %s2 = inlined_call_operand.vmem [shape: f32[1,128], index: 2, kind: input, shape index: {}]
  %s3 = inlined_call_operand.vmem [shape: bf16[512,512], index: 3, kind: input, shape index: {}]
  %s4 = inlined_call_operand.vmem [shape: f32[8,512], index: 4, kind: output, shape index: {0}]
  %s5 = inlined_call_operand.vmem [shape: f32[8,512], index: 5, kind: output, shape index: {1}]
  %6 = xla_tuple %s4, %s5
  %s7 = sld [smem:[#allocation0]]
  $region34: #{_forward_init.5} parent=0
    _
  %s9 = ssub.s32 1, %s7
  %s10 = scalar_select 0, %s9, %s7
  // Predicated region
  $region2: #{_forward_init.5} parent=0 // pred_check
    _
  $region3: #{_forward_init.5} parent=0 // pred_check_branch
    %12 = sbr.rel (0) target = $region5
  $region4: #{_forward_init.5} parent=0 // pred_region
    _
  $region5: #{_forward_init.5} parent=0 // pred_fallthru
    _
  // Predicated region
  $region6: #{_forward_init.5} parent=0 // pred_check
    _
  $region7: #{_forward_init.5} parent=0 // pred_check_branch
    %14 = sbr.rel (0) target = $region9
  $region8: #{_forward_init.5} parent=0 // pred_region
    _
  $region9: #{_forward_init.5} parent=0 // pred_fallthru
    _
  // Predicated region
  $region10: #{_forward_init.5} parent=0 // pred_check
    _
  $region11: #{_forward_init.5} parent=0 // pred_check_branch
    %16 = sbr.rel (0) target = $region13
  $region12: #{_forward_init.5} parent=0 // pred_region
    _
  $region13: #{_forward_init.5} parent=0 // pred_fallthru
    _
  // Predicated region
  $region14: #{_forward_init.5} parent=0 // pred_check
    _
  $region15: #{_forward_init.5} parent=0 // pred_check_branch
    %18 = sbr.rel (0) target = $region17
  $region16: #{_forward_init.5} parent=0 // pred_region
    _
  $region17: #{_forward_init.5} parent=0 // pred_fallthru
    _
  %v20 = vld [vmem:[%s0] sm:$0xff]
  %v21 = vld [vmem:[%s0 + $0x8] sm:$0xff]
  %v22 = vld [vmem:[%s0 + $0x10] sm:$0xff]
  %v23 = vld [vmem:[%s0 + $0x18] sm:$0xff]
  %v24 = vld [vmem:[%s1] sm:$0xf]
  %v25 = vld [vmem:[%s1 + $0x4] sm:$0xf]
  %v26 = vld [vmem:[%s1 + $0x8] sm:$0xf]
  %v27 = vld [vmem:[%s1 + $0xc] sm:$0xf]
  %v28 = vld [vmem:[%s1 + $0x10] sm:$0xf]
  %v29 = vld [vmem:[%s1 + $0x14] sm:$0xf]
  %v30 = vld [vmem:[%s1 + $0x18] sm:$0xf]
  %v31 = vld [vmem:[%s1 + $0x1c] sm:$0xf]
  %v32 = vld [vmem:[%s1 + $0x20] sm:$0xf]
  %v33 = vld [vmem:[%s1 + $0x24] sm:$0xf]
  %v34 = vld [vmem:[%s1 + $0x28] sm:$0xf]
  %v35 = vld [vmem:[%s1 + $0x2c] sm:$0xf]
  %v36 = vld [vmem:[%s1 + $0x30] sm:$0xf]
  %v37 = vld [vmem:[%s1 + $0x34] sm:$0xf]
  %v38 = vld [vmem:[%s1 + $0x38] sm:$0xf]
  %v39 = vld [vmem:[%s1 + $0x3c] sm:$0xf]
  %v40 = vld [vmem:[%s1 + $0x40] sm:$0xf]
  %v41 = vld [vmem:[%s1 + $0x44] sm:$0xf]
  %v42 = vld [vmem:[%s1 + $0x48] sm:$0xf]
  %v43 = vld [vmem:[%s1 + $0x4c] sm:$0xf]
  %v44 = vld [vmem:[%s1 + $0x50] sm:$0xf]
  %v45 = vld [vmem:[%s1 + $0x54] sm:$0xf]
  %v46 = vld [vmem:[%s1 + $0x58] sm:$0xf]
  %v47 = vld [vmem:[%s1 + $0x5c] sm:$0xf]
  %v48 = vld [vmem:[%s1 + $0x60] sm:$0xf]
  %v49 = vld [vmem:[%s1 + $0x64] sm:$0xf]
  %v50 = vld [vmem:[%s1 + $0x68] sm:$0xf]
  %v51 = vld [vmem:[%s1 + $0x6c] sm:$0xf]
  %v52 = vld [vmem:[%s1 + $0x70] sm:$0xf]
  %v53 = vld [vmem:[%s1 + $0x74] sm:$0xf]
  %v54 = vld [vmem:[%s1 + $0x78] sm:$0xf]
  %v55 = vld [vmem:[%s1 + $0x7c] sm:$0xf]
  %v56 = vld [vmem:[%s2] sm:$0x1]
  %v58 = vlaneseq
  %v59 = vshrl.u32 %v58, 7
  %v60 = vsub.s32 0, %v59
  %v61 = vrot.slane %v56, %v60
  %v67 = vunpack.c.l.b16 %v20
  %v68 = vunpack.c.h.b16 %v20
  %v69 = vunpack.c.l.b16 %v21
  %v70 = vunpack.c.h.b16 %v21
  %v71 = vunpack.c.l.b16 %v22
  %v72 = vunpack.c.h.b16 %v22
  %v73 = vunpack.c.l.b16 %v23
  %v74 = vunpack.c.h.b16 %v23
  %v75 = vpack.c.b16 %v69, %v67
  %v76 = vpack.c.b16 %v70, %v68
  %v77 = vpack.c.b16 %v73, %v71
  %v78 = vpack.c.b16 %v74, %v72
  %v115 = vunpack.c.l.b16 %v24
  %v116 = vunpack.c.l.b16 %v25
  %v117 = vunpack.c.l.b16 %v26
  %v118 = vunpack.c.l.b16 %v27
  %v119 = vunpack.c.l.b16 %v28
  %v120 = vunpack.c.l.b16 %v29
  %v121 = vunpack.c.l.b16 %v30
  %v122 = vunpack.c.l.b16 %v31
  %v123 = vunpack.c.l.b16 %v32
  %v124 = vunpack.c.l.b16 %v33
  %v125 = vunpack.c.l.b16 %v34
  %v126 = vunpack.c.l.b16 %v35
  %v127 = vunpack.c.l.b16 %v36
  %v128 = vunpack.c.l.b16 %v37
  %v129 = vunpack.c.l.b16 %v38
  %v130 = vunpack.c.l.b16 %v39
  %v131 = vunpack.c.l.b16 %v40
  %v132 = vunpack.c.l.b16 %v41
  %v133 = vunpack.c.l.b16 %v42
  %v134 = vunpack.c.l.b16 %v43
  %v135 = vunpack.c.l.b16 %v44
  %v136 = vunpack.c.l.b16 %v45
  %v137 = vunpack.c.l.b16 %v46
  %v138 = vunpack.c.l.b16 %v47
  %v139 = vunpack.c.l.b16 %v48
  %v140 = vunpack.c.l.b16 %v49
  %v141 = vunpack.c.l.b16 %v50
  %v142 = vunpack.c.l.b16 %v51
  %v143 = vunpack.c.l.b16 %v52
  %v144 = vunpack.c.l.b16 %v53
  %v145 = vunpack.c.l.b16 %v54
  %v146 = vunpack.c.l.b16 %v55
  %v147 = vpack.c.b16 %v116, %v115
  %v148 = vpack.c.b16 %v118, %v117
  %v149 = vpack.c.b16 %v120, %v119
  %v150 = vpack.c.b16 %v122, %v121
  %v151 = vpack.c.b16 %v124, %v123
  %v152 = vpack.c.b16 %v126, %v125
  %v153 = vpack.c.b16 %v128, %v127
  %v154 = vpack.c.b16 %v130, %v129
  %v155 = vpack.c.b16 %v132, %v131
  %v156 = vpack.c.b16 %v134, %v133
  %v157 = vpack.c.b16 %v136, %v135
  %v158 = vpack.c.b16 %v138, %v137
  %v159 = vpack.c.b16 %v140, %v139
  %v160 = vpack.c.b16 %v142, %v141
  %v161 = vpack.c.b16 %v144, %v143
  %v162 = vpack.c.b16 %v146, %v145
  %179 = vmatprep.subr.bf16.mxu0 0
  %180 = vmatpush1.bf16.msra.mxu0 %v147
  %181 = vmatprep.subr.bf16.mxu0 0
  %182 = vmatpush1.bf16.msra.mxu0 %v148
  %183 = vmatprep.subr.bf16.mxu0 0
  %184 = vmatpush1.bf16.msra.mxu0 %v149
  %185 = vmatprep.subr.bf16.mxu0 0
  %186 = vmatpush1.bf16.msra.mxu0 %v150
  %187 = vmatprep.subr.bf16.mxu0 0
  %188 = vmatpush1.bf16.msra.mxu0 %v151
  %189 = vmatprep.subr.bf16.mxu0 0
  %190 = vmatpush1.bf16.msra.mxu0 %v152
  %191 = vmatprep.subr.bf16.mxu0 0
  %192 = vmatpush1.bf16.msra.mxu0 %v153
  %193 = vmatprep.subr.bf16.mxu0 0
  %194 = vmatpush1.bf16.msra.mxu0 %v154
  %195 = vmatprep.subr.bf16.mxu0 0
  %196 = vmatpush1.bf16.msra.mxu0 %v155
  %197 = vmatprep.subr.bf16.mxu0 0
  %198 = vmatpush1.bf16.msra.mxu0 %v156
  %199 = vmatprep.subr.bf16.mxu0 0
  %200 = vmatpush1.bf16.msra.mxu0 %v157
  %201 = vmatprep.subr.bf16.mxu0 0
  %202 = vmatpush1.bf16.msra.mxu0 %v158
  %203 = vmatprep.subr.bf16.mxu0 0
  %204 = vmatpush1.bf16.msra.mxu0 %v159
  %205 = vmatprep.subr.bf16.mxu0 0
  %206 = vmatpush1.bf16.msra.mxu0 %v160
  %207 = vmatprep.subr.bf16.mxu0 0
  %208 = vmatpush1.bf16.msra.mxu0 %v161
  %209 = vmatprep.subr.bf16.mxu0 0
  %210 = vmatpush1.bf16.msra.mxu0 %v162
  %211 = vmatprep.mubr.bf16.mxu0 %v76
  %212 = vmatmul.mubr.bf16.gmra.mrb[0].mxu0 %v75
  %v213 = vpop.f32.mrb[0].mxu0
  %v214 = vadd.f32 %v61, %v213
  %v215 = vpop.f32.mrb[0].mxu0
  %v216 = vpop.f32.mrb[0].mxu0
  %v217 = vadd.f32 %v61, %v216
  %v218 = vpop.f32.mrb[0].mxu0
  %219 = vmatprep.mubr.bf16.mxu0 %v78
  %220 = vmatmul.mubr.bf16.gmra.mrb[0].mxu0 %v77
  %v221 = vpop.f32.mrb[0].mxu0
  %v222 = vadd.f32 %v61, %v221
  %v223 = vpop.f32.mrb[0].mxu0
  %v224 = vpop.f32.mrb[0].mxu0
  %v225 = vadd.f32 %v61, %v224
  %v226 = vpop.f32.mrb[0].mxu0
  %227 = vdwg.mxu0
  %228 = vst [vmem:[%s4] sm:$0xff] %v214
  %229 = vst [vmem:[%s4 + $0x8] sm:$0xff] %v217
  %230 = vst [vmem:[%s4 + $0x10] sm:$0xff] %v222
  %231 = vst [vmem:[%s4 + $0x18] sm:$0xff] %v225
  %v232 = vld [vmem:[%s4] sm:$0xff]
  %v233 = vld [vmem:[%s4 + $0x8] sm:$0xff]
  %v234 = vld [vmem:[%s4 + $0x10] sm:$0xff]
  %v235 = vld [vmem:[%s4 + $0x18] sm:$0xff]
  %v236 = vpack.c.bf16 %v232, %v232
  %v237 = vpack.c.bf16 %v233, %v233
  %v238 = vpack.c.bf16 %v234, %v234
  %v239 = vpack.c.bf16 %v235, %v235
  %v240 = vld [vmem:[%s3] sm:$0xff]
  %v241 = vld [vmem:[%s3 + $0x8] sm:$0xff]
  %v242 = vld [vmem:[%s3 + $0x10] sm:$0xff]
  %v243 = vld [vmem:[%s3 + $0x18] sm:$0xff]
  %v244 = vld [vmem:[%s3 + $0x20] sm:$0xff]
  %v245 = vld [vmem:[%s3 + $0x28] sm:$0xff]
  %v246 = vld [vmem:[%s3 + $0x30] sm:$0xff]
  %v247 = vld [vmem:[%s3 + $0x38] sm:$0xff]
  %v248 = vld [vmem:[%s3 + $0x40] sm:$0xff]
  %v249 = vld [vmem:[%s3 + $0x48] sm:$0xff]
  %v250 = vld [vmem:[%s3 + $0x50] sm:$0xff]
  %v251 = vld [vmem:[%s3 + $0x58] sm:$0xff]
  %v252 = vld [vmem:[%s3 + $0x60] sm:$0xff]
  %v253 = vld [vmem:[%s3 + $0x68] sm:$0xff]
  %v254 = vld [vmem:[%s3 + $0x70] sm:$0xff]
  %v255 = vld [vmem:[%s3 + $0x78] sm:$0xff]
  %v256 = vld [vmem:[%s3 + $0x80] sm:$0xff]
  %v257 = vld [vmem:[%s3 + $0x88] sm:$0xff]
  %v258 = vld [vmem:[%s3 + $0x90] sm:$0xff]
  %v259 = vld [vmem:[%s3 + $0x98] sm:$0xff]
  %v260 = vld [vmem:[%s3 + $0xa0] sm:$0xff]
  %v261 = vld [vmem:[%s3 + $0xa8] sm:$0xff]
  %v262 = vld [vmem:[%s3 + $0xb0] sm:$0xff]
  %v263 = vld [vmem:[%s3 + $0xb8] sm:$0xff]
  %v264 = vld [vmem:[%s3 + $0xc0] sm:$0xff]
  %v265 = vld [vmem:[%s3 + $0xc8] sm:$0xff]
  %v266 = vld [vmem:[%s3 + $0xd0] sm:$0xff]
  %v267 = vld [vmem:[%s3 + $0xd8] sm:$0xff]
  %v268 = vld [vmem:[%s3 + $0xe0] sm:$0xff]
  %v269 = vld [vmem:[%s3 + $0xe8] sm:$0xff]
  %v270 = vld [vmem:[%s3 + $0xf0] sm:$0xff]
  %v271 = vld [vmem:[%s3 + $0xf8] sm:$0xff]
  %v272 = vld [vmem:[%s3 + $0x100] sm:$0xff]
  %v273 = vld [vmem:[%s3 + $0x108] sm:$0xff]
  %v274 = vld [vmem:[%s3 + $0x110] sm:$0xff]
  %v275 = vld [vmem:[%s3 + $0x118] sm:$0xff]
  %v276 = vld [vmem:[%s3 + $0x120] sm:$0xff]
  %v277 = vld [vmem:[%s3 + $0x128] sm:$0xff]
  %v278 = vld [vmem:[%s3 + $0x130] sm:$0xff]
  %v279 = vld [vmem:[%s3 + $0x138] sm:$0xff]
  %v280 = vld [vmem:[%s3 + $0x140] sm:$0xff]
  %v281 = vld [vmem:[%s3 + $0x148] sm:$0xff]
  %v282 = vld [vmem:[%s3 + $0x150] sm:$0xff]
  %v283 = vld [vmem:[%s3 + $0x158] sm:$0xff]
  %v284 = vld [vmem:[%s3 + $0x160] sm:$0xff]
  %v285 = vld [vmem:[%s3 + $0x168] sm:$0xff]
  %v286 = vld [vmem:[%s3 + $0x170] sm:$0xff]
  %v287 = vld [vmem:[%s3 + $0x178] sm:$0xff]
  %v288 = vld [vmem:[%s3 + $0x180] sm:$0xff]
  %v289 = vld [vmem:[%s3 + $0x188] sm:$0xff]
  %v290 = vld [vmem:[%s3 + $0x190] sm:$0xff]
  %v291 = vld [vmem:[%s3 + $0x198] sm:$0xff]
  %v292 = vld [vmem:[%s3 + $0x1a0] sm:$0xff]
  %v293 = vld [vmem:[%s3 + $0x1a8] sm:$0xff]
  %v294 = vld [vmem:[%s3 + $0x1b0] sm:$0xff]
  %v295 = vld [vmem:[%s3 + $0x1b8] sm:$0xff]
  %v296 = vld [vmem:[%s3 + $0x1c0] sm:$0xff]
  %v297 = vld [vmem:[%s3 + $0x1c8] sm:$0xff]
  %v298 = vld [vmem:[%s3 + $0x1d0] sm:$0xff]
  %v299 = vld [vmem:[%s3 + $0x1d8] sm:$0xff]
  %v300 = vld [vmem:[%s3 + $0x1e0] sm:$0xff]
  %v301 = vld [vmem:[%s3 + $0x1e8] sm:$0xff]
  %v302 = vld [vmem:[%s3 + $0x1f0] sm:$0xff]
  %v303 = vld [vmem:[%s3 + $0x1f8] sm:$0xff]
  %v304 = vld [vmem:[%s3 + $0x200] sm:$0xff]
  %v305 = vld [vmem:[%s3 + $0x208] sm:$0xff]
  %v306 = vld [vmem:[%s3 + $0x210] sm:$0xff]
  %v307 = vld [vmem:[%s3 + $0x218] sm:$0xff]
  %v308 = vld [vmem:[%s3 + $0x220] sm:$0xff]
  %v309 = vld [vmem:[%s3 + $0x228] sm:$0xff]
  %v310 = vld [vmem:[%s3 + $0x230] sm:$0xff]
  %v311 = vld [vmem:[%s3 + $0x238] sm:$0xff]
  %v312 = vld [vmem:[%s3 + $0x240] sm:$0xff]
  %v313 = vld [vmem:[%s3 + $0x248] sm:$0xff]
  %v314 = vld [vmem:[%s3 + $0x250] sm:$0xff]
  %v315 = vld [vmem:[%s3 + $0x258] sm:$0xff]
  %v316 = vld [vmem:[%s3 + $0x260] sm:$0xff]
  %v317 = vld [vmem:[%s3 + $0x268] sm:$0xff]
  %v318 = vld [vmem:[%s3 + $0x270] sm:$0xff]
  %v319 = vld [vmem:[%s3 + $0x278] sm:$0xff]
  %v320 = vld [vmem:[%s3 + $0x280] sm:$0xff]
  %v321 = vld [vmem:[%s3 + $0x288] sm:$0xff]
  %v322 = vld [vmem:[%s3 + $0x290] sm:$0xff]
  %v323 = vld [vmem:[%s3 + $0x298] sm:$0xff]
  %v324 = vld [vmem:[%s3 + $0x2a0] sm:$0xff]
  %v325 = vld [vmem:[%s3 + $0x2a8] sm:$0xff]
  %v326 = vld [vmem:[%s3 + $0x2b0] sm:$0xff]
  %v327 = vld [vmem:[%s3 + $0x2b8] sm:$0xff]
  %v328 = vld [vmem:[%s3 + $0x2c0] sm:$0xff]
  %v329 = vld [vmem:[%s3 + $0x2c8] sm:$0xff]
  %v330 = vld [vmem:[%s3 + $0x2d0] sm:$0xff]
  %v331 = vld [vmem:[%s3 + $0x2d8] sm:$0xff]
  %v332 = vld [vmem:[%s3 + $0x2e0] sm:$0xff]
  %v333 = vld [vmem:[%s3 + $0x2e8] sm:$0xff]
  %v334 = vld [vmem:[%s3 + $0x2f0] sm:$0xff]
  %v335 = vld [vmem:[%s3 + $0x2f8] sm:$0xff]
  %v336 = vld [vmem:[%s3 + $0x300] sm:$0xff]
  %v337 = vld [vmem:[%s3 + $0x308] sm:$0xff]
  %v338 = vld [vmem:[%s3 + $0x310] sm:$0xff]
  %v339 = vld [vmem:[%s3 + $0x318] sm:$0xff]
  %v340 = vld [vmem:[%s3 + $0x320] sm:$0xff]
  %v341 = vld [vmem:[%s3 + $0x328] sm:$0xff]
  %v342 = vld [vmem:[%s3 + $0x330] sm:$0xff]
  %v343 = vld [vmem:[%s3 + $0x338] sm:$0xff]
  %v344 = vld [vmem:[%s3 + $0x340] sm:$0xff]
  %v345 = vld [vmem:[%s3 + $0x348] sm:$0xff]
  %v346 = vld [vmem:[%s3 + $0x350] sm:$0xff]
  %v347 = vld [vmem:[%s3 + $0x358] sm:$0xff]
  %v348 = vld [vmem:[%s3 + $0x360] sm:$0xff]
  %v349 = vld [vmem:[%s3 + $0x368] sm:$0xff]
  %v350 = vld [vmem:[%s3 + $0x370] sm:$0xff]
  %v351 = vld [vmem:[%s3 + $0x378] sm:$0xff]
  %v352 = vld [vmem:[%s3 + $0x380] sm:$0xff]
  %v353 = vld [vmem:[%s3 + $0x388] sm:$0xff]
  %v354 = vld [vmem:[%s3 + $0x390] sm:$0xff]
  %v355 = vld [vmem:[%s3 + $0x398] sm:$0xff]
  %v356 = vld [vmem:[%s3 + $0x3a0] sm:$0xff]
  %v357 = vld [vmem:[%s3 + $0x3a8] sm:$0xff]
  %v358 = vld [vmem:[%s3 + $0x3b0] sm:$0xff]
  %v359 = vld [vmem:[%s3 + $0x3b8] sm:$0xff]
  %v360 = vld [vmem:[%s3 + $0x3c0] sm:$0xff]
  %v361 = vld [vmem:[%s3 + $0x3c8] sm:$0xff]
  %v362 = vld [vmem:[%s3 + $0x3d0] sm:$0xff]
  %v363 = vld [vmem:[%s3 + $0x3d8] sm:$0xff]
  %v364 = vld [vmem:[%s3 + $0x3e0] sm:$0xff]
  %v365 = vld [vmem:[%s3 + $0x3e8] sm:$0xff]
  %v366 = vld [vmem:[%s3 + $0x3f0] sm:$0xff]
  %v367 = vld [vmem:[%s3 + $0x3f8] sm:$0xff]
  %v496 = vunpack.c.l.b16 %v240
  %v497 = vunpack.c.h.b16 %v240
  %v498 = vunpack.c.l.b16 %v241
  %v499 = vunpack.c.h.b16 %v241
  %v500 = vunpack.c.l.b16 %v242
  %v501 = vunpack.c.h.b16 %v242
  %v502 = vunpack.c.l.b16 %v243
  %v503 = vunpack.c.h.b16 %v243
  %v504 = vunpack.c.l.b16 %v244
  %v505 = vunpack.c.h.b16 %v244
  %v506 = vunpack.c.l.b16 %v245
  %v507 = vunpack.c.h.b16 %v245
  %v508 = vunpack.c.l.b16 %v246
  %v509 = vunpack.c.h.b16 %v246
  %v510 = vunpack.c.l.b16 %v247
  %v511 = vunpack.c.h.b16 %v247
  %v512 = vunpack.c.l.b16 %v248
  %v513 = vunpack.c.h.b16 %v248
  %v514 = vunpack.c.l.b16 %v249
  %v515 = vunpack.c.h.b16 %v249
  %v516 = vunpack.c.l.b16 %v250
  %v517 = vunpack.c.h.b16 %v250
  %v518 = vunpack.c.l.b16 %v251
  %v519 = vunpack.c.h.b16 %v251
  %v520 = vunpack.c.l.b16 %v252
  %v521 = vunpack.c.h.b16 %v252
  %v522 = vunpack.c.l.b16 %v253
  %v523 = vunpack.c.h.b16 %v253
  %v524 = vunpack.c.l.b16 %v254
  %v525 = vunpack.c.h.b16 %v254
  %v526 = vunpack.c.l.b16 %v255
  %v527 = vunpack.c.h.b16 %v255
  %v528 = vunpack.c.l.b16 %v256
  %v529 = vunpack.c.h.b16 %v256
  %v530 = vunpack.c.l.b16 %v257
  %v531 = vunpack.c.h.b16 %v257
  %v532 = vunpack.c.l.b16 %v258
  %v533 = vunpack.c.h.b16 %v258
  %v534 = vunpack.c.l.b16 %v259
  %v535 = vunpack.c.h.b16 %v259
  %v536 = vunpack.c.l.b16 %v260
  %v537 = vunpack.c.h.b16 %v260
  %v538 = vunpack.c.l.b16 %v261
  %v539 = vunpack.c.h.b16 %v261
  %v540 = vunpack.c.l.b16 %v262
  %v541 = vunpack.c.h.b16 %v262
  %v542 = vunpack.c.l.b16 %v263
  %v543 = vunpack.c.h.b16 %v263
  %v544 = vunpack.c.l.b16 %v264
  %v545 = vunpack.c.h.b16 %v264
  %v546 = vunpack.c.l.b16 %v265
  %v547 = vunpack.c.h.b16 %v265
  %v548 = vunpack.c.l.b16 %v266
  %v549 = vunpack.c.h.b16 %v266
  %v550 = vunpack.c.l.b16 %v267
  %v551 = vunpack.c.h.b16 %v267
  %v552 = vunpack.c.l.b16 %v268
  %v553 = vunpack.c.h.b16 %v268
  %v554 = vunpack.c.l.b16 %v269
  %v555 = vunpack.c.h.b16 %v269
  %v556 = vunpack.c.l.b16 %v270
  %v557 = vunpack.c.h.b16 %v270
  %v558 = vunpack.c.l.b16 %v271
  %v559 = vunpack.c.h.b16 %v271
  %v560 = vunpack.c.l.b16 %v272
  %v561 = vunpack.c.h.b16 %v272
  %v562 = vunpack.c.l.b16 %v273
  %v563 = vunpack.c.h.b16 %v273
  %v564 = vunpack.c.l.b16 %v274
  %v565 = vunpack.c.h.b16 %v274
  %v566 = vunpack.c.l.b16 %v275
  %v567 = vunpack.c.h.b16 %v275
  %v568 = vunpack.c.l.b16 %v276
  %v569 = vunpack.c.h.b16 %v276
  %v570 = vunpack.c.l.b16 %v277
  %v571 = vunpack.c.h.b16 %v277
  %v572 = vunpack.c.l.b16 %v278
  %v573 = vunpack.c.h.b16 %v278
  %v574 = vunpack.c.l.b16 %v279
  %v575 = vunpack.c.h.b16 %v279
  %v576 = vunpack.c.l.b16 %v280
  %v577 = vunpack.c.h.b16 %v280
  %v578 = vunpack.c.l.b16 %v281
  %v579 = vunpack.c.h.b16 %v281
  %v580 = vunpack.c.l.b16 %v282
  %v581 = vunpack.c.h.b16 %v282
  %v582 = vunpack.c.l.b16 %v283
  %v583 = vunpack.c.h.b16 %v283
  %v584 = vunpack.c.l.b16 %v284
  %v585 = vunpack.c.h.b16 %v284
  %v586 = vunpack.c.l.b16 %v285
  %v587 = vunpack.c.h.b16 %v285
  %v588 = vunpack.c.l.b16 %v286
  %v589 = vunpack.c.h.b16 %v286
  %v590 = vunpack.c.l.b16 %v287
  %v591 = vunpack.c.h.b16 %v287
  %v592 = vunpack.c.l.b16 %v288
  %v593 = vunpack.c.h.b16 %v288
  %v594 = vunpack.c.l.b16 %v289
  %v595 = vunpack.c.h.b16 %v289
  %v596 = vunpack.c.l.b16 %v290
  %v597 = vunpack.c.h.b16 %v290
  %v598 = vunpack.c.l.b16 %v291
  %v599 = vunpack.c.h.b16 %v291
  %v600 = vunpack.c.l.b16 %v292
  %v601 = vunpack.c.h.b16 %v292
  %v602 = vunpack.c.l.b16 %v293
  %v603 = vunpack.c.h.b16 %v293
  %v604 = vunpack.c.l.b16 %v294
  %v605 = vunpack.c.h.b16 %v294
  %v606 = vunpack.c.l.b16 %v295
  %v607 = vunpack.c.h.b16 %v295
  %v608 = vunpack.c.l.b16 %v296
  %v609 = vunpack.c.h.b16 %v296
  %v610 = vunpack.c.l.b16 %v297
  %v611 = vunpack.c.h.b16 %v297
  %v612 = vunpack.c.l.b16 %v298
  %v613 = vunpack.c.h.b16 %v298
  %v614 = vunpack.c.l.b16 %v299
  %v615 = vunpack.c.h.b16 %v299
  %v616 = vunpack.c.l.b16 %v300
  %v617 = vunpack.c.h.b16 %v300
  %v618 = vunpack.c.l.b16 %v301
  %v619 = vunpack.c.h.b16 %v301
  %v620 = vunpack.c.l.b16 %v302
  %v621 = vunpack.c.h.b16 %v302
  %v622 = vunpack.c.l.b16 %v303
  %v623 = vunpack.c.h.b16 %v303
  %v624 = vunpack.c.l.b16 %v304
  %v625 = vunpack.c.h.b16 %v304
  %v626 = vunpack.c.l.b16 %v305
  %v627 = vunpack.c.h.b16 %v305
  %v628 = vunpack.c.l.b16 %v306
  %v629 = vunpack.c.h.b16 %v306
  %v630 = vunpack.c.l.b16 %v307
  %v631 = vunpack.c.h.b16 %v307
  %v632 = vunpack.c.l.b16 %v308
  %v633 = vunpack.c.h.b16 %v308
  %v634 = vunpack.c.l.b16 %v309
  %v635 = vunpack.c.h.b16 %v309
  %v636 = vunpack.c.l.b16 %v310
  %v637 = vunpack.c.h.b16 %v310
  %v638 = vunpack.c.l.b16 %v311
  %v639 = vunpack.c.h.b16 %v311
  %v640 = vunpack.c.l.b16 %v312
  %v641 = vunpack.c.h.b16 %v312
  %v642 = vunpack.c.l.b16 %v313
  %v643 = vunpack.c.h.b16 %v313
  %v644 = vunpack.c.l.b16 %v314
  %v645 = vunpack.c.h.b16 %v314
  %v646 = vunpack.c.l.b16 %v315
  %v647 = vunpack.c.h.b16 %v315
  %v648 = vunpack.c.l.b16 %v316
  %v649 = vunpack.c.h.b16 %v316
  %v650 = vunpack.c.l.b16 %v317
  %v651 = vunpack.c.h.b16 %v317
  %v652 = vunpack.c.l.b16 %v318
  %v653 = vunpack.c.h.b16 %v318
  %v654 = vunpack.c.l.b16 %v319
  %v655 = vunpack.c.h.b16 %v319
  %v656 = vunpack.c.l.b16 %v320
  %v657 = vunpack.c.h.b16 %v320
  %v658 = vunpack.c.l.b16 %v321
  %v659 = vunpack.c.h.b16 %v321
  %v660 = vunpack.c.l.b16 %v322
  %v661 = vunpack.c.h.b16 %v322
  %v662 = vunpack.c.l.b16 %v323
  %v663 = vunpack.c.h.b16 %v323
  %v664 = vunpack.c.l.b16 %v324
  %v665 = vunpack.c.h.b16 %v324
  %v666 = vunpack.c.l.b16 %v325
  %v667 = vunpack.c.h.b16 %v325
  %v668 = vunpack.c.l.b16 %v326
  %v669 = vunpack.c.h.b16 %v326
  %v670 = vunpack.c.l.b16 %v327
  %v671 = vunpack.c.h.b16 %v327
  %v672 = vunpack.c.l.b16 %v328
  %v673 = vunpack.c.h.b16 %v328
  %v674 = vunpack.c.l.b16 %v329
  %v675 = vunpack.c.h.b16 %v329
  %v676 = vunpack.c.l.b16 %v330
  %v677 = vunpack.c.h.b16 %v330
  %v678 = vunpack.c.l.b16 %v331
  %v679 = vunpack.c.h.b16 %v331
  %v680 = vunpack.c.l.b16 %v332
  %v681 = vunpack.c.h.b16 %v332
  %v682 = vunpack.c.l.b16 %v333
  %v683 = vunpack.c.h.b16 %v333
  %v684 = vunpack.c.l.b16 %v334
  %v685 = vunpack.c.h.b16 %v334
  %v686 = vunpack.c.l.b16 %v335
  %v687 = vunpack.c.h.b16 %v335
  %v688 = vunpack.c.l.b16 %v336
  %v689 = vunpack.c.h.b16 %v336
  %v690 = vunpack.c.l.b16 %v337
  %v691 = vunpack.c.h.b16 %v337
  %v692 = vunpack.c.l.b16 %v338
  %v693 = vunpack.c.h.b16 %v338
  %v694 = vunpack.c.l.b16 %v339
  %v695 = vunpack.c.h.b16 %v339
  %v696 = vunpack.c.l.b16 %v340
  %v697 = vunpack.c.h.b16 %v340
  %v698 = vunpack.c.l.b16 %v341
  %v699 = vunpack.c.h.b16 %v341
  %v700 = vunpack.c.l.b16 %v342
  %v701 = vunpack.c.h.b16 %v342
  %v702 = vunpack.c.l.b16 %v343
  %v703 = vunpack.c.h.b16 %v343
  %v704 = vunpack.c.l.b16 %v344
  %v705 = vunpack.c.h.b16 %v344
  %v706 = vunpack.c.l.b16 %v345
  %v707 = vunpack.c.h.b16 %v345
  %v708 = vunpack.c.l.b16 %v346
  %v709 = vunpack.c.h.b16 %v346
  %v710 = vunpack.c.l.b16 %v347
  %v711 = vunpack.c.h.b16 %v347
  %v712 = vunpack.c.l.b16 %v348
  %v713 = vunpack.c.h.b16 %v348
  %v714 = vunpack.c.l.b16 %v349
  %v715 = vunpack.c.h.b16 %v349
  %v716 = vunpack.c.l.b16 %v350
  %v717 = vunpack.c.h.b16 %v350
  %v718 = vunpack.c.l.b16 %v351
  %v719 = vunpack.c.h.b16 %v351
  %v720 = vunpack.c.l.b16 %v352
  %v721 = vunpack.c.h.b16 %v352
  %v722 = vunpack.c.l.b16 %v353
  %v723 = vunpack.c.h.b16 %v353
  %v724 = vunpack.c.l.b16 %v354
  %v725 = vunpack.c.h.b16 %v354
  %v726 = vunpack.c.l.b16 %v355
  %v727 = vunpack.c.h.b16 %v355
  %v728 = vunpack.c.l.b16 %v356
  %v729 = vunpack.c.h.b16 %v356
  %v730 = vunpack.c.l.b16 %v357
  %v731 = vunpack.c.h.b16 %v357
  %v732 = vunpack.c.l.b16 %v358
  %v733 = vunpack.c.h.b16 %v358
  %v734 = vunpack.c.l.b16 %v359
  %v735 = vunpack.c.h.b16 %v359
  %v736 = vunpack.c.l.b16 %v360
  %v737 = vunpack.c.h.b16 %v360
  %v738 = vunpack.c.l.b16 %v361
  %v739 = vunpack.c.h.b16 %v361
  %v740 = vunpack.c.l.b16 %v362
  %v741 = vunpack.c.h.b16 %v362
  %v742 = vunpack.c.l.b16 %v363
  %v743 = vunpack.c.h.b16 %v363
  %v744 = vunpack.c.l.b16 %v364
  %v745 = vunpack.c.h.b16 %v364
  %v746 = vunpack.c.l.b16 %v365
  %v747 = vunpack.c.h.b16 %v365
  %v748 = vunpack.c.l.b16 %v366
  %v749 = vunpack.c.h.b16 %v366
  %v750 = vunpack.c.l.b16 %v367
  %v751 = vunpack.c.h.b16 %v367
  %v752 = vpack.c.b16 %v500, %v496
  %v753 = vpack.c.b16 %v501, %v497
  %v754 = vpack.c.b16 %v502, %v498
  %v755 = vpack.c.b16 %v503, %v499
  %v756 = vpack.c.b16 %v508, %v504
  %v757 = vpack.c.b16 %v509, %v505
  %v758 = vpack.c.b16 %v510, %v506
  %v759 = vpack.c.b16 %v511, %v507
  %v760 = vpack.c.b16 %v516, %v512
  %v761 = vpack.c.b16 %v517, %v513
  %v762 = vpack.c.b16 %v518, %v514
  %v763 = vpack.c.b16 %v519, %v515
  %v764 = vpack.c.b16 %v524, %v520
  %v765 = vpack.c.b16 %v525, %v521
  %v766 = vpack.c.b16 %v526, %v522
  %v767 = vpack.c.b16 %v527, %v523
  %v768 = vpack.c.b16 %v532, %v528
  %v769 = vpack.c.b16 %v533, %v529
  %v770 = vpack.c.b16 %v534, %v530
  %v771 = vpack.c.b16 %v535, %v531
  %v772 = vpack.c.b16 %v540, %v536
  %v773 = vpack.c.b16 %v541, %v537
  %v774 = vpack.c.b16 %v542, %v538
  %v775 = vpack.c.b16 %v543, %v539
  %v776 = vpack.c.b16 %v548, %v544
  %v777 = vpack.c.b16 %v549, %v545
  %v778 = vpack.c.b16 %v550, %v546
  %v779 = vpack.c.b16 %v551, %v547
  %v780 = vpack.c.b16 %v556, %v552
  %v781 = vpack.c.b16 %v557, %v553
  %v782 = vpack.c.b16 %v558, %v554
  %v783 = vpack.c.b16 %v559, %v555
  %v784 = vpack.c.b16 %v564, %v560
  %v785 = vpack.c.b16 %v565, %v561
  %v786 = vpack.c.b16 %v566, %v562
  %v787 = vpack.c.b16 %v567, %v563
  %v788 = vpack.c.b16 %v572, %v568
  %v789 = vpack.c.b16 %v573, %v569
  %v790 = vpack.c.b16 %v574, %v570
  %v791 = vpack.c.b16 %v575, %v571
  %v792 = vpack.c.b16 %v580, %v576
  %v793 = vpack.c.b16 %v581, %v577
  %v794 = vpack.c.b16 %v582, %v578
  %v795 = vpack.c.b16 %v583, %v579
  %v796 = vpack.c.b16 %v588, %v584
  %v797 = vpack.c.b16 %v589, %v585
  %v798 = vpack.c.b16 %v590, %v586
  %v799 = vpack.c.b16 %v591, %v587
  %v800 = vpack.c.b16 %v596, %v592
  %v801 = vpack.c.b16 %v597, %v593
  %v802 = vpack.c.b16 %v598, %v594
  %v803 = vpack.c.b16 %v599, %v595
  %v804 = vpack.c.b16 %v604, %v600
  %v805 = vpack.c.b16 %v605, %v601
  %v806 = vpack.c.b16 %v606, %v602
  %v807 = vpack.c.b16 %v607, %v603
  %v808 = vpack.c.b16 %v612, %v608
  %v809 = vpack.c.b16 %v613, %v609
  %v810 = vpack.c.b16 %v614, %v610
  %v811 = vpack.c.b16 %v615, %v611
  %v812 = vpack.c.b16 %v620, %v616
  %v813 = vpack.c.b16 %v621, %v617
  %v814 = vpack.c.b16 %v622, %v618
  %v815 = vpack.c.b16 %v623, %v619
  %v816 = vpack.c.b16 %v628, %v624
  %v817 = vpack.c.b16 %v629, %v625
  %v818 = vpack.c.b16 %v630, %v626
  %v819 = vpack.c.b16 %v631, %v627
  %v820 = vpack.c.b16 %v636, %v632
  %v821 = vpack.c.b16 %v637, %v633
  %v822 = vpack.c.b16 %v638, %v634
  %v823 = vpack.c.b16 %v639, %v635
  %v824 = vpack.c.b16 %v644, %v640
  %v825 = vpack.c.b16 %v645, %v641
  %v826 = vpack.c.b16 %v646, %v642
  %v827 = vpack.c.b16 %v647, %v643
  %v828 = vpack.c.b16 %v652, %v648
  %v829 = vpack.c.b16 %v653, %v649
  %v830 = vpack.c.b16 %v654, %v650
  %v831 = vpack.c.b16 %v655, %v651
  %v832 = vpack.c.b16 %v660, %v656
  %v833 = vpack.c.b16 %v661, %v657
  %v834 = vpack.c.b16 %v662, %v658
  %v835 = vpack.c.b16 %v663, %v659
  %v836 = vpack.c.b16 %v668, %v664
  %v837 = vpack.c.b16 %v669, %v665
  %v838 = vpack.c.b16 %v670, %v666
  %v839 = vpack.c.b16 %v671, %v667
  %v840 = vpack.c.b16 %v676, %v672
  %v841 = vpack.c.b16 %v677, %v673
  %v842 = vpack.c.b16 %v678, %v674
  %v843 = vpack.c.b16 %v679, %v675
  %v844 = vpack.c.b16 %v684, %v680
  %v845 = vpack.c.b16 %v685, %v681
  %v846 = vpack.c.b16 %v686, %v682
  %v847 = vpack.c.b16 %v687, %v683
  %v848 = vpack.c.b16 %v692, %v688
  %v849 = vpack.c.b16 %v693, %v689
  %v850 = vpack.c.b16 %v694, %v690
  %v851 = vpack.c.b16 %v695, %v691
  %v852 = vpack.c.b16 %v700, %v696
  %v853 = vpack.c.b16 %v701, %v697
  %v854 = vpack.c.b16 %v702, %v698
  %v855 = vpack.c.b16 %v703, %v699
  %v856 = vpack.c.b16 %v708, %v704
  %v857 = vpack.c.b16 %v709, %v705
  %v858 = vpack.c.b16 %v710, %v706
  %v859 = vpack.c.b16 %v711, %v707
  %v860 = vpack.c.b16 %v716, %v712
  %v861 = vpack.c.b16 %v717, %v713
  %v862 = vpack.c.b16 %v718, %v714
  %v863 = vpack.c.b16 %v719, %v715
  %v864 = vpack.c.b16 %v724, %v720
  %v865 = vpack.c.b16 %v725, %v721
  %v866 = vpack.c.b16 %v726, %v722
  %v867 = vpack.c.b16 %v727, %v723
  %v868 = vpack.c.b16 %v732, %v728
  %v869 = vpack.c.b16 %v733, %v729
  %v870 = vpack.c.b16 %v734, %v730
  %v871 = vpack.c.b16 %v735, %v731
  %v872 = vpack.c.b16 %v740, %v736
  %v873 = vpack.c.b16 %v741, %v737
  %v874 = vpack.c.b16 %v742, %v738
  %v875 = vpack.c.b16 %v743, %v739
  %v876 = vpack.c.b16 %v748, %v744
  %v877 = vpack.c.b16 %v749, %v745
  %v878 = vpack.c.b16 %v750, %v746
  %v879 = vpack.c.b16 %v751, %v747
  %1008 = vmatprep.subr.bf16.mxu0 %v753
  %1009 = vmatpush1.bf16.msra.mxu0 %v752
  %1010 = vmatprep.subr.bf16.mxu0 %v757
  %1011 = vmatpush1.bf16.msra.mxu0 %v756
  %1012 = vmatprep.subr.bf16.mxu0 %v761
  %1013 = vmatpush1.bf16.msra.mxu0 %v760
  %1014 = vmatprep.subr.bf16.mxu0 %v765
  %1015 = vmatpush1.bf16.msra.mxu0 %v764
  %1016 = vmatprep.subr.bf16.mxu0 %v769
  %1017 = vmatpush1.bf16.msra.mxu0 %v768
  %1018 = vmatprep.subr.bf16.mxu0 %v773
  %1019 = vmatpush1.bf16.msra.mxu0 %v772
  %1020 = vmatprep.subr.bf16.mxu0 %v777
  %1021 = vmatpush1.bf16.msra.mxu0 %v776
  %1022 = vmatprep.subr.bf16.mxu0 %v781
  %1023 = vmatpush1.bf16.msra.mxu0 %v780
  %1024 = vmatprep.subr.bf16.mxu0 %v785
  %1025 = vmatpush1.bf16.msra.mxu0 %v784
  %1026 = vmatprep.subr.bf16.mxu0 %v789
  %1027 = vmatpush1.bf16.msra.mxu0 %v788
  %1028 = vmatprep.subr.bf16.mxu0 %v793
  %1029 = vmatpush1.bf16.msra.mxu0 %v792
  %1030 = vmatprep.subr.bf16.mxu0 %v797
  %1031 = vmatpush1.bf16.msra.mxu0 %v796
  %1032 = vmatprep.subr.bf16.mxu0 %v801
  %1033 = vmatpush1.bf16.msra.mxu0 %v800
  %1034 = vmatprep.subr.bf16.mxu0 %v805
  %1035 = vmatpush1.bf16.msra.mxu0 %v804
  %1036 = vmatprep.subr.bf16.mxu0 %v809
  %1037 = vmatpush1.bf16.msra.mxu0 %v808
  %1038 = vmatprep.subr.bf16.mxu0 %v813
  %1039 = vmatpush1.bf16.msra.mxu0 %v812
  %1040 = vmatprep.mubr.bf16.mxu0 %v237
  %1041 = vmatmul.mubr.bf16.gmra.mrb[0].mxu0 %v236
  %v1042 = vpop.f32.mrb[0].mxu0
  %v1043 = vadd.f32 0.0, %v1042
  %v1044 = vpop.f32.mrb[0].mxu0
  %v1045 = vadd.f32 0.0, %v1044
  %v1046 = vpop.f32.mrb[0].mxu0
  %v1047 = vpop.f32.mrb[0].mxu0
  %1048 = vdwg.mxu0
  %1049 = vmatprep.subr.bf16.mxu0 %v817
  %1050 = vmatpush1.bf16.msra.mxu0 %v816
  %1051 = vmatprep.subr.bf16.mxu0 %v821
  %1052 = vmatpush1.bf16.msra.mxu0 %v820
  %1053 = vmatprep.subr.bf16.mxu0 %v825
  %1054 = vmatpush1.bf16.msra.mxu0 %v824
  %1055 = vmatprep.subr.bf16.mxu0 %v829
  %1056 = vmatpush1.bf16.msra.mxu0 %v828
  %1057 = vmatprep.subr.bf16.mxu0 %v833
  %1058 = vmatpush1.bf16.msra.mxu0 %v832
  %1059 = vmatprep.subr.bf16.mxu0 %v837
  %1060 = vmatpush1.bf16.msra.mxu0 %v836
  %1061 = vmatprep.subr.bf16.mxu0 %v841
  %1062 = vmatpush1.bf16.msra.mxu0 %v840
  %1063 = vmatprep.subr.bf16.mxu0 %v845
  %1064 = vmatpush1.bf16.msra.mxu0 %v844
  %1065 = vmatprep.subr.bf16.mxu0 %v849
  %1066 = vmatpush1.bf16.msra.mxu0 %v848
  %1067 = vmatprep.subr.bf16.mxu0 %v853
  %1068 = vmatpush1.bf16.msra.mxu0 %v852
  %1069 = vmatprep.subr.bf16.mxu0 %v857
  %1070 = vmatpush1.bf16.msra.mxu0 %v856
  %1071 = vmatprep.subr.bf16.mxu0 %v861
  %1072 = vmatpush1.bf16.msra.mxu0 %v860
  %1073 = vmatprep.subr.bf16.mxu0 %v865
  %1074 = vmatpush1.bf16.msra.mxu0 %v864
  %1075 = vmatprep.subr.bf16.mxu0 %v869
  %1076 = vmatpush1.bf16.msra.mxu0 %v868
  %1077 = vmatprep.subr.bf16.mxu0 %v873
  %1078 = vmatpush1.bf16.msra.mxu0 %v872
  %1079 = vmatprep.subr.bf16.mxu0 %v877
  %1080 = vmatpush1.bf16.msra.mxu0 %v876
  %1081 = vmatprep.mubr.bf16.mxu0 %v239
  %1082 = vmatmul.mubr.bf16.gmra.mrb[0].mxu0 %v238
  %v1083 = vpop.f32.mrb[0].mxu0
  %v1084 = vadd.f32 %v1043, %v1083
  %v1085 = vpop.f32.mrb[0].mxu0
  %v1086 = vadd.f32 %v1045, %v1085
  %v1087 = vpop.f32.mrb[0].mxu0
  %v1088 = vpop.f32.mrb[0].mxu0
  %1089 = vdwg.mxu0
  %1090 = vmatprep.subr.bf16.mxu0 %v755
  %1091 = vmatpush1.bf16.msra.mxu0 %v754
  %1092 = vmatprep.subr.bf16.mxu0 %v759
  %1093 = vmatpush1.bf16.msra.mxu0 %v758
  %1094 = vmatprep.subr.bf16.mxu0 %v763
  %1095 = vmatpush1.bf16.msra.mxu0 %v762
  %1096 = vmatprep.subr.bf16.mxu0 %v767
  %1097 = vmatpush1.bf16.msra.mxu0 %v766
  %1098 = vmatprep.subr.bf16.mxu0 %v771
  %1099 = vmatpush1.bf16.msra.mxu0 %v770
  %1100 = vmatprep.subr.bf16.mxu0 %v775
  %1101 = vmatpush1.bf16.msra.mxu0 %v774
  %1102 = vmatprep.subr.bf16.mxu0 %v779
  %1103 = vmatpush1.bf16.msra.mxu0 %v778
  %1104 = vmatprep.subr.bf16.mxu0 %v783
  %1105 = vmatpush1.bf16.msra.mxu0 %v782
  %1106 = vmatprep.subr.bf16.mxu0 %v787
  %1107 = vmatpush1.bf16.msra.mxu0 %v786
  %1108 = vmatprep.subr.bf16.mxu0 %v791
  %1109 = vmatpush1.bf16.msra.mxu0 %v790
  %1110 = vmatprep.subr.bf16.mxu0 %v795
  %1111 = vmatpush1.bf16.msra.mxu0 %v794
  %1112 = vmatprep.subr.bf16.mxu0 %v799
  %1113 = vmatpush1.bf16.msra.mxu0 %v798
  %1114 = vmatprep.subr.bf16.mxu0 %v803
  %1115 = vmatpush1.bf16.msra.mxu0 %v802
  %1116 = vmatprep.subr.bf16.mxu0 %v807
  %1117 = vmatpush1.bf16.msra.mxu0 %v806
  %1118 = vmatprep.subr.bf16.mxu0 %v811
  %1119 = vmatpush1.bf16.msra.mxu0 %v810
  %1120 = vmatprep.subr.bf16.mxu0 %v815
  %1121 = vmatpush1.bf16.msra.mxu0 %v814
  %1122 = vmatprep.mubr.bf16.mxu0 %v237
  %1123 = vmatmul.mubr.bf16.gmra.mrb[0].mxu0 %v236
  %v1124 = vpop.f32.mrb[0].mxu0
  %v1125 = vadd.f32 0.0, %v1124
  %v1126 = vpop.f32.mrb[0].mxu0
  %v1127 = vadd.f32 0.0, %v1126
  %v1128 = vpop.f32.mrb[0].mxu0
  %v1129 = vpop.f32.mrb[0].mxu0
  %1130 = vdwg.mxu0
  %1131 = vmatprep.subr.bf16.mxu0 %v819
  %1132 = vmatpush1.bf16.msra.mxu0 %v818
  %1133 = vmatprep.subr.bf16.mxu0 %v823
  %1134 = vmatpush1.bf16.msra.mxu0 %v822
  %1135 = vmatprep.subr.bf16.mxu0 %v827
  %1136 = vmatpush1.bf16.msra.mxu0 %v826
  %1137 = vmatprep.subr.bf16.mxu0 %v831
  %1138 = vmatpush1.bf16.msra.mxu0 %v830
  %1139 = vmatprep.subr.bf16.mxu0 %v835
  %1140 = vmatpush1.bf16.msra.mxu0 %v834
  %1141 = vmatprep.subr.bf16.mxu0 %v839
  %1142 = vmatpush1.bf16.msra.mxu0 %v838
  %1143 = vmatprep.subr.bf16.mxu0 %v843
  %1144 = vmatpush1.bf16.msra.mxu0 %v842
  %1145 = vmatprep.subr.bf16.mxu0 %v847
  %1146 = vmatpush1.bf16.msra.mxu0 %v846
  %1147 = vmatprep.subr.bf16.mxu0 %v851
  %1148 = vmatpush1.bf16.msra.mxu0 %v850
  %1149 = vmatprep.subr.bf16.mxu0 %v855
  %1150 = vmatpush1.bf16.msra.mxu0 %v854
  %1151 = vmatprep.subr.bf16.mxu0 %v859
  %1152 = vmatpush1.bf16.msra.mxu0 %v858
  %1153 = vmatprep.subr.bf16.mxu0 %v863
  %1154 = vmatpush1.bf16.msra.mxu0 %v862
  %1155 = vmatprep.subr.bf16.mxu0 %v867
  %1156 = vmatpush1.bf16.msra.mxu0 %v866
  %1157 = vmatprep.subr.bf16.mxu0 %v871
  %1158 = vmatpush1.bf16.msra.mxu0 %v870
  %1159 = vmatprep.subr.bf16.mxu0 %v875
  %1160 = vmatpush1.bf16.msra.mxu0 %v874
  %1161 = vmatprep.subr.bf16.mxu0 %v879
  %1162 = vmatpush1.bf16.msra.mxu0 %v878
  %1163 = vmatprep.mubr.bf16.mxu0 %v239
  %1164 = vmatmul.mubr.bf16.gmra.mrb[0].mxu0 %v238
  %v1165 = vpop.f32.mrb[0].mxu0
  %v1166 = vadd.f32 %v1125, %v1165
  %v1167 = vpop.f32.mrb[0].mxu0
  %v1168 = vadd.f32 %v1127, %v1167
  %v1169 = vpop.f32.mrb[0].mxu0
  %v1170 = vpop.f32.mrb[0].mxu0
  %1171 = vdwg.mxu0
  %v1172 = vtanh.pop %v1084
  %v1173 = vtanh.pop %v1086
  %v1174 = vtanh.pop %v1166
  %v1175 = vtanh.pop %v1168
  %1176 = vst [vmem:[%s5] sm:$0xff] %v1172
  %1177 = vst [vmem:[%s5 + $0x8] sm:$0xff] %v1173
  %1178 = vst [vmem:[%s5 + $0x10] sm:$0xff] %v1174
  %1179 = vst [vmem:[%s5 + $0x18] sm:$0xff] %v1175
  // Predicated region
  $region18: #{_forward_init.5} parent=0 // pred_check
    _
  $region19: #{_forward_init.5} parent=0 // pred_check_branch
    %1181 = sbr.rel (0) target = $region21
  $region20: #{_forward_init.5} parent=0 // pred_region
    _
  $region21: #{_forward_init.5} parent=0 // pred_fallthru
    _
  // Predicated region
  $region22: #{_forward_init.5} parent=0 // pred_check
    _
  $region23: #{_forward_init.5} parent=0 // pred_check_branch
    %1183 = sbr.rel (0) target = $region25
  $region24: #{_forward_init.5} parent=0 // pred_region
    _
  $region25: #{_forward_init.5} parent=0 // pred_fallthru
    _
  // Predicated region
  $region26: #{_forward_init.5} parent=0 // pred_check
    _
  $region27: #{_forward_init.5} parent=0 // pred_check_branch
    %1185 = sbr.rel (0) target = $region29
  $region28: #{_forward_init.5} parent=0 // pred_region
    _
  $region29: #{_forward_init.5} parent=0 // pred_fallthru
    _
  // Predicated region
  $region30: #{_forward_init.5} parent=0 // pred_check
    _
  $region31: #{_forward_init.5} parent=0 // pred_check_branch
    %1187 = sbr.rel (0) target = $region33
  $region32: #{_forward_init.5} parent=0 // pred_region
    _
  $region33: #{_forward_init.5} parent=0 // pred_fallthru
    _

</llo_original>
